<compile_context>
chip_gen: v5e
topology: v5e:2x2
jax: 0.10.0
libtpu: 0.0.40
codegen_flags: <defaults>
</compile_context>

<pallas_src>
import math
import jax
import jax.numpy as jnp
from jax.experimental import pallas as pl
from jax.experimental.pallas import tpu as pltpu

# ----------------------------- model sizes ---------------------------------
VOCAB = 50
HIDDEN = 64          # GRU hidden size (== embedding dim, as in CRAFT)
EMBED = HIDDEN
H2 = 2 * HIDDEN      # packed / padded lane width (128)
TIME_BUCKET = 8      # bucket T / Td to multiples of this to avoid recompiles


def _round_up(n, m):
    return ((n + m - 1) // m) * m


def _pick_batch_tile(n, per_row_bytes, budget_bytes=20 * 1024 * 1024, cap=256):
    """Largest multiple-of-8 batch tile whose per-tile VMEM footprint stays under
    budget (conservative for v7x's 64 MiB VMEM); capped at 256 rows."""
    tile = (budget_bytes // max(per_row_bytes, 1)) // 8 * 8
    tile = max(8, min(cap, tile))
    n8 = _round_up(max(n, 1), 8)
    if n8 <= tile:
        return n8, n8
    return tile, _round_up(n8, tile)


def _sig(x):
    # sigmoid(x) = 0.5 * (1 + tanh(x/2)); one EUP op instead of exp + divide.
    return 0.5 * (jnp.tanh(0.5 * x) + 1.0)


# --------------------------- weight preparation -----------------------------
def _split_gates(w):
    # (I, 3H) with columns [r|z|n] -> list of 3 (I, H)
    H = w.shape[1] // 3
    return [w[:, g * H:(g + 1) * H] for g in range(3)]


def _split_bias(b):
    # (1, 3H) -> list of 3 (H,)
    H = b.shape[1] // 3
    return [b[0, g * H:(g + 1) * H] for g in range(3)]


def prep_bidir_layer0(pf, pb):
    """Encoder layer 0 (input E). fwd/bwd packed as [fwd | bwd] on 2H lanes.
    All three gates fused on the lane axis: gate g lives in lanes [g*2H,(g+1)*2H)."""
    H = pf["w_hh"].shape[0]
    E = pf["w_ih"].shape[0]
    wi_f, wi_b = _split_gates(pf["w_ih"]), _split_gates(pb["w_ih"])   # 3 x (E,H)
    wh_f, wh_b = _split_gates(pf["w_hh"]), _split_gates(pb["w_hh"])   # 3 x (H,H)
    bi_f, bh_f = _split_bias(pf["b_ih"]), _split_bias(pf["b_hh"])
    bi_b, bh_b = _split_bias(pb["b_ih"]), _split_bias(pb["b_hh"])

    w0i = jnp.zeros((2 * E, 3 * H2), jnp.float32)
    w0h = jnp.zeros((H2, 3 * H2), jnp.float32)
    b0i = jnp.zeros((1, 3 * H2), jnp.float32)
    for g in range(3):
        c = g * H2
        # input rows: [x(t) | x(T-1-t)]
        w0i = w0i.at[0:E, c:c + H].set(wi_f[g])
        w0i = w0i.at[E:2 * E, c + H:c + H2].set(wi_b[g])
        # block-diagonal recurrent weights on packed [h_fwd | h_bwd]
        w0h = w0h.at[0:H, c:c + H].set(wh_f[g])
        w0h = w0h.at[H:H2, c + H:c + H2].set(wh_b[g])
        # fold b_ih + b_hh for r,z ; only b_ih for n (b_hn multiplied by r later)
        bf = bi_f[g] + bh_f[g] if g < 2 else bi_f[g]
        bb = bi_b[g] + bh_b[g] if g < 2 else bi_b[g]
        b0i = b0i.at[0, c:c + H].set(bf)
        b0i = b0i.at[0, c + H:c + H2].set(bb)
    b0hn = jnp.concatenate([bh_f[2], bh_b[2]])[None, :]               # (1, 2H)
    return w0i, b0i, w0h, b0hn


def prep_bidir_layer1(pf, pb):
    """Encoder layer 1 (input = 2H bidirectional layer-0 output).

    Layer-0 outputs are stored as y[i]  = [out_fwd(i)     | out_bwd(T-1-i)]
                                  yr[i] = y[T-1-i] = [out_fwd(T-1-i) | out_bwd(i)]
    and the hoisted projection is   gi[i] = y[i] @ A + yr[i] @ Bm + b, giving
    fwd-direction gi at time i in the fwd lanes, bwd-direction gi (time T-1-i)
    in the bwd lanes of each fused gate slot."""
    H = pf["w_hh"].shape[0]
    wi_f, wi_b = _split_gates(pf["w_ih"]), _split_gates(pb["w_ih"])   # 3 x (2H,H)
    wh_f, wh_b = _split_gates(pf["w_hh"]), _split_gates(pb["w_hh"])   # 3 x (H,H)
    bi_f, bh_f = _split_bias(pf["b_ih"]), _split_bias(pf["b_hh"])
    bi_b, bh_b = _split_bias(pb["b_ih"]), _split_bias(pb["b_hh"])

    A = jnp.zeros((H2, 3 * H2), jnp.float32)
    Bm = jnp.zeros((H2, 3 * H2), jnp.float32)
    w1h = jnp.zeros((H2, 3 * H2), jnp.float32)
    b1i = jnp.zeros((1, 3 * H2), jnp.float32)
    for g in range(3):
        c = g * H2
        A = A.at[0:H, c:c + H].set(wi_f[g][0:H, :])           # y fwd-half -> fwd gi
        A = A.at[H:H2, c + H:c + H2].set(wi_b[g][H:H2, :])    # y bwd-half -> bwd gi
        Bm = Bm.at[H:H2, c:c + H].set(wi_f[g][H:H2, :])       # yr bwd-half -> fwd gi
        Bm = Bm.at[0:H, c + H:c + H2].set(wi_b[g][0:H, :])    # yr fwd-half -> bwd gi
        w1h = w1h.at[0:H, c:c + H].set(wh_f[g])
        w1h = w1h.at[H:H2, c + H:c + H2].set(wh_b[g])
        bf = bi_f[g] + bh_f[g] if g < 2 else bi_f[g]
        bb = bi_b[g] + bh_b[g] if g < 2 else bi_b[g]
        b1i = b1i.at[0, c:c + H].set(bf)
        b1i = b1i.at[0, c + H:c + H2].set(bb)
    b1hn = jnp.concatenate([bh_f[2], bh_b[2]])[None, :]
    return A, Bm, b1i, w1h, b1hn


def prep_ctx_layer(p):
    """Unidirectional context-encoder layer with the hidden state padded to 128
    lanes (real hidden in lanes 0:H, padding lanes provably stay 0).  Gates are
    fused on the lane axis at 128-lane slots so every per-step slice is tile
    aligned."""
    H = p["w_hh"].shape[0]
    wi = _split_gates(p["w_ih"])                                       # 3 x (H,H)
    wh = _split_gates(p["w_hh"])
    bi, bh = _split_bias(p["b_ih"]), _split_bias(p["b_hh"])
    Wi = jnp.zeros((H2, 3 * H2), jnp.float32)
    Wh = jnp.zeros((H2, 3 * H2), jnp.float32)
    bI = jnp.zeros((1, 3 * H2), jnp.float32)
    for g in range(3):
        c = g * H2
        Wi = Wi.at[0:H, c:c + H].set(wi[g])
        Wh = Wh.at[0:H, c:c + H].set(wh[g])
        bf = bi[g] + bh[g] if g < 2 else bi[g]
        bI = bI.at[0, c:c + H].set(bf)
    bhn = jnp.zeros((1, H2), jnp.float32).at[0, 0:H].set(bh[2])
    return Wi, bI, Wh, bhn


def prepare_kernel_params(params):
    """One-time weight packing (hoisted out of the forward pass)."""
    clf = params["clf"]
    cw1p = jnp.zeros((H2, HIDDEN), jnp.float32).at[0:HIDDEN].set(clf["w1"])
    return {
        "embedding": params["embedding"],
        "enc0": prep_bidir_layer0(params["enc_l0_fwd"], params["enc_l0_bwd"]),
        "enc1": prep_bidir_layer1(params["enc_l1_fwd"], params["enc_l1_bwd"]),
        "ctx0": prep_ctx_layer(params["ctx_l0"]),
        "ctx1": prep_ctx_layer(params["ctx_l1"]),
        "clf": {"w1": cw1p, "b1": clf["b1"], "w2": clf["w2"], "b2": clf["b2"],
                "w3": clf["w3"], "b3": clf["b3"]},
    }


# ------------------- kernel 1: fused bidirectional encoder ------------------
def encoder_forward(x3d, ulen, enc0, enc1, tn):
    """x3d:  (T, NP, 2E)  time-major, x3d[t, n] = [emb(t,n) | emb(T-1-t,n)]
       ulen: (NP, 1) int32 valid lengths (0 for padded rows)
       tn:   batch tile (multiple of 8, divides NP)
       returns the packed (NP, 2H) final last-layer hidden [h_fwd | h_bwd]."""
    T, NP, E2 = x3d.shape
    G3 = 3 * H2
    H = HIDDEN
    w0i, b0i, w0h, b0hn = enc0
    a1, bm1, b1i, w1h, b1hn = enc1

    def kernel(x_ref, len_ref, w0i_ref, b0i_ref, w0h_ref, b0hn_ref,
               a1_ref, bm1_ref, b1i_ref, w1h_ref, b1hn_ref,
               out_ref, gi_scr, y_scr, yr_scr):
        f32 = jnp.float32
        lens = len_ref[...]                                        # (tn, 1) int32
        lane = jax.lax.broadcasted_iota(jnp.int32, (tn, H2), 1)
        fwd_lane = lane < H                                        # fwd lanes < H

        # ---- layer 0: hoisted input projection (single fused matmul) ----
        x2 = x_ref[...].reshape(T * tn, E2)                        # tile-preserving
        gi_scr[...] = jnp.dot(x2, w0i_ref[...],
                              preferred_element_type=f32) + b0i_ref[...]

        def gru_step(i, h, wh_ref, bhn_ref, store):
            # ONE fused matmul per step; slices are 128-lane aligned.
            gh = jnp.dot(h, wh_ref[...], preferred_element_type=f32)   # (tn, 3*2H)
            gi_t = gi_scr[pl.ds(i * tn, tn), :]                        # (tn, 3*2H)
            rz = _sig(gi_t[:, 0:2 * H2] + gh[:, 0:2 * H2])             # r|z together
            r = rz[:, 0:H2]
            z = rz[:, H2:2 * H2]
            n = jnp.tanh(gi_t[:, 2 * H2:G3] + r * (gh[:, 2 * H2:G3] + bhn_ref[...]))
            h_new = (1.0 - z) * n + z * h
            # fwd lanes process time i, bwd lanes process time T-1-i
            mask = lens > jnp.where(fwd_lane, i, T - 1 - i)
            if store:
                o = jnp.where(mask, h_new, 0.0)     # packed-seq: zeros past length
                y_scr[pl.ds(i * tn, tn), :] = o
                yr_scr[pl.ds((T - 1 - i) * tn, tn), :] = o
            return jnp.where(mask, h_new, h)        # freeze hidden past length

        h = jnp.zeros((tn, H2), f32)
        for i in range(T):                           # layer 0 (fwd+bwd on lanes)
            h = gru_step(i, h, w0h_ref, b0hn_ref, True)

        # ---- layer 1: hoisted input projection from layer-0 outputs ----
        gi_scr[...] = (jnp.dot(y_scr[...], a1_ref[...], preferred_element_type=f32)
                       + jnp.dot(yr_scr[...], bm1_ref[...], preferred_element_type=f32)
                       + b1i_ref[...])

        h = jnp.zeros((tn, H2), f32)
        for i in range(T):                           # layer 1
            h = gru_step(i, h, w1h_ref, b1hn_ref, False)

        # lane-dense (128-wide) output; fwd+bwd sum happens in the wrapper
        out_ref[...] = h

    weight_args = (w0i, b0i, w0h, b0hn, a1, bm1, b1i, w1h, b1hn)
    in_specs = ([pl.BlockSpec((T, tn, E2), lambda b: (0, b, 0)),
                 pl.BlockSpec((tn, 1), lambda b: (b, 0))]
                + [pl.BlockSpec(w.shape, lambda b: (0, 0)) for w in weight_args])

    return pl.pallas_call(
        kernel,
        out_shape=jax.ShapeDtypeStruct((NP, H2), jnp.float32),
        grid=(NP // tn,),
        in_specs=in_specs,
        out_specs=pl.BlockSpec((tn, H2), lambda b: (b, 0)),
        scratch_shapes=[pltpu.VMEM((T * tn, G3), jnp.float32),
                        pltpu.VMEM((T * tn, H2), jnp.float32),
                        pltpu.VMEM((T * tn, H2), jnp.float32)],
        compiler_params=pltpu.CompilerParams(
            dimension_semantics=("parallel",),
            vmem_limit_bytes=32 * 1024 * 1024),
    )(x3d, ulen, *weight_args)


# ------------- kernel 2: fused context encoder + classifier MLP -------------
def context_classifier_forward(ctx3d, dlen, ctx0, ctx1, clf, tb):
    """ctx3d: (Td, BP, 128) time-major context-encoder input, lane-padded
              (real utterance vectors in lanes 0:H, zeros elsewhere)
       dlen:  (BP, 1) int32 dialog lengths (0 for padded dialogs)
       returns logits (BP, 1)."""
    Td, BP, HP = ctx3d.shape
    G3 = 3 * HP
    w0i, b0i, w0h, b0hn = ctx0
    w1i, b1i, w1h, b1hn = ctx1

    def kernel(u_ref, len_ref, w0i_ref, b0i_ref, w0h_ref, b0hn_ref,
               w1i_ref, b1i_ref, w1h_ref, b1hn_ref,
               cw1_ref, cb1_ref, cw2_ref, cb2_ref, cw3_ref, cb3_ref,
               out_ref, gi_scr, y_scr):
        f32 = jnp.float32
        lens = len_ref[...]                                        # (tb, 1) int32

        # layer 0: hoisted input projection over all timesteps (single matmul)
        u2 = u_ref[...].reshape(Td * tb, HP)
        gi_scr[...] = jnp.dot(u2, w0i_ref[...],
                              preferred_element_type=f32) + b0i_ref[...]

        def gru_step(i, h, wh_ref, bhn_ref, store):
            gh = jnp.dot(h, wh_ref[...], preferred_element_type=f32)   # (tb, 384)
            gi_t = gi_scr[pl.ds(i * tb, tb), :]
            rz = _sig(gi_t[:, 0:2 * HP] + gh[:, 0:2 * HP])
            r = rz[:, 0:HP]
            z = rz[:, HP:2 * HP]
            n = jnp.tanh(gi_t[:, 2 * HP:G3] + r * (gh[:, 2 * HP:G3] + bhn_ref[...]))
            h_new = (1.0 - z) * n + z * h
            mask = lens > i
            if store:
                y_scr[pl.ds(i * tb, tb), :] = jnp.where(mask, h_new, 0.0)
            return jnp.where(mask, h_new, h)

        h = jnp.zeros((tb, HP), f32)
        for i in range(Td):                          # context layer 0
            h = gru_step(i, h, w0h_ref, b0hn_ref, True)

        # hoisted layer-1 input projection
        gi_scr[...] = jnp.dot(y_scr[...], w1i_ref[...],
                              preferred_element_type=f32) + b1i_ref[...]

        h = jnp.zeros((tb, HP), f32)
        for i in range(Td):                          # context layer 1
            h = gru_step(i, h, w1h_ref, b1hn_ref, False)

        # classifier on final hidden (== outputs[length-1] since h is frozen).
        # cw1 is row-padded to 128 so no 64-lane slice of h is needed.
        def leaky(v):
            return jnp.where(v > 0, v, 0.01 * v)
        a1 = leaky(jnp.dot(h, cw1_ref[...], preferred_element_type=f32) + cb1_ref[...])
        a2 = leaky(jnp.dot(a1, cw2_ref[...], preferred_element_type=f32) + cb2_ref[...])
        # raw logits (reference Predictor applies no final sigmoid)
        out_ref[...] = jnp.dot(a2, cw3_ref[...], preferred_element_type=f32) + cb3_ref[...]

    weight_args = (w0i, b0i, w0h, b0hn, w1i, b1i, w1h, b1hn,
                   clf["w1"], clf["b1"], clf["w2"], clf["b2"], clf["w3"], clf["b3"])
    in_specs = ([pl.BlockSpec((Td, tb, HP), lambda b: (0, b, 0)),
                 pl.BlockSpec((tb, 1), lambda b: (b, 0))]
                + [pl.BlockSpec(w.shape, lambda b: (0, 0)) for w in weight_args])

    return pl.pallas_call(
        kernel,
        out_shape=jax.ShapeDtypeStruct((BP, 1), jnp.float32),
        grid=(BP // tb,),
        in_specs=in_specs,
        out_specs=pl.BlockSpec((tb, 1), lambda b: (b, 0)),
        scratch_shapes=[pltpu.VMEM((Td * tb, G3), jnp.float32),
                        pltpu.VMEM((Td * tb, HP), jnp.float32)],
        compiler_params=pltpu.CompilerParams(
            dimension_semantics=("parallel",),
            vmem_limit_bytes=32 * 1024 * 1024),
    )(ctx3d, dlen, *weight_args)


# ----------------------------- parameter init -------------------------------
def init_gru(key, input_size, hidden_size):
    s = 1.0 / math.sqrt(hidden_size)
    k1, k2, k3, k4 = jax.random.split(key, 4)
    return {
        "w_ih": jax.random.uniform(k1, (input_size, 3 * hidden_size), minval=-s, maxval=s),
        "w_hh": jax.random.uniform(k2, (hidden_size, 3 * hidden_size), minval=-s, maxval=s),
        "b_ih": jax.random.uniform(k3, (1, 3 * hidden_size), minval=-s, maxval=s),
        "b_hh": jax.random.uniform(k4, (1, 3 * hidden_size), minval=-s, maxval=s),
    }


def init_params(key):
    keys = jax.random.split(key, 12)
    s = 1.0 / math.sqrt(HIDDEN)
    return {
        "embedding": jax.random.normal(keys[0], (VOCAB, EMBED)) * 0.1,
        "enc_l0_fwd": init_gru(keys[1], EMBED, HIDDEN),
        "enc_l0_bwd": init_gru(keys[2], EMBED, HIDDEN),
        "enc_l1_fwd": init_gru(keys[3], 2 * HIDDEN, HIDDEN),
        "enc_l1_bwd": init_gru(keys[4], 2 * HIDDEN, HIDDEN),
        "ctx_l0": init_gru(keys[5], HIDDEN, HIDDEN),
        "ctx_l1": init_gru(keys[6], HIDDEN, HIDDEN),
        "clf": {
            "w1": jax.random.uniform(keys[7], (HIDDEN, HIDDEN), minval=-s, maxval=s),
            "b1": jnp.zeros((1, HIDDEN), jnp.float32),
            "w2": jax.random.uniform(keys[8], (HIDDEN, HIDDEN // 2), minval=-s, maxval=s),
            "b2": jnp.zeros((1, HIDDEN // 2), jnp.float32),
            "w3": jax.random.uniform(keys[9], (HIDDEN // 2, 1), minval=-s, maxval=s),
            "b3": jnp.zeros((1, 1), jnp.float32),
        },
    }


# ----------------------------- Predictor forward ----------------------------
def predictor_forward(kp, input_batch, dialog_lengths, dialog_lengths_list,
                      utt_lengths, batch_indices, dialog_indices, batch_size,
                      max_length):
    """kp = prepare_kernel_params(params) (packed once at model-load time)."""
    H = HIDDEN
    T0, N = input_batch.shape
    T = _round_up(T0, TIME_BUCKET)                  # bucketed -> no recompiles

    # --- utterance encoder input (XLA glue: embedding gather + time packing) ---
    emb = kp["embedding"][input_batch]                               # (T0, N, E)
    emb = jnp.pad(emb, ((0, T - T0), (0, 0), (0, 0)))
    xcat = jnp.concatenate([emb, emb[::-1]], axis=-1)                # [x(t)|x(T-1-t)]

    per_row = T * 4 * (3 * H2 + 2 * H2) + 2 * T * (2 * EMBED) * 4    # scratch + dbl-buf x
    tn, NP = _pick_batch_tile(N, per_row)
    xcat = jnp.pad(xcat, ((0, 0), (0, NP - N), (0, 0)))              # (T, NP, 2E)
    ulen = jnp.pad(utt_lengths.astype(jnp.int32), (0, NP - N)).reshape(NP, 1)

    h_packed = encoder_forward(xcat, ulen, kp["enc0"], kp["enc1"], tn)   # (NP, 2H)
    # utt_encoder_hidden[-2] + utt_encoder_hidden[-1] (last-layer fwd + bwd)
    utt_summed = h_packed[:N, 0:H] + h_packed[:N, H:2 * H]               # (N, H)

    # --- regroup per dialog (makeContextEncoderInput: XLA scatter glue) ---
    B = batch_size
    Td0 = max(dialog_lengths_list)
    Td = _round_up(Td0, TIME_BUCKET)
    ctx = jnp.zeros((Td, B, H), jnp.float32)
    ctx = ctx.at[dialog_indices, batch_indices].set(utt_summed)          # (Td, B, H)

    per_row_c = Td * 4 * (3 * H2 + H2) + 2 * Td * H2 * 4
    tb, BP = _pick_batch_tile(B, per_row_c)
    # pad batch and pad lanes H -> 128 so the context state is lane-dense
    ctx = jnp.pad(ctx, ((0, 0), (0, BP - B), (0, H2 - H)))               # (Td, BP, 128)
    dlen = jnp.pad(dialog_lengths.astype(jnp.int32), (0, BP - B)).reshape(BP, 1)

    # --- context encoder + classifier (single Pallas call) ---
    logits = context_classifier_forward(ctx, dlen, kp["ctx0"], kp["ctx1"],
                                        kp["clf"], tb)
    return logits[:B, 0]                                                 # (B,)


# --------------------------------- main --------------------------------------
if __name__ == "__main__":
    key = jax.random.PRNGKey(0)
    params = init_params(key)
    kp = prepare_kernel_params(params)       # hoisted: packed once, reused per call

    # small example: 2 dialogs with 3 and 2 utterances, 8 tokens max per utterance
    batch_size = 2
    max_length = 8
    dialog_lengths_list = (3, 2)              # tuple -> hashable static arg
    num_utts = sum(dialog_lengths_list)

    input_batch = jax.random.randint(jax.random.PRNGKey(1),
                                     (max_length, num_utts), 0, VOCAB)    # (T, N)
    utt_lengths = jnp.array([8, 6, 5, 7, 4], jnp.int32)                   # (N,)
    dialog_lengths = jnp.array(dialog_lengths_list, jnp.int32)            # (B,)
    batch_indices = jnp.array([0, 0, 0, 1, 1], jnp.int32)                 # which dialog
    dialog_indices = jnp.array([0, 1, 2, 0, 1], jnp.int32)                # position in dialog

    fwd = jax.jit(predictor_forward,
                  static_argnames=("dialog_lengths_list", "batch_size", "max_length"))
    logits = fwd(kp, input_batch, dialog_lengths,
                 dialog_lengths_list=dialog_lengths_list,
                 utt_lengths=utt_lengths,
                 batch_indices=batch_indices,
                 dialog_indices=dialog_indices,
                 batch_size=batch_size,
                 max_length=max_length)
    jax.block_until_ready(logits)
    assert logits.shape == (batch_size,)
    print("KERNEL_OK")
</pallas_src>

<mosaic_0001>
module attributes {stable_mosaic.version = 11 : i64} {
  func.func @kernel(%arg0: i32, %arg1: memref<8x8x128xf32, #tpu.memory_space<vmem>>, %arg2: memref<8x1xi32, #tpu.memory_space<vmem>>, %arg3: memref<128x384xf32, #tpu.memory_space<vmem>>, %arg4: memref<1x384xf32, #tpu.memory_space<vmem>>, %arg5: memref<128x384xf32, #tpu.memory_space<vmem>>, %arg6: memref<1x128xf32, #tpu.memory_space<vmem>>, %arg7: memref<128x384xf32, #tpu.memory_space<vmem>>, %arg8: memref<128x384xf32, #tpu.memory_space<vmem>>, %arg9: memref<1x384xf32, #tpu.memory_space<vmem>>, %arg10: memref<128x384xf32, #tpu.memory_space<vmem>>, %arg11: memref<1x128xf32, #tpu.memory_space<vmem>>, %arg12: memref<8x128xf32, #tpu.memory_space<vmem>>, %arg13: memref<64x384xf32, #tpu.memory_space<vmem>>, %arg14: memref<64x128xf32, #tpu.memory_space<vmem>>, %arg15: memref<64x128xf32, #tpu.memory_space<vmem>>) attributes {dimension_semantics = [#tpu.dimension_semantics<parallel>], iteration_bounds = array<i64: 1>, scalar_prefetch = 0 : i64, scratch_operands = 3 : i64, tpu.core_type = #tpu.core_type<tc>, window_params = [{transform_indices = @transform_0, window_bounds = array<i64: 8, 8, 128>}, {transform_indices = @transform_1, window_bounds = array<i64: 8, 1>}, {pipeline_mode = #tpu.pipeline_mode<synchronous>, transform_indices = @transform_2, window_bounds = array<i64: 128, 384>}, {pipeline_mode = #tpu.pipeline_mode<synchronous>, transform_indices = @transform_3, window_bounds = array<i64: 1, 384>}, {pipeline_mode = #tpu.pipeline_mode<synchronous>, transform_indices = @transform_4, window_bounds = array<i64: 128, 384>}, {pipeline_mode = #tpu.pipeline_mode<synchronous>, transform_indices = @transform_5, window_bounds = array<i64: 1, 128>}, {pipeline_mode = #tpu.pipeline_mode<synchronous>, transform_indices = @transform_6, window_bounds = array<i64: 128, 384>}, {pipeline_mode = #tpu.pipeline_mode<synchronous>, transform_indices = @transform_7, window_bounds = array<i64: 128, 384>}, {pipeline_mode = #tpu.pipeline_mode<synchronous>, transform_indices = @transform_8, window_bounds = array<i64: 1, 384>}, {pipeline_mode = #tpu.pipeline_mode<synchronous>, transform_indices = @transform_9, window_bounds = array<i64: 128, 384>}, {pipeline_mode = #tpu.pipeline_mode<synchronous>, transform_indices = @transform_10, window_bounds = array<i64: 1, 128>}, {transform_indices = @transform_11, window_bounds = array<i64: 8, 128>}]} {
    %c0 = arith.constant 0 : index
    %c0_0 = arith.constant 0 : index
    %0 = vector.load %arg2[%c0, %c0_0] : memref<8x1xi32, #tpu.memory_space<vmem>>, vector<8x1xi32>
    %1 = tpu.iota {dimensions = array<i32: 1>} : vector<8x128xi32>
    %c64_i32 = arith.constant 64 : i32
    %2 = vector.broadcast %c64_i32 : i32 to vector<8x128xi32>
    %3 = arith.cmpi slt, %1, %2 : vector<8x128xi32>
    %c0_1 = arith.constant 0 : index
    %c0_2 = arith.constant 0 : index
    %c0_3 = arith.constant 0 : index
    %4 = vector.load %arg1[%c0_1, %c0_2, %c0_3] : memref<8x8x128xf32, #tpu.memory_space<vmem>>, vector<8x8x128xf32>
    %5 = vector.shape_cast %4 : vector<8x8x128xf32> to vector<64x128xf32>
    %c0_4 = arith.constant 0 : index
    %c0_5 = arith.constant 0 : index
    %6 = vector.load %arg3[%c0_4, %c0_5] : memref<128x384xf32, #tpu.memory_space<vmem>>, vector<128x384xf32>
    %cst = arith.constant dense<0.000000e+00> : vector<64x384xf32>
    %7 = tpu.matmul %5, %6, %cst {dimension_numbers = #tpu.dot_dimension_numbers<[1], [0], [0], [1], [0, 0, 1, 1], [], []>} : vector<64x128xf32>, vector<128x384xf32>, vector<64x384xf32> -> vector<64x384xf32>
    %c0_6 = arith.constant 0 : index
    %c0_7 = arith.constant 0 : index
    %8 = vector.load %arg4[%c0_6, %c0_7] : memref<1x384xf32, #tpu.memory_space<vmem>>, vector<1x384xf32>
    %9 = vector.broadcast %8 : vector<1x384xf32> to vector<64x384xf32>
    %10 = arith.addf %7, %9 : vector<64x384xf32>
    %c0_8 = arith.constant 0 : index
    %c0_9 = arith.constant 0 : index
    %11 = vector.load %arg13[%c0_8, %c0_9] : memref<64x384xf32, #tpu.memory_space<vmem>>, vector<64x384xf32>
    tpu.vector_store %arg13[%c0_8, %c0_9], %10 {strides = array<i32>} : memref<64x384xf32, #tpu.memory_space<vmem>>, vector<64x384xf32>,
    %cst_10 = arith.constant 0.000000e+00 : f32
    %12 = vector.broadcast %cst_10 : f32 to vector<8x128xf32>
    %c0_11 = arith.constant 0 : index
    %c0_12 = arith.constant 0 : index
    %13 = vector.load %arg5[%c0_11, %c0_12] : memref<128x384xf32, #tpu.memory_space<vmem>>, vector<128x384xf32>
    %cst_13 = arith.constant dense<0.000000e+00> : vector<8x384xf32>
    %14 = tpu.matmul %12, %13, %cst_13 {dimension_numbers = #tpu.dot_dimension_numbers<[1], [0], [0], [1], [0, 0, 1, 1], [], []>} : vector<8x128xf32>, vector<128x384xf32>, vector<8x384xf32> -> vector<8x384xf32>
    %c0_14 = arith.constant 0 : index
    %c0_15 = arith.constant 0 : index
    %15 = vector.load %arg13[%c0_14, %c0_15] : memref<64x384xf32, #tpu.memory_space<vmem>>, vector<8x384xf32>
    %16 = vector.extract_strided_slice %15 {offsets = [0, 0], sizes = [8, 256], strides = [1, 1]} : vector<8x384xf32> to vector<8x256xf32>
    %17 = vector.extract_strided_slice %14 {offsets = [0, 0], sizes = [8, 256], strides = [1, 1]} : vector<8x384xf32> to vector<8x256xf32>
    %18 = arith.addf %16, %17 : vector<8x256xf32>
    %cst_16 = arith.constant 5.000000e-01 : f32
    %19 = vector.broadcast %cst_16 : f32 to vector<8x256xf32>
    %20 = arith.mulf %19, %18 : vector<8x256xf32>
    %21 = math.tanh %20 : vector<8x256xf32>
    %cst_17 = arith.constant 1.000000e+00 : f32
    %22 = vector.broadcast %cst_17 : f32 to vector<8x256xf32>
    %23 = arith.addf %21, %22 : vector<8x256xf32>
    %cst_18 = arith.constant 5.000000e-01 : f32
    %24 = vector.broadcast %cst_18 : f32 to vector<8x256xf32>
    %25 = arith.mulf %24, %23 : vector<8x256xf32>
    %26 = vector.extract_strided_slice %25 {offsets = [0, 0], sizes = [8, 128], strides = [1, 1]} : vector<8x256xf32> to vector<8x128xf32>
    %27 = vector.extract_strided_slice %25 {offsets = [0, 128], sizes = [8, 128], strides = [1, 1]} : vector<8x256xf32> to vector<8x128xf32>
    %28 = vector.extract_strided_slice %15 {offsets = [0, 256], sizes = [8, 128], strides = [1, 1]} : vector<8x384xf32> to vector<8x128xf32>
    %29 = vector.extract_strided_slice %14 {offsets = [0, 256], sizes = [8, 128], strides = [1, 1]} : vector<8x384xf32> to vector<8x128xf32>
    %c0_19 = arith.constant 0 : index
    %c0_20 = arith.constant 0 : index
    %30 = vector.load %arg6[%c0_19, %c0_20] : memref<1x128xf32, #tpu.memory_space<vmem>>, vector<1x128xf32>
    %31 = vector.broadcast %30 : vector<1x128xf32> to vector<8x128xf32>
    %32 = arith.addf %29, %31 : vector<8x128xf32>
    %33 = arith.mulf %26, %32 : vector<8x128xf32>
    %34 = arith.addf %28, %33 : vector<8x128xf32>
    %35 = math.tanh %34 : vector<8x128xf32>
    %cst_21 = arith.constant 1.000000e+00 : f32
    %36 = vector.broadcast %cst_21 : f32 to vector<8x128xf32>
    %37 = arith.subf %36, %27 : vector<8x128xf32>
    %38 = arith.mulf %37, %35 : vector<8x128xf32>
    %39 = arith.mulf %27, %12 : vector<8x128xf32>
    %40 = arith.addf %38, %39 : vector<8x128xf32>
    %c0_i32 = arith.constant 0 : i32
    %c7_i32 = arith.constant 7 : i32
    %41 = vector.broadcast %c0_i32 : i32 to vector<8x128xi32>
    %42 = vector.broadcast %c7_i32 : i32 to vector<8x128xi32>
    %43 = arith.select %3, %41, %42 : vector<8x128xi1>, vector<8x128xi32>
    %44 = vector.broadcast %0 : vector<8x1xi32> to vector<8x128xi32>
    %45 = arith.cmpi sgt, %44, %43 : vector<8x128xi32>
    %cst_22 = arith.constant 0.000000e+00 : f32
    %46 = vector.broadcast %cst_22 : f32 to vector<8x128xf32>
    %47 = arith.select %45, %40, %46 : vector<8x128xi1>, vector<8x128xf32>
    %c0_23 = arith.constant 0 : index
    %c0_24 = arith.constant 0 : index
    %48 = vector.load %arg14[%c0_23, %c0_24] : memref<64x128xf32, #tpu.memory_space<vmem>>, vector<8x128xf32>
    tpu.vector_store %arg14[%c0_23, %c0_24], %47 {strides = array<i32>} : memref<64x128xf32, #tpu.memory_space<vmem>>, vector<8x128xf32>,
    %c56 = arith.constant 56 : index
    %c0_25 = arith.constant 0 : index
    %49 = vector.load %arg15[%c56, %c0_25] : memref<64x128xf32, #tpu.memory_space<vmem>>, vector<8x128xf32>
    tpu.vector_store %arg15[%c56, %c0_25], %47 {strides = array<i32>} : memref<64x128xf32, #tpu.memory_space<vmem>>, vector<8x128xf32>,
    %50 = arith.select %45, %40, %12 : vector<8x128xi1>, vector<8x128xf32>
    %c0_26 = arith.constant 0 : index
    %c0_27 = arith.constant 0 : index
    %51 = vector.load %arg5[%c0_26, %c0_27] : memref<128x384xf32, #tpu.memory_space<vmem>>, vector<128x384xf32>
    %cst_28 = arith.constant dense<0.000000e+00> : vector<8x384xf32>
    %52 = tpu.matmul %50, %51, %cst_28 {dimension_numbers = #tpu.dot_dimension_numbers<[1], [0], [0], [1], [0, 0, 1, 1], [], []>} : vector<8x128xf32>, vector<128x384xf32>, vector<8x384xf32> -> vector<8x384xf32>
    %c8 = arith.constant 8 : index
    %c0_29 = arith.constant 0 : index
    %53 = vector.load %arg13[%c8, %c0_29] : memref<64x384xf32, #tpu.memory_space<vmem>>, vector<8x384xf32>
    %54 = vector.extract_strided_slice %53 {offsets = [0, 0], sizes = [8, 256], strides = [1, 1]} : vector<8x384xf32> to vector<8x256xf32>
    %55 = vector.extract_strided_slice %52 {offsets = [0, 0], sizes = [8, 256], strides = [1, 1]} : vector<8x384xf32> to vector<8x256xf32>
    %56 = arith.addf %54, %55 : vector<8x256xf32>
    %cst_30 = arith.constant 5.000000e-01 : f32
    %57 = vector.broadcast %cst_30 : f32 to vector<8x256xf32>
    %58 = arith.mulf %57, %56 : vector<8x256xf32>
    %59 = math.tanh %58 : vector<8x256xf32>
    %cst_31 = arith.constant 1.000000e+00 : f32
    %60 = vector.broadcast %cst_31 : f32 to vector<8x256xf32>
    %61 = arith.addf %59, %60 : vector<8x256xf32>
    %cst_32 = arith.constant 5.000000e-01 : f32
    %62 = vector.broadcast %cst_32 : f32 to vector<8x256xf32>
    %63 = arith.mulf %62, %61 : vector<8x256xf32>
    %64 = vector.extract_strided_slice %63 {offsets = [0, 0], sizes = [8, 128], strides = [1, 1]} : vector<8x256xf32> to vector<8x128xf32>
    %65 = vector.extract_strided_slice %63 {offsets = [0, 128], sizes = [8, 128], strides = [1, 1]} : vector<8x256xf32> to vector<8x128xf32>
    %66 = vector.extract_strided_slice %53 {offsets = [0, 256], sizes = [8, 128], strides = [1, 1]} : vector<8x384xf32> to vector<8x128xf32>
    %67 = vector.extract_strided_slice %52 {offsets = [0, 256], sizes = [8, 128], strides = [1, 1]} : vector<8x384xf32> to vector<8x128xf32>
    %c0_33 = arith.constant 0 : index
    %c0_34 = arith.constant 0 : index
    %68 = vector.load %arg6[%c0_33, %c0_34] : memref<1x128xf32, #tpu.memory_space<vmem>>, vector<1x128xf32>
    %69 = vector.broadcast %68 : vector<1x128xf32> to vector<8x128xf32>
    %70 = arith.addf %67, %69 : vector<8x128xf32>
    %71 = arith.mulf %64, %70 : vector<8x128xf32>
    %72 = arith.addf %66, %71 : vector<8x128xf32>
    %73 = math.tanh %72 : vector<8x128xf32>
    %cst_35 = arith.constant 1.000000e+00 : f32
    %74 = vector.broadcast %cst_35 : f32 to vector<8x128xf32>
    %75 = arith.subf %74, %65 : vector<8x128xf32>
    %76 = arith.mulf %75, %73 : vector<8x128xf32>
    %77 = arith.mulf %65, %50 : vector<8x128xf32>
    %78 = arith.addf %76, %77 : vector<8x128xf32>
    %c1_i32 = arith.constant 1 : i32
    %c6_i32 = arith.constant 6 : i32
    %79 = vector.broadcast %c1_i32 : i32 to vector<8x128xi32>
    %80 = vector.broadcast %c6_i32 : i32 to vector<8x128xi32>
    %81 = arith.select %3, %79, %80 : vector<8x128xi1>, vector<8x128xi32>
    %82 = vector.broadcast %0 : vector<8x1xi32> to vector<8x128xi32>
    %83 = arith.cmpi sgt, %82, %81 : vector<8x128xi32>
    %cst_36 = arith.constant 0.000000e+00 : f32
    %84 = vector.broadcast %cst_36 : f32 to vector<8x128xf32>
    %85 = arith.select %83, %78, %84 : vector<8x128xi1>, vector<8x128xf32>
    %c8_37 = arith.constant 8 : index
    %c0_38 = arith.constant 0 : index
    %86 = vector.load %arg14[%c8_37, %c0_38] : memref<64x128xf32, #tpu.memory_space<vmem>>, vector<8x128xf32>
    tpu.vector_store %arg14[%c8_37, %c0_38], %85 {strides = array<i32>} : memref<64x128xf32, #tpu.memory_space<vmem>>, vector<8x128xf32>,
    %c48 = arith.constant 48 : index
    %c0_39 = arith.constant 0 : index
    %87 = vector.load %arg15[%c48, %c0_39] : memref<64x128xf32, #tpu.memory_space<vmem>>, vector<8x128xf32>
    tpu.vector_store %arg15[%c48, %c0_39], %85 {strides = array<i32>} : memref<64x128xf32, #tpu.memory_space<vmem>>, vector<8x128xf32>,
    %88 = arith.select %83, %78, %50 : vector<8x128xi1>, vector<8x128xf32>
    %c0_40 = arith.constant 0 : index
    %c0_41 = arith.constant 0 : index
    %89 = vector.load %arg5[%c0_40, %c0_41] : memref<128x384xf32, #tpu.memory_space<vmem>>, vector<128x384xf32>
    %cst_42 = arith.constant dense<0.000000e+00> : vector<8x384xf32>
    %90 = tpu.matmul %88, %89, %cst_42 {dimension_numbers = #tpu.dot_dimension_numbers<[1], [0], [0], [1], [0, 0, 1, 1], [], []>} : vector<8x128xf32>, vector<128x384xf32>, vector<8x384xf32> -> vector<8x384xf32>
    %c16 = arith.constant 16 : index
    %c0_43 = arith.constant 0 : index
    %91 = vector.load %arg13[%c16, %c0_43] : memref<64x384xf32, #tpu.memory_space<vmem>>, vector<8x384xf32>
    %92 = vector.extract_strided_slice %91 {offsets = [0, 0], sizes = [8, 256], strides = [1, 1]} : vector<8x384xf32> to vector<8x256xf32>
    %93 = vector.extract_strided_slice %90 {offsets = [0, 0], sizes = [8, 256], strides = [1, 1]} : vector<8x384xf32> to vector<8x256xf32>
    %94 = arith.addf %92, %93 : vector<8x256xf32>
    %cst_44 = arith.constant 5.000000e-01 : f32
    %95 = vector.broadcast %cst_44 : f32 to vector<8x256xf32>
    %96 = arith.mulf %95, %94 : vector<8x256xf32>
    %97 = math.tanh %96 : vector<8x256xf32>
    %cst_45 = arith.constant 1.000000e+00 : f32
    %98 = vector.broadcast %cst_45 : f32 to vector<8x256xf32>
    %99 = arith.addf %97, %98 : vector<8x256xf32>
    %cst_46 = arith.constant 5.000000e-01 : f32
    %100 = vector.broadcast %cst_46 : f32 to vector<8x256xf32>
    %101 = arith.mulf %100, %99 : vector<8x256xf32>
    %102 = vector.extract_strided_slice %101 {offsets = [0, 0], sizes = [8, 128], strides = [1, 1]} : vector<8x256xf32> to vector<8x128xf32>
    %103 = vector.extract_strided_slice %101 {offsets = [0, 128], sizes = [8, 128], strides = [1, 1]} : vector<8x256xf32> to vector<8x128xf32>
    %104 = vector.extract_strided_slice %91 {offsets = [0, 256], sizes = [8, 128], strides = [1, 1]} : vector<8x384xf32> to vector<8x128xf32>
    %105 = vector.extract_strided_slice %90 {offsets = [0, 256], sizes = [8, 128], strides = [1, 1]} : vector<8x384xf32> to vector<8x128xf32>
    %c0_47 = arith.constant 0 : index
    %c0_48 = arith.constant 0 : index
    %106 = vector.load %arg6[%c0_47, %c0_48] : memref<1x128xf32, #tpu.memory_space<vmem>>, vector<1x128xf32>
    %107 = vector.broadcast %106 : vector<1x128xf32> to vector<8x128xf32>
    %108 = arith.addf %105, %107 : vector<8x128xf32>
    %109 = arith.mulf %102, %108 : vector<8x128xf32>
    %110 = arith.addf %104, %109 : vector<8x128xf32>
    %111 = math.tanh %110 : vector<8x128xf32>
    %cst_49 = arith.constant 1.000000e+00 : f32
    %112 = vector.broadcast %cst_49 : f32 to vector<8x128xf32>
    %113 = arith.subf %112, %103 : vector<8x128xf32>
    %114 = arith.mulf %113, %111 : vector<8x128xf32>
    %115 = arith.mulf %103, %88 : vector<8x128xf32>
    %116 = arith.addf %114, %115 : vector<8x128xf32>
    %c2_i32 = arith.constant 2 : i32
    %c5_i32 = arith.constant 5 : i32
    %117 = vector.broadcast %c2_i32 : i32 to vector<8x128xi32>
    %118 = vector.broadcast %c5_i32 : i32 to vector<8x128xi32>
    %119 = arith.select %3, %117, %118 : vector<8x128xi1>, vector<8x128xi32>
    %120 = vector.broadcast %0 : vector<8x1xi32> to vector<8x128xi32>
    %121 = arith.cmpi sgt, %120, %119 : vector<8x128xi32>
    %cst_50 = arith.constant 0.000000e+00 : f32
    %122 = vector.broadcast %cst_50 : f32 to vector<8x128xf32>
    %123 = arith.select %121, %116, %122 : vector<8x128xi1>, vector<8x128xf32>
    %c16_51 = arith.constant 16 : index
    %c0_52 = arith.constant 0 : index
    %124 = vector.load %arg14[%c16_51, %c0_52] : memref<64x128xf32, #tpu.memory_space<vmem>>, vector<8x128xf32>
    tpu.vector_store %arg14[%c16_51, %c0_52], %123 {strides = array<i32>} : memref<64x128xf32, #tpu.memory_space<vmem>>, vector<8x128xf32>,
    %c40 = arith.constant 40 : index
    %c0_53 = arith.constant 0 : index
    %125 = vector.load %arg15[%c40, %c0_53] : memref<64x128xf32, #tpu.memory_space<vmem>>, vector<8x128xf32>
    tpu.vector_store %arg15[%c40, %c0_53], %123 {strides = array<i32>} : memref<64x128xf32, #tpu.memory_space<vmem>>, vector<8x128xf32>,
    %126 = arith.select %121, %116, %88 : vector<8x128xi1>, vector<8x128xf32>
    %c0_54 = arith.constant 0 : index
    %c0_55 = arith.constant 0 : index
    %127 = vector.load %arg5[%c0_54, %c0_55] : memref<128x384xf32, #tpu.memory_space<vmem>>, vector<128x384xf32>
    %cst_56 = arith.constant dense<0.000000e+00> : vector<8x384xf32>
    %128 = tpu.matmul %126, %127, %cst_56 {dimension_numbers = #tpu.dot_dimension_numbers<[1], [0], [0], [1], [0, 0, 1, 1], [], []>} : vector<8x128xf32>, vector<128x384xf32>, vector<8x384xf32> -> vector<8x384xf32>
    %c24 = arith.constant 24 : index
    %c0_57 = arith.constant 0 : index
    %129 = vector.load %arg13[%c24, %c0_57] : memref<64x384xf32, #tpu.memory_space<vmem>>, vector<8x384xf32>
    %130 = vector.extract_strided_slice %129 {offsets = [0, 0], sizes = [8, 256], strides = [1, 1]} : vector<8x384xf32> to vector<8x256xf32>
    %131 = vector.extract_strided_slice %128 {offsets = [0, 0], sizes = [8, 256], strides = [1, 1]} : vector<8x384xf32> to vector<8x256xf32>
    %132 = arith.addf %130, %131 : vector<8x256xf32>
    %cst_58 = arith.constant 5.000000e-01 : f32
    %133 = vector.broadcast %cst_58 : f32 to vector<8x256xf32>
    %134 = arith.mulf %133, %132 : vector<8x256xf32>
    %135 = math.tanh %134 : vector<8x256xf32>
    %cst_59 = arith.constant 1.000000e+00 : f32
    %136 = vector.broadcast %cst_59 : f32 to vector<8x256xf32>
    %137 = arith.addf %135, %136 : vector<8x256xf32>
    %cst_60 = arith.constant 5.000000e-01 : f32
    %138 = vector.broadcast %cst_60 : f32 to vector<8x256xf32>
    %139 = arith.mulf %138, %137 : vector<8x256xf32>
    %140 = vector.extract_strided_slice %139 {offsets = [0, 0], sizes = [8, 128], strides = [1, 1]} : vector<8x256xf32> to vector<8x128xf32>
    %141 = vector.extract_strided_slice %139 {offsets = [0, 128], sizes = [8, 128], strides = [1, 1]} : vector<8x256xf32> to vector<8x128xf32>
    %142 = vector.extract_strided_slice %129 {offsets = [0, 256], sizes = [8, 128], strides = [1, 1]} : vector<8x384xf32> to vector<8x128xf32>
    %143 = vector.extract_strided_slice %128 {offsets = [0, 256], sizes = [8, 128], strides = [1, 1]} : vector<8x384xf32> to vector<8x128xf32>
    %c0_61 = arith.constant 0 : index
    %c0_62 = arith.constant 0 : index
    %144 = vector.load %arg6[%c0_61, %c0_62] : memref<1x128xf32, #tpu.memory_space<vmem>>, vector<1x128xf32>
    %145 = vector.broadcast %144 : vector<1x128xf32> to vector<8x128xf32>
    %146 = arith.addf %143, %145 : vector<8x128xf32>
    %147 = arith.mulf %140, %146 : vector<8x128xf32>
    %148 = arith.addf %142, %147 : vector<8x128xf32>
    %149 = math.tanh %148 : vector<8x128xf32>
    %cst_63 = arith.constant 1.000000e+00 : f32
    %150 = vector.broadcast %cst_63 : f32 to vector<8x128xf32>
    %151 = arith.subf %150, %141 : vector<8x128xf32>
    %152 = arith.mulf %151, %149 : vector<8x128xf32>
    %153 = arith.mulf %141, %126 : vector<8x128xf32>
    %154 = arith.addf %152, %153 : vector<8x128xf32>
    %c3_i32 = arith.constant 3 : i32
    %c4_i32 = arith.constant 4 : i32
    %155 = vector.broadcast %c3_i32 : i32 to vector<8x128xi32>
    %156 = vector.broadcast %c4_i32 : i32 to vector<8x128xi32>
    %157 = arith.select %3, %155, %156 : vector<8x128xi1>, vector<8x128xi32>
    %158 = vector.broadcast %0 : vector<8x1xi32> to vector<8x128xi32>
    %159 = arith.cmpi sgt, %158, %157 : vector<8x128xi32>
    %cst_64 = arith.constant 0.000000e+00 : f32
    %160 = vector.broadcast %cst_64 : f32 to vector<8x128xf32>
    %161 = arith.select %159, %154, %160 : vector<8x128xi1>, vector<8x128xf32>
    %c24_65 = arith.constant 24 : index
    %c0_66 = arith.constant 0 : index
    %162 = vector.load %arg14[%c24_65, %c0_66] : memref<64x128xf32, #tpu.memory_space<vmem>>, vector<8x128xf32>
    tpu.vector_store %arg14[%c24_65, %c0_66], %161 {strides = array<i32>} : memref<64x128xf32, #tpu.memory_space<vmem>>, vector<8x128xf32>,
    %c32 = arith.constant 32 : index
    %c0_67 = arith.constant 0 : index
    %163 = vector.load %arg15[%c32, %c0_67] : memref<64x128xf32, #tpu.memory_space<vmem>>, vector<8x128xf32>
    tpu.vector_store %arg15[%c32, %c0_67], %161 {strides = array<i32>} : memref<64x128xf32, #tpu.memory_space<vmem>>, vector<8x128xf32>,
    %164 = arith.select %159, %154, %126 : vector<8x128xi1>, vector<8x128xf32>
    %c0_68 = arith.constant 0 : index
    %c0_69 = arith.constant 0 : index
    %165 = vector.load %arg5[%c0_68, %c0_69] : memref<128x384xf32, #tpu.memory_space<vmem>>, vector<128x384xf32>
    %cst_70 = arith.constant dense<0.000000e+00> : vector<8x384xf32>
    %166 = tpu.matmul %164, %165, %cst_70 {dimension_numbers = #tpu.dot_dimension_numbers<[1], [0], [0], [1], [0, 0, 1, 1], [], []>} : vector<8x128xf32>, vector<128x384xf32>, vector<8x384xf32> -> vector<8x384xf32>
    %c32_71 = arith.constant 32 : index
    %c0_72 = arith.constant 0 : index
    %167 = vector.load %arg13[%c32_71, %c0_72] : memref<64x384xf32, #tpu.memory_space<vmem>>, vector<8x384xf32>
    %168 = vector.extract_strided_slice %167 {offsets = [0, 0], sizes = [8, 256], strides = [1, 1]} : vector<8x384xf32> to vector<8x256xf32>
    %169 = vector.extract_strided_slice %166 {offsets = [0, 0], sizes = [8, 256], strides = [1, 1]} : vector<8x384xf32> to vector<8x256xf32>
    %170 = arith.addf %168, %169 : vector<8x256xf32>
    %cst_73 = arith.constant 5.000000e-01 : f32
    %171 = vector.broadcast %cst_73 : f32 to vector<8x256xf32>
    %172 = arith.mulf %171, %170 : vector<8x256xf32>
    %173 = math.tanh %172 : vector<8x256xf32>
    %cst_74 = arith.constant 1.000000e+00 : f32
    %174 = vector.broadcast %cst_74 : f32 to vector<8x256xf32>
    %175 = arith.addf %173, %174 : vector<8x256xf32>
    %cst_75 = arith.constant 5.000000e-01 : f32
    %176 = vector.broadcast %cst_75 : f32 to vector<8x256xf32>
    %177 = arith.mulf %176, %175 : vector<8x256xf32>
    %178 = vector.extract_strided_slice %177 {offsets = [0, 0], sizes = [8, 128], strides = [1, 1]} : vector<8x256xf32> to vector<8x128xf32>
    %179 = vector.extract_strided_slice %177 {offsets = [0, 128], sizes = [8, 128], strides = [1, 1]} : vector<8x256xf32> to vector<8x128xf32>
    %180 = vector.extract_strided_slice %167 {offsets = [0, 256], sizes = [8, 128], strides = [1, 1]} : vector<8x384xf32> to vector<8x128xf32>
    %181 = vector.extract_strided_slice %166 {offsets = [0, 256], sizes = [8, 128], strides = [1, 1]} : vector<8x384xf32> to vector<8x128xf32>
    %c0_76 = arith.constant 0 : index
    %c0_77 = arith.constant 0 : index
    %182 = vector.load %arg6[%c0_76, %c0_77] : memref<1x128xf32, #tpu.memory_space<vmem>>, vector<1x128xf32>
    %183 = vector.broadcast %182 : vector<1x128xf32> to vector<8x128xf32>
    %184 = arith.addf %181, %183 : vector<8x128xf32>
    %185 = arith.mulf %178, %184 : vector<8x128xf32>
    %186 = arith.addf %180, %185 : vector<8x128xf32>
    %187 = math.tanh %186 : vector<8x128xf32>
    %cst_78 = arith.constant 1.000000e+00 : f32
    %188 = vector.broadcast %cst_78 : f32 to vector<8x128xf32>
    %189 = arith.subf %188, %179 : vector<8x128xf32>
    %190 = arith.mulf %189, %187 : vector<8x128xf32>
    %191 = arith.mulf %179, %164 : vector<8x128xf32>
    %192 = arith.addf %190, %191 : vector<8x128xf32>
    %c4_i32_79 = arith.constant 4 : i32
    %c3_i32_80 = arith.constant 3 : i32
    %193 = vector.broadcast %c4_i32_79 : i32 to vector<8x128xi32>
    %194 = vector.broadcast %c3_i32_80 : i32 to vector<8x128xi32>
    %195 = arith.select %3, %193, %194 : vector<8x128xi1>, vector<8x128xi32>
    %196 = vector.broadcast %0 : vector<8x1xi32> to vector<8x128xi32>
    %197 = arith.cmpi sgt, %196, %195 : vector<8x128xi32>
    %cst_81 = arith.constant 0.000000e+00 : f32
    %198 = vector.broadcast %cst_81 : f32 to vector<8x128xf32>
    %199 = arith.select %197, %192, %198 : vector<8x128xi1>, vector<8x128xf32>
    %c32_82 = arith.constant 32 : index
    %c0_83 = arith.constant 0 : index
    %200 = vector.load %arg14[%c32_82, %c0_83] : memref<64x128xf32, #tpu.memory_space<vmem>>, vector<8x128xf32>
    tpu.vector_store %arg14[%c32_82, %c0_83], %199 {strides = array<i32>} : memref<64x128xf32, #tpu.memory_space<vmem>>, vector<8x128xf32>,
    %c24_84 = arith.constant 24 : index
    %c0_85 = arith.constant 0 : index
    %201 = vector.load %arg15[%c24_84, %c0_85] : memref<64x128xf32, #tpu.memory_space<vmem>>, vector<8x128xf32>
    tpu.vector_store %arg15[%c24_84, %c0_85], %199 {strides = array<i32>} : memref<64x128xf32, #tpu.memory_space<vmem>>, vector<8x128xf32>,
    %202 = arith.select %197, %192, %164 : vector<8x128xi1>, vector<8x128xf32>
    %c0_86 = arith.constant 0 : index
    %c0_87 = arith.constant 0 : index
    %203 = vector.load %arg5[%c0_86, %c0_87] : memref<128x384xf32, #tpu.memory_space<vmem>>, vector<128x384xf32>
    %cst_88 = arith.constant dense<0.000000e+00> : vector<8x384xf32>
    %204 = tpu.matmul %202, %203, %cst_88 {dimension_numbers = #tpu.dot_dimension_numbers<[1], [0], [0], [1], [0, 0, 1, 1], [], []>} : vector<8x128xf32>, vector<128x384xf32>, vector<8x384xf32> -> vector<8x384xf32>
    %c40_89 = arith.constant 40 : index
    %c0_90 = arith.constant 0 : index
    %205 = vector.load %arg13[%c40_89, %c0_90] : memref<64x384xf32, #tpu.memory_space<vmem>>, vector<8x384xf32>
    %206 = vector.extract_strided_slice %205 {offsets = [0, 0], sizes = [8, 256], strides = [1, 1]} : vector<8x384xf32> to vector<8x256xf32>
    %207 = vector.extract_strided_slice %204 {offsets = [0, 0], sizes = [8, 256], strides = [1, 1]} : vector<8x384xf32> to vector<8x256xf32>
    %208 = arith.addf %206, %207 : vector<8x256xf32>
    %cst_91 = arith.constant 5.000000e-01 : f32
    %209 = vector.broadcast %cst_91 : f32 to vector<8x256xf32>
    %210 = arith.mulf %209, %208 : vector<8x256xf32>
    %211 = math.tanh %210 : vector<8x256xf32>
    %cst_92 = arith.constant 1.000000e+00 : f32
    %212 = vector.broadcast %cst_92 : f32 to vector<8x256xf32>
    %213 = arith.addf %211, %212 : vector<8x256xf32>
    %cst_93 = arith.constant 5.000000e-01 : f32
    %214 = vector.broadcast %cst_93 : f32 to vector<8x256xf32>
    %215 = arith.mulf %214, %213 : vector<8x256xf32>
    %216 = vector.extract_strided_slice %215 {offsets = [0, 0], sizes = [8, 128], strides = [1, 1]} : vector<8x256xf32> to vector<8x128xf32>
    %217 = vector.extract_strided_slice %215 {offsets = [0, 128], sizes = [8, 128], strides = [1, 1]} : vector<8x256xf32> to vector<8x128xf32>
    %218 = vector.extract_strided_slice %205 {offsets = [0, 256], sizes = [8, 128], strides = [1, 1]} : vector<8x384xf32> to vector<8x128xf32>
    %219 = vector.extract_strided_slice %204 {offsets = [0, 256], sizes = [8, 128], strides = [1, 1]} : vector<8x384xf32> to vector<8x128xf32>
    %c0_94 = arith.constant 0 : index
    %c0_95 = arith.constant 0 : index
    %220 = vector.load %arg6[%c0_94, %c0_95] : memref<1x128xf32, #tpu.memory_space<vmem>>, vector<1x128xf32>
    %221 = vector.broadcast %220 : vector<1x128xf32> to vector<8x128xf32>
    %222 = arith.addf %219, %221 : vector<8x128xf32>
    %223 = arith.mulf %216, %222 : vector<8x128xf32>
    %224 = arith.addf %218, %223 : vector<8x128xf32>
    %225 = math.tanh %224 : vector<8x128xf32>
    %cst_96 = arith.constant 1.000000e+00 : f32
    %226 = vector.broadcast %cst_96 : f32 to vector<8x128xf32>
    %227 = arith.subf %226, %217 : vector<8x128xf32>
    %228 = arith.mulf %227, %225 : vector<8x128xf32>
    %229 = arith.mulf %217, %202 : vector<8x128xf32>
    %230 = arith.addf %228, %229 : vector<8x128xf32>
    %c5_i32_97 = arith.constant 5 : i32
    %c2_i32_98 = arith.constant 2 : i32
    %231 = vector.broadcast %c5_i32_97 : i32 to vector<8x128xi32>
    %232 = vector.broadcast %c2_i32_98 : i32 to vector<8x128xi32>
    %233 = arith.select %3, %231, %232 : vector<8x128xi1>, vector<8x128xi32>
    %234 = vector.broadcast %0 : vector<8x1xi32> to vector<8x128xi32>
    %235 = arith.cmpi sgt, %234, %233 : vector<8x128xi32>
    %cst_99 = arith.constant 0.000000e+00 : f32
    %236 = vector.broadcast %cst_99 : f32 to vector<8x128xf32>
    %237 = arith.select %235, %230, %236 : vector<8x128xi1>, vector<8x128xf32>
    %c40_100 = arith.constant 40 : index
    %c0_101 = arith.constant 0 : index
    %238 = vector.load %arg14[%c40_100, %c0_101] : memref<64x128xf32, #tpu.memory_space<vmem>>, vector<8x128xf32>
    tpu.vector_store %arg14[%c40_100, %c0_101], %237 {strides = array<i32>} : memref<64x128xf32, #tpu.memory_space<vmem>>, vector<8x128xf32>,
    %c16_102 = arith.constant 16 : index
    %c0_103 = arith.constant 0 : index
    %239 = vector.load %arg15[%c16_102, %c0_103] : memref<64x128xf32, #tpu.memory_space<vmem>>, vector<8x128xf32>
    tpu.vector_store %arg15[%c16_102, %c0_103], %237 {strides = array<i32>} : memref<64x128xf32, #tpu.memory_space<vmem>>, vector<8x128xf32>,
    %240 = arith.select %235, %230, %202 : vector<8x128xi1>, vector<8x128xf32>
    %c0_104 = arith.constant 0 : index
    %c0_105 = arith.constant 0 : index
    %241 = vector.load %arg5[%c0_104, %c0_105] : memref<128x384xf32, #tpu.memory_space<vmem>>, vector<128x384xf32>
    %cst_106 = arith.constant dense<0.000000e+00> : vector<8x384xf32>
    %242 = tpu.matmul %240, %241, %cst_106 {dimension_numbers = #tpu.dot_dimension_numbers<[1], [0], [0], [1], [0, 0, 1, 1], [], []>} : vector<8x128xf32>, vector<128x384xf32>, vector<8x384xf32> -> vector<8x384xf32>
    %c48_107 = arith.constant 48 : index
    %c0_108 = arith.constant 0 : index
    %243 = vector.load %arg13[%c48_107, %c0_108] : memref<64x384xf32, #tpu.memory_space<vmem>>, vector<8x384xf32>
    %244 = vector.extract_strided_slice %243 {offsets = [0, 0], sizes = [8, 256], strides = [1, 1]} : vector<8x384xf32> to vector<8x256xf32>
    %245 = vector.extract_strided_slice %242 {offsets = [0, 0], sizes = [8, 256], strides = [1, 1]} : vector<8x384xf32> to vector<8x256xf32>
    %246 = arith.addf %244, %245 : vector<8x256xf32>
    %cst_109 = arith.constant 5.000000e-01 : f32
    %247 = vector.broadcast %cst_109 : f32 to vector<8x256xf32>
    %248 = arith.mulf %247, %246 : vector<8x256xf32>
    %249 = math.tanh %248 : vector<8x256xf32>
    %cst_110 = arith.constant 1.000000e+00 : f32
    %250 = vector.broadcast %cst_110 : f32 to vector<8x256xf32>
    %251 = arith.addf %249, %250 : vector<8x256xf32>
    %cst_111 = arith.constant 5.000000e-01 : f32
    %252 = vector.broadcast %cst_111 : f32 to vector<8x256xf32>
    %253 = arith.mulf %252, %251 : vector<8x256xf32>
    %254 = vector.extract_strided_slice %253 {offsets = [0, 0], sizes = [8, 128], strides = [1, 1]} : vector<8x256xf32> to vector<8x128xf32>
    %255 = vector.extract_strided_slice %253 {offsets = [0, 128], sizes = [8, 128], strides = [1, 1]} : vector<8x256xf32> to vector<8x128xf32>
    %256 = vector.extract_strided_slice %243 {offsets = [0, 256], sizes = [8, 128], strides = [1, 1]} : vector<8x384xf32> to vector<8x128xf32>
    %257 = vector.extract_strided_slice %242 {offsets = [0, 256], sizes = [8, 128], strides = [1, 1]} : vector<8x384xf32> to vector<8x128xf32>
    %c0_112 = arith.constant 0 : index
    %c0_113 = arith.constant 0 : index
    %258 = vector.load %arg6[%c0_112, %c0_113] : memref<1x128xf32, #tpu.memory_space<vmem>>, vector<1x128xf32>
    %259 = vector.broadcast %258 : vector<1x128xf32> to vector<8x128xf32>
    %260 = arith.addf %257, %259 : vector<8x128xf32>
    %261 = arith.mulf %254, %260 : vector<8x128xf32>
    %262 = arith.addf %256, %261 : vector<8x128xf32>
    %263 = math.tanh %262 : vector<8x128xf32>
    %cst_114 = arith.constant 1.000000e+00 : f32
    %264 = vector.broadcast %cst_114 : f32 to vector<8x128xf32>
    %265 = arith.subf %264, %255 : vector<8x128xf32>
    %266 = arith.mulf %265, %263 : vector<8x128xf32>
    %267 = arith.mulf %255, %240 : vector<8x128xf32>
    %268 = arith.addf %266, %267 : vector<8x128xf32>
    %c6_i32_115 = arith.constant 6 : i32
    %c1_i32_116 = arith.constant 1 : i32
    %269 = vector.broadcast %c6_i32_115 : i32 to vector<8x128xi32>
    %270 = vector.broadcast %c1_i32_116 : i32 to vector<8x128xi32>
    %271 = arith.select %3, %269, %270 : vector<8x128xi1>, vector<8x128xi32>
    %272 = vector.broadcast %0 : vector<8x1xi32> to vector<8x128xi32>
    %273 = arith.cmpi sgt, %272, %271 : vector<8x128xi32>
    %cst_117 = arith.constant 0.000000e+00 : f32
    %274 = vector.broadcast %cst_117 : f32 to vector<8x128xf32>
    %275 = arith.select %273, %268, %274 : vector<8x128xi1>, vector<8x128xf32>
    %c48_118 = arith.constant 48 : index
    %c0_119 = arith.constant 0 : index
    %276 = vector.load %arg14[%c48_118, %c0_119] : memref<64x128xf32, #tpu.memory_space<vmem>>, vector<8x128xf32>
    tpu.vector_store %arg14[%c48_118, %c0_119], %275 {strides = array<i32>} : memref<64x128xf32, #tpu.memory_space<vmem>>, vector<8x128xf32>,
    %c8_120 = arith.constant 8 : index
    %c0_121 = arith.constant 0 : index
    %277 = vector.load %arg15[%c8_120, %c0_121] : memref<64x128xf32, #tpu.memory_space<vmem>>, vector<8x128xf32>
    tpu.vector_store %arg15[%c8_120, %c0_121], %275 {strides = array<i32>} : memref<64x128xf32, #tpu.memory_space<vmem>>, vector<8x128xf32>,
    %278 = arith.select %273, %268, %240 : vector<8x128xi1>, vector<8x128xf32>
    %c0_122 = arith.constant 0 : index
    %c0_123 = arith.constant 0 : index
    %279 = vector.load %arg5[%c0_122, %c0_123] : memref<128x384xf32, #tpu.memory_space<vmem>>, vector<128x384xf32>
    %cst_124 = arith.constant dense<0.000000e+00> : vector<8x384xf32>
    %280 = tpu.matmul %278, %279, %cst_124 {dimension_numbers = #tpu.dot_dimension_numbers<[1], [0], [0], [1], [0, 0, 1, 1], [], []>} : vector<8x128xf32>, vector<128x384xf32>, vector<8x384xf32> -> vector<8x384xf32>
    %c56_125 = arith.constant 56 : index
    %c0_126 = arith.constant 0 : index
    %281 = vector.load %arg13[%c56_125, %c0_126] : memref<64x384xf32, #tpu.memory_space<vmem>>, vector<8x384xf32>
    %282 = vector.extract_strided_slice %281 {offsets = [0, 0], sizes = [8, 256], strides = [1, 1]} : vector<8x384xf32> to vector<8x256xf32>
    %283 = vector.extract_strided_slice %280 {offsets = [0, 0], sizes = [8, 256], strides = [1, 1]} : vector<8x384xf32> to vector<8x256xf32>
    %284 = arith.addf %282, %283 : vector<8x256xf32>
    %cst_127 = arith.constant 5.000000e-01 : f32
    %285 = vector.broadcast %cst_127 : f32 to vector<8x256xf32>
    %286 = arith.mulf %285, %284 : vector<8x256xf32>
    %287 = math.tanh %286 : vector<8x256xf32>
    %cst_128 = arith.constant 1.000000e+00 : f32
    %288 = vector.broadcast %cst_128 : f32 to vector<8x256xf32>
    %289 = arith.addf %287, %288 : vector<8x256xf32>
    %cst_129 = arith.constant 5.000000e-01 : f32
    %290 = vector.broadcast %cst_129 : f32 to vector<8x256xf32>
    %291 = arith.mulf %290, %289 : vector<8x256xf32>
    %292 = vector.extract_strided_slice %291 {offsets = [0, 0], sizes = [8, 128], strides = [1, 1]} : vector<8x256xf32> to vector<8x128xf32>
    %293 = vector.extract_strided_slice %291 {offsets = [0, 128], sizes = [8, 128], strides = [1, 1]} : vector<8x256xf32> to vector<8x128xf32>
    %294 = vector.extract_strided_slice %281 {offsets = [0, 256], sizes = [8, 128], strides = [1, 1]} : vector<8x384xf32> to vector<8x128xf32>
    %295 = vector.extract_strided_slice %280 {offsets = [0, 256], sizes = [8, 128], strides = [1, 1]} : vector<8x384xf32> to vector<8x128xf32>
    %c0_130 = arith.constant 0 : index
    %c0_131 = arith.constant 0 : index
    %296 = vector.load %arg6[%c0_130, %c0_131] : memref<1x128xf32, #tpu.memory_space<vmem>>, vector<1x128xf32>
    %297 = vector.broadcast %296 : vector<1x128xf32> to vector<8x128xf32>
    %298 = arith.addf %295, %297 : vector<8x128xf32>
    %299 = arith.mulf %292, %298 : vector<8x128xf32>
    %300 = arith.addf %294, %299 : vector<8x128xf32>
    %301 = math.tanh %300 : vector<8x128xf32>
    %cst_132 = arith.constant 1.000000e+00 : f32
    %302 = vector.broadcast %cst_132 : f32 to vector<8x128xf32>
    %303 = arith.subf %302, %293 : vector<8x128xf32>
    %304 = arith.mulf %303, %301 : vector<8x128xf32>
    %305 = arith.mulf %293, %278 : vector<8x128xf32>
    %306 = arith.addf %304, %305 : vector<8x128xf32>
    %c7_i32_133 = arith.constant 7 : i32
    %c0_i32_134 = arith.constant 0 : i32
    %307 = vector.broadcast %c7_i32_133 : i32 to vector<8x128xi32>
    %308 = vector.broadcast %c0_i32_134 : i32 to vector<8x128xi32>
    %309 = arith.select %3, %307, %308 : vector<8x128xi1>, vector<8x128xi32>
    %310 = vector.broadcast %0 : vector<8x1xi32> to vector<8x128xi32>
    %311 = arith.cmpi sgt, %310, %309 : vector<8x128xi32>
    %cst_135 = arith.constant 0.000000e+00 : f32
    %312 = vector.broadcast %cst_135 : f32 to vector<8x128xf32>
    %313 = arith.select %311, %306, %312 : vector<8x128xi1>, vector<8x128xf32>
    %c56_136 = arith.constant 56 : index
    %c0_137 = arith.constant 0 : index
    %314 = vector.load %arg14[%c56_136, %c0_137] : memref<64x128xf32, #tpu.memory_space<vmem>>, vector<8x128xf32>
    tpu.vector_store %arg14[%c56_136, %c0_137], %313 {strides = array<i32>} : memref<64x128xf32, #tpu.memory_space<vmem>>, vector<8x128xf32>,
    %c0_138 = arith.constant 0 : index
    %c0_139 = arith.constant 0 : index
    %315 = vector.load %arg15[%c0_138, %c0_139] : memref<64x128xf32, #tpu.memory_space<vmem>>, vector<8x128xf32>
    tpu.vector_store %arg15[%c0_138, %c0_139], %313 {strides = array<i32>} : memref<64x128xf32, #tpu.memory_space<vmem>>, vector<8x128xf32>,
    %c0_140 = arith.constant 0 : index
    %c0_141 = arith.constant 0 : index
    %316 = vector.load %arg14[%c0_140, %c0_141] : memref<64x128xf32, #tpu.memory_space<vmem>>, vector<64x128xf32>
    %c0_142 = arith.constant 0 : index
    %c0_143 = arith.constant 0 : index
    %317 = vector.load %arg7[%c0_142, %c0_143] : memref<128x384xf32, #tpu.memory_space<vmem>>, vector<128x384xf32>
    %cst_144 = arith.constant dense<0.000000e+00> : vector<64x384xf32>
    %318 = tpu.matmul %316, %317, %cst_144 {dimension_numbers = #tpu.dot_dimension_numbers<[1], [0], [0], [1], [0, 0, 1, 1], [], []>} : vector<64x128xf32>, vector<128x384xf32>, vector<64x384xf32> -> vector<64x384xf32>
    %c0_145 = arith.constant 0 : index
    %c0_146 = arith.constant 0 : index
    %319 = vector.load %arg15[%c0_145, %c0_146] : memref<64x128xf32, #tpu.memory_space<vmem>>, vector<64x128xf32>
    %c0_147 = arith.constant 0 : index
    %c0_148 = arith.constant 0 : index
    %320 = vector.load %arg8[%c0_147, %c0_148] : memref<128x384xf32, #tpu.memory_space<vmem>>, vector<128x384xf32>
    %cst_149 = arith.constant dense<0.000000e+00> : vector<64x384xf32>
    %321 = tpu.matmul %319, %320, %cst_149 {dimension_numbers = #tpu.dot_dimension_numbers<[1], [0], [0], [1], [0, 0, 1, 1], [], []>} : vector<64x128xf32>, vector<128x384xf32>, vector<64x384xf32> -> vector<64x384xf32>
    %322 = arith.addf %318, %321 : vector<64x384xf32>
    %c0_150 = arith.constant 0 : index
    %c0_151 = arith.constant 0 : index
    %323 = vector.load %arg9[%c0_150, %c0_151] : memref<1x384xf32, #tpu.memory_space<vmem>>, vector<1x384xf32>
    %324 = vector.broadcast %323 : vector<1x384xf32> to vector<64x384xf32>
    %325 = arith.addf %322, %324 : vector<64x384xf32>
    %c0_152 = arith.constant 0 : index
    %c0_153 = arith.constant 0 : index
    %326 = vector.load %arg13[%c0_152, %c0_153] : memref<64x384xf32, #tpu.memory_space<vmem>>, vector<64x384xf32>
    tpu.vector_store %arg13[%c0_152, %c0_153], %325 {strides = array<i32>} : memref<64x384xf32, #tpu.memory_space<vmem>>, vector<64x384xf32>,
    %cst_154 = arith.constant 0.000000e+00 : f32
    %327 = vector.broadcast %cst_154 : f32 to vector<8x128xf32>
    %c0_155 = arith.constant 0 : index
    %c0_156 = arith.constant 0 : index
    %328 = vector.load %arg10[%c0_155, %c0_156] : memref<128x384xf32, #tpu.memory_space<vmem>>, vector<128x384xf32>
    %cst_157 = arith.constant dense<0.000000e+00> : vector<8x384xf32>
    %329 = tpu.matmul %327, %328, %cst_157 {dimension_numbers = #tpu.dot_dimension_numbers<[1], [0], [0], [1], [0, 0, 1, 1], [], []>} : vector<8x128xf32>, vector<128x384xf32>, vector<8x384xf32> -> vector<8x384xf32>
    %c0_158 = arith.constant 0 : index
    %c0_159 = arith.constant 0 : index
    %330 = vector.load %arg13[%c0_158, %c0_159] : memref<64x384xf32, #tpu.memory_space<vmem>>, vector<8x384xf32>
    %331 = vector.extract_strided_slice %330 {offsets = [0, 0], sizes = [8, 256], strides = [1, 1]} : vector<8x384xf32> to vector<8x256xf32>
    %332 = vector.extract_strided_slice %329 {offsets = [0, 0], sizes = [8, 256], strides = [1, 1]} : vector<8x384xf32> to vector<8x256xf32>
    %333 = arith.addf %331, %332 : vector<8x256xf32>
    %cst_160 = arith.constant 5.000000e-01 : f32
    %334 = vector.broadcast %cst_160 : f32 to vector<8x256xf32>
    %335 = arith.mulf %334, %333 : vector<8x256xf32>
    %336 = math.tanh %335 : vector<8x256xf32>
    %cst_161 = arith.constant 1.000000e+00 : f32
    %337 = vector.broadcast %cst_161 : f32 to vector<8x256xf32>
    %338 = arith.addf %336, %337 : vector<8x256xf32>
    %cst_162 = arith.constant 5.000000e-01 : f32
    %339 = vector.broadcast %cst_162 : f32 to vector<8x256xf32>
    %340 = arith.mulf %339, %338 : vector<8x256xf32>
    %341 = vector.extract_strided_slice %340 {offsets = [0, 0], sizes = [8, 128], strides = [1, 1]} : vector<8x256xf32> to vector<8x128xf32>
    %342 = vector.extract_strided_slice %340 {offsets = [0, 128], sizes = [8, 128], strides = [1, 1]} : vector<8x256xf32> to vector<8x128xf32>
    %343 = vector.extract_strided_slice %330 {offsets = [0, 256], sizes = [8, 128], strides = [1, 1]} : vector<8x384xf32> to vector<8x128xf32>
    %344 = vector.extract_strided_slice %329 {offsets = [0, 256], sizes = [8, 128], strides = [1, 1]} : vector<8x384xf32> to vector<8x128xf32>
    %c0_163 = arith.constant 0 : index
    %c0_164 = arith.constant 0 : index
    %345 = vector.load %arg11[%c0_163, %c0_164] : memref<1x128xf32, #tpu.memory_space<vmem>>, vector<1x128xf32>
    %346 = vector.broadcast %345 : vector<1x128xf32> to vector<8x128xf32>
    %347 = arith.addf %344, %346 : vector<8x128xf32>
    %348 = arith.mulf %341, %347 : vector<8x128xf32>
    %349 = arith.addf %343, %348 : vector<8x128xf32>
    %350 = math.tanh %349 : vector<8x128xf32>
    %cst_165 = arith.constant 1.000000e+00 : f32
    %351 = vector.broadcast %cst_165 : f32 to vector<8x128xf32>
    %352 = arith.subf %351, %342 : vector<8x128xf32>
    %353 = arith.mulf %352, %350 : vector<8x128xf32>
    %354 = arith.mulf %342, %327 : vector<8x128xf32>
    %355 = arith.addf %353, %354 : vector<8x128xf32>
    %c0_i32_166 = arith.constant 0 : i32
    %c7_i32_167 = arith.constant 7 : i32
    %356 = vector.broadcast %c0_i32_166 : i32 to vector<8x128xi32>
    %357 = vector.broadcast %c7_i32_167 : i32 to vector<8x128xi32>
    %358 = arith.select %3, %356, %357 : vector<8x128xi1>, vector<8x128xi32>
    %359 = vector.broadcast %0 : vector<8x1xi32> to vector<8x128xi32>
    %360 = arith.cmpi sgt, %359, %358 : vector<8x128xi32>
    %361 = arith.select %360, %355, %327 : vector<8x128xi1>, vector<8x128xf32>
    %c0_168 = arith.constant 0 : index
    %c0_169 = arith.constant 0 : index
    %362 = vector.load %arg10[%c0_168, %c0_169] : memref<128x384xf32, #tpu.memory_space<vmem>>, vector<128x384xf32>
    %cst_170 = arith.constant dense<0.000000e+00> : vector<8x384xf32>
    %363 = tpu.matmul %361, %362, %cst_170 {dimension_numbers = #tpu.dot_dimension_numbers<[1], [0], [0], [1], [0, 0, 1, 1], [], []>} : vector<8x128xf32>, vector<128x384xf32>, vector<8x384xf32> -> vector<8x384xf32>
    %c8_171 = arith.constant 8 : index
    %c0_172 = arith.constant 0 : index
    %364 = vector.load %arg13[%c8_171, %c0_172] : memref<64x384xf32, #tpu.memory_space<vmem>>, vector<8x384xf32>
    %365 = vector.extract_strided_slice %364 {offsets = [0, 0], sizes = [8, 256], strides = [1, 1]} : vector<8x384xf32> to vector<8x256xf32>
    %366 = vector.extract_strided_slice %363 {offsets = [0, 0], sizes = [8, 256], strides = [1, 1]} : vector<8x384xf32> to vector<8x256xf32>
    %367 = arith.addf %365, %366 : vector<8x256xf32>
    %cst_173 = arith.constant 5.000000e-01 : f32
    %368 = vector.broadcast %cst_173 : f32 to vector<8x256xf32>
    %369 = arith.mulf %368, %367 : vector<8x256xf32>
    %370 = math.tanh %369 : vector<8x256xf32>
    %cst_174 = arith.constant 1.000000e+00 : f32
    %371 = vector.broadcast %cst_174 : f32 to vector<8x256xf32>
    %372 = arith.addf %370, %371 : vector<8x256xf32>
    %cst_175 = arith.constant 5.000000e-01 : f32
    %373 = vector.broadcast %cst_175 : f32 to vector<8x256xf32>
    %374 = arith.mulf %373, %372 : vector<8x256xf32>
    %375 = vector.extract_strided_slice %374 {offsets = [0, 0], sizes = [8, 128], strides = [1, 1]} : vector<8x256xf32> to vector<8x128xf32>
    %376 = vector.extract_strided_slice %374 {offsets = [0, 128], sizes = [8, 128], strides = [1, 1]} : vector<8x256xf32> to vector<8x128xf32>
    %377 = vector.extract_strided_slice %364 {offsets = [0, 256], sizes = [8, 128], strides = [1, 1]} : vector<8x384xf32> to vector<8x128xf32>
    %378 = vector.extract_strided_slice %363 {offsets = [0, 256], sizes = [8, 128], strides = [1, 1]} : vector<8x384xf32> to vector<8x128xf32>
    %c0_176 = arith.constant 0 : index
    %c0_177 = arith.constant 0 : index
    %379 = vector.load %arg11[%c0_176, %c0_177] : memref<1x128xf32, #tpu.memory_space<vmem>>, vector<1x128xf32>
    %380 = vector.broadcast %379 : vector<1x128xf32> to vector<8x128xf32>
    %381 = arith.addf %378, %380 : vector<8x128xf32>
    %382 = arith.mulf %375, %381 : vector<8x128xf32>
    %383 = arith.addf %377, %382 : vector<8x128xf32>
    %384 = math.tanh %383 : vector<8x128xf32>
    %cst_178 = arith.constant 1.000000e+00 : f32
    %385 = vector.broadcast %cst_178 : f32 to vector<8x128xf32>
    %386 = arith.subf %385, %376 : vector<8x128xf32>
    %387 = arith.mulf %386, %384 : vector<8x128xf32>
    %388 = arith.mulf %376, %361 : vector<8x128xf32>
    %389 = arith.addf %387, %388 : vector<8x128xf32>
    %c1_i32_179 = arith.constant 1 : i32
    %c6_i32_180 = arith.constant 6 : i32
    %390 = vector.broadcast %c1_i32_179 : i32 to vector<8x128xi32>
    %391 = vector.broadcast %c6_i32_180 : i32 to vector<8x128xi32>
    %392 = arith.select %3, %390, %391 : vector<8x128xi1>, vector<8x128xi32>
    %393 = vector.broadcast %0 : vector<8x1xi32> to vector<8x128xi32>
    %394 = arith.cmpi sgt, %393, %392 : vector<8x128xi32>
    %395 = arith.select %394, %389, %361 : vector<8x128xi1>, vector<8x128xf32>
    %c0_181 = arith.constant 0 : index
    %c0_182 = arith.constant 0 : index
    %396 = vector.load %arg10[%c0_181, %c0_182] : memref<128x384xf32, #tpu.memory_space<vmem>>, vector<128x384xf32>
    %cst_183 = arith.constant dense<0.000000e+00> : vector<8x384xf32>
    %397 = tpu.matmul %395, %396, %cst_183 {dimension_numbers = #tpu.dot_dimension_numbers<[1], [0], [0], [1], [0, 0, 1, 1], [], []>} : vector<8x128xf32>, vector<128x384xf32>, vector<8x384xf32> -> vector<8x384xf32>
    %c16_184 = arith.constant 16 : index
    %c0_185 = arith.constant 0 : index
    %398 = vector.load %arg13[%c16_184, %c0_185] : memref<64x384xf32, #tpu.memory_space<vmem>>, vector<8x384xf32>
    %399 = vector.extract_strided_slice %398 {offsets = [0, 0], sizes = [8, 256], strides = [1, 1]} : vector<8x384xf32> to vector<8x256xf32>
    %400 = vector.extract_strided_slice %397 {offsets = [0, 0], sizes = [8, 256], strides = [1, 1]} : vector<8x384xf32> to vector<8x256xf32>
    %401 = arith.addf %399, %400 : vector<8x256xf32>
    %cst_186 = arith.constant 5.000000e-01 : f32
    %402 = vector.broadcast %cst_186 : f32 to vector<8x256xf32>
    %403 = arith.mulf %402, %401 : vector<8x256xf32>
    %404 = math.tanh %403 : vector<8x256xf32>
    %cst_187 = arith.constant 1.000000e+00 : f32
    %405 = vector.broadcast %cst_187 : f32 to vector<8x256xf32>
    %406 = arith.addf %404, %405 : vector<8x256xf32>
    %cst_188 = arith.constant 5.000000e-01 : f32
    %407 = vector.broadcast %cst_188 : f32 to vector<8x256xf32>
    %408 = arith.mulf %407, %406 : vector<8x256xf32>
    %409 = vector.extract_strided_slice %408 {offsets = [0, 0], sizes = [8, 128], strides = [1, 1]} : vector<8x256xf32> to vector<8x128xf32>
    %410 = vector.extract_strided_slice %408 {offsets = [0, 128], sizes = [8, 128], strides = [1, 1]} : vector<8x256xf32> to vector<8x128xf32>
    %411 = vector.extract_strided_slice %398 {offsets = [0, 256], sizes = [8, 128], strides = [1, 1]} : vector<8x384xf32> to vector<8x128xf32>
    %412 = vector.extract_strided_slice %397 {offsets = [0, 256], sizes = [8, 128], strides = [1, 1]} : vector<8x384xf32> to vector<8x128xf32>
    %c0_189 = arith.constant 0 : index
    %c0_190 = arith.constant 0 : index
    %413 = vector.load %arg11[%c0_189, %c0_190] : memref<1x128xf32, #tpu.memory_space<vmem>>, vector<1x128xf32>
    %414 = vector.broadcast %413 : vector<1x128xf32> to vector<8x128xf32>
    %415 = arith.addf %412, %414 : vector<8x128xf32>
    %416 = arith.mulf %409, %415 : vector<8x128xf32>
    %417 = arith.addf %411, %416 : vector<8x128xf32>
    %418 = math.tanh %417 : vector<8x128xf32>
    %cst_191 = arith.constant 1.000000e+00 : f32
    %419 = vector.broadcast %cst_191 : f32 to vector<8x128xf32>
    %420 = arith.subf %419, %410 : vector<8x128xf32>
    %421 = arith.mulf %420, %418 : vector<8x128xf32>
    %422 = arith.mulf %410, %395 : vector<8x128xf32>
    %423 = arith.addf %421, %422 : vector<8x128xf32>
    %c2_i32_192 = arith.constant 2 : i32
    %c5_i32_193 = arith.constant 5 : i32
    %424 = vector.broadcast %c2_i32_192 : i32 to vector<8x128xi32>
    %425 = vector.broadcast %c5_i32_193 : i32 to vector<8x128xi32>
    %426 = arith.select %3, %424, %425 : vector<8x128xi1>, vector<8x128xi32>
    %427 = vector.broadcast %0 : vector<8x1xi32> to vector<8x128xi32>
    %428 = arith.cmpi sgt, %427, %426 : vector<8x128xi32>
    %429 = arith.select %428, %423, %395 : vector<8x128xi1>, vector<8x128xf32>
    %c0_194 = arith.constant 0 : index
    %c0_195 = arith.constant 0 : index
    %430 = vector.load %arg10[%c0_194, %c0_195] : memref<128x384xf32, #tpu.memory_space<vmem>>, vector<128x384xf32>
    %cst_196 = arith.constant dense<0.000000e+00> : vector<8x384xf32>
    %431 = tpu.matmul %429, %430, %cst_196 {dimension_numbers = #tpu.dot_dimension_numbers<[1], [0], [0], [1], [0, 0, 1, 1], [], []>} : vector<8x128xf32>, vector<128x384xf32>, vector<8x384xf32> -> vector<8x384xf32>
    %c24_197 = arith.constant 24 : index
    %c0_198 = arith.constant 0 : index
    %432 = vector.load %arg13[%c24_197, %c0_198] : memref<64x384xf32, #tpu.memory_space<vmem>>, vector<8x384xf32>
    %433 = vector.extract_strided_slice %432 {offsets = [0, 0], sizes = [8, 256], strides = [1, 1]} : vector<8x384xf32> to vector<8x256xf32>
    %434 = vector.extract_strided_slice %431 {offsets = [0, 0], sizes = [8, 256], strides = [1, 1]} : vector<8x384xf32> to vector<8x256xf32>
    %435 = arith.addf %433, %434 : vector<8x256xf32>
    %cst_199 = arith.constant 5.000000e-01 : f32
    %436 = vector.broadcast %cst_199 : f32 to vector<8x256xf32>
    %437 = arith.mulf %436, %435 : vector<8x256xf32>
    %438 = math.tanh %437 : vector<8x256xf32>
    %cst_200 = arith.constant 1.000000e+00 : f32
    %439 = vector.broadcast %cst_200 : f32 to vector<8x256xf32>
    %440 = arith.addf %438, %439 : vector<8x256xf32>
    %cst_201 = arith.constant 5.000000e-01 : f32
    %441 = vector.broadcast %cst_201 : f32 to vector<8x256xf32>
    %442 = arith.mulf %441, %440 : vector<8x256xf32>
    %443 = vector.extract_strided_slice %442 {offsets = [0, 0], sizes = [8, 128], strides = [1, 1]} : vector<8x256xf32> to vector<8x128xf32>
    %444 = vector.extract_strided_slice %442 {offsets = [0, 128], sizes = [8, 128], strides = [1, 1]} : vector<8x256xf32> to vector<8x128xf32>
    %445 = vector.extract_strided_slice %432 {offsets = [0, 256], sizes = [8, 128], strides = [1, 1]} : vector<8x384xf32> to vector<8x128xf32>
    %446 = vector.extract_strided_slice %431 {offsets = [0, 256], sizes = [8, 128], strides = [1, 1]} : vector<8x384xf32> to vector<8x128xf32>
    %c0_202 = arith.constant 0 : index
    %c0_203 = arith.constant 0 : index
    %447 = vector.load %arg11[%c0_202, %c0_203] : memref<1x128xf32, #tpu.memory_space<vmem>>, vector<1x128xf32>
    %448 = vector.broadcast %447 : vector<1x128xf32> to vector<8x128xf32>
    %449 = arith.addf %446, %448 : vector<8x128xf32>
    %450 = arith.mulf %443, %449 : vector<8x128xf32>
    %451 = arith.addf %445, %450 : vector<8x128xf32>
    %452 = math.tanh %451 : vector<8x128xf32>
    %cst_204 = arith.constant 1.000000e+00 : f32
    %453 = vector.broadcast %cst_204 : f32 to vector<8x128xf32>
    %454 = arith.subf %453, %444 : vector<8x128xf32>
    %455 = arith.mulf %454, %452 : vector<8x128xf32>
    %456 = arith.mulf %444, %429 : vector<8x128xf32>
    %457 = arith.addf %455, %456 : vector<8x128xf32>
    %c3_i32_205 = arith.constant 3 : i32
    %c4_i32_206 = arith.constant 4 : i32
    %458 = vector.broadcast %c3_i32_205 : i32 to vector<8x128xi32>
    %459 = vector.broadcast %c4_i32_206 : i32 to vector<8x128xi32>
    %460 = arith.select %3, %458, %459 : vector<8x128xi1>, vector<8x128xi32>
    %461 = vector.broadcast %0 : vector<8x1xi32> to vector<8x128xi32>
    %462 = arith.cmpi sgt, %461, %460 : vector<8x128xi32>
    %463 = arith.select %462, %457, %429 : vector<8x128xi1>, vector<8x128xf32>
    %c0_207 = arith.constant 0 : index
    %c0_208 = arith.constant 0 : index
    %464 = vector.load %arg10[%c0_207, %c0_208] : memref<128x384xf32, #tpu.memory_space<vmem>>, vector<128x384xf32>
    %cst_209 = arith.constant dense<0.000000e+00> : vector<8x384xf32>
    %465 = tpu.matmul %463, %464, %cst_209 {dimension_numbers = #tpu.dot_dimension_numbers<[1], [0], [0], [1], [0, 0, 1, 1], [], []>} : vector<8x128xf32>, vector<128x384xf32>, vector<8x384xf32> -> vector<8x384xf32>
    %c32_210 = arith.constant 32 : index
    %c0_211 = arith.constant 0 : index
    %466 = vector.load %arg13[%c32_210, %c0_211] : memref<64x384xf32, #tpu.memory_space<vmem>>, vector<8x384xf32>
    %467 = vector.extract_strided_slice %466 {offsets = [0, 0], sizes = [8, 256], strides = [1, 1]} : vector<8x384xf32> to vector<8x256xf32>
    %468 = vector.extract_strided_slice %465 {offsets = [0, 0], sizes = [8, 256], strides = [1, 1]} : vector<8x384xf32> to vector<8x256xf32>
    %469 = arith.addf %467, %468 : vector<8x256xf32>
    %cst_212 = arith.constant 5.000000e-01 : f32
    %470 = vector.broadcast %cst_212 : f32 to vector<8x256xf32>
    %471 = arith.mulf %470, %469 : vector<8x256xf32>
    %472 = math.tanh %471 : vector<8x256xf32>
    %cst_213 = arith.constant 1.000000e+00 : f32
    %473 = vector.broadcast %cst_213 : f32 to vector<8x256xf32>
    %474 = arith.addf %472, %473 : vector<8x256xf32>
    %cst_214 = arith.constant 5.000000e-01 : f32
    %475 = vector.broadcast %cst_214 : f32 to vector<8x256xf32>
    %476 = arith.mulf %475, %474 : vector<8x256xf32>
    %477 = vector.extract_strided_slice %476 {offsets = [0, 0], sizes = [8, 128], strides = [1, 1]} : vector<8x256xf32> to vector<8x128xf32>
    %478 = vector.extract_strided_slice %476 {offsets = [0, 128], sizes = [8, 128], strides = [1, 1]} : vector<8x256xf32> to vector<8x128xf32>
    %479 = vector.extract_strided_slice %466 {offsets = [0, 256], sizes = [8, 128], strides = [1, 1]} : vector<8x384xf32> to vector<8x128xf32>
    %480 = vector.extract_strided_slice %465 {offsets = [0, 256], sizes = [8, 128], strides = [1, 1]} : vector<8x384xf32> to vector<8x128xf32>
    %c0_215 = arith.constant 0 : index
    %c0_216 = arith.constant 0 : index
    %481 = vector.load %arg11[%c0_215, %c0_216] : memref<1x128xf32, #tpu.memory_space<vmem>>, vector<1x128xf32>
    %482 = vector.broadcast %481 : vector<1x128xf32> to vector<8x128xf32>
    %483 = arith.addf %480, %482 : vector<8x128xf32>
    %484 = arith.mulf %477, %483 : vector<8x128xf32>
    %485 = arith.addf %479, %484 : vector<8x128xf32>
    %486 = math.tanh %485 : vector<8x128xf32>
    %cst_217 = arith.constant 1.000000e+00 : f32
    %487 = vector.broadcast %cst_217 : f32 to vector<8x128xf32>
    %488 = arith.subf %487, %478 : vector<8x128xf32>
    %489 = arith.mulf %488, %486 : vector<8x128xf32>
    %490 = arith.mulf %478, %463 : vector<8x128xf32>
    %491 = arith.addf %489, %490 : vector<8x128xf32>
    %c4_i32_218 = arith.constant 4 : i32
    %c3_i32_219 = arith.constant 3 : i32
    %492 = vector.broadcast %c4_i32_218 : i32 to vector<8x128xi32>
    %493 = vector.broadcast %c3_i32_219 : i32 to vector<8x128xi32>
    %494 = arith.select %3, %492, %493 : vector<8x128xi1>, vector<8x128xi32>
    %495 = vector.broadcast %0 : vector<8x1xi32> to vector<8x128xi32>
    %496 = arith.cmpi sgt, %495, %494 : vector<8x128xi32>
    %497 = arith.select %496, %491, %463 : vector<8x128xi1>, vector<8x128xf32>
    %c0_220 = arith.constant 0 : index
    %c0_221 = arith.constant 0 : index
    %498 = vector.load %arg10[%c0_220, %c0_221] : memref<128x384xf32, #tpu.memory_space<vmem>>, vector<128x384xf32>
    %cst_222 = arith.constant dense<0.000000e+00> : vector<8x384xf32>
    %499 = tpu.matmul %497, %498, %cst_222 {dimension_numbers = #tpu.dot_dimension_numbers<[1], [0], [0], [1], [0, 0, 1, 1], [], []>} : vector<8x128xf32>, vector<128x384xf32>, vector<8x384xf32> -> vector<8x384xf32>
    %c40_223 = arith.constant 40 : index
    %c0_224 = arith.constant 0 : index
    %500 = vector.load %arg13[%c40_223, %c0_224] : memref<64x384xf32, #tpu.memory_space<vmem>>, vector<8x384xf32>
    %501 = vector.extract_strided_slice %500 {offsets = [0, 0], sizes = [8, 256], strides = [1, 1]} : vector<8x384xf32> to vector<8x256xf32>
    %502 = vector.extract_strided_slice %499 {offsets = [0, 0], sizes = [8, 256], strides = [1, 1]} : vector<8x384xf32> to vector<8x256xf32>
    %503 = arith.addf %501, %502 : vector<8x256xf32>
    %cst_225 = arith.constant 5.000000e-01 : f32
    %504 = vector.broadcast %cst_225 : f32 to vector<8x256xf32>
    %505 = arith.mulf %504, %503 : vector<8x256xf32>
    %506 = math.tanh %505 : vector<8x256xf32>
    %cst_226 = arith.constant 1.000000e+00 : f32
    %507 = vector.broadcast %cst_226 : f32 to vector<8x256xf32>
    %508 = arith.addf %506, %507 : vector<8x256xf32>
    %cst_227 = arith.constant 5.000000e-01 : f32
    %509 = vector.broadcast %cst_227 : f32 to vector<8x256xf32>
    %510 = arith.mulf %509, %508 : vector<8x256xf32>
    %511 = vector.extract_strided_slice %510 {offsets = [0, 0], sizes = [8, 128], strides = [1, 1]} : vector<8x256xf32> to vector<8x128xf32>
    %512 = vector.extract_strided_slice %510 {offsets = [0, 128], sizes = [8, 128], strides = [1, 1]} : vector<8x256xf32> to vector<8x128xf32>
    %513 = vector.extract_strided_slice %500 {offsets = [0, 256], sizes = [8, 128], strides = [1, 1]} : vector<8x384xf32> to vector<8x128xf32>
    %514 = vector.extract_strided_slice %499 {offsets = [0, 256], sizes = [8, 128], strides = [1, 1]} : vector<8x384xf32> to vector<8x128xf32>
    %c0_228 = arith.constant 0 : index
    %c0_229 = arith.constant 0 : index
    %515 = vector.load %arg11[%c0_228, %c0_229] : memref<1x128xf32, #tpu.memory_space<vmem>>, vector<1x128xf32>
    %516 = vector.broadcast %515 : vector<1x128xf32> to vector<8x128xf32>
    %517 = arith.addf %514, %516 : vector<8x128xf32>
    %518 = arith.mulf %511, %517 : vector<8x128xf32>
    %519 = arith.addf %513, %518 : vector<8x128xf32>
    %520 = math.tanh %519 : vector<8x128xf32>
    %cst_230 = arith.constant 1.000000e+00 : f32
    %521 = vector.broadcast %cst_230 : f32 to vector<8x128xf32>
    %522 = arith.subf %521, %512 : vector<8x128xf32>
    %523 = arith.mulf %522, %520 : vector<8x128xf32>
    %524 = arith.mulf %512, %497 : vector<8x128xf32>
    %525 = arith.addf %523, %524 : vector<8x128xf32>
    %c5_i32_231 = arith.constant 5 : i32
    %c2_i32_232 = arith.constant 2 : i32
    %526 = vector.broadcast %c5_i32_231 : i32 to vector<8x128xi32>
    %527 = vector.broadcast %c2_i32_232 : i32 to vector<8x128xi32>
    %528 = arith.select %3, %526, %527 : vector<8x128xi1>, vector<8x128xi32>
    %529 = vector.broadcast %0 : vector<8x1xi32> to vector<8x128xi32>
    %530 = arith.cmpi sgt, %529, %528 : vector<8x128xi32>
    %531 = arith.select %530, %525, %497 : vector<8x128xi1>, vector<8x128xf32>
    %c0_233 = arith.constant 0 : index
    %c0_234 = arith.constant 0 : index
    %532 = vector.load %arg10[%c0_233, %c0_234] : memref<128x384xf32, #tpu.memory_space<vmem>>, vector<128x384xf32>
    %cst_235 = arith.constant dense<0.000000e+00> : vector<8x384xf32>
    %533 = tpu.matmul %531, %532, %cst_235 {dimension_numbers = #tpu.dot_dimension_numbers<[1], [0], [0], [1], [0, 0, 1, 1], [], []>} : vector<8x128xf32>, vector<128x384xf32>, vector<8x384xf32> -> vector<8x384xf32>
    %c48_236 = arith.constant 48 : index
    %c0_237 = arith.constant 0 : index
    %534 = vector.load %arg13[%c48_236, %c0_237] : memref<64x384xf32, #tpu.memory_space<vmem>>, vector<8x384xf32>
    %535 = vector.extract_strided_slice %534 {offsets = [0, 0], sizes = [8, 256], strides = [1, 1]} : vector<8x384xf32> to vector<8x256xf32>
    %536 = vector.extract_strided_slice %533 {offsets = [0, 0], sizes = [8, 256], strides = [1, 1]} : vector<8x384xf32> to vector<8x256xf32>
    %537 = arith.addf %535, %536 : vector<8x256xf32>
    %cst_238 = arith.constant 5.000000e-01 : f32
    %538 = vector.broadcast %cst_238 : f32 to vector<8x256xf32>
    %539 = arith.mulf %538, %537 : vector<8x256xf32>
    %540 = math.tanh %539 : vector<8x256xf32>
    %cst_239 = arith.constant 1.000000e+00 : f32
    %541 = vector.broadcast %cst_239 : f32 to vector<8x256xf32>
    %542 = arith.addf %540, %541 : vector<8x256xf32>
    %cst_240 = arith.constant 5.000000e-01 : f32
    %543 = vector.broadcast %cst_240 : f32 to vector<8x256xf32>
    %544 = arith.mulf %543, %542 : vector<8x256xf32>
    %545 = vector.extract_strided_slice %544 {offsets = [0, 0], sizes = [8, 128], strides = [1, 1]} : vector<8x256xf32> to vector<8x128xf32>
    %546 = vector.extract_strided_slice %544 {offsets = [0, 128], sizes = [8, 128], strides = [1, 1]} : vector<8x256xf32> to vector<8x128xf32>
    %547 = vector.extract_strided_slice %534 {offsets = [0, 256], sizes = [8, 128], strides = [1, 1]} : vector<8x384xf32> to vector<8x128xf32>
    %548 = vector.extract_strided_slice %533 {offsets = [0, 256], sizes = [8, 128], strides = [1, 1]} : vector<8x384xf32> to vector<8x128xf32>
    %c0_241 = arith.constant 0 : index
    %c0_242 = arith.constant 0 : index
    %549 = vector.load %arg11[%c0_241, %c0_242] : memref<1x128xf32, #tpu.memory_space<vmem>>, vector<1x128xf32>
    %550 = vector.broadcast %549 : vector<1x128xf32> to vector<8x128xf32>
    %551 = arith.addf %548, %550 : vector<8x128xf32>
    %552 = arith.mulf %545, %551 : vector<8x128xf32>
    %553 = arith.addf %547, %552 : vector<8x128xf32>
    %554 = math.tanh %553 : vector<8x128xf32>
    %cst_243 = arith.constant 1.000000e+00 : f32
    %555 = vector.broadcast %cst_243 : f32 to vector<8x128xf32>
    %556 = arith.subf %555, %546 : vector<8x128xf32>
    %557 = arith.mulf %556, %554 : vector<8x128xf32>
    %558 = arith.mulf %546, %531 : vector<8x128xf32>
    %559 = arith.addf %557, %558 : vector<8x128xf32>
    %c6_i32_244 = arith.constant 6 : i32
    %c1_i32_245 = arith.constant 1 : i32
    %560 = vector.broadcast %c6_i32_244 : i32 to vector<8x128xi32>
    %561 = vector.broadcast %c1_i32_245 : i32 to vector<8x128xi32>
    %562 = arith.select %3, %560, %561 : vector<8x128xi1>, vector<8x128xi32>
    %563 = vector.broadcast %0 : vector<8x1xi32> to vector<8x128xi32>
    %564 = arith.cmpi sgt, %563, %562 : vector<8x128xi32>
    %565 = arith.select %564, %559, %531 : vector<8x128xi1>, vector<8x128xf32>
    %c0_246 = arith.constant 0 : index
    %c0_247 = arith.constant 0 : index
    %566 = vector.load %arg10[%c0_246, %c0_247] : memref<128x384xf32, #tpu.memory_space<vmem>>, vector<128x384xf32>
    %cst_248 = arith.constant dense<0.000000e+00> : vector<8x384xf32>
    %567 = tpu.matmul %565, %566, %cst_248 {dimension_numbers = #tpu.dot_dimension_numbers<[1], [0], [0], [1], [0, 0, 1, 1], [], []>} : vector<8x128xf32>, vector<128x384xf32>, vector<8x384xf32> -> vector<8x384xf32>
    %c56_249 = arith.constant 56 : index
    %c0_250 = arith.constant 0 : index
    %568 = vector.load %arg13[%c56_249, %c0_250] : memref<64x384xf32, #tpu.memory_space<vmem>>, vector<8x384xf32>
    %569 = vector.extract_strided_slice %568 {offsets = [0, 0], sizes = [8, 256], strides = [1, 1]} : vector<8x384xf32> to vector<8x256xf32>
    %570 = vector.extract_strided_slice %567 {offsets = [0, 0], sizes = [8, 256], strides = [1, 1]} : vector<8x384xf32> to vector<8x256xf32>
    %571 = arith.addf %569, %570 : vector<8x256xf32>
    %cst_251 = arith.constant 5.000000e-01 : f32
    %572 = vector.broadcast %cst_251 : f32 to vector<8x256xf32>
    %573 = arith.mulf %572, %571 : vector<8x256xf32>
    %574 = math.tanh %573 : vector<8x256xf32>
    %cst_252 = arith.constant 1.000000e+00 : f32
    %575 = vector.broadcast %cst_252 : f32 to vector<8x256xf32>
    %576 = arith.addf %574, %575 : vector<8x256xf32>
    %cst_253 = arith.constant 5.000000e-01 : f32
    %577 = vector.broadcast %cst_253 : f32 to vector<8x256xf32>
    %578 = arith.mulf %577, %576 : vector<8x256xf32>
    %579 = vector.extract_strided_slice %578 {offsets = [0, 0], sizes = [8, 128], strides = [1, 1]} : vector<8x256xf32> to vector<8x128xf32>
    %580 = vector.extract_strided_slice %578 {offsets = [0, 128], sizes = [8, 128], strides = [1, 1]} : vector<8x256xf32> to vector<8x128xf32>
    %581 = vector.extract_strided_slice %568 {offsets = [0, 256], sizes = [8, 128], strides = [1, 1]} : vector<8x384xf32> to vector<8x128xf32>
    %582 = vector.extract_strided_slice %567 {offsets = [0, 256], sizes = [8, 128], strides = [1, 1]} : vector<8x384xf32> to vector<8x128xf32>
    %c0_254 = arith.constant 0 : index
    %c0_255 = arith.constant 0 : index
    %583 = vector.load %arg11[%c0_254, %c0_255] : memref<1x128xf32, #tpu.memory_space<vmem>>, vector<1x128xf32>
    %584 = vector.broadcast %583 : vector<1x128xf32> to vector<8x128xf32>
    %585 = arith.addf %582, %584 : vector<8x128xf32>
    %586 = arith.mulf %579, %585 : vector<8x128xf32>
    %587 = arith.addf %581, %586 : vector<8x128xf32>
    %588 = math.tanh %587 : vector<8x128xf32>
    %cst_256 = arith.constant 1.000000e+00 : f32
    %589 = vector.broadcast %cst_256 : f32 to vector<8x128xf32>
    %590 = arith.subf %589, %580 : vector<8x128xf32>
    %591 = arith.mulf %590, %588 : vector<8x128xf32>
    %592 = arith.mulf %580, %565 : vector<8x128xf32>
    %593 = arith.addf %591, %592 : vector<8x128xf32>
    %c7_i32_257 = arith.constant 7 : i32
    %c0_i32_258 = arith.constant 0 : i32
    %594 = vector.broadcast %c7_i32_257 : i32 to vector<8x128xi32>
    %595 = vector.broadcast %c0_i32_258 : i32 to vector<8x128xi32>
    %596 = arith.select %3, %594, %595 : vector<8x128xi1>, vector<8x128xi32>
    %597 = vector.broadcast %0 : vector<8x1xi32> to vector<8x128xi32>
    %598 = arith.cmpi sgt, %597, %596 : vector<8x128xi32>
    %599 = arith.select %598, %593, %565 : vector<8x128xi1>, vector<8x128xf32>
    %c0_259 = arith.constant 0 : index
    %c0_260 = arith.constant 0 : index
    %600 = vector.load %arg12[%c0_259, %c0_260] : memref<8x128xf32, #tpu.memory_space<vmem>>, vector<8x128xf32>
    tpu.vector_store %arg12[%c0_259, %c0_260], %599 {strides = array<i32>} : memref<8x128xf32, #tpu.memory_space<vmem>>, vector<8x128xf32>,
    return
  }
  func.func @transform_0(%arg0: i32) -> (i32, i32, i32) {
    %c0_i32 = arith.constant 0 : i32
    %c0_i32_0 = arith.constant 0 : i32
    %c0_i32_1 = arith.constant 0 : i32
    return %c0_i32, %arg0, %c0_i32_0 : i32, i32, i32
  }
  func.func @transform_1(%arg0: i32) -> (i32, i32) {
    %c0_i32 = arith.constant 0 : i32
    %c0_i32_0 = arith.constant 0 : i32
    return %arg0, %c0_i32 : i32, i32
  }
  func.func @transform_2(%arg0: i32) -> (i32, i32) {
    %c0_i32 = arith.constant 0 : i32
    %c0_i32_0 = arith.constant 0 : i32
    %c0_i32_1 = arith.constant 0 : i32
    return %c0_i32, %c0_i32_0 : i32, i32
  }
  func.func @transform_3(%arg0: i32) -> (i32, i32) {
    %c0_i32 = arith.constant 0 : i32
    %c0_i32_0 = arith.constant 0 : i32
    %c0_i32_1 = arith.constant 0 : i32
    return %c0_i32, %c0_i32_0 : i32, i32
  }
  func.func @transform_4(%arg0: i32) -> (i32, i32) {
    %c0_i32 = arith.constant 0 : i32
    %c0_i32_0 = arith.constant 0 : i32
    %c0_i32_1 = arith.constant 0 : i32
    return %c0_i32, %c0_i32_0 : i32, i32
  }
  func.func @transform_5(%arg0: i32) -> (i32, i32) {
    %c0_i32 = arith.constant 0 : i32
    %c0_i32_0 = arith.constant 0 : i32
    %c0_i32_1 = arith.constant 0 : i32
    return %c0_i32, %c0_i32_0 : i32, i32
  }
  func.func @transform_6(%arg0: i32) -> (i32, i32) {
    %c0_i32 = arith.constant 0 : i32
    %c0_i32_0 = arith.constant 0 : i32
    %c0_i32_1 = arith.constant 0 : i32
    return %c0_i32, %c0_i32_0 : i32, i32
  }
  func.func @transform_7(%arg0: i32) -> (i32, i32) {
    %c0_i32 = arith.constant 0 : i32
    %c0_i32_0 = arith.constant 0 : i32
    %c0_i32_1 = arith.constant 0 : i32
    return %c0_i32, %c0_i32_0 : i32, i32
  }
  func.func @transform_8(%arg0: i32) -> (i32, i32) {
    %c0_i32 = arith.constant 0 : i32
    %c0_i32_0 = arith.constant 0 : i32
    %c0_i32_1 = arith.constant 0 : i32
    return %c0_i32, %c0_i32_0 : i32, i32
  }
  func.func @transform_9(%arg0: i32) -> (i32, i32) {
    %c0_i32 = arith.constant 0 : i32
    %c0_i32_0 = arith.constant 0 : i32
    %c0_i32_1 = arith.constant 0 : i32
    return %c0_i32, %c0_i32_0 : i32, i32
  }
  func.func @transform_10(%arg0: i32) -> (i32, i32) {
    %c0_i32 = arith.constant 0 : i32
    %c0_i32_0 = arith.constant 0 : i32
    %c0_i32_1 = arith.constant 0 : i32
    return %c0_i32, %c0_i32_0 : i32, i32
  }
  func.func @transform_11(%arg0: i32) -> (i32, i32) {
    %c0_i32 = arith.constant 0 : i32
    %c0_i32_0 = arith.constant 0 : i32
    return %arg0, %c0_i32 : i32, i32
  }
}

module attributes {stable_mosaic.version = 11 : i64} {
  func.func @kernel(%arg0: i32, %arg1: memref<8x8x128xf32, #tpu.memory_space<vmem>>, %arg2: memref<8x1xi32, #tpu.memory_space<vmem>>, %arg3: memref<128x384xf32, #tpu.memory_space<vmem>>, %arg4: memref<1x384xf32, #tpu.memory_space<vmem>>, %arg5: memref<128x384xf32, #tpu.memory_space<vmem>>, %arg6: memref<1x128xf32, #tpu.memory_space<vmem>>, %arg7: memref<128x384xf32, #tpu.memory_space<vmem>>, %arg8: memref<1x384xf32, #tpu.memory_space<vmem>>, %arg9: memref<128x384xf32, #tpu.memory_space<vmem>>, %arg10: memref<1x128xf32, #tpu.memory_space<vmem>>, %arg11: memref<128x64xf32, #tpu.memory_space<vmem>>, %arg12: memref<1x64xf32, #tpu.memory_space<vmem>>, %arg13: memref<64x32xf32, #tpu.memory_space<vmem>>, %arg14: memref<1x32xf32, #tpu.memory_space<vmem>>, %arg15: memref<32x1xf32, #tpu.memory_space<vmem>>, %arg16: memref<1x1xf32, #tpu.memory_space<vmem>>, %arg17: memref<8x1xf32, #tpu.memory_space<vmem>>, %arg18: memref<64x384xf32, #tpu.memory_space<vmem>>, %arg19: memref<64x128xf32, #tpu.memory_space<vmem>>) attributes {dimension_semantics = [#tpu.dimension_semantics<parallel>], iteration_bounds = array<i64: 1>, scalar_prefetch = 0 : i64, scratch_operands = 2 : i64, tpu.core_type = #tpu.core_type<tc>, window_params = [{transform_indices = @transform_0, window_bounds = array<i64: 8, 8, 128>}, {transform_indices = @transform_1, window_bounds = array<i64: 8, 1>}, {pipeline_mode = #tpu.pipeline_mode<synchronous>, transform_indices = @transform_2, window_bounds = array<i64: 128, 384>}, {pipeline_mode = #tpu.pipeline_mode<synchronous>, transform_indices = @transform_3, window_bounds = array<i64: 1, 384>}, {pipeline_mode = #tpu.pipeline_mode<synchronous>, transform_indices = @transform_4, window_bounds = array<i64: 128, 384>}, {pipeline_mode = #tpu.pipeline_mode<synchronous>, transform_indices = @transform_5, window_bounds = array<i64: 1, 128>}, {pipeline_mode = #tpu.pipeline_mode<synchronous>, transform_indices = @transform_6, window_bounds = array<i64: 128, 384>}, {pipeline_mode = #tpu.pipeline_mode<synchronous>, transform_indices = @transform_7, window_bounds = array<i64: 1, 384>}, {pipeline_mode = #tpu.pipeline_mode<synchronous>, transform_indices = @transform_8, window_bounds = array<i64: 128, 384>}, {pipeline_mode = #tpu.pipeline_mode<synchronous>, transform_indices = @transform_9, window_bounds = array<i64: 1, 128>}, {pipeline_mode = #tpu.pipeline_mode<synchronous>, transform_indices = @transform_10, window_bounds = array<i64: 128, 64>}, {pipeline_mode = #tpu.pipeline_mode<synchronous>, transform_indices = @transform_11, window_bounds = array<i64: 1, 64>}, {pipeline_mode = #tpu.pipeline_mode<synchronous>, transform_indices = @transform_12, window_bounds = array<i64: 64, 32>}, {pipeline_mode = #tpu.pipeline_mode<synchronous>, transform_indices = @transform_13, window_bounds = array<i64: 1, 32>}, {pipeline_mode = #tpu.pipeline_mode<synchronous>, transform_indices = @transform_14, window_bounds = array<i64: 32, 1>}, {pipeline_mode = #tpu.pipeline_mode<synchronous>, transform_indices = @transform_15, window_bounds = array<i64: 1, 1>}, {transform_indices = @transform_16, window_bounds = array<i64: 8, 1>}]} {
    %c0 = arith.constant 0 : index
    %c0_0 = arith.constant 0 : index
    %0 = vector.load %arg2[%c0, %c0_0] : memref<8x1xi32, #tpu.memory_space<vmem>>, vector<8x1xi32>
    %c0_1 = arith.constant 0 : index
    %c0_2 = arith.constant 0 : index
    %c0_3 = arith.constant 0 : index
    %1 = vector.load %arg1[%c0_1, %c0_2, %c0_3] : memref<8x8x128xf32, #tpu.memory_space<vmem>>, vector<8x8x128xf32>
    %2 = vector.shape_cast %1 : vector<8x8x128xf32> to vector<64x128xf32>
    %c0_4 = arith.constant 0 : index
    %c0_5 = arith.constant 0 : index
    %3 = vector.load %arg3[%c0_4, %c0_5] : memref<128x384xf32, #tpu.memory_space<vmem>>, vector<128x384xf32>
    %cst = arith.constant dense<0.000000e+00> : vector<64x384xf32>
    %4 = tpu.matmul %2, %3, %cst {dimension_numbers = #tpu.dot_dimension_numbers<[1], [0], [0], [1], [0, 0, 1, 1], [], []>} : vector<64x128xf32>, vector<128x384xf32>, vector<64x384xf32> -> vector<64x384xf32>
    %c0_6 = arith.constant 0 : index
    %c0_7 = arith.constant 0 : index
    %5 = vector.load %arg4[%c0_6, %c0_7] : memref<1x384xf32, #tpu.memory_space<vmem>>, vector<1x384xf32>
    %6 = vector.broadcast %5 : vector<1x384xf32> to vector<64x384xf32>
    %7 = arith.addf %4, %6 : vector<64x384xf32>
    %c0_8 = arith.constant 0 : index
    %c0_9 = arith.constant 0 : index
    %8 = vector.load %arg18[%c0_8, %c0_9] : memref<64x384xf32, #tpu.memory_space<vmem>>, vector<64x384xf32>
    tpu.vector_store %arg18[%c0_8, %c0_9], %7 {strides = array<i32>} : memref<64x384xf32, #tpu.memory_space<vmem>>, vector<64x384xf32>,
    %cst_10 = arith.constant 0.000000e+00 : f32
    %9 = vector.broadcast %cst_10 : f32 to vector<8x128xf32>
    %c0_11 = arith.constant 0 : index
    %c0_12 = arith.constant 0 : index
    %10 = vector.load %arg5[%c0_11, %c0_12] : memref<128x384xf32, #tpu.memory_space<vmem>>, vector<128x384xf32>
    %cst_13 = arith.constant dense<0.000000e+00> : vector<8x384xf32>
    %11 = tpu.matmul %9, %10, %cst_13 {dimension_numbers = #tpu.dot_dimension_numbers<[1], [0], [0], [1], [0, 0, 1, 1], [], []>} : vector<8x128xf32>, vector<128x384xf32>, vector<8x384xf32> -> vector<8x384xf32>
    %c0_14 = arith.constant 0 : index
    %c0_15 = arith.constant 0 : index
    %12 = vector.load %arg18[%c0_14, %c0_15] : memref<64x384xf32, #tpu.memory_space<vmem>>, vector<8x384xf32>
    %13 = vector.extract_strided_slice %12 {offsets = [0, 0], sizes = [8, 256], strides = [1, 1]} : vector<8x384xf32> to vector<8x256xf32>
    %14 = vector.extract_strided_slice %11 {offsets = [0, 0], sizes = [8, 256], strides = [1, 1]} : vector<8x384xf32> to vector<8x256xf32>
    %15 = arith.addf %13, %14 : vector<8x256xf32>
    %cst_16 = arith.constant 5.000000e-01 : f32
    %16 = vector.broadcast %cst_16 : f32 to vector<8x256xf32>
    %17 = arith.mulf %16, %15 : vector<8x256xf32>
    %18 = math.tanh %17 : vector<8x256xf32>
    %cst_17 = arith.constant 1.000000e+00 : f32
    %19 = vector.broadcast %cst_17 : f32 to vector<8x256xf32>
    %20 = arith.addf %18, %19 : vector<8x256xf32>
    %cst_18 = arith.constant 5.000000e-01 : f32
    %21 = vector.broadcast %cst_18 : f32 to vector<8x256xf32>
    %22 = arith.mulf %21, %20 : vector<8x256xf32>
    %23 = vector.extract_strided_slice %22 {offsets = [0, 0], sizes = [8, 128], strides = [1, 1]} : vector<8x256xf32> to vector<8x128xf32>
    %24 = vector.extract_strided_slice %22 {offsets = [0, 128], sizes = [8, 128], strides = [1, 1]} : vector<8x256xf32> to vector<8x128xf32>
    %25 = vector.extract_strided_slice %12 {offsets = [0, 256], sizes = [8, 128], strides = [1, 1]} : vector<8x384xf32> to vector<8x128xf32>
    %26 = vector.extract_strided_slice %11 {offsets = [0, 256], sizes = [8, 128], strides = [1, 1]} : vector<8x384xf32> to vector<8x128xf32>
    %c0_19 = arith.constant 0 : index
    %c0_20 = arith.constant 0 : index
    %27 = vector.load %arg6[%c0_19, %c0_20] : memref<1x128xf32, #tpu.memory_space<vmem>>, vector<1x128xf32>
    %28 = vector.broadcast %27 : vector<1x128xf32> to vector<8x128xf32>
    %29 = arith.addf %26, %28 : vector<8x128xf32>
    %30 = arith.mulf %23, %29 : vector<8x128xf32>
    %31 = arith.addf %25, %30 : vector<8x128xf32>
    %32 = math.tanh %31 : vector<8x128xf32>
    %cst_21 = arith.constant 1.000000e+00 : f32
    %33 = vector.broadcast %cst_21 : f32 to vector<8x128xf32>
    %34 = arith.subf %33, %24 : vector<8x128xf32>
    %35 = arith.mulf %34, %32 : vector<8x128xf32>
    %36 = arith.mulf %24, %9 : vector<8x128xf32>
    %37 = arith.addf %35, %36 : vector<8x128xf32>
    %c0_i32 = arith.constant 0 : i32
    %38 = vector.broadcast %c0_i32 : i32 to vector<8x1xi32>
    %39 = arith.cmpi sgt, %0, %38 : vector<8x1xi32>
    %cst_22 = arith.constant 0.000000e+00 : f32
    %40 = vector.shape_cast %39 : vector<8x1xi1> to vector<8x1xi1>
    %41 = vector.broadcast %40 : vector<8x1xi1> to vector<8x128xi1>
    %42 = vector.broadcast %cst_22 : f32 to vector<8x128xf32>
    %43 = arith.select %41, %37, %42 : vector<8x128xi1>, vector<8x128xf32>
    %c0_23 = arith.constant 0 : index
    %c0_24 = arith.constant 0 : index
    %44 = vector.load %arg19[%c0_23, %c0_24] : memref<64x128xf32, #tpu.memory_space<vmem>>, vector<8x128xf32>
    tpu.vector_store %arg19[%c0_23, %c0_24], %43 {strides = array<i32>} : memref<64x128xf32, #tpu.memory_space<vmem>>, vector<8x128xf32>,
    %45 = vector.shape_cast %39 : vector<8x1xi1> to vector<8x1xi1>
    %46 = vector.broadcast %45 : vector<8x1xi1> to vector<8x128xi1>
    %47 = arith.select %46, %37, %9 : vector<8x128xi1>, vector<8x128xf32>
    %c0_25 = arith.constant 0 : index
    %c0_26 = arith.constant 0 : index
    %48 = vector.load %arg5[%c0_25, %c0_26] : memref<128x384xf32, #tpu.memory_space<vmem>>, vector<128x384xf32>
    %cst_27 = arith.constant dense<0.000000e+00> : vector<8x384xf32>
    %49 = tpu.matmul %47, %48, %cst_27 {dimension_numbers = #tpu.dot_dimension_numbers<[1], [0], [0], [1], [0, 0, 1, 1], [], []>} : vector<8x128xf32>, vector<128x384xf32>, vector<8x384xf32> -> vector<8x384xf32>
    %c8 = arith.constant 8 : index
    %c0_28 = arith.constant 0 : index
    %50 = vector.load %arg18[%c8, %c0_28] : memref<64x384xf32, #tpu.memory_space<vmem>>, vector<8x384xf32>
    %51 = vector.extract_strided_slice %50 {offsets = [0, 0], sizes = [8, 256], strides = [1, 1]} : vector<8x384xf32> to vector<8x256xf32>
    %52 = vector.extract_strided_slice %49 {offsets = [0, 0], sizes = [8, 256], strides = [1, 1]} : vector<8x384xf32> to vector<8x256xf32>
    %53 = arith.addf %51, %52 : vector<8x256xf32>
    %cst_29 = arith.constant 5.000000e-01 : f32
    %54 = vector.broadcast %cst_29 : f32 to vector<8x256xf32>
    %55 = arith.mulf %54, %53 : vector<8x256xf32>
    %56 = math.tanh %55 : vector<8x256xf32>
    %cst_30 = arith.constant 1.000000e+00 : f32
    %57 = vector.broadcast %cst_30 : f32 to vector<8x256xf32>
    %58 = arith.addf %56, %57 : vector<8x256xf32>
    %cst_31 = arith.constant 5.000000e-01 : f32
    %59 = vector.broadcast %cst_31 : f32 to vector<8x256xf32>
    %60 = arith.mulf %59, %58 : vector<8x256xf32>
    %61 = vector.extract_strided_slice %60 {offsets = [0, 0], sizes = [8, 128], strides = [1, 1]} : vector<8x256xf32> to vector<8x128xf32>
    %62 = vector.extract_strided_slice %60 {offsets = [0, 128], sizes = [8, 128], strides = [1, 1]} : vector<8x256xf32> to vector<8x128xf32>
    %63 = vector.extract_strided_slice %50 {offsets = [0, 256], sizes = [8, 128], strides = [1, 1]} : vector<8x384xf32> to vector<8x128xf32>
    %64 = vector.extract_strided_slice %49 {offsets = [0, 256], sizes = [8, 128], strides = [1, 1]} : vector<8x384xf32> to vector<8x128xf32>
    %c0_32 = arith.constant 0 : index
    %c0_33 = arith.constant 0 : index
    %65 = vector.load %arg6[%c0_32, %c0_33] : memref<1x128xf32, #tpu.memory_space<vmem>>, vector<1x128xf32>
    %66 = vector.broadcast %65 : vector<1x128xf32> to vector<8x128xf32>
    %67 = arith.addf %64, %66 : vector<8x128xf32>
    %68 = arith.mulf %61, %67 : vector<8x128xf32>
    %69 = arith.addf %63, %68 : vector<8x128xf32>
    %70 = math.tanh %69 : vector<8x128xf32>
    %cst_34 = arith.constant 1.000000e+00 : f32
    %71 = vector.broadcast %cst_34 : f32 to vector<8x128xf32>
    %72 = arith.subf %71, %62 : vector<8x128xf32>
    %73 = arith.mulf %72, %70 : vector<8x128xf32>
    %74 = arith.mulf %62, %47 : vector<8x128xf32>
    %75 = arith.addf %73, %74 : vector<8x128xf32>
    %c1_i32 = arith.constant 1 : i32
    %76 = vector.broadcast %c1_i32 : i32 to vector<8x1xi32>
    %77 = arith.cmpi sgt, %0, %76 : vector<8x1xi32>
    %cst_35 = arith.constant 0.000000e+00 : f32
    %78 = vector.shape_cast %77 : vector<8x1xi1> to vector<8x1xi1>
    %79 = vector.broadcast %78 : vector<8x1xi1> to vector<8x128xi1>
    %80 = vector.broadcast %cst_35 : f32 to vector<8x128xf32>
    %81 = arith.select %79, %75, %80 : vector<8x128xi1>, vector<8x128xf32>
    %c8_36 = arith.constant 8 : index
    %c0_37 = arith.constant 0 : index
    %82 = vector.load %arg19[%c8_36, %c0_37] : memref<64x128xf32, #tpu.memory_space<vmem>>, vector<8x128xf32>
    tpu.vector_store %arg19[%c8_36, %c0_37], %81 {strides = array<i32>} : memref<64x128xf32, #tpu.memory_space<vmem>>, vector<8x128xf32>,
    %83 = vector.shape_cast %77 : vector<8x1xi1> to vector<8x1xi1>
    %84 = vector.broadcast %83 : vector<8x1xi1> to vector<8x128xi1>
    %85 = arith.select %84, %75, %47 : vector<8x128xi1>, vector<8x128xf32>
    %c0_38 = arith.constant 0 : index
    %c0_39 = arith.constant 0 : index
    %86 = vector.load %arg5[%c0_38, %c0_39] : memref<128x384xf32, #tpu.memory_space<vmem>>, vector<128x384xf32>
    %cst_40 = arith.constant dense<0.000000e+00> : vector<8x384xf32>
    %87 = tpu.matmul %85, %86, %cst_40 {dimension_numbers = #tpu.dot_dimension_numbers<[1], [0], [0], [1], [0, 0, 1, 1], [], []>} : vector<8x128xf32>, vector<128x384xf32>, vector<8x384xf32> -> vector<8x384xf32>
    %c16 = arith.constant 16 : index
    %c0_41 = arith.constant 0 : index
    %88 = vector.load %arg18[%c16, %c0_41] : memref<64x384xf32, #tpu.memory_space<vmem>>, vector<8x384xf32>
    %89 = vector.extract_strided_slice %88 {offsets = [0, 0], sizes = [8, 256], strides = [1, 1]} : vector<8x384xf32> to vector<8x256xf32>
    %90 = vector.extract_strided_slice %87 {offsets = [0, 0], sizes = [8, 256], strides = [1, 1]} : vector<8x384xf32> to vector<8x256xf32>
    %91 = arith.addf %89, %90 : vector<8x256xf32>
    %cst_42 = arith.constant 5.000000e-01 : f32
    %92 = vector.broadcast %cst_42 : f32 to vector<8x256xf32>
    %93 = arith.mulf %92, %91 : vector<8x256xf32>
    %94 = math.tanh %93 : vector<8x256xf32>
    %cst_43 = arith.constant 1.000000e+00 : f32
    %95 = vector.broadcast %cst_43 : f32 to vector<8x256xf32>
    %96 = arith.addf %94, %95 : vector<8x256xf32>
    %cst_44 = arith.constant 5.000000e-01 : f32
    %97 = vector.broadcast %cst_44 : f32 to vector<8x256xf32>
    %98 = arith.mulf %97, %96 : vector<8x256xf32>
    %99 = vector.extract_strided_slice %98 {offsets = [0, 0], sizes = [8, 128], strides = [1, 1]} : vector<8x256xf32> to vector<8x128xf32>
    %100 = vector.extract_strided_slice %98 {offsets = [0, 128], sizes = [8, 128], strides = [1, 1]} : vector<8x256xf32> to vector<8x128xf32>
    %101 = vector.extract_strided_slice %88 {offsets = [0, 256], sizes = [8, 128], strides = [1, 1]} : vector<8x384xf32> to vector<8x128xf32>
    %102 = vector.extract_strided_slice %87 {offsets = [0, 256], sizes = [8, 128], strides = [1, 1]} : vector<8x384xf32> to vector<8x128xf32>
    %c0_45 = arith.constant 0 : index
    %c0_46 = arith.constant 0 : index
    %103 = vector.load %arg6[%c0_45, %c0_46] : memref<1x128xf32, #tpu.memory_space<vmem>>, vector<1x128xf32>
    %104 = vector.broadcast %103 : vector<1x128xf32> to vector<8x128xf32>
    %105 = arith.addf %102, %104 : vector<8x128xf32>
    %106 = arith.mulf %99, %105 : vector<8x128xf32>
    %107 = arith.addf %101, %106 : vector<8x128xf32>
    %108 = math.tanh %107 : vector<8x128xf32>
    %cst_47 = arith.constant 1.000000e+00 : f32
    %109 = vector.broadcast %cst_47 : f32 to vector<8x128xf32>
    %110 = arith.subf %109, %100 : vector<8x128xf32>
    %111 = arith.mulf %110, %108 : vector<8x128xf32>
    %112 = arith.mulf %100, %85 : vector<8x128xf32>
    %113 = arith.addf %111, %112 : vector<8x128xf32>
    %c2_i32 = arith.constant 2 : i32
    %114 = vector.broadcast %c2_i32 : i32 to vector<8x1xi32>
    %115 = arith.cmpi sgt, %0, %114 : vector<8x1xi32>
    %cst_48 = arith.constant 0.000000e+00 : f32
    %116 = vector.shape_cast %115 : vector<8x1xi1> to vector<8x1xi1>
    %117 = vector.broadcast %116 : vector<8x1xi1> to vector<8x128xi1>
    %118 = vector.broadcast %cst_48 : f32 to vector<8x128xf32>
    %119 = arith.select %117, %113, %118 : vector<8x128xi1>, vector<8x128xf32>
    %c16_49 = arith.constant 16 : index
    %c0_50 = arith.constant 0 : index
    %120 = vector.load %arg19[%c16_49, %c0_50] : memref<64x128xf32, #tpu.memory_space<vmem>>, vector<8x128xf32>
    tpu.vector_store %arg19[%c16_49, %c0_50], %119 {strides = array<i32>} : memref<64x128xf32, #tpu.memory_space<vmem>>, vector<8x128xf32>,
    %121 = vector.shape_cast %115 : vector<8x1xi1> to vector<8x1xi1>
    %122 = vector.broadcast %121 : vector<8x1xi1> to vector<8x128xi1>
    %123 = arith.select %122, %113, %85 : vector<8x128xi1>, vector<8x128xf32>
    %c0_51 = arith.constant 0 : index
    %c0_52 = arith.constant 0 : index
    %124 = vector.load %arg5[%c0_51, %c0_52] : memref<128x384xf32, #tpu.memory_space<vmem>>, vector<128x384xf32>
    %cst_53 = arith.constant dense<0.000000e+00> : vector<8x384xf32>
    %125 = tpu.matmul %123, %124, %cst_53 {dimension_numbers = #tpu.dot_dimension_numbers<[1], [0], [0], [1], [0, 0, 1, 1], [], []>} : vector<8x128xf32>, vector<128x384xf32>, vector<8x384xf32> -> vector<8x384xf32>
    %c24 = arith.constant 24 : index
    %c0_54 = arith.constant 0 : index
    %126 = vector.load %arg18[%c24, %c0_54] : memref<64x384xf32, #tpu.memory_space<vmem>>, vector<8x384xf32>
    %127 = vector.extract_strided_slice %126 {offsets = [0, 0], sizes = [8, 256], strides = [1, 1]} : vector<8x384xf32> to vector<8x256xf32>
    %128 = vector.extract_strided_slice %125 {offsets = [0, 0], sizes = [8, 256], strides = [1, 1]} : vector<8x384xf32> to vector<8x256xf32>
    %129 = arith.addf %127, %128 : vector<8x256xf32>
    %cst_55 = arith.constant 5.000000e-01 : f32
    %130 = vector.broadcast %cst_55 : f32 to vector<8x256xf32>
    %131 = arith.mulf %130, %129 : vector<8x256xf32>
    %132 = math.tanh %131 : vector<8x256xf32>
    %cst_56 = arith.constant 1.000000e+00 : f32
    %133 = vector.broadcast %cst_56 : f32 to vector<8x256xf32>
    %134 = arith.addf %132, %133 : vector<8x256xf32>
    %cst_57 = arith.constant 5.000000e-01 : f32
    %135 = vector.broadcast %cst_57 : f32 to vector<8x256xf32>
    %136 = arith.mulf %135, %134 : vector<8x256xf32>
    %137 = vector.extract_strided_slice %136 {offsets = [0, 0], sizes = [8, 128], strides = [1, 1]} : vector<8x256xf32> to vector<8x128xf32>
    %138 = vector.extract_strided_slice %136 {offsets = [0, 128], sizes = [8, 128], strides = [1, 1]} : vector<8x256xf32> to vector<8x128xf32>
    %139 = vector.extract_strided_slice %126 {offsets = [0, 256], sizes = [8, 128], strides = [1, 1]} : vector<8x384xf32> to vector<8x128xf32>
    %140 = vector.extract_strided_slice %125 {offsets = [0, 256], sizes = [8, 128], strides = [1, 1]} : vector<8x384xf32> to vector<8x128xf32>
    %c0_58 = arith.constant 0 : index
    %c0_59 = arith.constant 0 : index
    %141 = vector.load %arg6[%c0_58, %c0_59] : memref<1x128xf32, #tpu.memory_space<vmem>>, vector<1x128xf32>
    %142 = vector.broadcast %141 : vector<1x128xf32> to vector<8x128xf32>
    %143 = arith.addf %140, %142 : vector<8x128xf32>
    %144 = arith.mulf %137, %143 : vector<8x128xf32>
    %145 = arith.addf %139, %144 : vector<8x128xf32>
    %146 = math.tanh %145 : vector<8x128xf32>
    %cst_60 = arith.constant 1.000000e+00 : f32
    %147 = vector.broadcast %cst_60 : f32 to vector<8x128xf32>
    %148 = arith.subf %147, %138 : vector<8x128xf32>
    %149 = arith.mulf %148, %146 : vector<8x128xf32>
    %150 = arith.mulf %138, %123 : vector<8x128xf32>
    %151 = arith.addf %149, %150 : vector<8x128xf32>
    %c3_i32 = arith.constant 3 : i32
    %152 = vector.broadcast %c3_i32 : i32 to vector<8x1xi32>
    %153 = arith.cmpi sgt, %0, %152 : vector<8x1xi32>
    %cst_61 = arith.constant 0.000000e+00 : f32
    %154 = vector.shape_cast %153 : vector<8x1xi1> to vector<8x1xi1>
    %155 = vector.broadcast %154 : vector<8x1xi1> to vector<8x128xi1>
    %156 = vector.broadcast %cst_61 : f32 to vector<8x128xf32>
    %157 = arith.select %155, %151, %156 : vector<8x128xi1>, vector<8x128xf32>
    %c24_62 = arith.constant 24 : index
    %c0_63 = arith.constant 0 : index
    %158 = vector.load %arg19[%c24_62, %c0_63] : memref<64x128xf32, #tpu.memory_space<vmem>>, vector<8x128xf32>
    tpu.vector_store %arg19[%c24_62, %c0_63], %157 {strides = array<i32>} : memref<64x128xf32, #tpu.memory_space<vmem>>, vector<8x128xf32>,
    %159 = vector.shape_cast %153 : vector<8x1xi1> to vector<8x1xi1>
    %160 = vector.broadcast %159 : vector<8x1xi1> to vector<8x128xi1>
    %161 = arith.select %160, %151, %123 : vector<8x128xi1>, vector<8x128xf32>
    %c0_64 = arith.constant 0 : index
    %c0_65 = arith.constant 0 : index
    %162 = vector.load %arg5[%c0_64, %c0_65] : memref<128x384xf32, #tpu.memory_space<vmem>>, vector<128x384xf32>
    %cst_66 = arith.constant dense<0.000000e+00> : vector<8x384xf32>
    %163 = tpu.matmul %161, %162, %cst_66 {dimension_numbers = #tpu.dot_dimension_numbers<[1], [0], [0], [1], [0, 0, 1, 1], [], []>} : vector<8x128xf32>, vector<128x384xf32>, vector<8x384xf32> -> vector<8x384xf32>
    %c32 = arith.constant 32 : index
    %c0_67 = arith.constant 0 : index
    %164 = vector.load %arg18[%c32, %c0_67] : memref<64x384xf32, #tpu.memory_space<vmem>>, vector<8x384xf32>
    %165 = vector.extract_strided_slice %164 {offsets = [0, 0], sizes = [8, 256], strides = [1, 1]} : vector<8x384xf32> to vector<8x256xf32>
    %166 = vector.extract_strided_slice %163 {offsets = [0, 0], sizes = [8, 256], strides = [1, 1]} : vector<8x384xf32> to vector<8x256xf32>
    %167 = arith.addf %165, %166 : vector<8x256xf32>
    %cst_68 = arith.constant 5.000000e-01 : f32
    %168 = vector.broadcast %cst_68 : f32 to vector<8x256xf32>
    %169 = arith.mulf %168, %167 : vector<8x256xf32>
    %170 = math.tanh %169 : vector<8x256xf32>
    %cst_69 = arith.constant 1.000000e+00 : f32
    %171 = vector.broadcast %cst_69 : f32 to vector<8x256xf32>
    %172 = arith.addf %170, %171 : vector<8x256xf32>
    %cst_70 = arith.constant 5.000000e-01 : f32
    %173 = vector.broadcast %cst_70 : f32 to vector<8x256xf32>
    %174 = arith.mulf %173, %172 : vector<8x256xf32>
    %175 = vector.extract_strided_slice %174 {offsets = [0, 0], sizes = [8, 128], strides = [1, 1]} : vector<8x256xf32> to vector<8x128xf32>
    %176 = vector.extract_strided_slice %174 {offsets = [0, 128], sizes = [8, 128], strides = [1, 1]} : vector<8x256xf32> to vector<8x128xf32>
    %177 = vector.extract_strided_slice %164 {offsets = [0, 256], sizes = [8, 128], strides = [1, 1]} : vector<8x384xf32> to vector<8x128xf32>
    %178 = vector.extract_strided_slice %163 {offsets = [0, 256], sizes = [8, 128], strides = [1, 1]} : vector<8x384xf32> to vector<8x128xf32>
    %c0_71 = arith.constant 0 : index
    %c0_72 = arith.constant 0 : index
    %179 = vector.load %arg6[%c0_71, %c0_72] : memref<1x128xf32, #tpu.memory_space<vmem>>, vector<1x128xf32>
    %180 = vector.broadcast %179 : vector<1x128xf32> to vector<8x128xf32>
    %181 = arith.addf %178, %180 : vector<8x128xf32>
    %182 = arith.mulf %175, %181 : vector<8x128xf32>
    %183 = arith.addf %177, %182 : vector<8x128xf32>
    %184 = math.tanh %183 : vector<8x128xf32>
    %cst_73 = arith.constant 1.000000e+00 : f32
    %185 = vector.broadcast %cst_73 : f32 to vector<8x128xf32>
    %186 = arith.subf %185, %176 : vector<8x128xf32>
    %187 = arith.mulf %186, %184 : vector<8x128xf32>
    %188 = arith.mulf %176, %161 : vector<8x128xf32>
    %189 = arith.addf %187, %188 : vector<8x128xf32>
    %c4_i32 = arith.constant 4 : i32
    %190 = vector.broadcast %c4_i32 : i32 to vector<8x1xi32>
    %191 = arith.cmpi sgt, %0, %190 : vector<8x1xi32>
    %cst_74 = arith.constant 0.000000e+00 : f32
    %192 = vector.shape_cast %191 : vector<8x1xi1> to vector<8x1xi1>
    %193 = vector.broadcast %192 : vector<8x1xi1> to vector<8x128xi1>
    %194 = vector.broadcast %cst_74 : f32 to vector<8x128xf32>
    %195 = arith.select %193, %189, %194 : vector<8x128xi1>, vector<8x128xf32>
    %c32_75 = arith.constant 32 : index
    %c0_76 = arith.constant 0 : index
    %196 = vector.load %arg19[%c32_75, %c0_76] : memref<64x128xf32, #tpu.memory_space<vmem>>, vector<8x128xf32>
    tpu.vector_store %arg19[%c32_75, %c0_76], %195 {strides = array<i32>} : memref<64x128xf32, #tpu.memory_space<vmem>>, vector<8x128xf32>,
    %197 = vector.shape_cast %191 : vector<8x1xi1> to vector<8x1xi1>
    %198 = vector.broadcast %197 : vector<8x1xi1> to vector<8x128xi1>
    %199 = arith.select %198, %189, %161 : vector<8x128xi1>, vector<8x128xf32>
    %c0_77 = arith.constant 0 : index
    %c0_78 = arith.constant 0 : index
    %200 = vector.load %arg5[%c0_77, %c0_78] : memref<128x384xf32, #tpu.memory_space<vmem>>, vector<128x384xf32>
    %cst_79 = arith.constant dense<0.000000e+00> : vector<8x384xf32>
    %201 = tpu.matmul %199, %200, %cst_79 {dimension_numbers = #tpu.dot_dimension_numbers<[1], [0], [0], [1], [0, 0, 1, 1], [], []>} : vector<8x128xf32>, vector<128x384xf32>, vector<8x384xf32> -> vector<8x384xf32>
    %c40 = arith.constant 40 : index
    %c0_80 = arith.constant 0 : index
    %202 = vector.load %arg18[%c40, %c0_80] : memref<64x384xf32, #tpu.memory_space<vmem>>, vector<8x384xf32>
    %203 = vector.extract_strided_slice %202 {offsets = [0, 0], sizes = [8, 256], strides = [1, 1]} : vector<8x384xf32> to vector<8x256xf32>
    %204 = vector.extract_strided_slice %201 {offsets = [0, 0], sizes = [8, 256], strides = [1, 1]} : vector<8x384xf32> to vector<8x256xf32>
    %205 = arith.addf %203, %204 : vector<8x256xf32>
    %cst_81 = arith.constant 5.000000e-01 : f32
    %206 = vector.broadcast %cst_81 : f32 to vector<8x256xf32>
    %207 = arith.mulf %206, %205 : vector<8x256xf32>
    %208 = math.tanh %207 : vector<8x256xf32>
    %cst_82 = arith.constant 1.000000e+00 : f32
    %209 = vector.broadcast %cst_82 : f32 to vector<8x256xf32>
    %210 = arith.addf %208, %209 : vector<8x256xf32>
    %cst_83 = arith.constant 5.000000e-01 : f32
    %211 = vector.broadcast %cst_83 : f32 to vector<8x256xf32>
    %212 = arith.mulf %211, %210 : vector<8x256xf32>
    %213 = vector.extract_strided_slice %212 {offsets = [0, 0], sizes = [8, 128], strides = [1, 1]} : vector<8x256xf32> to vector<8x128xf32>
    %214 = vector.extract_strided_slice %212 {offsets = [0, 128], sizes = [8, 128], strides = [1, 1]} : vector<8x256xf32> to vector<8x128xf32>
    %215 = vector.extract_strided_slice %202 {offsets = [0, 256], sizes = [8, 128], strides = [1, 1]} : vector<8x384xf32> to vector<8x128xf32>
    %216 = vector.extract_strided_slice %201 {offsets = [0, 256], sizes = [8, 128], strides = [1, 1]} : vector<8x384xf32> to vector<8x128xf32>
    %c0_84 = arith.constant 0 : index
    %c0_85 = arith.constant 0 : index
    %217 = vector.load %arg6[%c0_84, %c0_85] : memref<1x128xf32, #tpu.memory_space<vmem>>, vector<1x128xf32>
    %218 = vector.broadcast %217 : vector<1x128xf32> to vector<8x128xf32>
    %219 = arith.addf %216, %218 : vector<8x128xf32>
    %220 = arith.mulf %213, %219 : vector<8x128xf32>
    %221 = arith.addf %215, %220 : vector<8x128xf32>
    %222 = math.tanh %221 : vector<8x128xf32>
    %cst_86 = arith.constant 1.000000e+00 : f32
    %223 = vector.broadcast %cst_86 : f32 to vector<8x128xf32>
    %224 = arith.subf %223, %214 : vector<8x128xf32>
    %225 = arith.mulf %224, %222 : vector<8x128xf32>
    %226 = arith.mulf %214, %199 : vector<8x128xf32>
    %227 = arith.addf %225, %226 : vector<8x128xf32>
    %c5_i32 = arith.constant 5 : i32
    %228 = vector.broadcast %c5_i32 : i32 to vector<8x1xi32>
    %229 = arith.cmpi sgt, %0, %228 : vector<8x1xi32>
    %cst_87 = arith.constant 0.000000e+00 : f32
    %230 = vector.shape_cast %229 : vector<8x1xi1> to vector<8x1xi1>
    %231 = vector.broadcast %230 : vector<8x1xi1> to vector<8x128xi1>
    %232 = vector.broadcast %cst_87 : f32 to vector<8x128xf32>
    %233 = arith.select %231, %227, %232 : vector<8x128xi1>, vector<8x128xf32>
    %c40_88 = arith.constant 40 : index
    %c0_89 = arith.constant 0 : index
    %234 = vector.load %arg19[%c40_88, %c0_89] : memref<64x128xf32, #tpu.memory_space<vmem>>, vector<8x128xf32>
    tpu.vector_store %arg19[%c40_88, %c0_89], %233 {strides = array<i32>} : memref<64x128xf32, #tpu.memory_space<vmem>>, vector<8x128xf32>,
    %235 = vector.shape_cast %229 : vector<8x1xi1> to vector<8x1xi1>
    %236 = vector.broadcast %235 : vector<8x1xi1> to vector<8x128xi1>
    %237 = arith.select %236, %227, %199 : vector<8x128xi1>, vector<8x128xf32>
    %c0_90 = arith.constant 0 : index
    %c0_91 = arith.constant 0 : index
    %238 = vector.load %arg5[%c0_90, %c0_91] : memref<128x384xf32, #tpu.memory_space<vmem>>, vector<128x384xf32>
    %cst_92 = arith.constant dense<0.000000e+00> : vector<8x384xf32>
    %239 = tpu.matmul %237, %238, %cst_92 {dimension_numbers = #tpu.dot_dimension_numbers<[1], [0], [0], [1], [0, 0, 1, 1], [], []>} : vector<8x128xf32>, vector<128x384xf32>, vector<8x384xf32> -> vector<8x384xf32>
    %c48 = arith.constant 48 : index
    %c0_93 = arith.constant 0 : index
    %240 = vector.load %arg18[%c48, %c0_93] : memref<64x384xf32, #tpu.memory_space<vmem>>, vector<8x384xf32>
    %241 = vector.extract_strided_slice %240 {offsets = [0, 0], sizes = [8, 256], strides = [1, 1]} : vector<8x384xf32> to vector<8x256xf32>
    %242 = vector.extract_strided_slice %239 {offsets = [0, 0], sizes = [8, 256], strides = [1, 1]} : vector<8x384xf32> to vector<8x256xf32>
    %243 = arith.addf %241, %242 : vector<8x256xf32>
    %cst_94 = arith.constant 5.000000e-01 : f32
    %244 = vector.broadcast %cst_94 : f32 to vector<8x256xf32>
    %245 = arith.mulf %244, %243 : vector<8x256xf32>
    %246 = math.tanh %245 : vector<8x256xf32>
    %cst_95 = arith.constant 1.000000e+00 : f32
    %247 = vector.broadcast %cst_95 : f32 to vector<8x256xf32>
    %248 = arith.addf %246, %247 : vector<8x256xf32>
    %cst_96 = arith.constant 5.000000e-01 : f32
    %249 = vector.broadcast %cst_96 : f32 to vector<8x256xf32>
    %250 = arith.mulf %249, %248 : vector<8x256xf32>
    %251 = vector.extract_strided_slice %250 {offsets = [0, 0], sizes = [8, 128], strides = [1, 1]} : vector<8x256xf32> to vector<8x128xf32>
    %252 = vector.extract_strided_slice %250 {offsets = [0, 128], sizes = [8, 128], strides = [1, 1]} : vector<8x256xf32> to vector<8x128xf32>
    %253 = vector.extract_strided_slice %240 {offsets = [0, 256], sizes = [8, 128], strides = [1, 1]} : vector<8x384xf32> to vector<8x128xf32>
    %254 = vector.extract_strided_slice %239 {offsets = [0, 256], sizes = [8, 128], strides = [1, 1]} : vector<8x384xf32> to vector<8x128xf32>
    %c0_97 = arith.constant 0 : index
    %c0_98 = arith.constant 0 : index
    %255 = vector.load %arg6[%c0_97, %c0_98] : memref<1x128xf32, #tpu.memory_space<vmem>>, vector<1x128xf32>
    %256 = vector.broadcast %255 : vector<1x128xf32> to vector<8x128xf32>
    %257 = arith.addf %254, %256 : vector<8x128xf32>
    %258 = arith.mulf %251, %257 : vector<8x128xf32>
    %259 = arith.addf %253, %258 : vector<8x128xf32>
    %260 = math.tanh %259 : vector<8x128xf32>
    %cst_99 = arith.constant 1.000000e+00 : f32
    %261 = vector.broadcast %cst_99 : f32 to vector<8x128xf32>
    %262 = arith.subf %261, %252 : vector<8x128xf32>
    %263 = arith.mulf %262, %260 : vector<8x128xf32>
    %264 = arith.mulf %252, %237 : vector<8x128xf32>
    %265 = arith.addf %263, %264 : vector<8x128xf32>
    %c6_i32 = arith.constant 6 : i32
    %266 = vector.broadcast %c6_i32 : i32 to vector<8x1xi32>
    %267 = arith.cmpi sgt, %0, %266 : vector<8x1xi32>
    %cst_100 = arith.constant 0.000000e+00 : f32
    %268 = vector.shape_cast %267 : vector<8x1xi1> to vector<8x1xi1>
    %269 = vector.broadcast %268 : vector<8x1xi1> to vector<8x128xi1>
    %270 = vector.broadcast %cst_100 : f32 to vector<8x128xf32>
    %271 = arith.select %269, %265, %270 : vector<8x128xi1>, vector<8x128xf32>
    %c48_101 = arith.constant 48 : index
    %c0_102 = arith.constant 0 : index
    %272 = vector.load %arg19[%c48_101, %c0_102] : memref<64x128xf32, #tpu.memory_space<vmem>>, vector<8x128xf32>
    tpu.vector_store %arg19[%c48_101, %c0_102], %271 {strides = array<i32>} : memref<64x128xf32, #tpu.memory_space<vmem>>, vector<8x128xf32>,
    %273 = vector.shape_cast %267 : vector<8x1xi1> to vector<8x1xi1>
    %274 = vector.broadcast %273 : vector<8x1xi1> to vector<8x128xi1>
    %275 = arith.select %274, %265, %237 : vector<8x128xi1>, vector<8x128xf32>
    %c0_103 = arith.constant 0 : index
    %c0_104 = arith.constant 0 : index
    %276 = vector.load %arg5[%c0_103, %c0_104] : memref<128x384xf32, #tpu.memory_space<vmem>>, vector<128x384xf32>
    %cst_105 = arith.constant dense<0.000000e+00> : vector<8x384xf32>
    %277 = tpu.matmul %275, %276, %cst_105 {dimension_numbers = #tpu.dot_dimension_numbers<[1], [0], [0], [1], [0, 0, 1, 1], [], []>} : vector<8x128xf32>, vector<128x384xf32>, vector<8x384xf32> -> vector<8x384xf32>
    %c56 = arith.constant 56 : index
    %c0_106 = arith.constant 0 : index
    %278 = vector.load %arg18[%c56, %c0_106] : memref<64x384xf32, #tpu.memory_space<vmem>>, vector<8x384xf32>
    %279 = vector.extract_strided_slice %278 {offsets = [0, 0], sizes = [8, 256], strides = [1, 1]} : vector<8x384xf32> to vector<8x256xf32>
    %280 = vector.extract_strided_slice %277 {offsets = [0, 0], sizes = [8, 256], strides = [1, 1]} : vector<8x384xf32> to vector<8x256xf32>
    %281 = arith.addf %279, %280 : vector<8x256xf32>
    %cst_107 = arith.constant 5.000000e-01 : f32
    %282 = vector.broadcast %cst_107 : f32 to vector<8x256xf32>
    %283 = arith.mulf %282, %281 : vector<8x256xf32>
    %284 = math.tanh %283 : vector<8x256xf32>
    %cst_108 = arith.constant 1.000000e+00 : f32
    %285 = vector.broadcast %cst_108 : f32 to vector<8x256xf32>
    %286 = arith.addf %284, %285 : vector<8x256xf32>
    %cst_109 = arith.constant 5.000000e-01 : f32
    %287 = vector.broadcast %cst_109 : f32 to vector<8x256xf32>
    %288 = arith.mulf %287, %286 : vector<8x256xf32>
    %289 = vector.extract_strided_slice %288 {offsets = [0, 0], sizes = [8, 128], strides = [1, 1]} : vector<8x256xf32> to vector<8x128xf32>
    %290 = vector.extract_strided_slice %288 {offsets = [0, 128], sizes = [8, 128], strides = [1, 1]} : vector<8x256xf32> to vector<8x128xf32>
    %291 = vector.extract_strided_slice %278 {offsets = [0, 256], sizes = [8, 128], strides = [1, 1]} : vector<8x384xf32> to vector<8x128xf32>
    %292 = vector.extract_strided_slice %277 {offsets = [0, 256], sizes = [8, 128], strides = [1, 1]} : vector<8x384xf32> to vector<8x128xf32>
    %c0_110 = arith.constant 0 : index
    %c0_111 = arith.constant 0 : index
    %293 = vector.load %arg6[%c0_110, %c0_111] : memref<1x128xf32, #tpu.memory_space<vmem>>, vector<1x128xf32>
    %294 = vector.broadcast %293 : vector<1x128xf32> to vector<8x128xf32>
    %295 = arith.addf %292, %294 : vector<8x128xf32>
    %296 = arith.mulf %289, %295 : vector<8x128xf32>
    %297 = arith.addf %291, %296 : vector<8x128xf32>
    %298 = math.tanh %297 : vector<8x128xf32>
    %cst_112 = arith.constant 1.000000e+00 : f32
    %299 = vector.broadcast %cst_112 : f32 to vector<8x128xf32>
    %300 = arith.subf %299, %290 : vector<8x128xf32>
    %301 = arith.mulf %300, %298 : vector<8x128xf32>
    %302 = arith.mulf %290, %275 : vector<8x128xf32>
    %303 = arith.addf %301, %302 : vector<8x128xf32>
    %c7_i32 = arith.constant 7 : i32
    %304 = vector.broadcast %c7_i32 : i32 to vector<8x1xi32>
    %305 = arith.cmpi sgt, %0, %304 : vector<8x1xi32>
    %cst_113 = arith.constant 0.000000e+00 : f32
    %306 = vector.shape_cast %305 : vector<8x1xi1> to vector<8x1xi1>
    %307 = vector.broadcast %306 : vector<8x1xi1> to vector<8x128xi1>
    %308 = vector.broadcast %cst_113 : f32 to vector<8x128xf32>
    %309 = arith.select %307, %303, %308 : vector<8x128xi1>, vector<8x128xf32>
    %c56_114 = arith.constant 56 : index
    %c0_115 = arith.constant 0 : index
    %310 = vector.load %arg19[%c56_114, %c0_115] : memref<64x128xf32, #tpu.memory_space<vmem>>, vector<8x128xf32>
    tpu.vector_store %arg19[%c56_114, %c0_115], %309 {strides = array<i32>} : memref<64x128xf32, #tpu.memory_space<vmem>>, vector<8x128xf32>,
    %c0_116 = arith.constant 0 : index
    %c0_117 = arith.constant 0 : index
    %311 = vector.load %arg19[%c0_116, %c0_117] : memref<64x128xf32, #tpu.memory_space<vmem>>, vector<64x128xf32>
    %c0_118 = arith.constant 0 : index
    %c0_119 = arith.constant 0 : index
    %312 = vector.load %arg7[%c0_118, %c0_119] : memref<128x384xf32, #tpu.memory_space<vmem>>, vector<128x384xf32>
    %cst_120 = arith.constant dense<0.000000e+00> : vector<64x384xf32>
    %313 = tpu.matmul %311, %312, %cst_120 {dimension_numbers = #tpu.dot_dimension_numbers<[1], [0], [0], [1], [0, 0, 1, 1], [], []>} : vector<64x128xf32>, vector<128x384xf32>, vector<64x384xf32> -> vector<64x384xf32>
    %c0_121 = arith.constant 0 : index
    %c0_122 = arith.constant 0 : index
    %314 = vector.load %arg8[%c0_121, %c0_122] : memref<1x384xf32, #tpu.memory_space<vmem>>, vector<1x384xf32>
    %315 = vector.broadcast %314 : vector<1x384xf32> to vector<64x384xf32>
    %316 = arith.addf %313, %315 : vector<64x384xf32>
    %c0_123 = arith.constant 0 : index
    %c0_124 = arith.constant 0 : index
    %317 = vector.load %arg18[%c0_123, %c0_124] : memref<64x384xf32, #tpu.memory_space<vmem>>, vector<64x384xf32>
    tpu.vector_store %arg18[%c0_123, %c0_124], %316 {strides = array<i32>} : memref<64x384xf32, #tpu.memory_space<vmem>>, vector<64x384xf32>,
    %cst_125 = arith.constant 0.000000e+00 : f32
    %318 = vector.broadcast %cst_125 : f32 to vector<8x128xf32>
    %c0_126 = arith.constant 0 : index
    %c0_127 = arith.constant 0 : index
    %319 = vector.load %arg9[%c0_126, %c0_127] : memref<128x384xf32, #tpu.memory_space<vmem>>, vector<128x384xf32>
    %cst_128 = arith.constant dense<0.000000e+00> : vector<8x384xf32>
    %320 = tpu.matmul %318, %319, %cst_128 {dimension_numbers = #tpu.dot_dimension_numbers<[1], [0], [0], [1], [0, 0, 1, 1], [], []>} : vector<8x128xf32>, vector<128x384xf32>, vector<8x384xf32> -> vector<8x384xf32>
    %c0_129 = arith.constant 0 : index
    %c0_130 = arith.constant 0 : index
    %321 = vector.load %arg18[%c0_129, %c0_130] : memref<64x384xf32, #tpu.memory_space<vmem>>, vector<8x384xf32>
    %322 = vector.extract_strided_slice %321 {offsets = [0, 0], sizes = [8, 256], strides = [1, 1]} : vector<8x384xf32> to vector<8x256xf32>
    %323 = vector.extract_strided_slice %320 {offsets = [0, 0], sizes = [8, 256], strides = [1, 1]} : vector<8x384xf32> to vector<8x256xf32>
    %324 = arith.addf %322, %323 : vector<8x256xf32>
    %cst_131 = arith.constant 5.000000e-01 : f32
    %325 = vector.broadcast %cst_131 : f32 to vector<8x256xf32>
    %326 = arith.mulf %325, %324 : vector<8x256xf32>
    %327 = math.tanh %326 : vector<8x256xf32>
    %cst_132 = arith.constant 1.000000e+00 : f32
    %328 = vector.broadcast %cst_132 : f32 to vector<8x256xf32>
    %329 = arith.addf %327, %328 : vector<8x256xf32>
    %cst_133 = arith.constant 5.000000e-01 : f32
    %330 = vector.broadcast %cst_133 : f32 to vector<8x256xf32>
    %331 = arith.mulf %330, %329 : vector<8x256xf32>
    %332 = vector.extract_strided_slice %331 {offsets = [0, 0], sizes = [8, 128], strides = [1, 1]} : vector<8x256xf32> to vector<8x128xf32>
    %333 = vector.extract_strided_slice %331 {offsets = [0, 128], sizes = [8, 128], strides = [1, 1]} : vector<8x256xf32> to vector<8x128xf32>
    %334 = vector.extract_strided_slice %321 {offsets = [0, 256], sizes = [8, 128], strides = [1, 1]} : vector<8x384xf32> to vector<8x128xf32>
    %335 = vector.extract_strided_slice %320 {offsets = [0, 256], sizes = [8, 128], strides = [1, 1]} : vector<8x384xf32> to vector<8x128xf32>
    %c0_134 = arith.constant 0 : index
    %c0_135 = arith.constant 0 : index
    %336 = vector.load %arg10[%c0_134, %c0_135] : memref<1x128xf32, #tpu.memory_space<vmem>>, vector<1x128xf32>
    %337 = vector.broadcast %336 : vector<1x128xf32> to vector<8x128xf32>
    %338 = arith.addf %335, %337 : vector<8x128xf32>
    %339 = arith.mulf %332, %338 : vector<8x128xf32>
    %340 = arith.addf %334, %339 : vector<8x128xf32>
    %341 = math.tanh %340 : vector<8x128xf32>
    %cst_136 = arith.constant 1.000000e+00 : f32
    %342 = vector.broadcast %cst_136 : f32 to vector<8x128xf32>
    %343 = arith.subf %342, %333 : vector<8x128xf32>
    %344 = arith.mulf %343, %341 : vector<8x128xf32>
    %345 = arith.mulf %333, %318 : vector<8x128xf32>
    %346 = arith.addf %344, %345 : vector<8x128xf32>
    %c0_i32_137 = arith.constant 0 : i32
    %347 = vector.broadcast %c0_i32_137 : i32 to vector<8x1xi32>
    %348 = arith.cmpi sgt, %0, %347 : vector<8x1xi32>
    %349 = vector.shape_cast %348 : vector<8x1xi1> to vector<8x1xi1>
    %350 = vector.broadcast %349 : vector<8x1xi1> to vector<8x128xi1>
    %351 = arith.select %350, %346, %318 : vector<8x128xi1>, vector<8x128xf32>
    %c0_138 = arith.constant 0 : index
    %c0_139 = arith.constant 0 : index
    %352 = vector.load %arg9[%c0_138, %c0_139] : memref<128x384xf32, #tpu.memory_space<vmem>>, vector<128x384xf32>
    %cst_140 = arith.constant dense<0.000000e+00> : vector<8x384xf32>
    %353 = tpu.matmul %351, %352, %cst_140 {dimension_numbers = #tpu.dot_dimension_numbers<[1], [0], [0], [1], [0, 0, 1, 1], [], []>} : vector<8x128xf32>, vector<128x384xf32>, vector<8x384xf32> -> vector<8x384xf32>
    %c8_141 = arith.constant 8 : index
    %c0_142 = arith.constant 0 : index
    %354 = vector.load %arg18[%c8_141, %c0_142] : memref<64x384xf32, #tpu.memory_space<vmem>>, vector<8x384xf32>
    %355 = vector.extract_strided_slice %354 {offsets = [0, 0], sizes = [8, 256], strides = [1, 1]} : vector<8x384xf32> to vector<8x256xf32>
    %356 = vector.extract_strided_slice %353 {offsets = [0, 0], sizes = [8, 256], strides = [1, 1]} : vector<8x384xf32> to vector<8x256xf32>
    %357 = arith.addf %355, %356 : vector<8x256xf32>
    %cst_143 = arith.constant 5.000000e-01 : f32
    %358 = vector.broadcast %cst_143 : f32 to vector<8x256xf32>
    %359 = arith.mulf %358, %357 : vector<8x256xf32>
    %360 = math.tanh %359 : vector<8x256xf32>
    %cst_144 = arith.constant 1.000000e+00 : f32
    %361 = vector.broadcast %cst_144 : f32 to vector<8x256xf32>
    %362 = arith.addf %360, %361 : vector<8x256xf32>
    %cst_145 = arith.constant 5.000000e-01 : f32
    %363 = vector.broadcast %cst_145 : f32 to vector<8x256xf32>
    %364 = arith.mulf %363, %362 : vector<8x256xf32>
    %365 = vector.extract_strided_slice %364 {offsets = [0, 0], sizes = [8, 128], strides = [1, 1]} : vector<8x256xf32> to vector<8x128xf32>
    %366 = vector.extract_strided_slice %364 {offsets = [0, 128], sizes = [8, 128], strides = [1, 1]} : vector<8x256xf32> to vector<8x128xf32>
    %367 = vector.extract_strided_slice %354 {offsets = [0, 256], sizes = [8, 128], strides = [1, 1]} : vector<8x384xf32> to vector<8x128xf32>
    %368 = vector.extract_strided_slice %353 {offsets = [0, 256], sizes = [8, 128], strides = [1, 1]} : vector<8x384xf32> to vector<8x128xf32>
    %c0_146 = arith.constant 0 : index
    %c0_147 = arith.constant 0 : index
    %369 = vector.load %arg10[%c0_146, %c0_147] : memref<1x128xf32, #tpu.memory_space<vmem>>, vector<1x128xf32>
    %370 = vector.broadcast %369 : vector<1x128xf32> to vector<8x128xf32>
    %371 = arith.addf %368, %370 : vector<8x128xf32>
    %372 = arith.mulf %365, %371 : vector<8x128xf32>
    %373 = arith.addf %367, %372 : vector<8x128xf32>
    %374 = math.tanh %373 : vector<8x128xf32>
    %cst_148 = arith.constant 1.000000e+00 : f32
    %375 = vector.broadcast %cst_148 : f32 to vector<8x128xf32>
    %376 = arith.subf %375, %366 : vector<8x128xf32>
    %377 = arith.mulf %376, %374 : vector<8x128xf32>
    %378 = arith.mulf %366, %351 : vector<8x128xf32>
    %379 = arith.addf %377, %378 : vector<8x128xf32>
    %c1_i32_149 = arith.constant 1 : i32
    %380 = vector.broadcast %c1_i32_149 : i32 to vector<8x1xi32>
    %381 = arith.cmpi sgt, %0, %380 : vector<8x1xi32>
    %382 = vector.shape_cast %381 : vector<8x1xi1> to vector<8x1xi1>
    %383 = vector.broadcast %382 : vector<8x1xi1> to vector<8x128xi1>
    %384 = arith.select %383, %379, %351 : vector<8x128xi1>, vector<8x128xf32>
    %c0_150 = arith.constant 0 : index
    %c0_151 = arith.constant 0 : index
    %385 = vector.load %arg9[%c0_150, %c0_151] : memref<128x384xf32, #tpu.memory_space<vmem>>, vector<128x384xf32>
    %cst_152 = arith.constant dense<0.000000e+00> : vector<8x384xf32>
    %386 = tpu.matmul %384, %385, %cst_152 {dimension_numbers = #tpu.dot_dimension_numbers<[1], [0], [0], [1], [0, 0, 1, 1], [], []>} : vector<8x128xf32>, vector<128x384xf32>, vector<8x384xf32> -> vector<8x384xf32>
    %c16_153 = arith.constant 16 : index
    %c0_154 = arith.constant 0 : index
    %387 = vector.load %arg18[%c16_153, %c0_154] : memref<64x384xf32, #tpu.memory_space<vmem>>, vector<8x384xf32>
    %388 = vector.extract_strided_slice %387 {offsets = [0, 0], sizes = [8, 256], strides = [1, 1]} : vector<8x384xf32> to vector<8x256xf32>
    %389 = vector.extract_strided_slice %386 {offsets = [0, 0], sizes = [8, 256], strides = [1, 1]} : vector<8x384xf32> to vector<8x256xf32>
    %390 = arith.addf %388, %389 : vector<8x256xf32>
    %cst_155 = arith.constant 5.000000e-01 : f32
    %391 = vector.broadcast %cst_155 : f32 to vector<8x256xf32>
    %392 = arith.mulf %391, %390 : vector<8x256xf32>
    %393 = math.tanh %392 : vector<8x256xf32>
    %cst_156 = arith.constant 1.000000e+00 : f32
    %394 = vector.broadcast %cst_156 : f32 to vector<8x256xf32>
    %395 = arith.addf %393, %394 : vector<8x256xf32>
    %cst_157 = arith.constant 5.000000e-01 : f32
    %396 = vector.broadcast %cst_157 : f32 to vector<8x256xf32>
    %397 = arith.mulf %396, %395 : vector<8x256xf32>
    %398 = vector.extract_strided_slice %397 {offsets = [0, 0], sizes = [8, 128], strides = [1, 1]} : vector<8x256xf32> to vector<8x128xf32>
    %399 = vector.extract_strided_slice %397 {offsets = [0, 128], sizes = [8, 128], strides = [1, 1]} : vector<8x256xf32> to vector<8x128xf32>
    %400 = vector.extract_strided_slice %387 {offsets = [0, 256], sizes = [8, 128], strides = [1, 1]} : vector<8x384xf32> to vector<8x128xf32>
    %401 = vector.extract_strided_slice %386 {offsets = [0, 256], sizes = [8, 128], strides = [1, 1]} : vector<8x384xf32> to vector<8x128xf32>
    %c0_158 = arith.constant 0 : index
    %c0_159 = arith.constant 0 : index
    %402 = vector.load %arg10[%c0_158, %c0_159] : memref<1x128xf32, #tpu.memory_space<vmem>>, vector<1x128xf32>
    %403 = vector.broadcast %402 : vector<1x128xf32> to vector<8x128xf32>
    %404 = arith.addf %401, %403 : vector<8x128xf32>
    %405 = arith.mulf %398, %404 : vector<8x128xf32>
    %406 = arith.addf %400, %405 : vector<8x128xf32>
    %407 = math.tanh %406 : vector<8x128xf32>
    %cst_160 = arith.constant 1.000000e+00 : f32
    %408 = vector.broadcast %cst_160 : f32 to vector<8x128xf32>
    %409 = arith.subf %408, %399 : vector<8x128xf32>
    %410 = arith.mulf %409, %407 : vector<8x128xf32>
    %411 = arith.mulf %399, %384 : vector<8x128xf32>
    %412 = arith.addf %410, %411 : vector<8x128xf32>
    %c2_i32_161 = arith.constant 2 : i32
    %413 = vector.broadcast %c2_i32_161 : i32 to vector<8x1xi32>
    %414 = arith.cmpi sgt, %0, %413 : vector<8x1xi32>
    %415 = vector.shape_cast %414 : vector<8x1xi1> to vector<8x1xi1>
    %416 = vector.broadcast %415 : vector<8x1xi1> to vector<8x128xi1>
    %417 = arith.select %416, %412, %384 : vector<8x128xi1>, vector<8x128xf32>
    %c0_162 = arith.constant 0 : index
    %c0_163 = arith.constant 0 : index
    %418 = vector.load %arg9[%c0_162, %c0_163] : memref<128x384xf32, #tpu.memory_space<vmem>>, vector<128x384xf32>
    %cst_164 = arith.constant dense<0.000000e+00> : vector<8x384xf32>
    %419 = tpu.matmul %417, %418, %cst_164 {dimension_numbers = #tpu.dot_dimension_numbers<[1], [0], [0], [1], [0, 0, 1, 1], [], []>} : vector<8x128xf32>, vector<128x384xf32>, vector<8x384xf32> -> vector<8x384xf32>
    %c24_165 = arith.constant 24 : index
    %c0_166 = arith.constant 0 : index
    %420 = vector.load %arg18[%c24_165, %c0_166] : memref<64x384xf32, #tpu.memory_space<vmem>>, vector<8x384xf32>
    %421 = vector.extract_strided_slice %420 {offsets = [0, 0], sizes = [8, 256], strides = [1, 1]} : vector<8x384xf32> to vector<8x256xf32>
    %422 = vector.extract_strided_slice %419 {offsets = [0, 0], sizes = [8, 256], strides = [1, 1]} : vector<8x384xf32> to vector<8x256xf32>
    %423 = arith.addf %421, %422 : vector<8x256xf32>
    %cst_167 = arith.constant 5.000000e-01 : f32
    %424 = vector.broadcast %cst_167 : f32 to vector<8x256xf32>
    %425 = arith.mulf %424, %423 : vector<8x256xf32>
    %426 = math.tanh %425 : vector<8x256xf32>
    %cst_168 = arith.constant 1.000000e+00 : f32
    %427 = vector.broadcast %cst_168 : f32 to vector<8x256xf32>
    %428 = arith.addf %426, %427 : vector<8x256xf32>
    %cst_169 = arith.constant 5.000000e-01 : f32
    %429 = vector.broadcast %cst_169 : f32 to vector<8x256xf32>
    %430 = arith.mulf %429, %428 : vector<8x256xf32>
    %431 = vector.extract_strided_slice %430 {offsets = [0, 0], sizes = [8, 128], strides = [1, 1]} : vector<8x256xf32> to vector<8x128xf32>
    %432 = vector.extract_strided_slice %430 {offsets = [0, 128], sizes = [8, 128], strides = [1, 1]} : vector<8x256xf32> to vector<8x128xf32>
    %433 = vector.extract_strided_slice %420 {offsets = [0, 256], sizes = [8, 128], strides = [1, 1]} : vector<8x384xf32> to vector<8x128xf32>
    %434 = vector.extract_strided_slice %419 {offsets = [0, 256], sizes = [8, 128], strides = [1, 1]} : vector<8x384xf32> to vector<8x128xf32>
    %c0_170 = arith.constant 0 : index
    %c0_171 = arith.constant 0 : index
    %435 = vector.load %arg10[%c0_170, %c0_171] : memref<1x128xf32, #tpu.memory_space<vmem>>, vector<1x128xf32>
    %436 = vector.broadcast %435 : vector<1x128xf32> to vector<8x128xf32>
    %437 = arith.addf %434, %436 : vector<8x128xf32>
    %438 = arith.mulf %431, %437 : vector<8x128xf32>
    %439 = arith.addf %433, %438 : vector<8x128xf32>
    %440 = math.tanh %439 : vector<8x128xf32>
    %cst_172 = arith.constant 1.000000e+00 : f32
    %441 = vector.broadcast %cst_172 : f32 to vector<8x128xf32>
    %442 = arith.subf %441, %432 : vector<8x128xf32>
    %443 = arith.mulf %442, %440 : vector<8x128xf32>
    %444 = arith.mulf %432, %417 : vector<8x128xf32>
    %445 = arith.addf %443, %444 : vector<8x128xf32>
    %c3_i32_173 = arith.constant 3 : i32
    %446 = vector.broadcast %c3_i32_173 : i32 to vector<8x1xi32>
    %447 = arith.cmpi sgt, %0, %446 : vector<8x1xi32>
    %448 = vector.shape_cast %447 : vector<8x1xi1> to vector<8x1xi1>
    %449 = vector.broadcast %448 : vector<8x1xi1> to vector<8x128xi1>
    %450 = arith.select %449, %445, %417 : vector<8x128xi1>, vector<8x128xf32>
    %c0_174 = arith.constant 0 : index
    %c0_175 = arith.constant 0 : index
    %451 = vector.load %arg9[%c0_174, %c0_175] : memref<128x384xf32, #tpu.memory_space<vmem>>, vector<128x384xf32>
    %cst_176 = arith.constant dense<0.000000e+00> : vector<8x384xf32>
    %452 = tpu.matmul %450, %451, %cst_176 {dimension_numbers = #tpu.dot_dimension_numbers<[1], [0], [0], [1], [0, 0, 1, 1], [], []>} : vector<8x128xf32>, vector<128x384xf32>, vector<8x384xf32> -> vector<8x384xf32>
    %c32_177 = arith.constant 32 : index
    %c0_178 = arith.constant 0 : index
    %453 = vector.load %arg18[%c32_177, %c0_178] : memref<64x384xf32, #tpu.memory_space<vmem>>, vector<8x384xf32>
    %454 = vector.extract_strided_slice %453 {offsets = [0, 0], sizes = [8, 256], strides = [1, 1]} : vector<8x384xf32> to vector<8x256xf32>
    %455 = vector.extract_strided_slice %452 {offsets = [0, 0], sizes = [8, 256], strides = [1, 1]} : vector<8x384xf32> to vector<8x256xf32>
    %456 = arith.addf %454, %455 : vector<8x256xf32>
    %cst_179 = arith.constant 5.000000e-01 : f32
    %457 = vector.broadcast %cst_179 : f32 to vector<8x256xf32>
    %458 = arith.mulf %457, %456 : vector<8x256xf32>
    %459 = math.tanh %458 : vector<8x256xf32>
    %cst_180 = arith.constant 1.000000e+00 : f32
    %460 = vector.broadcast %cst_180 : f32 to vector<8x256xf32>
    %461 = arith.addf %459, %460 : vector<8x256xf32>
    %cst_181 = arith.constant 5.000000e-01 : f32
    %462 = vector.broadcast %cst_181 : f32 to vector<8x256xf32>
    %463 = arith.mulf %462, %461 : vector<8x256xf32>
    %464 = vector.extract_strided_slice %463 {offsets = [0, 0], sizes = [8, 128], strides = [1, 1]} : vector<8x256xf32> to vector<8x128xf32>
    %465 = vector.extract_strided_slice %463 {offsets = [0, 128], sizes = [8, 128], strides = [1, 1]} : vector<8x256xf32> to vector<8x128xf32>
    %466 = vector.extract_strided_slice %453 {offsets = [0, 256], sizes = [8, 128], strides = [1, 1]} : vector<8x384xf32> to vector<8x128xf32>
    %467 = vector.extract_strided_slice %452 {offsets = [0, 256], sizes = [8, 128], strides = [1, 1]} : vector<8x384xf32> to vector<8x128xf32>
    %c0_182 = arith.constant 0 : index
    %c0_183 = arith.constant 0 : index
    %468 = vector.load %arg10[%c0_182, %c0_183] : memref<1x128xf32, #tpu.memory_space<vmem>>, vector<1x128xf32>
    %469 = vector.broadcast %468 : vector<1x128xf32> to vector<8x128xf32>
    %470 = arith.addf %467, %469 : vector<8x128xf32>
    %471 = arith.mulf %464, %470 : vector<8x128xf32>
    %472 = arith.addf %466, %471 : vector<8x128xf32>
    %473 = math.tanh %472 : vector<8x128xf32>
    %cst_184 = arith.constant 1.000000e+00 : f32
    %474 = vector.broadcast %cst_184 : f32 to vector<8x128xf32>
    %475 = arith.subf %474, %465 : vector<8x128xf32>
    %476 = arith.mulf %475, %473 : vector<8x128xf32>
    %477 = arith.mulf %465, %450 : vector<8x128xf32>
    %478 = arith.addf %476, %477 : vector<8x128xf32>
    %c4_i32_185 = arith.constant 4 : i32
    %479 = vector.broadcast %c4_i32_185 : i32 to vector<8x1xi32>
    %480 = arith.cmpi sgt, %0, %479 : vector<8x1xi32>
    %481 = vector.shape_cast %480 : vector<8x1xi1> to vector<8x1xi1>
    %482 = vector.broadcast %481 : vector<8x1xi1> to vector<8x128xi1>
    %483 = arith.select %482, %478, %450 : vector<8x128xi1>, vector<8x128xf32>
    %c0_186 = arith.constant 0 : index
    %c0_187 = arith.constant 0 : index
    %484 = vector.load %arg9[%c0_186, %c0_187] : memref<128x384xf32, #tpu.memory_space<vmem>>, vector<128x384xf32>
    %cst_188 = arith.constant dense<0.000000e+00> : vector<8x384xf32>
    %485 = tpu.matmul %483, %484, %cst_188 {dimension_numbers = #tpu.dot_dimension_numbers<[1], [0], [0], [1], [0, 0, 1, 1], [], []>} : vector<8x128xf32>, vector<128x384xf32>, vector<8x384xf32> -> vector<8x384xf32>
    %c40_189 = arith.constant 40 : index
    %c0_190 = arith.constant 0 : index
    %486 = vector.load %arg18[%c40_189, %c0_190] : memref<64x384xf32, #tpu.memory_space<vmem>>, vector<8x384xf32>
    %487 = vector.extract_strided_slice %486 {offsets = [0, 0], sizes = [8, 256], strides = [1, 1]} : vector<8x384xf32> to vector<8x256xf32>
    %488 = vector.extract_strided_slice %485 {offsets = [0, 0], sizes = [8, 256], strides = [1, 1]} : vector<8x384xf32> to vector<8x256xf32>
    %489 = arith.addf %487, %488 : vector<8x256xf32>
    %cst_191 = arith.constant 5.000000e-01 : f32
    %490 = vector.broadcast %cst_191 : f32 to vector<8x256xf32>
    %491 = arith.mulf %490, %489 : vector<8x256xf32>
    %492 = math.tanh %491 : vector<8x256xf32>
    %cst_192 = arith.constant 1.000000e+00 : f32
    %493 = vector.broadcast %cst_192 : f32 to vector<8x256xf32>
    %494 = arith.addf %492, %493 : vector<8x256xf32>
    %cst_193 = arith.constant 5.000000e-01 : f32
    %495 = vector.broadcast %cst_193 : f32 to vector<8x256xf32>
    %496 = arith.mulf %495, %494 : vector<8x256xf32>
    %497 = vector.extract_strided_slice %496 {offsets = [0, 0], sizes = [8, 128], strides = [1, 1]} : vector<8x256xf32> to vector<8x128xf32>
    %498 = vector.extract_strided_slice %496 {offsets = [0, 128], sizes = [8, 128], strides = [1, 1]} : vector<8x256xf32> to vector<8x128xf32>
    %499 = vector.extract_strided_slice %486 {offsets = [0, 256], sizes = [8, 128], strides = [1, 1]} : vector<8x384xf32> to vector<8x128xf32>
    %500 = vector.extract_strided_slice %485 {offsets = [0, 256], sizes = [8, 128], strides = [1, 1]} : vector<8x384xf32> to vector<8x128xf32>
    %c0_194 = arith.constant 0 : index
    %c0_195 = arith.constant 0 : index
    %501 = vector.load %arg10[%c0_194, %c0_195] : memref<1x128xf32, #tpu.memory_space<vmem>>, vector<1x128xf32>
    %502 = vector.broadcast %501 : vector<1x128xf32> to vector<8x128xf32>
    %503 = arith.addf %500, %502 : vector<8x128xf32>
    %504 = arith.mulf %497, %503 : vector<8x128xf32>
    %505 = arith.addf %499, %504 : vector<8x128xf32>
    %506 = math.tanh %505 : vector<8x128xf32>
    %cst_196 = arith.constant 1.000000e+00 : f32
    %507 = vector.broadcast %cst_196 : f32 to vector<8x128xf32>
    %508 = arith.subf %507, %498 : vector<8x128xf32>
    %509 = arith.mulf %508, %506 : vector<8x128xf32>
    %510 = arith.mulf %498, %483 : vector<8x128xf32>
    %511 = arith.addf %509, %510 : vector<8x128xf32>
    %c5_i32_197 = arith.constant 5 : i32
    %512 = vector.broadcast %c5_i32_197 : i32 to vector<8x1xi32>
    %513 = arith.cmpi sgt, %0, %512 : vector<8x1xi32>
    %514 = vector.shape_cast %513 : vector<8x1xi1> to vector<8x1xi1>
    %515 = vector.broadcast %514 : vector<8x1xi1> to vector<8x128xi1>
    %516 = arith.select %515, %511, %483 : vector<8x128xi1>, vector<8x128xf32>
    %c0_198 = arith.constant 0 : index
    %c0_199 = arith.constant 0 : index
    %517 = vector.load %arg9[%c0_198, %c0_199] : memref<128x384xf32, #tpu.memory_space<vmem>>, vector<128x384xf32>
    %cst_200 = arith.constant dense<0.000000e+00> : vector<8x384xf32>
    %518 = tpu.matmul %516, %517, %cst_200 {dimension_numbers = #tpu.dot_dimension_numbers<[1], [0], [0], [1], [0, 0, 1, 1], [], []>} : vector<8x128xf32>, vector<128x384xf32>, vector<8x384xf32> -> vector<8x384xf32>
    %c48_201 = arith.constant 48 : index
    %c0_202 = arith.constant 0 : index
    %519 = vector.load %arg18[%c48_201, %c0_202] : memref<64x384xf32, #tpu.memory_space<vmem>>, vector<8x384xf32>
    %520 = vector.extract_strided_slice %519 {offsets = [0, 0], sizes = [8, 256], strides = [1, 1]} : vector<8x384xf32> to vector<8x256xf32>
    %521 = vector.extract_strided_slice %518 {offsets = [0, 0], sizes = [8, 256], strides = [1, 1]} : vector<8x384xf32> to vector<8x256xf32>
    %522 = arith.addf %520, %521 : vector<8x256xf32>
    %cst_203 = arith.constant 5.000000e-01 : f32
    %523 = vector.broadcast %cst_203 : f32 to vector<8x256xf32>
    %524 = arith.mulf %523, %522 : vector<8x256xf32>
    %525 = math.tanh %524 : vector<8x256xf32>
    %cst_204 = arith.constant 1.000000e+00 : f32
    %526 = vector.broadcast %cst_204 : f32 to vector<8x256xf32>
    %527 = arith.addf %525, %526 : vector<8x256xf32>
    %cst_205 = arith.constant 5.000000e-01 : f32
    %528 = vector.broadcast %cst_205 : f32 to vector<8x256xf32>
    %529 = arith.mulf %528, %527 : vector<8x256xf32>
    %530 = vector.extract_strided_slice %529 {offsets = [0, 0], sizes = [8, 128], strides = [1, 1]} : vector<8x256xf32> to vector<8x128xf32>
    %531 = vector.extract_strided_slice %529 {offsets = [0, 128], sizes = [8, 128], strides = [1, 1]} : vector<8x256xf32> to vector<8x128xf32>
    %532 = vector.extract_strided_slice %519 {offsets = [0, 256], sizes = [8, 128], strides = [1, 1]} : vector<8x384xf32> to vector<8x128xf32>
    %533 = vector.extract_strided_slice %518 {offsets = [0, 256], sizes = [8, 128], strides = [1, 1]} : vector<8x384xf32> to vector<8x128xf32>
    %c0_206 = arith.constant 0 : index
    %c0_207 = arith.constant 0 : index
    %534 = vector.load %arg10[%c0_206, %c0_207] : memref<1x128xf32, #tpu.memory_space<vmem>>, vector<1x128xf32>
    %535 = vector.broadcast %534 : vector<1x128xf32> to vector<8x128xf32>
    %536 = arith.addf %533, %535 : vector<8x128xf32>
    %537 = arith.mulf %530, %536 : vector<8x128xf32>
    %538 = arith.addf %532, %537 : vector<8x128xf32>
    %539 = math.tanh %538 : vector<8x128xf32>
    %cst_208 = arith.constant 1.000000e+00 : f32
    %540 = vector.broadcast %cst_208 : f32 to vector<8x128xf32>
    %541 = arith.subf %540, %531 : vector<8x128xf32>
    %542 = arith.mulf %541, %539 : vector<8x128xf32>
    %543 = arith.mulf %531, %516 : vector<8x128xf32>
    %544 = arith.addf %542, %543 : vector<8x128xf32>
    %c6_i32_209 = arith.constant 6 : i32
    %545 = vector.broadcast %c6_i32_209 : i32 to vector<8x1xi32>
    %546 = arith.cmpi sgt, %0, %545 : vector<8x1xi32>
    %547 = vector.shape_cast %546 : vector<8x1xi1> to vector<8x1xi1>
    %548 = vector.broadcast %547 : vector<8x1xi1> to vector<8x128xi1>
    %549 = arith.select %548, %544, %516 : vector<8x128xi1>, vector<8x128xf32>
    %c0_210 = arith.constant 0 : index
    %c0_211 = arith.constant 0 : index
    %550 = vector.load %arg9[%c0_210, %c0_211] : memref<128x384xf32, #tpu.memory_space<vmem>>, vector<128x384xf32>
    %cst_212 = arith.constant dense<0.000000e+00> : vector<8x384xf32>
    %551 = tpu.matmul %549, %550, %cst_212 {dimension_numbers = #tpu.dot_dimension_numbers<[1], [0], [0], [1], [0, 0, 1, 1], [], []>} : vector<8x128xf32>, vector<128x384xf32>, vector<8x384xf32> -> vector<8x384xf32>
    %c56_213 = arith.constant 56 : index
    %c0_214 = arith.constant 0 : index
    %552 = vector.load %arg18[%c56_213, %c0_214] : memref<64x384xf32, #tpu.memory_space<vmem>>, vector<8x384xf32>
    %553 = vector.extract_strided_slice %552 {offsets = [0, 0], sizes = [8, 256], strides = [1, 1]} : vector<8x384xf32> to vector<8x256xf32>
    %554 = vector.extract_strided_slice %551 {offsets = [0, 0], sizes = [8, 256], strides = [1, 1]} : vector<8x384xf32> to vector<8x256xf32>
    %555 = arith.addf %553, %554 : vector<8x256xf32>
    %cst_215 = arith.constant 5.000000e-01 : f32
    %556 = vector.broadcast %cst_215 : f32 to vector<8x256xf32>
    %557 = arith.mulf %556, %555 : vector<8x256xf32>
    %558 = math.tanh %557 : vector<8x256xf32>
    %cst_216 = arith.constant 1.000000e+00 : f32
    %559 = vector.broadcast %cst_216 : f32 to vector<8x256xf32>
    %560 = arith.addf %558, %559 : vector<8x256xf32>
    %cst_217 = arith.constant 5.000000e-01 : f32
    %561 = vector.broadcast %cst_217 : f32 to vector<8x256xf32>
    %562 = arith.mulf %561, %560 : vector<8x256xf32>
    %563 = vector.extract_strided_slice %562 {offsets = [0, 0], sizes = [8, 128], strides = [1, 1]} : vector<8x256xf32> to vector<8x128xf32>
    %564 = vector.extract_strided_slice %562 {offsets = [0, 128], sizes = [8, 128], strides = [1, 1]} : vector<8x256xf32> to vector<8x128xf32>
    %565 = vector.extract_strided_slice %552 {offsets = [0, 256], sizes = [8, 128], strides = [1, 1]} : vector<8x384xf32> to vector<8x128xf32>
    %566 = vector.extract_strided_slice %551 {offsets = [0, 256], sizes = [8, 128], strides = [1, 1]} : vector<8x384xf32> to vector<8x128xf32>
    %c0_218 = arith.constant 0 : index
    %c0_219 = arith.constant 0 : index
    %567 = vector.load %arg10[%c0_218, %c0_219] : memref<1x128xf32, #tpu.memory_space<vmem>>, vector<1x128xf32>
    %568 = vector.broadcast %567 : vector<1x128xf32> to vector<8x128xf32>
    %569 = arith.addf %566, %568 : vector<8x128xf32>
    %570 = arith.mulf %563, %569 : vector<8x128xf32>
    %571 = arith.addf %565, %570 : vector<8x128xf32>
    %572 = math.tanh %571 : vector<8x128xf32>
    %cst_220 = arith.constant 1.000000e+00 : f32
    %573 = vector.broadcast %cst_220 : f32 to vector<8x128xf32>
    %574 = arith.subf %573, %564 : vector<8x128xf32>
    %575 = arith.mulf %574, %572 : vector<8x128xf32>
    %576 = arith.mulf %564, %549 : vector<8x128xf32>
    %577 = arith.addf %575, %576 : vector<8x128xf32>
    %c7_i32_221 = arith.constant 7 : i32
    %578 = vector.broadcast %c7_i32_221 : i32 to vector<8x1xi32>
    %579 = arith.cmpi sgt, %0, %578 : vector<8x1xi32>
    %580 = vector.shape_cast %579 : vector<8x1xi1> to vector<8x1xi1>
    %581 = vector.broadcast %580 : vector<8x1xi1> to vector<8x128xi1>
    %582 = arith.select %581, %577, %549 : vector<8x128xi1>, vector<8x128xf32>
    %c0_222 = arith.constant 0 : index
    %c0_223 = arith.constant 0 : index
    %583 = vector.load %arg11[%c0_222, %c0_223] : memref<128x64xf32, #tpu.memory_space<vmem>>, vector<128x64xf32>
    %cst_224 = arith.constant dense<0.000000e+00> : vector<8x64xf32>
    %584 = tpu.matmul %582, %583, %cst_224 {dimension_numbers = #tpu.dot_dimension_numbers<[1], [0], [0], [1], [0, 0, 1, 1], [], []>} : vector<8x128xf32>, vector<128x64xf32>, vector<8x64xf32> -> vector<8x64xf32>
    %c0_225 = arith.constant 0 : index
    %c0_226 = arith.constant 0 : index
    %585 = vector.load %arg12[%c0_225, %c0_226] : memref<1x64xf32, #tpu.memory_space<vmem>>, vector<1x64xf32>
    %586 = vector.broadcast %585 : vector<1x64xf32> to vector<8x64xf32>
    %587 = arith.addf %584, %586 : vector<8x64xf32>
    %cst_227 = arith.constant 0.000000e+00 : f32
    %588 = vector.broadcast %cst_227 : f32 to vector<8x64xf32>
    %589 = arith.cmpf ogt, %587, %588 : vector<8x64xf32>
    %cst_228 = arith.constant 0.00999999977 : f32
    %590 = vector.broadcast %cst_228 : f32 to vector<8x64xf32>
    %591 = arith.mulf %590, %587 : vector<8x64xf32>
    %592 = arith.select %589, %587, %591 : vector<8x64xi1>, vector<8x64xf32>
    %c0_229 = arith.constant 0 : index
    %c0_230 = arith.constant 0 : index
    %593 = vector.load %arg13[%c0_229, %c0_230] : memref<64x32xf32, #tpu.memory_space<vmem>>, vector<64x32xf32>
    %cst_231 = arith.constant dense<0.000000e+00> : vector<8x32xf32>
    %594 = tpu.matmul %592, %593, %cst_231 {dimension_numbers = #tpu.dot_dimension_numbers<[1], [0], [0], [1], [0, 0, 1, 1], [], []>} : vector<8x64xf32>, vector<64x32xf32>, vector<8x32xf32> -> vector<8x32xf32>
    %c0_232 = arith.constant 0 : index
    %c0_233 = arith.constant 0 : index
    %595 = vector.load %arg14[%c0_232, %c0_233] : memref<1x32xf32, #tpu.memory_space<vmem>>, vector<1x32xf32>
    %596 = vector.broadcast %595 : vector<1x32xf32> to vector<8x32xf32>
    %597 = arith.addf %594, %596 : vector<8x32xf32>
    %cst_234 = arith.constant 0.000000e+00 : f32
    %598 = vector.broadcast %cst_234 : f32 to vector<8x32xf32>
    %599 = arith.cmpf ogt, %597, %598 : vector<8x32xf32>
    %cst_235 = arith.constant 0.00999999977 : f32
    %600 = vector.broadcast %cst_235 : f32 to vector<8x32xf32>
    %601 = arith.mulf %600, %597 : vector<8x32xf32>
    %602 = arith.select %599, %597, %601 : vector<8x32xi1>, vector<8x32xf32>
    %c0_236 = arith.constant 0 : index
    %c0_237 = arith.constant 0 : index
    %603 = vector.load %arg15[%c0_236, %c0_237] : memref<32x1xf32, #tpu.memory_space<vmem>>, vector<32x1xf32>
    %cst_238 = arith.constant dense<0.000000e+00> : vector<8x1xf32>
    %604 = tpu.matmul %602, %603, %cst_238 {dimension_numbers = #tpu.dot_dimension_numbers<[1], [0], [0], [1], [0, 0, 1, 1], [], []>} : vector<8x32xf32>, vector<32x1xf32>, vector<8x1xf32> -> vector<8x1xf32>
    %c0_239 = arith.constant 0 : index
    %c0_240 = arith.constant 0 : index
    %605 = vector.load %arg16[%c0_239, %c0_240] : memref<1x1xf32, #tpu.memory_space<vmem>>, vector<1x1xf32>
    %606 = vector.broadcast %605 : vector<1x1xf32> to vector<8x1xf32>
    %607 = arith.addf %604, %606 : vector<8x1xf32>
    %c0_241 = arith.constant 0 : index
    %c0_242 = arith.constant 0 : index
    %608 = vector.load %arg17[%c0_241, %c0_242] : memref<8x1xf32, #tpu.memory_space<vmem>>, vector<8x1xf32>
    tpu.vector_store %arg17[%c0_241, %c0_242], %607 {strides = array<i32>} : memref<8x1xf32, #tpu.memory_space<vmem>>, vector<8x1xf32>,
    return
  }
  func.func @transform_0(%arg0: i32) -> (i32, i32, i32) {
    %c0_i32 = arith.constant 0 : i32
    %c0_i32_0 = arith.constant 0 : i32
    %c0_i32_1 = arith.constant 0 : i32
    return %c0_i32, %arg0, %c0_i32_0 : i32, i32, i32
  }
  func.func @transform_1(%arg0: i32) -> (i32, i32) {
    %c0_i32 = arith.constant 0 : i32
    %c0_i32_0 = arith.constant 0 : i32
    return %arg0, %c0_i32 : i32, i32
  }
  func.func @transform_2(%arg0: i32) -> (i32, i32) {
    %c0_i32 = arith.constant 0 : i32
    %c0_i32_0 = arith.constant 0 : i32
    %c0_i32_1 = arith.constant 0 : i32
    return %c0_i32, %c0_i32_0 : i32, i32
  }
  func.func @transform_3(%arg0: i32) -> (i32, i32) {
    %c0_i32 = arith.constant 0 : i32
    %c0_i32_0 = arith.constant 0 : i32
    %c0_i32_1 = arith.constant 0 : i32
    return %c0_i32, %c0_i32_0 : i32, i32
  }
  func.func @transform_4(%arg0: i32) -> (i32, i32) {
    %c0_i32 = arith.constant 0 : i32
    %c0_i32_0 = arith.constant 0 : i32
    %c0_i32_1 = arith.constant 0 : i32
    return %c0_i32, %c0_i32_0 : i32, i32
  }
  func.func @transform_5(%arg0: i32) -> (i32, i32) {
    %c0_i32 = arith.constant 0 : i32
    %c0_i32_0 = arith.constant 0 : i32
    %c0_i32_1 = arith.constant 0 : i32
    return %c0_i32, %c0_i32_0 : i32, i32
  }
  func.func @transform_6(%arg0: i32) -> (i32, i32) {
    %c0_i32 = arith.constant 0 : i32
    %c0_i32_0 = arith.constant 0 : i32
    %c0_i32_1 = arith.constant 0 : i32
    return %c0_i32, %c0_i32_0 : i32, i32
  }
  func.func @transform_7(%arg0: i32) -> (i32, i32) {
    %c0_i32 = arith.constant 0 : i32
    %c0_i32_0 = arith.constant 0 : i32
    %c0_i32_1 = arith.constant 0 : i32
    return %c0_i32, %c0_i32_0 : i32, i32
  }
  func.func @transform_8(%arg0: i32) -> (i32, i32) {
    %c0_i32 = arith.constant 0 : i32
    %c0_i32_0 = arith.constant 0 : i32
    %c0_i32_1 = arith.constant 0 : i32
    return %c0_i32, %c0_i32_0 : i32, i32
  }
  func.func @transform_9(%arg0: i32) -> (i32, i32) {
    %c0_i32 = arith.constant 0 : i32
    %c0_i32_0 = arith.constant 0 : i32
    %c0_i32_1 = arith.constant 0 : i32
    return %c0_i32, %c0_i32_0 : i32, i32
  }
  func.func @transform_10(%arg0: i32) -> (i32, i32) {
    %c0_i32 = arith.constant 0 : i32
    %c0_i32_0 = arith.constant 0 : i32
    %c0_i32_1 = arith.constant 0 : i32
    return %c0_i32, %c0_i32_0 : i32, i32
  }
  func.func @transform_11(%arg0: i32) -> (i32, i32) {
    %c0_i32 = arith.constant 0 : i32
    %c0_i32_0 = arith.constant 0 : i32
    %c0_i32_1 = arith.constant 0 : i32
    return %c0_i32, %c0_i32_0 : i32, i32
  }
  func.func @transform_12(%arg0: i32) -> (i32, i32) {
    %c0_i32 = arith.constant 0 : i32
    %c0_i32_0 = arith.constant 0 : i32
    %c0_i32_1 = arith.constant 0 : i32
    return %c0_i32, %c0_i32_0 : i32, i32
  }
  func.func @transform_13(%arg0: i32) -> (i32, i32) {
    %c0_i32 = arith.constant 0 : i32
    %c0_i32_0 = arith.constant 0 : i32
    %c0_i32_1 = arith.constant 0 : i32
    return %c0_i32, %c0_i32_0 : i32, i32
  }
  func.func @transform_14(%arg0: i32) -> (i32, i32) {
    %c0_i32 = arith.constant 0 : i32
    %c0_i32_0 = arith.constant 0 : i32
    %c0_i32_1 = arith.constant 0 : i32
    return %c0_i32, %c0_i32_0 : i32, i32
  }
  func.func @transform_15(%arg0: i32) -> (i32, i32) {
    %c0_i32 = arith.constant 0 : i32
    %c0_i32_0 = arith.constant 0 : i32
    %c0_i32_1 = arith.constant 0 : i32
    return %c0_i32, %c0_i32_0 : i32, i32
  }
  func.func @transform_16(%arg0: i32) -> (i32, i32) {
    %c0_i32 = arith.constant 0 : i32
    %c0_i32_0 = arith.constant 0 : i32
    return %arg0, %c0_i32 : i32, i32
  }
}

</mosaic_0001>

<llo_original>
// kernel: predictor_forward.2
$region0: #{predictor_forward.2}
  #allocation0 [shape = 'u32[]', space=smem, size = 0x4, offset = 0x4, fixed_abs, tag = 'smem constant byte address 0x4 - core index']
  #allocation1 [shape = 'u32[72,128]{1,0:T(1,128)}', space=vmem, size = 0x9000, scoped, tag = 'internal scratch']
  #allocation2 [shape = 'f32[64,384]{1,0:T(8,128)}', space=vmem, size = 0x18000, scoped, tag = 'scratch operand']
  #allocation3 [shape = 'f32[64,128]{1,0:T(8,128)}', space=vmem, size = 0x8000, scoped, tag = 'scratch operand']
  #allocation4 [shape = 'f32[64,128]{1,0:T(8,128)}', space=vmem, size = 0x8000, scoped, tag = 'scratch operand']
  %s0 = inlined_call_operand.vmem [shape: f32[8,8,128], index: 0, kind: input, shape index: {}]
  %s1 = inlined_call_operand.vmem [shape: s32[8,1], index: 1, kind: input, shape index: {}]
  %s2 = inlined_call_operand.vmem [shape: f32[128,384], index: 2, kind: input, shape index: {}]
  %s3 = inlined_call_operand.vmem [shape: f32[1,384], index: 3, kind: input, shape index: {}]
  %s4 = inlined_call_operand.vmem [shape: f32[128,384], index: 4, kind: input, shape index: {}]
  %s5 = inlined_call_operand.vmem [shape: f32[1,128], index: 5, kind: input, shape index: {}]
  %s6 = inlined_call_operand.hbm [shape: f32[128,384], index: 6, kind: input, shape index: {}]
  %s7 = inlined_call_operand.hbm [shape: f32[128,384], index: 7, kind: input, shape index: {}]
  %s8 = inlined_call_operand.vmem [shape: f32[1,384], index: 8, kind: input, shape index: {}]
  %s9 = inlined_call_operand.hbm [shape: f32[128,384], index: 9, kind: input, shape index: {}]
  %s10 = inlined_call_operand.vmem [shape: f32[1,128], index: 10, kind: input, shape index: {}]
  %s11 = inlined_call_operand.vmem [shape: f32[8,128], index: 11, kind: output, shape index: {}]
  %s12 = sld [smem:[#allocation0]]
  $region66: #{predictor_forward.2} parent=0
    _
  %s14 = ssub.s32 1, %s12
  %s15 = scalar_select 0, %s14, %s12
  $region1: #{predictor_forward.2} parent=0
    #allocation5 [shape = 'u8[196608]{0}', space=vmem, size = 0x30000, scoped, tag = 'input window, operand 6, single buffered']
    #allocation6 [shape = 's32[1]{0}', space=sflag, size = 0x4, scoped, tag = 'scoped memory for predictor_forward.2']
    #allocation7 [shape = 'u8[196608]{0}', space=vmem, size = 0x30000, scoped, tag = 'input window, operand 7, single buffered']
    #allocation8 [shape = 's32[1]{0}', space=sflag, size = 0x4, scoped, tag = 'scoped memory for predictor_forward.2']
    #allocation9 [shape = 'u8[196608]{0}', space=vmem, size = 0x30000, scoped, tag = 'input window, operand 9, single buffered']
    %16 = vsyncpa [#allocation6], 0
    %17 = vsyncpa [#allocation8], 0
    // Predicated region
    $region2: #{predictor_forward.2} parent=1 // pred_check
      _
    $region3: #{predictor_forward.2} parent=1 // pred_check_branch
      %19 = sbr.rel (0) target = $region5
    $region4: #{predictor_forward.2} parent=1 // pred_region
      _
    $region5: #{predictor_forward.2} parent=1 // pred_fallthru
      _
    // Predicated region
    $region6: #{predictor_forward.2} parent=1 // pred_check
      _
    $region7: #{predictor_forward.2} parent=1 // pred_check_branch
      %21 = sbr.rel (0) target = $region9
    $region8: #{predictor_forward.2} parent=1 // pred_region
      _
    $region9: #{predictor_forward.2} parent=1 // pred_fallthru
      _
    // Predicated region
    $region10: #{predictor_forward.2} parent=1 // pred_check
      _
    $region11: #{predictor_forward.2} parent=1 // pred_check_branch
      %23 = sbr.rel (0) target = $region13
    $region12: #{predictor_forward.2} parent=1 // pred_region
      _
    $region13: #{predictor_forward.2} parent=1 // pred_fallthru
      _
    // Predicated region
    $region14: #{predictor_forward.2} parent=1 // pred_check
      _
    $region15: #{predictor_forward.2} parent=1 // pred_check_branch
      %25 = sbr.rel (0) target = $region17
    $region16: #{predictor_forward.2} parent=1 // pred_region
      _
    $region17: #{predictor_forward.2} parent=1 // pred_fallthru
      _
    // Predicated region
    $region18: #{predictor_forward.2} parent=1 // pred_check
      _
    $region19: #{predictor_forward.2} parent=1 // pred_check_branch
      %27 = sbr.rel (0) target = $region21
    $region20: #{predictor_forward.2} parent=1 // pred_region
      _
    $region21: #{predictor_forward.2} parent=1 // pred_fallthru
      _
    // Predicated region
    $region22: #{predictor_forward.2} parent=1 // pred_check
      _
    $region23: #{predictor_forward.2} parent=1 // pred_check_branch
      %29 = sbr.rel (0) target = $region25
    $region24: #{predictor_forward.2} parent=1 // pred_region
      _
    $region25: #{predictor_forward.2} parent=1 // pred_fallthru
      _
    // Predicated region
    $region26: #{predictor_forward.2} parent=1 // pred_check
      _
    $region27: #{predictor_forward.2} parent=1 // pred_check_branch
      %31 = sbr.rel (0) target = $region29
    $region28: #{predictor_forward.2} parent=1 // pred_region
      %33 = vsyncadd [#allocation6], 0
      %s34 = sshll.u32 %s6, 4
      %s35 = int_to_ptr.hbm [resolvable:$true] %s34
      %s36 = sshll.u32 [#allocation5], 4
      %s37 = int_to_ptr.vmem [resolvable:$true] %s36
      %42 = dma.hbm_to_vmem [thread:$0]  %s35, 6144, %s37, [#allocation6], 384, 384, 24
    $region29: #{predictor_forward.2} parent=1 // pred_fallthru
      _
    // Predicated region
    $region30: #{predictor_forward.2} parent=1 // pred_check
      _
    $region31: #{predictor_forward.2} parent=1 // pred_check_branch
      %44 = sbr.rel (0) target = $region33
    $region32: #{predictor_forward.2} parent=1 // pred_region
      %46 = vsyncadd [#allocation8], 0
      %s47 = sshll.u32 %s7, 4
      %s48 = int_to_ptr.hbm [resolvable:$true] %s47
      %s49 = sshll.u32 [#allocation7], 4
      %s50 = int_to_ptr.vmem [resolvable:$true] %s49
      %55 = dma.hbm_to_vmem [thread:$0]  %s48, 6144, %s50, [#allocation8], 384, 384, 24
    $region33: #{predictor_forward.2} parent=1 // pred_fallthru
      _
    // Predicated region
    $region34: #{predictor_forward.2} parent=1 // pred_check
      _
    $region35: #{predictor_forward.2} parent=1 // pred_check_branch
      %57 = sbr.rel (0) target = $region37
    $region36: #{predictor_forward.2} parent=1 // pred_region
      _
    $region37: #{predictor_forward.2} parent=1 // pred_fallthru
      _
    // Predicated region
    $region38: #{predictor_forward.2} parent=1 // pred_check
      _
    $region39: #{predictor_forward.2} parent=1 // pred_check_branch
      %59 = sbr.rel (0) target = $region41
    $region40: #{predictor_forward.2} parent=1 // pred_region
      %61 = vsyncadd [#allocation8], 0
      %s62 = sshll.u32 %s9, 4
      %s63 = int_to_ptr.hbm [resolvable:$true] %s62
      %s64 = sshll.u32 [#allocation9], 4
      %s65 = int_to_ptr.vmem [resolvable:$true] %s64
      %70 = dma.hbm_to_vmem [thread:$0]  %s63, 6144, %s65, [#allocation8], 384, 384, 24
    $region41: #{predictor_forward.2} parent=1 // pred_fallthru
      _
    // Predicated region
    $region42: #{predictor_forward.2} parent=1 // pred_check
      _
    $region43: #{predictor_forward.2} parent=1 // pred_check_branch
      %72 = sbr.rel (0) target = $region45
    $region44: #{predictor_forward.2} parent=1 // pred_region
      _
    $region45: #{predictor_forward.2} parent=1 // pred_fallthru
      _
    // Predicated region
    $region46: #{predictor_forward.2} parent=1 // pred_check
      _
    $region47: #{predictor_forward.2} parent=1 // pred_check_branch
      %74 = sbr.rel (0) target = $region49
    $region48: #{predictor_forward.2} parent=1 // pred_region
      %76 = dma.done [#allocation6], 6144
    $region49: #{predictor_forward.2} parent=1 // pred_fallthru
      _
    // Predicated region
    $region50: #{predictor_forward.2} parent=1 // pred_check
      _
    $region51: #{predictor_forward.2} parent=1 // pred_check_branch
      %78 = sbr.rel (0) target = $region53
    $region52: #{predictor_forward.2} parent=1 // pred_region
      %80 = dma.done [#allocation8], 6144
    $region53: #{predictor_forward.2} parent=1 // pred_fallthru
      _
    // Predicated region
    $region54: #{predictor_forward.2} parent=1 // pred_check
      _
    $region55: #{predictor_forward.2} parent=1 // pred_check_branch
      %82 = sbr.rel (0) target = $region57
    $region56: #{predictor_forward.2} parent=1 // pred_region
      %84 = dma.done [#allocation8], 6144
    $region57: #{predictor_forward.2} parent=1 // pred_fallthru
      _
    %v85 = vld [vmem:[%s1] sm:$0xff]
    %v86 = vlaneseq
    %v87 = vand.u32 %v86, 127
    %vm88 = vcmp.lt.s32.totalorder %v87, 64
    %v89 = vld [vmem:[%s0] sm:$0xff]
    %v90 = vld [vmem:[%s0 + $0x8] sm:$0xff]
    %v91 = vld [vmem:[%s0 + $0x10] sm:$0xff]
    %v92 = vld [vmem:[%s0 + $0x18] sm:$0xff]
    %v93 = vld [vmem:[%s0 + $0x20] sm:$0xff]
    %v94 = vld [vmem:[%s0 + $0x28] sm:$0xff]
    %v95 = vld [vmem:[%s0 + $0x30] sm:$0xff]
    %v96 = vld [vmem:[%s0 + $0x38] sm:$0xff]
    %v97 = vld [vmem:[%s2] sm:$0xff]
    %v98 = vld [vmem:[%s2 + $0x8] sm:$0xff]
    %v99 = vld [vmem:[%s2 + $0x10] sm:$0xff]
    %v100 = vld [vmem:[%s2 + $0x18] sm:$0xff]
    %v101 = vld [vmem:[%s2 + $0x20] sm:$0xff]
    %v102 = vld [vmem:[%s2 + $0x28] sm:$0xff]
    %v103 = vld [vmem:[%s2 + $0x30] sm:$0xff]
    %v104 = vld [vmem:[%s2 + $0x38] sm:$0xff]
    %v105 = vld [vmem:[%s2 + $0x40] sm:$0xff]
    %v106 = vld [vmem:[%s2 + $0x48] sm:$0xff]
    %v107 = vld [vmem:[%s2 + $0x50] sm:$0xff]
    %v108 = vld [vmem:[%s2 + $0x58] sm:$0xff]
    %v109 = vld [vmem:[%s2 + $0x60] sm:$0xff]
    %v110 = vld [vmem:[%s2 + $0x68] sm:$0xff]
    %v111 = vld [vmem:[%s2 + $0x70] sm:$0xff]
    %v112 = vld [vmem:[%s2 + $0x78] sm:$0xff]
    %v113 = vld [vmem:[%s2 + $0x80] sm:$0xff]
    %v114 = vld [vmem:[%s2 + $0x88] sm:$0xff]
    %v115 = vld [vmem:[%s2 + $0x90] sm:$0xff]
    %v116 = vld [vmem:[%s2 + $0x98] sm:$0xff]
    %v117 = vld [vmem:[%s2 + $0xa0] sm:$0xff]
    %v118 = vld [vmem:[%s2 + $0xa8] sm:$0xff]
    %v119 = vld [vmem:[%s2 + $0xb0] sm:$0xff]
    %v120 = vld [vmem:[%s2 + $0xb8] sm:$0xff]
    %v121 = vld [vmem:[%s2 + $0xc0] sm:$0xff]
    %v122 = vld [vmem:[%s2 + $0xc8] sm:$0xff]
    %v123 = vld [vmem:[%s2 + $0xd0] sm:$0xff]
    %v124 = vld [vmem:[%s2 + $0xd8] sm:$0xff]
    %v125 = vld [vmem:[%s2 + $0xe0] sm:$0xff]
    %v126 = vld [vmem:[%s2 + $0xe8] sm:$0xff]
    %v127 = vld [vmem:[%s2 + $0xf0] sm:$0xff]
    %v128 = vld [vmem:[%s2 + $0xf8] sm:$0xff]
    %v129 = vld [vmem:[%s2 + $0x100] sm:$0xff]
    %v130 = vld [vmem:[%s2 + $0x108] sm:$0xff]
    %v131 = vld [vmem:[%s2 + $0x110] sm:$0xff]
    %v132 = vld [vmem:[%s2 + $0x118] sm:$0xff]
    %v133 = vld [vmem:[%s2 + $0x120] sm:$0xff]
    %v134 = vld [vmem:[%s2 + $0x128] sm:$0xff]
    %v135 = vld [vmem:[%s2 + $0x130] sm:$0xff]
    %v136 = vld [vmem:[%s2 + $0x138] sm:$0xff]
    %v137 = vld [vmem:[%s2 + $0x140] sm:$0xff]
    %v138 = vld [vmem:[%s2 + $0x148] sm:$0xff]
    %v139 = vld [vmem:[%s2 + $0x150] sm:$0xff]
    %v140 = vld [vmem:[%s2 + $0x158] sm:$0xff]
    %v141 = vld [vmem:[%s2 + $0x160] sm:$0xff]
    %v142 = vld [vmem:[%s2 + $0x168] sm:$0xff]
    %v143 = vld [vmem:[%s2 + $0x170] sm:$0xff]
    %v144 = vld [vmem:[%s2 + $0x178] sm:$0xff]
    %v145 = vld [vmem:[%s3] sm:$0x7]
    %v147 = vperm.slane %v145, 0
    %v148 = vperm.slane %v145, 1
    %v149 = vperm.slane %v145, 2
    %153 = vmatpush.msra.mxu0 %v142
    %154 = vmatpush.msra.mxu0 %v139
    %155 = vmatpush.msra.mxu0 %v136
    %156 = vmatpush.msra.mxu0 %v133
    %157 = vmatpush.msra.mxu0 %v130
    %158 = vmatpush.msra.mxu0 %v127
    %159 = vmatpush.msra.mxu0 %v124
    %160 = vmatpush.msra.mxu0 %v121
    %161 = vmatpush.msra.mxu0 %v118
    %162 = vmatpush.msra.mxu0 %v115
    %163 = vmatpush.msra.mxu0 %v112
    %164 = vmatpush.msra.mxu0 %v109
    %165 = vmatpush.msra.mxu0 %v106
    %166 = vmatpush.msra.mxu0 %v103
    %167 = vmatpush.msra.mxu0 %v100
    %168 = vmatpush.msra.mxu0 %v97
    %169 = vmatmul.f32.gmra.mxu0 %v89
    %v170 = vpop.f32.mrf.mxu0
    %v171 = vadd.f32 %v147, %v170
    %172 = vmatmul.f32.gmra.mxu0 %v90
    %v173 = vpop.f32.mrf.mxu0
    %v174 = vadd.f32 %v147, %v173
    %175 = vmatmul.f32.gmra.mxu0 %v91
    %v176 = vpop.f32.mrf.mxu0
    %v177 = vadd.f32 %v147, %v176
    %178 = vmatmul.f32.gmra.mxu0 %v92
    %v179 = vpop.f32.mrf.mxu0
    %v180 = vadd.f32 %v147, %v179
    %181 = vmatmul.f32.gmra.mxu0 %v93
    %v182 = vpop.f32.mrf.mxu0
    %v183 = vadd.f32 %v147, %v182
    %184 = vmatmul.f32.gmra.mxu0 %v94
    %v185 = vpop.f32.mrf.mxu0
    %v186 = vadd.f32 %v147, %v185
    %187 = vmatmul.f32.gmra.mxu0 %v95
    %v188 = vpop.f32.mrf.mxu0
    %v189 = vadd.f32 %v147, %v188
    %190 = vmatmul.f32.gmra.mxu0 %v96
    %v191 = vpop.f32.mrf.mxu0
    %v192 = vadd.f32 %v147, %v191
    %193 = vdwg.mxu0
    %194 = vmatpush.msra.mxu0 %v143
    %195 = vmatpush.msra.mxu0 %v140
    %196 = vmatpush.msra.mxu0 %v137
    %197 = vmatpush.msra.mxu0 %v134
    %198 = vmatpush.msra.mxu0 %v131
    %199 = vmatpush.msra.mxu0 %v128
    %200 = vmatpush.msra.mxu0 %v125
    %201 = vmatpush.msra.mxu0 %v122
    %202 = vmatpush.msra.mxu0 %v119
    %203 = vmatpush.msra.mxu0 %v116
    %204 = vmatpush.msra.mxu0 %v113
    %205 = vmatpush.msra.mxu0 %v110
    %206 = vmatpush.msra.mxu0 %v107
    %207 = vmatpush.msra.mxu0 %v104
    %208 = vmatpush.msra.mxu0 %v101
    %209 = vmatpush.msra.mxu0 %v98
    %210 = vmatmul.f32.gmra.mxu0 %v89
    %v211 = vpop.f32.mrf.mxu0
    %v212 = vadd.f32 %v148, %v211
    %213 = vmatmul.f32.gmra.mxu0 %v90
    %v214 = vpop.f32.mrf.mxu0
    %v215 = vadd.f32 %v148, %v214
    %216 = vmatmul.f32.gmra.mxu0 %v91
    %v217 = vpop.f32.mrf.mxu0
    %v218 = vadd.f32 %v148, %v217
    %219 = vmatmul.f32.gmra.mxu0 %v92
    %v220 = vpop.f32.mrf.mxu0
    %v221 = vadd.f32 %v148, %v220
    %222 = vmatmul.f32.gmra.mxu0 %v93
    %v223 = vpop.f32.mrf.mxu0
    %v224 = vadd.f32 %v148, %v223
    %225 = vmatmul.f32.gmra.mxu0 %v94
    %v226 = vpop.f32.mrf.mxu0
    %v227 = vadd.f32 %v148, %v226
    %228 = vmatmul.f32.gmra.mxu0 %v95
    %v229 = vpop.f32.mrf.mxu0
    %v230 = vadd.f32 %v148, %v229
    %231 = vmatmul.f32.gmra.mxu0 %v96
    %v232 = vpop.f32.mrf.mxu0
    %v233 = vadd.f32 %v148, %v232
    %234 = vdwg.mxu0
    %235 = vmatpush.msra.mxu0 %v144
    %236 = vmatpush.msra.mxu0 %v141
    %237 = vmatpush.msra.mxu0 %v138
    %238 = vmatpush.msra.mxu0 %v135
    %239 = vmatpush.msra.mxu0 %v132
    %240 = vmatpush.msra.mxu0 %v129
    %241 = vmatpush.msra.mxu0 %v126
    %242 = vmatpush.msra.mxu0 %v123
    %243 = vmatpush.msra.mxu0 %v120
    %244 = vmatpush.msra.mxu0 %v117
    %245 = vmatpush.msra.mxu0 %v114
    %246 = vmatpush.msra.mxu0 %v111
    %247 = vmatpush.msra.mxu0 %v108
    %248 = vmatpush.msra.mxu0 %v105
    %249 = vmatpush.msra.mxu0 %v102
    %250 = vmatpush.msra.mxu0 %v99
    %251 = vmatmul.f32.gmra.mxu0 %v89
    %v252 = vpop.f32.mrf.mxu0
    %v253 = vadd.f32 %v149, %v252
    %254 = vmatmul.f32.gmra.mxu0 %v90
    %v255 = vpop.f32.mrf.mxu0
    %v256 = vadd.f32 %v149, %v255
    %257 = vmatmul.f32.gmra.mxu0 %v91
    %v258 = vpop.f32.mrf.mxu0
    %v259 = vadd.f32 %v149, %v258
    %260 = vmatmul.f32.gmra.mxu0 %v92
    %v261 = vpop.f32.mrf.mxu0
    %v262 = vadd.f32 %v149, %v261
    %263 = vmatmul.f32.gmra.mxu0 %v93
    %v264 = vpop.f32.mrf.mxu0
    %v265 = vadd.f32 %v149, %v264
    %266 = vmatmul.f32.gmra.mxu0 %v94
    %v267 = vpop.f32.mrf.mxu0
    %v268 = vadd.f32 %v149, %v267
    %269 = vmatmul.f32.gmra.mxu0 %v95
    %v270 = vpop.f32.mrf.mxu0
    %v271 = vadd.f32 %v149, %v270
    %272 = vmatmul.f32.gmra.mxu0 %v96
    %v273 = vpop.f32.mrf.mxu0
    %v274 = vadd.f32 %v149, %v273
    %275 = vdwg.mxu0
    %276 = vst [vmem:[#allocation2] sm:$0xff] %v171
    %277 = vst [vmem:[#allocation2 + $0x8] sm:$0xff] %v212
    %278 = vst [vmem:[#allocation2 + $0x10] sm:$0xff] %v253
    %279 = vst [vmem:[#allocation2 + $0x18] sm:$0xff] %v174
    %280 = vst [vmem:[#allocation2 + $0x20] sm:$0xff] %v215
    %281 = vst [vmem:[#allocation2 + $0x28] sm:$0xff] %v256
    %282 = vst [vmem:[#allocation2 + $0x30] sm:$0xff] %v177
    %283 = vst [vmem:[#allocation2 + $0x38] sm:$0xff] %v218
    %284 = vst [vmem:[#allocation2 + $0x40] sm:$0xff] %v259
    %285 = vst [vmem:[#allocation2 + $0x48] sm:$0xff] %v180
    %286 = vst [vmem:[#allocation2 + $0x50] sm:$0xff] %v221
    %287 = vst [vmem:[#allocation2 + $0x58] sm:$0xff] %v262
    %288 = vst [vmem:[#allocation2 + $0x60] sm:$0xff] %v183
    %289 = vst [vmem:[#allocation2 + $0x68] sm:$0xff] %v224
    %290 = vst [vmem:[#allocation2 + $0x70] sm:$0xff] %v265
    %291 = vst [vmem:[#allocation2 + $0x78] sm:$0xff] %v186
    %292 = vst [vmem:[#allocation2 + $0x80] sm:$0xff] %v227
    %293 = vst [vmem:[#allocation2 + $0x88] sm:$0xff] %v268
    %294 = vst [vmem:[#allocation2 + $0x90] sm:$0xff] %v189
    %295 = vst [vmem:[#allocation2 + $0x98] sm:$0xff] %v230
    %296 = vst [vmem:[#allocation2 + $0xa0] sm:$0xff] %v271
    %297 = vst [vmem:[#allocation2 + $0xa8] sm:$0xff] %v192
    %298 = vst [vmem:[#allocation2 + $0xb0] sm:$0xff] %v233
    %299 = vst [vmem:[#allocation2 + $0xb8] sm:$0xff] %v274
    %v300 = vld [vmem:[%s4] sm:$0xff]
    %v301 = vld [vmem:[%s4 + $0x8] sm:$0xff]
    %v302 = vld [vmem:[%s4 + $0x10] sm:$0xff]
    %v303 = vld [vmem:[%s4 + $0x18] sm:$0xff]
    %v304 = vld [vmem:[%s4 + $0x20] sm:$0xff]
    %v305 = vld [vmem:[%s4 + $0x28] sm:$0xff]
    %v306 = vld [vmem:[%s4 + $0x30] sm:$0xff]
    %v307 = vld [vmem:[%s4 + $0x38] sm:$0xff]
    %v308 = vld [vmem:[%s4 + $0x40] sm:$0xff]
    %v309 = vld [vmem:[%s4 + $0x48] sm:$0xff]
    %v310 = vld [vmem:[%s4 + $0x50] sm:$0xff]
    %v311 = vld [vmem:[%s4 + $0x58] sm:$0xff]
    %v312 = vld [vmem:[%s4 + $0x60] sm:$0xff]
    %v313 = vld [vmem:[%s4 + $0x68] sm:$0xff]
    %v314 = vld [vmem:[%s4 + $0x70] sm:$0xff]
    %v315 = vld [vmem:[%s4 + $0x78] sm:$0xff]
    %v316 = vld [vmem:[%s4 + $0x80] sm:$0xff]
    %v317 = vld [vmem:[%s4 + $0x88] sm:$0xff]
    %v318 = vld [vmem:[%s4 + $0x90] sm:$0xff]
    %v319 = vld [vmem:[%s4 + $0x98] sm:$0xff]
    %v320 = vld [vmem:[%s4 + $0xa0] sm:$0xff]
    %v321 = vld [vmem:[%s4 + $0xa8] sm:$0xff]
    %v322 = vld [vmem:[%s4 + $0xb0] sm:$0xff]
    %v323 = vld [vmem:[%s4 + $0xb8] sm:$0xff]
    %v324 = vld [vmem:[%s4 + $0xc0] sm:$0xff]
    %v325 = vld [vmem:[%s4 + $0xc8] sm:$0xff]
    %v326 = vld [vmem:[%s4 + $0xd0] sm:$0xff]
    %v327 = vld [vmem:[%s4 + $0xd8] sm:$0xff]
    %v328 = vld [vmem:[%s4 + $0xe0] sm:$0xff]
    %v329 = vld [vmem:[%s4 + $0xe8] sm:$0xff]
    %v330 = vld [vmem:[%s4 + $0xf0] sm:$0xff]
    %v331 = vld [vmem:[%s4 + $0xf8] sm:$0xff]
    %v332 = vld [vmem:[%s4 + $0x100] sm:$0xff]
    %v333 = vld [vmem:[%s4 + $0x108] sm:$0xff]
    %v334 = vld [vmem:[%s4 + $0x110] sm:$0xff]
    %v335 = vld [vmem:[%s4 + $0x118] sm:$0xff]
    %v336 = vld [vmem:[%s4 + $0x120] sm:$0xff]
    %v337 = vld [vmem:[%s4 + $0x128] sm:$0xff]
    %v338 = vld [vmem:[%s4 + $0x130] sm:$0xff]
    %v339 = vld [vmem:[%s4 + $0x138] sm:$0xff]
    %v340 = vld [vmem:[%s4 + $0x140] sm:$0xff]
    %v341 = vld [vmem:[%s4 + $0x148] sm:$0xff]
    %v342 = vld [vmem:[%s4 + $0x150] sm:$0xff]
    %v343 = vld [vmem:[%s4 + $0x158] sm:$0xff]
    %v344 = vld [vmem:[%s4 + $0x160] sm:$0xff]
    %v345 = vld [vmem:[%s4 + $0x168] sm:$0xff]
    %v346 = vld [vmem:[%s4 + $0x170] sm:$0xff]
    %v347 = vld [vmem:[%s4 + $0x178] sm:$0xff]
    %348 = vmatpush.msra.mxu0 %v345
    %349 = vmatpush.msra.mxu0 %v342
    %350 = vmatpush.msra.mxu0 %v339
    %351 = vmatpush.msra.mxu0 %v336
    %352 = vmatpush.msra.mxu0 %v333
    %353 = vmatpush.msra.mxu0 %v330
    %354 = vmatpush.msra.mxu0 %v327
    %355 = vmatpush.msra.mxu0 %v324
    %356 = vmatpush.msra.mxu0 %v321
    %357 = vmatpush.msra.mxu0 %v318
    %358 = vmatpush.msra.mxu0 %v315
    %359 = vmatpush.msra.mxu0 %v312
    %360 = vmatpush.msra.mxu0 %v309
    %361 = vmatpush.msra.mxu0 %v306
    %362 = vmatpush.msra.mxu0 %v303
    %363 = vmatpush.msra.mxu0 %v300
    %364 = vmatmul.f32.gmra.mxu0 0.0
    %v365 = vpop.f32.mrf.mxu0
    %v366 = vadd.f32 0.0, %v365
    %367 = vdwg.mxu0
    %368 = vmatpush.msra.mxu0 %v346
    %369 = vmatpush.msra.mxu0 %v343
    %370 = vmatpush.msra.mxu0 %v340
    %371 = vmatpush.msra.mxu0 %v337
    %372 = vmatpush.msra.mxu0 %v334
    %373 = vmatpush.msra.mxu0 %v331
    %374 = vmatpush.msra.mxu0 %v328
    %375 = vmatpush.msra.mxu0 %v325
    %376 = vmatpush.msra.mxu0 %v322
    %377 = vmatpush.msra.mxu0 %v319
    %378 = vmatpush.msra.mxu0 %v316
    %379 = vmatpush.msra.mxu0 %v313
    %380 = vmatpush.msra.mxu0 %v310
    %381 = vmatpush.msra.mxu0 %v307
    %382 = vmatpush.msra.mxu0 %v304
    %383 = vmatpush.msra.mxu0 %v301
    %384 = vmatmul.f32.gmra.mxu0 0.0
    %v385 = vpop.f32.mrf.mxu0
    %v386 = vadd.f32 0.0, %v385
    %387 = vdwg.mxu0
    %388 = vmatpush.msra.mxu0 %v347
    %389 = vmatpush.msra.mxu0 %v344
    %390 = vmatpush.msra.mxu0 %v341
    %391 = vmatpush.msra.mxu0 %v338
    %392 = vmatpush.msra.mxu0 %v335
    %393 = vmatpush.msra.mxu0 %v332
    %394 = vmatpush.msra.mxu0 %v329
    %395 = vmatpush.msra.mxu0 %v326
    %396 = vmatpush.msra.mxu0 %v323
    %397 = vmatpush.msra.mxu0 %v320
    %398 = vmatpush.msra.mxu0 %v317
    %399 = vmatpush.msra.mxu0 %v314
    %400 = vmatpush.msra.mxu0 %v311
    %401 = vmatpush.msra.mxu0 %v308
    %402 = vmatpush.msra.mxu0 %v305
    %403 = vmatpush.msra.mxu0 %v302
    %404 = vmatmul.f32.gmra.mxu0 0.0
    %v405 = vpop.f32.mrf.mxu0
    %v406 = vadd.f32 0.0, %v405
    %407 = vdwg.mxu0
    %v408 = vld [vmem:[#allocation2] sm:$0xff]
    %v409 = vld [vmem:[#allocation2 + $0x8] sm:$0xff]
    %v410 = vld [vmem:[#allocation2 + $0x10] sm:$0xff]
    %v411 = vadd.f32 %v408, %v366
    %v412 = vadd.f32 %v409, %v386
    %v413 = vmul.f32 %v411, 0.5
    %v414 = vmul.f32 %v412, 0.5
    %v415 = vtanh.pop %v413
    %v416 = vtanh.pop %v414
    %v417 = vadd.f32 %v415, 1.0
    %v418 = vadd.f32 %v416, 1.0
    %v419 = vmul.f32 %v417, 0.5
    %v420 = vmul.f32 %v418, 0.5
    %v421 = vld [vmem:[%s5] sm:$0x1]
    %v423 = vperm.slane %v421, 0
    %v425 = vadd.f32 %v406, %v423
    %v426 = vmul.f32 %v419, %v425
    %v427 = vadd.f32 %v410, %v426
    %v428 = vtanh.pop %v427
    %v429 = vsub.f32 1.0, %v420
    %v430 = vmul.f32 %v429, %v428
    %v431 = vmul.f32 %v420, 0.0
    %v432 = vadd.f32 %v430, %v431
    %v433 = vsel %vm88, 0, 7
    %434 = vset.pattern.permute.xlu0 0
    %435 = vperm.xlu0 %434, %v85
    %v436 = vpop.permute.xlu0 %435
    %vm437 = vcmp.gt.s32.totalorder %v436, %v433
    %v438 = vsel %vm437, %v432, 0.0
    %439 = vst [vmem:[#allocation3] sm:$0xff] %v438
    %440 = vst [vmem:[#allocation4 + $0x38] sm:$0xff] %v438
    %v441 = vld [vmem:[%s4] sm:$0xff]
    %v442 = vld [vmem:[%s4 + $0x8] sm:$0xff]
    %v443 = vld [vmem:[%s4 + $0x10] sm:$0xff]
    %v444 = vld [vmem:[%s4 + $0x18] sm:$0xff]
    %v445 = vld [vmem:[%s4 + $0x20] sm:$0xff]
    %v446 = vld [vmem:[%s4 + $0x28] sm:$0xff]
    %v447 = vld [vmem:[%s4 + $0x30] sm:$0xff]
    %v448 = vld [vmem:[%s4 + $0x38] sm:$0xff]
    %v449 = vld [vmem:[%s4 + $0x40] sm:$0xff]
    %v450 = vld [vmem:[%s4 + $0x48] sm:$0xff]
    %v451 = vld [vmem:[%s4 + $0x50] sm:$0xff]
    %v452 = vld [vmem:[%s4 + $0x58] sm:$0xff]
    %v453 = vld [vmem:[%s4 + $0x60] sm:$0xff]
    %v454 = vld [vmem:[%s4 + $0x68] sm:$0xff]
    %v455 = vld [vmem:[%s4 + $0x70] sm:$0xff]
    %v456 = vld [vmem:[%s4 + $0x78] sm:$0xff]
    %v457 = vld [vmem:[%s4 + $0x80] sm:$0xff]
    %v458 = vld [vmem:[%s4 + $0x88] sm:$0xff]
    %v459 = vld [vmem:[%s4 + $0x90] sm:$0xff]
    %v460 = vld [vmem:[%s4 + $0x98] sm:$0xff]
    %v461 = vld [vmem:[%s4 + $0xa0] sm:$0xff]
    %v462 = vld [vmem:[%s4 + $0xa8] sm:$0xff]
    %v463 = vld [vmem:[%s4 + $0xb0] sm:$0xff]
    %v464 = vld [vmem:[%s4 + $0xb8] sm:$0xff]
    %v465 = vld [vmem:[%s4 + $0xc0] sm:$0xff]
    %v466 = vld [vmem:[%s4 + $0xc8] sm:$0xff]
    %v467 = vld [vmem:[%s4 + $0xd0] sm:$0xff]
    %v468 = vld [vmem:[%s4 + $0xd8] sm:$0xff]
    %v469 = vld [vmem:[%s4 + $0xe0] sm:$0xff]
    %v470 = vld [vmem:[%s4 + $0xe8] sm:$0xff]
    %v471 = vld [vmem:[%s4 + $0xf0] sm:$0xff]
    %v472 = vld [vmem:[%s4 + $0xf8] sm:$0xff]
    %v473 = vld [vmem:[%s4 + $0x100] sm:$0xff]
    %v474 = vld [vmem:[%s4 + $0x108] sm:$0xff]
    %v475 = vld [vmem:[%s4 + $0x110] sm:$0xff]
    %v476 = vld [vmem:[%s4 + $0x118] sm:$0xff]
    %v477 = vld [vmem:[%s4 + $0x120] sm:$0xff]
    %v478 = vld [vmem:[%s4 + $0x128] sm:$0xff]
    %v479 = vld [vmem:[%s4 + $0x130] sm:$0xff]
    %v480 = vld [vmem:[%s4 + $0x138] sm:$0xff]
    %v481 = vld [vmem:[%s4 + $0x140] sm:$0xff]
    %v482 = vld [vmem:[%s4 + $0x148] sm:$0xff]
    %v483 = vld [vmem:[%s4 + $0x150] sm:$0xff]
    %v484 = vld [vmem:[%s4 + $0x158] sm:$0xff]
    %v485 = vld [vmem:[%s4 + $0x160] sm:$0xff]
    %v486 = vld [vmem:[%s4 + $0x168] sm:$0xff]
    %v487 = vld [vmem:[%s4 + $0x170] sm:$0xff]
    %v488 = vld [vmem:[%s4 + $0x178] sm:$0xff]
    %489 = vmatpush.msra.mxu0 %v486
    %490 = vmatpush.msra.mxu0 %v483
    %491 = vmatpush.msra.mxu0 %v480
    %492 = vmatpush.msra.mxu0 %v477
    %493 = vmatpush.msra.mxu0 %v474
    %494 = vmatpush.msra.mxu0 %v471
    %495 = vmatpush.msra.mxu0 %v468
    %496 = vmatpush.msra.mxu0 %v465
    %497 = vmatpush.msra.mxu0 %v462
    %498 = vmatpush.msra.mxu0 %v459
    %499 = vmatpush.msra.mxu0 %v456
    %500 = vmatpush.msra.mxu0 %v453
    %501 = vmatpush.msra.mxu0 %v450
    %502 = vmatpush.msra.mxu0 %v447
    %503 = vmatpush.msra.mxu0 %v444
    %504 = vmatpush.msra.mxu0 %v441
    %505 = vmatmul.f32.gmra.mxu0 %v438
    %v506 = vpop.f32.mrf.mxu0
    %v507 = vadd.f32 0.0, %v506
    %508 = vdwg.mxu0
    %509 = vmatpush.msra.mxu0 %v487
    %510 = vmatpush.msra.mxu0 %v484
    %511 = vmatpush.msra.mxu0 %v481
    %512 = vmatpush.msra.mxu0 %v478
    %513 = vmatpush.msra.mxu0 %v475
    %514 = vmatpush.msra.mxu0 %v472
    %515 = vmatpush.msra.mxu0 %v469
    %516 = vmatpush.msra.mxu0 %v466
    %517 = vmatpush.msra.mxu0 %v463
    %518 = vmatpush.msra.mxu0 %v460
    %519 = vmatpush.msra.mxu0 %v457
    %520 = vmatpush.msra.mxu0 %v454
    %521 = vmatpush.msra.mxu0 %v451
    %522 = vmatpush.msra.mxu0 %v448
    %523 = vmatpush.msra.mxu0 %v445
    %524 = vmatpush.msra.mxu0 %v442
    %525 = vmatmul.f32.gmra.mxu0 %v438
    %v526 = vpop.f32.mrf.mxu0
    %v527 = vadd.f32 0.0, %v526
    %528 = vdwg.mxu0
    %529 = vmatpush.msra.mxu0 %v488
    %530 = vmatpush.msra.mxu0 %v485
    %531 = vmatpush.msra.mxu0 %v482
    %532 = vmatpush.msra.mxu0 %v479
    %533 = vmatpush.msra.mxu0 %v476
    %534 = vmatpush.msra.mxu0 %v473
    %535 = vmatpush.msra.mxu0 %v470
    %536 = vmatpush.msra.mxu0 %v467
    %537 = vmatpush.msra.mxu0 %v464
    %538 = vmatpush.msra.mxu0 %v461
    %539 = vmatpush.msra.mxu0 %v458
    %540 = vmatpush.msra.mxu0 %v455
    %541 = vmatpush.msra.mxu0 %v452
    %542 = vmatpush.msra.mxu0 %v449
    %543 = vmatpush.msra.mxu0 %v446
    %544 = vmatpush.msra.mxu0 %v443
    %545 = vmatmul.f32.gmra.mxu0 %v438
    %v546 = vpop.f32.mrf.mxu0
    %v547 = vadd.f32 0.0, %v546
    %548 = vdwg.mxu0
    %v549 = vld [vmem:[#allocation2 + $0x18] sm:$0xff]
    %v550 = vld [vmem:[#allocation2 + $0x20] sm:$0xff]
    %v551 = vld [vmem:[#allocation2 + $0x28] sm:$0xff]
    %v552 = vadd.f32 %v549, %v507
    %v553 = vadd.f32 %v550, %v527
    %v554 = vmul.f32 %v552, 0.5
    %v555 = vmul.f32 %v553, 0.5
    %v556 = vtanh.pop %v554
    %v557 = vtanh.pop %v555
    %v558 = vadd.f32 %v556, 1.0
    %v559 = vadd.f32 %v557, 1.0
    %v560 = vmul.f32 %v558, 0.5
    %v561 = vmul.f32 %v559, 0.5
    %v562 = vld [vmem:[%s5] sm:$0x1]
    %v564 = vperm.slane %v562, 0
    %v566 = vadd.f32 %v547, %v564
    %v567 = vmul.f32 %v560, %v566
    %v568 = vadd.f32 %v551, %v567
    %v569 = vtanh.pop %v568
    %v570 = vsub.f32 1.0, %v561
    %v571 = vmul.f32 %v570, %v569
    %v572 = vmul.f32 %v561, %v438
    %v573 = vadd.f32 %v571, %v572
    %v574 = vsel %vm88, 1, 6
    %vm575 = vcmp.gt.s32.totalorder %v436, %v574
    %v576 = vsel %vm575, %v573, 0.0
    %577 = vst [vmem:[#allocation3 + $0x8] sm:$0xff] %v576
    %578 = vst [vmem:[#allocation4 + $0x30] sm:$0xff] %v576
    %v579 = vsel %vm575, %v573, %v438
    %v580 = vld [vmem:[%s4] sm:$0xff]
    %v581 = vld [vmem:[%s4 + $0x8] sm:$0xff]
    %v582 = vld [vmem:[%s4 + $0x10] sm:$0xff]
    %v583 = vld [vmem:[%s4 + $0x18] sm:$0xff]
    %v584 = vld [vmem:[%s4 + $0x20] sm:$0xff]
    %v585 = vld [vmem:[%s4 + $0x28] sm:$0xff]
    %v586 = vld [vmem:[%s4 + $0x30] sm:$0xff]
    %v587 = vld [vmem:[%s4 + $0x38] sm:$0xff]
    %v588 = vld [vmem:[%s4 + $0x40] sm:$0xff]
    %v589 = vld [vmem:[%s4 + $0x48] sm:$0xff]
    %v590 = vld [vmem:[%s4 + $0x50] sm:$0xff]
    %v591 = vld [vmem:[%s4 + $0x58] sm:$0xff]
    %v592 = vld [vmem:[%s4 + $0x60] sm:$0xff]
    %v593 = vld [vmem:[%s4 + $0x68] sm:$0xff]
    %v594 = vld [vmem:[%s4 + $0x70] sm:$0xff]
    %v595 = vld [vmem:[%s4 + $0x78] sm:$0xff]
    %v596 = vld [vmem:[%s4 + $0x80] sm:$0xff]
    %v597 = vld [vmem:[%s4 + $0x88] sm:$0xff]
    %v598 = vld [vmem:[%s4 + $0x90] sm:$0xff]
    %v599 = vld [vmem:[%s4 + $0x98] sm:$0xff]
    %v600 = vld [vmem:[%s4 + $0xa0] sm:$0xff]
    %v601 = vld [vmem:[%s4 + $0xa8] sm:$0xff]
    %v602 = vld [vmem:[%s4 + $0xb0] sm:$0xff]
    %v603 = vld [vmem:[%s4 + $0xb8] sm:$0xff]
    %v604 = vld [vmem:[%s4 + $0xc0] sm:$0xff]
    %v605 = vld [vmem:[%s4 + $0xc8] sm:$0xff]
    %v606 = vld [vmem:[%s4 + $0xd0] sm:$0xff]
    %v607 = vld [vmem:[%s4 + $0xd8] sm:$0xff]
    %v608 = vld [vmem:[%s4 + $0xe0] sm:$0xff]
    %v609 = vld [vmem:[%s4 + $0xe8] sm:$0xff]
    %v610 = vld [vmem:[%s4 + $0xf0] sm:$0xff]
    %v611 = vld [vmem:[%s4 + $0xf8] sm:$0xff]
    %v612 = vld [vmem:[%s4 + $0x100] sm:$0xff]
    %v613 = vld [vmem:[%s4 + $0x108] sm:$0xff]
    %v614 = vld [vmem:[%s4 + $0x110] sm:$0xff]
    %v615 = vld [vmem:[%s4 + $0x118] sm:$0xff]
    %v616 = vld [vmem:[%s4 + $0x120] sm:$0xff]
    %v617 = vld [vmem:[%s4 + $0x128] sm:$0xff]
    %v618 = vld [vmem:[%s4 + $0x130] sm:$0xff]
    %v619 = vld [vmem:[%s4 + $0x138] sm:$0xff]
    %v620 = vld [vmem:[%s4 + $0x140] sm:$0xff]
    %v621 = vld [vmem:[%s4 + $0x148] sm:$0xff]
    %v622 = vld [vmem:[%s4 + $0x150] sm:$0xff]
    %v623 = vld [vmem:[%s4 + $0x158] sm:$0xff]
    %v624 = vld [vmem:[%s4 + $0x160] sm:$0xff]
    %v625 = vld [vmem:[%s4 + $0x168] sm:$0xff]
    %v626 = vld [vmem:[%s4 + $0x170] sm:$0xff]
    %v627 = vld [vmem:[%s4 + $0x178] sm:$0xff]
    %628 = vmatpush.msra.mxu0 %v625
    %629 = vmatpush.msra.mxu0 %v622
    %630 = vmatpush.msra.mxu0 %v619
    %631 = vmatpush.msra.mxu0 %v616
    %632 = vmatpush.msra.mxu0 %v613
    %633 = vmatpush.msra.mxu0 %v610
    %634 = vmatpush.msra.mxu0 %v607
    %635 = vmatpush.msra.mxu0 %v604
    %636 = vmatpush.msra.mxu0 %v601
    %637 = vmatpush.msra.mxu0 %v598
    %638 = vmatpush.msra.mxu0 %v595
    %639 = vmatpush.msra.mxu0 %v592
    %640 = vmatpush.msra.mxu0 %v589
    %641 = vmatpush.msra.mxu0 %v586
    %642 = vmatpush.msra.mxu0 %v583
    %643 = vmatpush.msra.mxu0 %v580
    %644 = vmatmul.f32.gmra.mxu0 %v579
    %v645 = vpop.f32.mrf.mxu0
    %v646 = vadd.f32 0.0, %v645
    %647 = vdwg.mxu0
    %648 = vmatpush.msra.mxu0 %v626
    %649 = vmatpush.msra.mxu0 %v623
    %650 = vmatpush.msra.mxu0 %v620
    %651 = vmatpush.msra.mxu0 %v617
    %652 = vmatpush.msra.mxu0 %v614
    %653 = vmatpush.msra.mxu0 %v611
    %654 = vmatpush.msra.mxu0 %v608
    %655 = vmatpush.msra.mxu0 %v605
    %656 = vmatpush.msra.mxu0 %v602
    %657 = vmatpush.msra.mxu0 %v599
    %658 = vmatpush.msra.mxu0 %v596
    %659 = vmatpush.msra.mxu0 %v593
    %660 = vmatpush.msra.mxu0 %v590
    %661 = vmatpush.msra.mxu0 %v587
    %662 = vmatpush.msra.mxu0 %v584
    %663 = vmatpush.msra.mxu0 %v581
    %664 = vmatmul.f32.gmra.mxu0 %v579
    %v665 = vpop.f32.mrf.mxu0
    %v666 = vadd.f32 0.0, %v665
    %667 = vdwg.mxu0
    %668 = vmatpush.msra.mxu0 %v627
    %669 = vmatpush.msra.mxu0 %v624
    %670 = vmatpush.msra.mxu0 %v621
    %671 = vmatpush.msra.mxu0 %v618
    %672 = vmatpush.msra.mxu0 %v615
    %673 = vmatpush.msra.mxu0 %v612
    %674 = vmatpush.msra.mxu0 %v609
    %675 = vmatpush.msra.mxu0 %v606
    %676 = vmatpush.msra.mxu0 %v603
    %677 = vmatpush.msra.mxu0 %v600
    %678 = vmatpush.msra.mxu0 %v597
    %679 = vmatpush.msra.mxu0 %v594
    %680 = vmatpush.msra.mxu0 %v591
    %681 = vmatpush.msra.mxu0 %v588
    %682 = vmatpush.msra.mxu0 %v585
    %683 = vmatpush.msra.mxu0 %v582
    %684 = vmatmul.f32.gmra.mxu0 %v579
    %v685 = vpop.f32.mrf.mxu0
    %v686 = vadd.f32 0.0, %v685
    %687 = vdwg.mxu0
    %v688 = vld [vmem:[#allocation2 + $0x30] sm:$0xff]
    %v689 = vld [vmem:[#allocation2 + $0x38] sm:$0xff]
    %v690 = vld [vmem:[#allocation2 + $0x40] sm:$0xff]
    %v691 = vadd.f32 %v688, %v646
    %v692 = vadd.f32 %v689, %v666
    %v693 = vmul.f32 %v691, 0.5
    %v694 = vmul.f32 %v692, 0.5
    %v695 = vtanh.pop %v693
    %v696 = vtanh.pop %v694
    %v697 = vadd.f32 %v695, 1.0
    %v698 = vadd.f32 %v696, 1.0
    %v699 = vmul.f32 %v697, 0.5
    %v700 = vmul.f32 %v698, 0.5
    %v701 = vld [vmem:[%s5] sm:$0x1]
    %v703 = vperm.slane %v701, 0
    %v705 = vadd.f32 %v686, %v703
    %v706 = vmul.f32 %v699, %v705
    %v707 = vadd.f32 %v690, %v706
    %v708 = vtanh.pop %v707
    %v709 = vsub.f32 1.0, %v700
    %v710 = vmul.f32 %v709, %v708
    %v711 = vmul.f32 %v700, %v579
    %v712 = vadd.f32 %v710, %v711
    %v713 = vsel %vm88, 2, 5
    %vm714 = vcmp.gt.s32.totalorder %v436, %v713
    %v715 = vsel %vm714, %v712, 0.0
    %716 = vst [vmem:[#allocation3 + $0x10] sm:$0xff] %v715
    %717 = vst [vmem:[#allocation4 + $0x28] sm:$0xff] %v715
    %v718 = vsel %vm714, %v712, %v579
    %v719 = vld [vmem:[%s4] sm:$0xff]
    %v720 = vld [vmem:[%s4 + $0x8] sm:$0xff]
    %v721 = vld [vmem:[%s4 + $0x10] sm:$0xff]
    %v722 = vld [vmem:[%s4 + $0x18] sm:$0xff]
    %v723 = vld [vmem:[%s4 + $0x20] sm:$0xff]
    %v724 = vld [vmem:[%s4 + $0x28] sm:$0xff]
    %v725 = vld [vmem:[%s4 + $0x30] sm:$0xff]
    %v726 = vld [vmem:[%s4 + $0x38] sm:$0xff]
    %v727 = vld [vmem:[%s4 + $0x40] sm:$0xff]
    %v728 = vld [vmem:[%s4 + $0x48] sm:$0xff]
    %v729 = vld [vmem:[%s4 + $0x50] sm:$0xff]
    %v730 = vld [vmem:[%s4 + $0x58] sm:$0xff]
    %v731 = vld [vmem:[%s4 + $0x60] sm:$0xff]
    %v732 = vld [vmem:[%s4 + $0x68] sm:$0xff]
    %v733 = vld [vmem:[%s4 + $0x70] sm:$0xff]
    %v734 = vld [vmem:[%s4 + $0x78] sm:$0xff]
    %v735 = vld [vmem:[%s4 + $0x80] sm:$0xff]
    %v736 = vld [vmem:[%s4 + $0x88] sm:$0xff]
    %v737 = vld [vmem:[%s4 + $0x90] sm:$0xff]
    %v738 = vld [vmem:[%s4 + $0x98] sm:$0xff]
    %v739 = vld [vmem:[%s4 + $0xa0] sm:$0xff]
    %v740 = vld [vmem:[%s4 + $0xa8] sm:$0xff]
    %v741 = vld [vmem:[%s4 + $0xb0] sm:$0xff]
    %v742 = vld [vmem:[%s4 + $0xb8] sm:$0xff]
    %v743 = vld [vmem:[%s4 + $0xc0] sm:$0xff]
    %v744 = vld [vmem:[%s4 + $0xc8] sm:$0xff]
    %v745 = vld [vmem:[%s4 + $0xd0] sm:$0xff]
    %v746 = vld [vmem:[%s4 + $0xd8] sm:$0xff]
    %v747 = vld [vmem:[%s4 + $0xe0] sm:$0xff]
    %v748 = vld [vmem:[%s4 + $0xe8] sm:$0xff]
    %v749 = vld [vmem:[%s4 + $0xf0] sm:$0xff]
    %v750 = vld [vmem:[%s4 + $0xf8] sm:$0xff]
    %v751 = vld [vmem:[%s4 + $0x100] sm:$0xff]
    %v752 = vld [vmem:[%s4 + $0x108] sm:$0xff]
    %v753 = vld [vmem:[%s4 + $0x110] sm:$0xff]
    %v754 = vld [vmem:[%s4 + $0x118] sm:$0xff]
    %v755 = vld [vmem:[%s4 + $0x120] sm:$0xff]
    %v756 = vld [vmem:[%s4 + $0x128] sm:$0xff]
    %v757 = vld [vmem:[%s4 + $0x130] sm:$0xff]
    %v758 = vld [vmem:[%s4 + $0x138] sm:$0xff]
    %v759 = vld [vmem:[%s4 + $0x140] sm:$0xff]
    %v760 = vld [vmem:[%s4 + $0x148] sm:$0xff]
    %v761 = vld [vmem:[%s4 + $0x150] sm:$0xff]
    %v762 = vld [vmem:[%s4 + $0x158] sm:$0xff]
    %v763 = vld [vmem:[%s4 + $0x160] sm:$0xff]
    %v764 = vld [vmem:[%s4 + $0x168] sm:$0xff]
    %v765 = vld [vmem:[%s4 + $0x170] sm:$0xff]
    %v766 = vld [vmem:[%s4 + $0x178] sm:$0xff]
    %767 = vmatpush.msra.mxu0 %v764
    %768 = vmatpush.msra.mxu0 %v761
    %769 = vmatpush.msra.mxu0 %v758
    %770 = vmatpush.msra.mxu0 %v755
    %771 = vmatpush.msra.mxu0 %v752
    %772 = vmatpush.msra.mxu0 %v749
    %773 = vmatpush.msra.mxu0 %v746
    %774 = vmatpush.msra.mxu0 %v743
    %775 = vmatpush.msra.mxu0 %v740
    %776 = vmatpush.msra.mxu0 %v737
    %777 = vmatpush.msra.mxu0 %v734
    %778 = vmatpush.msra.mxu0 %v731
    %779 = vmatpush.msra.mxu0 %v728
    %780 = vmatpush.msra.mxu0 %v725
    %781 = vmatpush.msra.mxu0 %v722
    %782 = vmatpush.msra.mxu0 %v719
    %783 = vmatmul.f32.gmra.mxu0 %v718
    %v784 = vpop.f32.mrf.mxu0
    %v785 = vadd.f32 0.0, %v784
    %786 = vdwg.mxu0
    %787 = vmatpush.msra.mxu0 %v765
    %788 = vmatpush.msra.mxu0 %v762
    %789 = vmatpush.msra.mxu0 %v759
    %790 = vmatpush.msra.mxu0 %v756
    %791 = vmatpush.msra.mxu0 %v753
    %792 = vmatpush.msra.mxu0 %v750
    %793 = vmatpush.msra.mxu0 %v747
    %794 = vmatpush.msra.mxu0 %v744
    %795 = vmatpush.msra.mxu0 %v741
    %796 = vmatpush.msra.mxu0 %v738
    %797 = vmatpush.msra.mxu0 %v735
    %798 = vmatpush.msra.mxu0 %v732
    %799 = vmatpush.msra.mxu0 %v729
    %800 = vmatpush.msra.mxu0 %v726
    %801 = vmatpush.msra.mxu0 %v723
    %802 = vmatpush.msra.mxu0 %v720
    %803 = vmatmul.f32.gmra.mxu0 %v718
    %v804 = vpop.f32.mrf.mxu0
    %v805 = vadd.f32 0.0, %v804
    %806 = vdwg.mxu0
    %807 = vmatpush.msra.mxu0 %v766
    %808 = vmatpush.msra.mxu0 %v763
    %809 = vmatpush.msra.mxu0 %v760
    %810 = vmatpush.msra.mxu0 %v757
    %811 = vmatpush.msra.mxu0 %v754
    %812 = vmatpush.msra.mxu0 %v751
    %813 = vmatpush.msra.mxu0 %v748
    %814 = vmatpush.msra.mxu0 %v745
    %815 = vmatpush.msra.mxu0 %v742
    %816 = vmatpush.msra.mxu0 %v739
    %817 = vmatpush.msra.mxu0 %v736
    %818 = vmatpush.msra.mxu0 %v733
    %819 = vmatpush.msra.mxu0 %v730
    %820 = vmatpush.msra.mxu0 %v727
    %821 = vmatpush.msra.mxu0 %v724
    %822 = vmatpush.msra.mxu0 %v721
    %823 = vmatmul.f32.gmra.mxu0 %v718
    %v824 = vpop.f32.mrf.mxu0
    %v825 = vadd.f32 0.0, %v824
    %826 = vdwg.mxu0
    %v827 = vld [vmem:[#allocation2 + $0x48] sm:$0xff]
    %v828 = vld [vmem:[#allocation2 + $0x50] sm:$0xff]
    %v829 = vld [vmem:[#allocation2 + $0x58] sm:$0xff]
    %v830 = vadd.f32 %v827, %v785
    %v831 = vadd.f32 %v828, %v805
    %v832 = vmul.f32 %v830, 0.5
    %v833 = vmul.f32 %v831, 0.5
    %v834 = vtanh.pop %v832
    %v835 = vtanh.pop %v833
    %v836 = vadd.f32 %v834, 1.0
    %v837 = vadd.f32 %v835, 1.0
    %v838 = vmul.f32 %v836, 0.5
    %v839 = vmul.f32 %v837, 0.5
    %v840 = vld [vmem:[%s5] sm:$0x1]
    %v842 = vperm.slane %v840, 0
    %v844 = vadd.f32 %v825, %v842
    %v845 = vmul.f32 %v838, %v844
    %v846 = vadd.f32 %v829, %v845
    %v847 = vtanh.pop %v846
    %v848 = vsub.f32 1.0, %v839
    %v849 = vmul.f32 %v848, %v847
    %v850 = vmul.f32 %v839, %v718
    %v851 = vadd.f32 %v849, %v850
    %v852 = vsel %vm88, 3, 4
    %vm853 = vcmp.gt.s32.totalorder %v436, %v852
    %v854 = vsel %vm853, %v851, 0.0
    %855 = vst [vmem:[#allocation3 + $0x18] sm:$0xff] %v854
    %856 = vst [vmem:[#allocation4 + $0x20] sm:$0xff] %v854
    %v857 = vsel %vm853, %v851, %v718
    %v858 = vld [vmem:[%s4] sm:$0xff]
    %v859 = vld [vmem:[%s4 + $0x8] sm:$0xff]
    %v860 = vld [vmem:[%s4 + $0x10] sm:$0xff]
    %v861 = vld [vmem:[%s4 + $0x18] sm:$0xff]
    %v862 = vld [vmem:[%s4 + $0x20] sm:$0xff]
    %v863 = vld [vmem:[%s4 + $0x28] sm:$0xff]
    %v864 = vld [vmem:[%s4 + $0x30] sm:$0xff]
    %v865 = vld [vmem:[%s4 + $0x38] sm:$0xff]
    %v866 = vld [vmem:[%s4 + $0x40] sm:$0xff]
    %v867 = vld [vmem:[%s4 + $0x48] sm:$0xff]
    %v868 = vld [vmem:[%s4 + $0x50] sm:$0xff]
    %v869 = vld [vmem:[%s4 + $0x58] sm:$0xff]
    %v870 = vld [vmem:[%s4 + $0x60] sm:$0xff]
    %v871 = vld [vmem:[%s4 + $0x68] sm:$0xff]
    %v872 = vld [vmem:[%s4 + $0x70] sm:$0xff]
    %v873 = vld [vmem:[%s4 + $0x78] sm:$0xff]
    %v874 = vld [vmem:[%s4 + $0x80] sm:$0xff]
    %v875 = vld [vmem:[%s4 + $0x88] sm:$0xff]
    %v876 = vld [vmem:[%s4 + $0x90] sm:$0xff]
    %v877 = vld [vmem:[%s4 + $0x98] sm:$0xff]
    %v878 = vld [vmem:[%s4 + $0xa0] sm:$0xff]
    %v879 = vld [vmem:[%s4 + $0xa8] sm:$0xff]
    %v880 = vld [vmem:[%s4 + $0xb0] sm:$0xff]
    %v881 = vld [vmem:[%s4 + $0xb8] sm:$0xff]
    %v882 = vld [vmem:[%s4 + $0xc0] sm:$0xff]
    %v883 = vld [vmem:[%s4 + $0xc8] sm:$0xff]
    %v884 = vld [vmem:[%s4 + $0xd0] sm:$0xff]
    %v885 = vld [vmem:[%s4 + $0xd8] sm:$0xff]
    %v886 = vld [vmem:[%s4 + $0xe0] sm:$0xff]
    %v887 = vld [vmem:[%s4 + $0xe8] sm:$0xff]
    %v888 = vld [vmem:[%s4 + $0xf0] sm:$0xff]
    %v889 = vld [vmem:[%s4 + $0xf8] sm:$0xff]
    %v890 = vld [vmem:[%s4 + $0x100] sm:$0xff]
    %v891 = vld [vmem:[%s4 + $0x108] sm:$0xff]
    %v892 = vld [vmem:[%s4 + $0x110] sm:$0xff]
    %v893 = vld [vmem:[%s4 + $0x118] sm:$0xff]
    %v894 = vld [vmem:[%s4 + $0x120] sm:$0xff]
    %v895 = vld [vmem:[%s4 + $0x128] sm:$0xff]
    %v896 = vld [vmem:[%s4 + $0x130] sm:$0xff]
    %v897 = vld [vmem:[%s4 + $0x138] sm:$0xff]
    %v898 = vld [vmem:[%s4 + $0x140] sm:$0xff]
    %v899 = vld [vmem:[%s4 + $0x148] sm:$0xff]
    %v900 = vld [vmem:[%s4 + $0x150] sm:$0xff]
    %v901 = vld [vmem:[%s4 + $0x158] sm:$0xff]
    %v902 = vld [vmem:[%s4 + $0x160] sm:$0xff]
    %v903 = vld [vmem:[%s4 + $0x168] sm:$0xff]
    %v904 = vld [vmem:[%s4 + $0x170] sm:$0xff]
    %v905 = vld [vmem:[%s4 + $0x178] sm:$0xff]
    %906 = vmatpush.msra.mxu0 %v903
    %907 = vmatpush.msra.mxu0 %v900
    %908 = vmatpush.msra.mxu0 %v897
    %909 = vmatpush.msra.mxu0 %v894
    %910 = vmatpush.msra.mxu0 %v891
    %911 = vmatpush.msra.mxu0 %v888
    %912 = vmatpush.msra.mxu0 %v885
    %913 = vmatpush.msra.mxu0 %v882
    %914 = vmatpush.msra.mxu0 %v879
    %915 = vmatpush.msra.mxu0 %v876
    %916 = vmatpush.msra.mxu0 %v873
    %917 = vmatpush.msra.mxu0 %v870
    %918 = vmatpush.msra.mxu0 %v867
    %919 = vmatpush.msra.mxu0 %v864
    %920 = vmatpush.msra.mxu0 %v861
    %921 = vmatpush.msra.mxu0 %v858
    %922 = vmatmul.f32.gmra.mxu0 %v857
    %v923 = vpop.f32.mrf.mxu0
    %v924 = vadd.f32 0.0, %v923
    %925 = vdwg.mxu0
    %926 = vmatpush.msra.mxu0 %v904
    %927 = vmatpush.msra.mxu0 %v901
    %928 = vmatpush.msra.mxu0 %v898
    %929 = vmatpush.msra.mxu0 %v895
    %930 = vmatpush.msra.mxu0 %v892
    %931 = vmatpush.msra.mxu0 %v889
    %932 = vmatpush.msra.mxu0 %v886
    %933 = vmatpush.msra.mxu0 %v883
    %934 = vmatpush.msra.mxu0 %v880
    %935 = vmatpush.msra.mxu0 %v877
    %936 = vmatpush.msra.mxu0 %v874
    %937 = vmatpush.msra.mxu0 %v871
    %938 = vmatpush.msra.mxu0 %v868
    %939 = vmatpush.msra.mxu0 %v865
    %940 = vmatpush.msra.mxu0 %v862
    %941 = vmatpush.msra.mxu0 %v859
    %942 = vmatmul.f32.gmra.mxu0 %v857
    %v943 = vpop.f32.mrf.mxu0
    %v944 = vadd.f32 0.0, %v943
    %945 = vdwg.mxu0
    %946 = vmatpush.msra.mxu0 %v905
    %947 = vmatpush.msra.mxu0 %v902
    %948 = vmatpush.msra.mxu0 %v899
    %949 = vmatpush.msra.mxu0 %v896
    %950 = vmatpush.msra.mxu0 %v893
    %951 = vmatpush.msra.mxu0 %v890
    %952 = vmatpush.msra.mxu0 %v887
    %953 = vmatpush.msra.mxu0 %v884
    %954 = vmatpush.msra.mxu0 %v881
    %955 = vmatpush.msra.mxu0 %v878
    %956 = vmatpush.msra.mxu0 %v875
    %957 = vmatpush.msra.mxu0 %v872
    %958 = vmatpush.msra.mxu0 %v869
    %959 = vmatpush.msra.mxu0 %v866
    %960 = vmatpush.msra.mxu0 %v863
    %961 = vmatpush.msra.mxu0 %v860
    %962 = vmatmul.f32.gmra.mxu0 %v857
    %v963 = vpop.f32.mrf.mxu0
    %v964 = vadd.f32 0.0, %v963
    %965 = vdwg.mxu0
    %v966 = vld [vmem:[#allocation2 + $0x60] sm:$0xff]
    %v967 = vld [vmem:[#allocation2 + $0x68] sm:$0xff]
    %v968 = vld [vmem:[#allocation2 + $0x70] sm:$0xff]
    %v969 = vadd.f32 %v966, %v924
    %v970 = vadd.f32 %v967, %v944
    %v971 = vmul.f32 %v969, 0.5
    %v972 = vmul.f32 %v970, 0.5
    %v973 = vtanh.pop %v971
    %v974 = vtanh.pop %v972
    %v975 = vadd.f32 %v973, 1.0
    %v976 = vadd.f32 %v974, 1.0
    %v977 = vmul.f32 %v975, 0.5
    %v978 = vmul.f32 %v976, 0.5
    %v979 = vld [vmem:[%s5] sm:$0x1]
    %v981 = vperm.slane %v979, 0
    %v983 = vadd.f32 %v964, %v981
    %v984 = vmul.f32 %v977, %v983
    %v985 = vadd.f32 %v968, %v984
    %v986 = vtanh.pop %v985
    %v987 = vsub.f32 1.0, %v978
    %v988 = vmul.f32 %v987, %v986
    %v989 = vmul.f32 %v978, %v857
    %v990 = vadd.f32 %v988, %v989
    %v991 = vsel %vm88, 4, 3
    %vm992 = vcmp.gt.s32.totalorder %v436, %v991
    %v993 = vsel %vm992, %v990, 0.0
    %994 = vst [vmem:[#allocation3 + $0x20] sm:$0xff] %v993
    %995 = vst [vmem:[#allocation4 + $0x18] sm:$0xff] %v993
    %v996 = vsel %vm992, %v990, %v857
    %v997 = vld [vmem:[%s4] sm:$0xff]
    %v998 = vld [vmem:[%s4 + $0x8] sm:$0xff]
    %v999 = vld [vmem:[%s4 + $0x10] sm:$0xff]
    %v1000 = vld [vmem:[%s4 + $0x18] sm:$0xff]
    %v1001 = vld [vmem:[%s4 + $0x20] sm:$0xff]
    %v1002 = vld [vmem:[%s4 + $0x28] sm:$0xff]
    %v1003 = vld [vmem:[%s4 + $0x30] sm:$0xff]
    %v1004 = vld [vmem:[%s4 + $0x38] sm:$0xff]
    %v1005 = vld [vmem:[%s4 + $0x40] sm:$0xff]
    %v1006 = vld [vmem:[%s4 + $0x48] sm:$0xff]
    %v1007 = vld [vmem:[%s4 + $0x50] sm:$0xff]
    %v1008 = vld [vmem:[%s4 + $0x58] sm:$0xff]
    %v1009 = vld [vmem:[%s4 + $0x60] sm:$0xff]
    %v1010 = vld [vmem:[%s4 + $0x68] sm:$0xff]
    %v1011 = vld [vmem:[%s4 + $0x70] sm:$0xff]
    %v1012 = vld [vmem:[%s4 + $0x78] sm:$0xff]
    %v1013 = vld [vmem:[%s4 + $0x80] sm:$0xff]
    %v1014 = vld [vmem:[%s4 + $0x88] sm:$0xff]
    %v1015 = vld [vmem:[%s4 + $0x90] sm:$0xff]
    %v1016 = vld [vmem:[%s4 + $0x98] sm:$0xff]
    %v1017 = vld [vmem:[%s4 + $0xa0] sm:$0xff]
    %v1018 = vld [vmem:[%s4 + $0xa8] sm:$0xff]
    %v1019 = vld [vmem:[%s4 + $0xb0] sm:$0xff]
    %v1020 = vld [vmem:[%s4 + $0xb8] sm:$0xff]
    %v1021 = vld [vmem:[%s4 + $0xc0] sm:$0xff]
    %v1022 = vld [vmem:[%s4 + $0xc8] sm:$0xff]
    %v1023 = vld [vmem:[%s4 + $0xd0] sm:$0xff]
    %v1024 = vld [vmem:[%s4 + $0xd8] sm:$0xff]
    %v1025 = vld [vmem:[%s4 + $0xe0] sm:$0xff]
    %v1026 = vld [vmem:[%s4 + $0xe8] sm:$0xff]
    %v1027 = vld [vmem:[%s4 + $0xf0] sm:$0xff]
    %v1028 = vld [vmem:[%s4 + $0xf8] sm:$0xff]
    %v1029 = vld [vmem:[%s4 + $0x100] sm:$0xff]
    %v1030 = vld [vmem:[%s4 + $0x108] sm:$0xff]
    %v1031 = vld [vmem:[%s4 + $0x110] sm:$0xff]
    %v1032 = vld [vmem:[%s4 + $0x118] sm:$0xff]
    %v1033 = vld [vmem:[%s4 + $0x120] sm:$0xff]
    %v1034 = vld [vmem:[%s4 + $0x128] sm:$0xff]
    %v1035 = vld [vmem:[%s4 + $0x130] sm:$0xff]
    %v1036 = vld [vmem:[%s4 + $0x138] sm:$0xff]
    %v1037 = vld [vmem:[%s4 + $0x140] sm:$0xff]
    %v1038 = vld [vmem:[%s4 + $0x148] sm:$0xff]
    %v1039 = vld [vmem:[%s4 + $0x150] sm:$0xff]
    %v1040 = vld [vmem:[%s4 + $0x158] sm:$0xff]
    %v1041 = vld [vmem:[%s4 + $0x160] sm:$0xff]
    %v1042 = vld [vmem:[%s4 + $0x168] sm:$0xff]
    %v1043 = vld [vmem:[%s4 + $0x170] sm:$0xff]
    %v1044 = vld [vmem:[%s4 + $0x178] sm:$0xff]
    %1045 = vmatpush.msra.mxu0 %v1042
    %1046 = vmatpush.msra.mxu0 %v1039
    %1047 = vmatpush.msra.mxu0 %v1036
    %1048 = vmatpush.msra.mxu0 %v1033
    %1049 = vmatpush.msra.mxu0 %v1030
    %1050 = vmatpush.msra.mxu0 %v1027
    %1051 = vmatpush.msra.mxu0 %v1024
    %1052 = vmatpush.msra.mxu0 %v1021
    %1053 = vmatpush.msra.mxu0 %v1018
    %1054 = vmatpush.msra.mxu0 %v1015
    %1055 = vmatpush.msra.mxu0 %v1012
    %1056 = vmatpush.msra.mxu0 %v1009
    %1057 = vmatpush.msra.mxu0 %v1006
    %1058 = vmatpush.msra.mxu0 %v1003
    %1059 = vmatpush.msra.mxu0 %v1000
    %1060 = vmatpush.msra.mxu0 %v997
    %1061 = vmatmul.f32.gmra.mxu0 %v996
    %v1062 = vpop.f32.mrf.mxu0
    %v1063 = vadd.f32 0.0, %v1062
    %1064 = vdwg.mxu0
    %1065 = vmatpush.msra.mxu0 %v1043
    %1066 = vmatpush.msra.mxu0 %v1040
    %1067 = vmatpush.msra.mxu0 %v1037
    %1068 = vmatpush.msra.mxu0 %v1034
    %1069 = vmatpush.msra.mxu0 %v1031
    %1070 = vmatpush.msra.mxu0 %v1028
    %1071 = vmatpush.msra.mxu0 %v1025
    %1072 = vmatpush.msra.mxu0 %v1022
    %1073 = vmatpush.msra.mxu0 %v1019
    %1074 = vmatpush.msra.mxu0 %v1016
    %1075 = vmatpush.msra.mxu0 %v1013
    %1076 = vmatpush.msra.mxu0 %v1010
    %1077 = vmatpush.msra.mxu0 %v1007
    %1078 = vmatpush.msra.mxu0 %v1004
    %1079 = vmatpush.msra.mxu0 %v1001
    %1080 = vmatpush.msra.mxu0 %v998
    %1081 = vmatmul.f32.gmra.mxu0 %v996
    %v1082 = vpop.f32.mrf.mxu0
    %v1083 = vadd.f32 0.0, %v1082
    %1084 = vdwg.mxu0
    %1085 = vmatpush.msra.mxu0 %v1044
    %1086 = vmatpush.msra.mxu0 %v1041
    %1087 = vmatpush.msra.mxu0 %v1038
    %1088 = vmatpush.msra.mxu0 %v1035
    %1089 = vmatpush.msra.mxu0 %v1032
    %1090 = vmatpush.msra.mxu0 %v1029
    %1091 = vmatpush.msra.mxu0 %v1026
    %1092 = vmatpush.msra.mxu0 %v1023
    %1093 = vmatpush.msra.mxu0 %v1020
    %1094 = vmatpush.msra.mxu0 %v1017
    %1095 = vmatpush.msra.mxu0 %v1014
    %1096 = vmatpush.msra.mxu0 %v1011
    %1097 = vmatpush.msra.mxu0 %v1008
    %1098 = vmatpush.msra.mxu0 %v1005
    %1099 = vmatpush.msra.mxu0 %v1002
    %1100 = vmatpush.msra.mxu0 %v999
    %1101 = vmatmul.f32.gmra.mxu0 %v996
    %v1102 = vpop.f32.mrf.mxu0
    %v1103 = vadd.f32 0.0, %v1102
    %1104 = vdwg.mxu0
    %v1105 = vld [vmem:[#allocation2 + $0x78] sm:$0xff]
    %v1106 = vld [vmem:[#allocation2 + $0x80] sm:$0xff]
    %v1107 = vld [vmem:[#allocation2 + $0x88] sm:$0xff]
    %v1108 = vadd.f32 %v1105, %v1063
    %v1109 = vadd.f32 %v1106, %v1083
    %v1110 = vmul.f32 %v1108, 0.5
    %v1111 = vmul.f32 %v1109, 0.5
    %v1112 = vtanh.pop %v1110
    %v1113 = vtanh.pop %v1111
    %v1114 = vadd.f32 %v1112, 1.0
    %v1115 = vadd.f32 %v1113, 1.0
    %v1116 = vmul.f32 %v1114, 0.5
    %v1117 = vmul.f32 %v1115, 0.5
    %v1118 = vld [vmem:[%s5] sm:$0x1]
    %v1120 = vperm.slane %v1118, 0
    %v1122 = vadd.f32 %v1103, %v1120
    %v1123 = vmul.f32 %v1116, %v1122
    %v1124 = vadd.f32 %v1107, %v1123
    %v1125 = vtanh.pop %v1124
    %v1126 = vsub.f32 1.0, %v1117
    %v1127 = vmul.f32 %v1126, %v1125
    %v1128 = vmul.f32 %v1117, %v996
    %v1129 = vadd.f32 %v1127, %v1128
    %v1130 = vsel %vm88, 5, 2
    %vm1131 = vcmp.gt.s32.totalorder %v436, %v1130
    %v1132 = vsel %vm1131, %v1129, 0.0
    %1133 = vst [vmem:[#allocation3 + $0x28] sm:$0xff] %v1132
    %1134 = vst [vmem:[#allocation4 + $0x10] sm:$0xff] %v1132
    %v1135 = vsel %vm1131, %v1129, %v996
    %v1136 = vld [vmem:[%s4] sm:$0xff]
    %v1137 = vld [vmem:[%s4 + $0x8] sm:$0xff]
    %v1138 = vld [vmem:[%s4 + $0x10] sm:$0xff]
    %v1139 = vld [vmem:[%s4 + $0x18] sm:$0xff]
    %v1140 = vld [vmem:[%s4 + $0x20] sm:$0xff]
    %v1141 = vld [vmem:[%s4 + $0x28] sm:$0xff]
    %v1142 = vld [vmem:[%s4 + $0x30] sm:$0xff]
    %v1143 = vld [vmem:[%s4 + $0x38] sm:$0xff]
    %v1144 = vld [vmem:[%s4 + $0x40] sm:$0xff]
    %v1145 = vld [vmem:[%s4 + $0x48] sm:$0xff]
    %v1146 = vld [vmem:[%s4 + $0x50] sm:$0xff]
    %v1147 = vld [vmem:[%s4 + $0x58] sm:$0xff]
    %v1148 = vld [vmem:[%s4 + $0x60] sm:$0xff]
    %v1149 = vld [vmem:[%s4 + $0x68] sm:$0xff]
    %v1150 = vld [vmem:[%s4 + $0x70] sm:$0xff]
    %v1151 = vld [vmem:[%s4 + $0x78] sm:$0xff]
    %v1152 = vld [vmem:[%s4 + $0x80] sm:$0xff]
    %v1153 = vld [vmem:[%s4 + $0x88] sm:$0xff]
    %v1154 = vld [vmem:[%s4 + $0x90] sm:$0xff]
    %v1155 = vld [vmem:[%s4 + $0x98] sm:$0xff]
    %v1156 = vld [vmem:[%s4 + $0xa0] sm:$0xff]
    %v1157 = vld [vmem:[%s4 + $0xa8] sm:$0xff]
    %v1158 = vld [vmem:[%s4 + $0xb0] sm:$0xff]
    %v1159 = vld [vmem:[%s4 + $0xb8] sm:$0xff]
    %v1160 = vld [vmem:[%s4 + $0xc0] sm:$0xff]
    %v1161 = vld [vmem:[%s4 + $0xc8] sm:$0xff]
    %v1162 = vld [vmem:[%s4 + $0xd0] sm:$0xff]
    %v1163 = vld [vmem:[%s4 + $0xd8] sm:$0xff]
    %v1164 = vld [vmem:[%s4 + $0xe0] sm:$0xff]
    %v1165 = vld [vmem:[%s4 + $0xe8] sm:$0xff]
    %v1166 = vld [vmem:[%s4 + $0xf0] sm:$0xff]
    %v1167 = vld [vmem:[%s4 + $0xf8] sm:$0xff]
    %v1168 = vld [vmem:[%s4 + $0x100] sm:$0xff]
    %v1169 = vld [vmem:[%s4 + $0x108] sm:$0xff]
    %v1170 = vld [vmem:[%s4 + $0x110] sm:$0xff]
    %v1171 = vld [vmem:[%s4 + $0x118] sm:$0xff]
    %v1172 = vld [vmem:[%s4 + $0x120] sm:$0xff]
    %v1173 = vld [vmem:[%s4 + $0x128] sm:$0xff]
    %v1174 = vld [vmem:[%s4 + $0x130] sm:$0xff]
    %v1175 = vld [vmem:[%s4 + $0x138] sm:$0xff]
    %v1176 = vld [vmem:[%s4 + $0x140] sm:$0xff]
    %v1177 = vld [vmem:[%s4 + $0x148] sm:$0xff]
    %v1178 = vld [vmem:[%s4 + $0x150] sm:$0xff]
    %v1179 = vld [vmem:[%s4 + $0x158] sm:$0xff]
    %v1180 = vld [vmem:[%s4 + $0x160] sm:$0xff]
    %v1181 = vld [vmem:[%s4 + $0x168] sm:$0xff]
    %v1182 = vld [vmem:[%s4 + $0x170] sm:$0xff]
    %v1183 = vld [vmem:[%s4 + $0x178] sm:$0xff]
    %1184 = vmatpush.msra.mxu0 %v1181
    %1185 = vmatpush.msra.mxu0 %v1178
    %1186 = vmatpush.msra.mxu0 %v1175
    %1187 = vmatpush.msra.mxu0 %v1172
    %1188 = vmatpush.msra.mxu0 %v1169
    %1189 = vmatpush.msra.mxu0 %v1166
    %1190 = vmatpush.msra.mxu0 %v1163
    %1191 = vmatpush.msra.mxu0 %v1160
    %1192 = vmatpush.msra.mxu0 %v1157
    %1193 = vmatpush.msra.mxu0 %v1154
    %1194 = vmatpush.msra.mxu0 %v1151
    %1195 = vmatpush.msra.mxu0 %v1148
    %1196 = vmatpush.msra.mxu0 %v1145
    %1197 = vmatpush.msra.mxu0 %v1142
    %1198 = vmatpush.msra.mxu0 %v1139
    %1199 = vmatpush.msra.mxu0 %v1136
    %1200 = vmatmul.f32.gmra.mxu0 %v1135
    %v1201 = vpop.f32.mrf.mxu0
    %v1202 = vadd.f32 0.0, %v1201
    %1203 = vdwg.mxu0
    %1204 = vmatpush.msra.mxu0 %v1182
    %1205 = vmatpush.msra.mxu0 %v1179
    %1206 = vmatpush.msra.mxu0 %v1176
    %1207 = vmatpush.msra.mxu0 %v1173
    %1208 = vmatpush.msra.mxu0 %v1170
    %1209 = vmatpush.msra.mxu0 %v1167
    %1210 = vmatpush.msra.mxu0 %v1164
    %1211 = vmatpush.msra.mxu0 %v1161
    %1212 = vmatpush.msra.mxu0 %v1158
    %1213 = vmatpush.msra.mxu0 %v1155
    %1214 = vmatpush.msra.mxu0 %v1152
    %1215 = vmatpush.msra.mxu0 %v1149
    %1216 = vmatpush.msra.mxu0 %v1146
    %1217 = vmatpush.msra.mxu0 %v1143
    %1218 = vmatpush.msra.mxu0 %v1140
    %1219 = vmatpush.msra.mxu0 %v1137
    %1220 = vmatmul.f32.gmra.mxu0 %v1135
    %v1221 = vpop.f32.mrf.mxu0
    %v1222 = vadd.f32 0.0, %v1221
    %1223 = vdwg.mxu0
    %1224 = vmatpush.msra.mxu0 %v1183
    %1225 = vmatpush.msra.mxu0 %v1180
    %1226 = vmatpush.msra.mxu0 %v1177
    %1227 = vmatpush.msra.mxu0 %v1174
    %1228 = vmatpush.msra.mxu0 %v1171
    %1229 = vmatpush.msra.mxu0 %v1168
    %1230 = vmatpush.msra.mxu0 %v1165
    %1231 = vmatpush.msra.mxu0 %v1162
    %1232 = vmatpush.msra.mxu0 %v1159
    %1233 = vmatpush.msra.mxu0 %v1156
    %1234 = vmatpush.msra.mxu0 %v1153
    %1235 = vmatpush.msra.mxu0 %v1150
    %1236 = vmatpush.msra.mxu0 %v1147
    %1237 = vmatpush.msra.mxu0 %v1144
    %1238 = vmatpush.msra.mxu0 %v1141
    %1239 = vmatpush.msra.mxu0 %v1138
    %1240 = vmatmul.f32.gmra.mxu0 %v1135
    %v1241 = vpop.f32.mrf.mxu0
    %v1242 = vadd.f32 0.0, %v1241
    %1243 = vdwg.mxu0
    %v1244 = vld [vmem:[#allocation2 + $0x90] sm:$0xff]
    %v1245 = vld [vmem:[#allocation2 + $0x98] sm:$0xff]
    %v1246 = vld [vmem:[#allocation2 + $0xa0] sm:$0xff]
    %v1247 = vadd.f32 %v1244, %v1202
    %v1248 = vadd.f32 %v1245, %v1222
    %v1249 = vmul.f32 %v1247, 0.5
    %v1250 = vmul.f32 %v1248, 0.5
    %v1251 = vtanh.pop %v1249
    %v1252 = vtanh.pop %v1250
    %v1253 = vadd.f32 %v1251, 1.0
    %v1254 = vadd.f32 %v1252, 1.0
    %v1255 = vmul.f32 %v1253, 0.5
    %v1256 = vmul.f32 %v1254, 0.5
    %v1257 = vld [vmem:[%s5] sm:$0x1]
    %v1259 = vperm.slane %v1257, 0
    %v1261 = vadd.f32 %v1242, %v1259
    %v1262 = vmul.f32 %v1255, %v1261
    %v1263 = vadd.f32 %v1246, %v1262
    %v1264 = vtanh.pop %v1263
    %v1265 = vsub.f32 1.0, %v1256
    %v1266 = vmul.f32 %v1265, %v1264
    %v1267 = vmul.f32 %v1256, %v1135
    %v1268 = vadd.f32 %v1266, %v1267
    %v1269 = vsel %vm88, 6, 1
    %vm1270 = vcmp.gt.s32.totalorder %v436, %v1269
    %v1271 = vsel %vm1270, %v1268, 0.0
    %1272 = vst [vmem:[#allocation3 + $0x30] sm:$0xff] %v1271
    %1273 = vst [vmem:[#allocation4 + $0x8] sm:$0xff] %v1271
    %v1274 = vsel %vm1270, %v1268, %v1135
    %v1275 = vld [vmem:[%s4] sm:$0xff]
    %v1276 = vld [vmem:[%s4 + $0x8] sm:$0xff]
    %v1277 = vld [vmem:[%s4 + $0x10] sm:$0xff]
    %v1278 = vld [vmem:[%s4 + $0x18] sm:$0xff]
    %v1279 = vld [vmem:[%s4 + $0x20] sm:$0xff]
    %v1280 = vld [vmem:[%s4 + $0x28] sm:$0xff]
    %v1281 = vld [vmem:[%s4 + $0x30] sm:$0xff]
    %v1282 = vld [vmem:[%s4 + $0x38] sm:$0xff]
    %v1283 = vld [vmem:[%s4 + $0x40] sm:$0xff]
    %v1284 = vld [vmem:[%s4 + $0x48] sm:$0xff]
    %v1285 = vld [vmem:[%s4 + $0x50] sm:$0xff]
    %v1286 = vld [vmem:[%s4 + $0x58] sm:$0xff]
    %v1287 = vld [vmem:[%s4 + $0x60] sm:$0xff]
    %v1288 = vld [vmem:[%s4 + $0x68] sm:$0xff]
    %v1289 = vld [vmem:[%s4 + $0x70] sm:$0xff]
    %v1290 = vld [vmem:[%s4 + $0x78] sm:$0xff]
    %v1291 = vld [vmem:[%s4 + $0x80] sm:$0xff]
    %v1292 = vld [vmem:[%s4 + $0x88] sm:$0xff]
    %v1293 = vld [vmem:[%s4 + $0x90] sm:$0xff]
    %v1294 = vld [vmem:[%s4 + $0x98] sm:$0xff]
    %v1295 = vld [vmem:[%s4 + $0xa0] sm:$0xff]
    %v1296 = vld [vmem:[%s4 + $0xa8] sm:$0xff]
    %v1297 = vld [vmem:[%s4 + $0xb0] sm:$0xff]
    %v1298 = vld [vmem:[%s4 + $0xb8] sm:$0xff]
    %v1299 = vld [vmem:[%s4 + $0xc0] sm:$0xff]
    %v1300 = vld [vmem:[%s4 + $0xc8] sm:$0xff]
    %v1301 = vld [vmem:[%s4 + $0xd0] sm:$0xff]
    %v1302 = vld [vmem:[%s4 + $0xd8] sm:$0xff]
    %v1303 = vld [vmem:[%s4 + $0xe0] sm:$0xff]
    %v1304 = vld [vmem:[%s4 + $0xe8] sm:$0xff]
    %v1305 = vld [vmem:[%s4 + $0xf0] sm:$0xff]
    %v1306 = vld [vmem:[%s4 + $0xf8] sm:$0xff]
    %v1307 = vld [vmem:[%s4 + $0x100] sm:$0xff]
    %v1308 = vld [vmem:[%s4 + $0x108] sm:$0xff]
    %v1309 = vld [vmem:[%s4 + $0x110] sm:$0xff]
    %v1310 = vld [vmem:[%s4 + $0x118] sm:$0xff]
    %v1311 = vld [vmem:[%s4 + $0x120] sm:$0xff]
    %v1312 = vld [vmem:[%s4 + $0x128] sm:$0xff]
    %v1313 = vld [vmem:[%s4 + $0x130] sm:$0xff]
    %v1314 = vld [vmem:[%s4 + $0x138] sm:$0xff]
    %v1315 = vld [vmem:[%s4 + $0x140] sm:$0xff]
    %v1316 = vld [vmem:[%s4 + $0x148] sm:$0xff]
    %v1317 = vld [vmem:[%s4 + $0x150] sm:$0xff]
    %v1318 = vld [vmem:[%s4 + $0x158] sm:$0xff]
    %v1319 = vld [vmem:[%s4 + $0x160] sm:$0xff]
    %v1320 = vld [vmem:[%s4 + $0x168] sm:$0xff]
    %v1321 = vld [vmem:[%s4 + $0x170] sm:$0xff]
    %v1322 = vld [vmem:[%s4 + $0x178] sm:$0xff]
    %1323 = vmatpush.msra.mxu0 %v1320
    %1324 = vmatpush.msra.mxu0 %v1317
    %1325 = vmatpush.msra.mxu0 %v1314
    %1326 = vmatpush.msra.mxu0 %v1311
    %1327 = vmatpush.msra.mxu0 %v1308
    %1328 = vmatpush.msra.mxu0 %v1305
    %1329 = vmatpush.msra.mxu0 %v1302
    %1330 = vmatpush.msra.mxu0 %v1299
    %1331 = vmatpush.msra.mxu0 %v1296
    %1332 = vmatpush.msra.mxu0 %v1293
    %1333 = vmatpush.msra.mxu0 %v1290
    %1334 = vmatpush.msra.mxu0 %v1287
    %1335 = vmatpush.msra.mxu0 %v1284
    %1336 = vmatpush.msra.mxu0 %v1281
    %1337 = vmatpush.msra.mxu0 %v1278
    %1338 = vmatpush.msra.mxu0 %v1275
    %1339 = vmatmul.f32.gmra.mxu0 %v1274
    %v1340 = vpop.f32.mrf.mxu0
    %v1341 = vadd.f32 0.0, %v1340
    %1342 = vdwg.mxu0
    %1343 = vmatpush.msra.mxu0 %v1321
    %1344 = vmatpush.msra.mxu0 %v1318
    %1345 = vmatpush.msra.mxu0 %v1315
    %1346 = vmatpush.msra.mxu0 %v1312
    %1347 = vmatpush.msra.mxu0 %v1309
    %1348 = vmatpush.msra.mxu0 %v1306
    %1349 = vmatpush.msra.mxu0 %v1303
    %1350 = vmatpush.msra.mxu0 %v1300
    %1351 = vmatpush.msra.mxu0 %v1297
    %1352 = vmatpush.msra.mxu0 %v1294
    %1353 = vmatpush.msra.mxu0 %v1291
    %1354 = vmatpush.msra.mxu0 %v1288
    %1355 = vmatpush.msra.mxu0 %v1285
    %1356 = vmatpush.msra.mxu0 %v1282
    %1357 = vmatpush.msra.mxu0 %v1279
    %1358 = vmatpush.msra.mxu0 %v1276
    %1359 = vmatmul.f32.gmra.mxu0 %v1274
    %v1360 = vpop.f32.mrf.mxu0
    %v1361 = vadd.f32 0.0, %v1360
    %1362 = vdwg.mxu0
    %1363 = vmatpush.msra.mxu0 %v1322
    %1364 = vmatpush.msra.mxu0 %v1319
    %1365 = vmatpush.msra.mxu0 %v1316
    %1366 = vmatpush.msra.mxu0 %v1313
    %1367 = vmatpush.msra.mxu0 %v1310
    %1368 = vmatpush.msra.mxu0 %v1307
    %1369 = vmatpush.msra.mxu0 %v1304
    %1370 = vmatpush.msra.mxu0 %v1301
    %1371 = vmatpush.msra.mxu0 %v1298
    %1372 = vmatpush.msra.mxu0 %v1295
    %1373 = vmatpush.msra.mxu0 %v1292
    %1374 = vmatpush.msra.mxu0 %v1289
    %1375 = vmatpush.msra.mxu0 %v1286
    %1376 = vmatpush.msra.mxu0 %v1283
    %1377 = vmatpush.msra.mxu0 %v1280
    %1378 = vmatpush.msra.mxu0 %v1277
    %1379 = vmatmul.f32.gmra.mxu0 %v1274
    %v1380 = vpop.f32.mrf.mxu0
    %v1381 = vadd.f32 0.0, %v1380
    %1382 = vdwg.mxu0
    %v1383 = vld [vmem:[#allocation2 + $0xa8] sm:$0xff]
    %v1384 = vld [vmem:[#allocation2 + $0xb0] sm:$0xff]
    %v1385 = vld [vmem:[#allocation2 + $0xb8] sm:$0xff]
    %v1386 = vadd.f32 %v1383, %v1341
    %v1387 = vadd.f32 %v1384, %v1361
    %v1388 = vmul.f32 %v1386, 0.5
    %v1389 = vmul.f32 %v1387, 0.5
    %v1390 = vtanh.pop %v1388
    %v1391 = vtanh.pop %v1389
    %v1392 = vadd.f32 %v1390, 1.0
    %v1393 = vadd.f32 %v1391, 1.0
    %v1394 = vmul.f32 %v1392, 0.5
    %v1395 = vmul.f32 %v1393, 0.5
    %v1396 = vld [vmem:[%s5] sm:$0x1]
    %v1398 = vperm.slane %v1396, 0
    %v1400 = vadd.f32 %v1381, %v1398
    %v1401 = vmul.f32 %v1394, %v1400
    %v1402 = vadd.f32 %v1385, %v1401
    %v1403 = vtanh.pop %v1402
    %v1404 = vsub.f32 1.0, %v1395
    %v1405 = vmul.f32 %v1404, %v1403
    %v1406 = vmul.f32 %v1395, %v1274
    %v1407 = vadd.f32 %v1405, %v1406
    %v1408 = vsel %vm88, 7, 0
    %vm1409 = vcmp.gt.s32.totalorder %v436, %v1408
    %v1410 = vsel %vm1409, %v1407, 0.0
    %1411 = vst [vmem:[#allocation3 + $0x38] sm:$0xff] %v1410
    %1412 = vst [vmem:[#allocation4] sm:$0xff] %v1410
    %v1413 = vld [vmem:[#allocation3] sm:$0xff]
    %v1414 = vld [vmem:[#allocation3 + $0x8] sm:$0xff]
    %v1415 = vld [vmem:[#allocation3 + $0x10] sm:$0xff]
    %v1416 = vld [vmem:[#allocation3 + $0x18] sm:$0xff]
    %v1417 = vld [vmem:[#allocation3 + $0x20] sm:$0xff]
    %v1418 = vld [vmem:[#allocation3 + $0x28] sm:$0xff]
    %v1419 = vld [vmem:[#allocation3 + $0x30] sm:$0xff]
    %v1420 = vld [vmem:[#allocation3 + $0x38] sm:$0xff]
    %v1421 = vld [vmem:[#allocation5] sm:$0xff]
    %v1422 = vld [vmem:[#allocation5 + $0x8] sm:$0xff]
    %v1423 = vld [vmem:[#allocation5 + $0x10] sm:$0xff]
    %v1424 = vld [vmem:[#allocation5 + $0x18] sm:$0xff]
    %v1425 = vld [vmem:[#allocation5 + $0x20] sm:$0xff]
    %v1426 = vld [vmem:[#allocation5 + $0x28] sm:$0xff]
    %v1427 = vld [vmem:[#allocation5 + $0x30] sm:$0xff]
    %v1428 = vld [vmem:[#allocation5 + $0x38] sm:$0xff]
    %v1429 = vld [vmem:[#allocation5 + $0x40] sm:$0xff]
    %v1430 = vld [vmem:[#allocation5 + $0x48] sm:$0xff]
    %v1431 = vld [vmem:[#allocation5 + $0x50] sm:$0xff]
    %v1432 = vld [vmem:[#allocation5 + $0x58] sm:$0xff]
    %v1433 = vld [vmem:[#allocation5 + $0x60] sm:$0xff]
    %v1434 = vld [vmem:[#allocation5 + $0x68] sm:$0xff]
    %v1435 = vld [vmem:[#allocation5 + $0x70] sm:$0xff]
    %v1436 = vld [vmem:[#allocation5 + $0x78] sm:$0xff]
    %v1437 = vld [vmem:[#allocation5 + $0x80] sm:$0xff]
    %v1438 = vld [vmem:[#allocation5 + $0x88] sm:$0xff]
    %v1439 = vld [vmem:[#allocation5 + $0x90] sm:$0xff]
    %v1440 = vld [vmem:[#allocation5 + $0x98] sm:$0xff]
    %v1441 = vld [vmem:[#allocation5 + $0xa0] sm:$0xff]
    %v1442 = vld [vmem:[#allocation5 + $0xa8] sm:$0xff]
    %v1443 = vld [vmem:[#allocation5 + $0xb0] sm:$0xff]
    %v1444 = vld [vmem:[#allocation5 + $0xb8] sm:$0xff]
    %v1445 = vld [vmem:[#allocation5 + $0xc0] sm:$0xff]
    %v1446 = vld [vmem:[#allocation5 + $0xc8] sm:$0xff]
    %v1447 = vld [vmem:[#allocation5 + $0xd0] sm:$0xff]
    %v1448 = vld [vmem:[#allocation5 + $0xd8] sm:$0xff]
    %v1449 = vld [vmem:[#allocation5 + $0xe0] sm:$0xff]
    %v1450 = vld [vmem:[#allocation5 + $0xe8] sm:$0xff]
    %v1451 = vld [vmem:[#allocation5 + $0xf0] sm:$0xff]
    %v1452 = vld [vmem:[#allocation5 + $0xf8] sm:$0xff]
    %v1453 = vld [vmem:[#allocation5 + $0x100] sm:$0xff]
    %v1454 = vld [vmem:[#allocation5 + $0x108] sm:$0xff]
    %v1455 = vld [vmem:[#allocation5 + $0x110] sm:$0xff]
    %v1456 = vld [vmem:[#allocation5 + $0x118] sm:$0xff]
    %v1457 = vld [vmem:[#allocation5 + $0x120] sm:$0xff]
    %v1458 = vld [vmem:[#allocation5 + $0x128] sm:$0xff]
    %v1459 = vld [vmem:[#allocation5 + $0x130] sm:$0xff]
    %v1460 = vld [vmem:[#allocation5 + $0x138] sm:$0xff]
    %v1461 = vld [vmem:[#allocation5 + $0x140] sm:$0xff]
    %v1462 = vld [vmem:[#allocation5 + $0x148] sm:$0xff]
    %v1463 = vld [vmem:[#allocation5 + $0x150] sm:$0xff]
    %v1464 = vld [vmem:[#allocation5 + $0x158] sm:$0xff]
    %v1465 = vld [vmem:[#allocation5 + $0x160] sm:$0xff]
    %v1466 = vld [vmem:[#allocation5 + $0x168] sm:$0xff]
    %v1467 = vld [vmem:[#allocation5 + $0x170] sm:$0xff]
    %v1468 = vld [vmem:[#allocation5 + $0x178] sm:$0xff]
    %v1469 = vld [vmem:[#allocation4] sm:$0xff]
    %v1470 = vld [vmem:[#allocation4 + $0x8] sm:$0xff]
    %v1471 = vld [vmem:[#allocation4 + $0x10] sm:$0xff]
    %v1472 = vld [vmem:[#allocation4 + $0x18] sm:$0xff]
    %v1473 = vld [vmem:[#allocation4 + $0x20] sm:$0xff]
    %v1474 = vld [vmem:[#allocation4 + $0x28] sm:$0xff]
    %v1475 = vld [vmem:[#allocation4 + $0x30] sm:$0xff]
    %v1476 = vld [vmem:[#allocation4 + $0x38] sm:$0xff]
    %v1477 = vld [vmem:[#allocation7] sm:$0xff]
    %v1478 = vld [vmem:[#allocation7 + $0x8] sm:$0xff]
    %v1479 = vld [vmem:[#allocation7 + $0x10] sm:$0xff]
    %v1480 = vld [vmem:[#allocation7 + $0x18] sm:$0xff]
    %v1481 = vld [vmem:[#allocation7 + $0x20] sm:$0xff]
    %v1482 = vld [vmem:[#allocation7 + $0x28] sm:$0xff]
    %v1483 = vld [vmem:[#allocation7 + $0x30] sm:$0xff]
    %v1484 = vld [vmem:[#allocation7 + $0x38] sm:$0xff]
    %v1485 = vld [vmem:[#allocation7 + $0x40] sm:$0xff]
    %v1486 = vld [vmem:[#allocation7 + $0x48] sm:$0xff]
    %v1487 = vld [vmem:[#allocation7 + $0x50] sm:$0xff]
    %v1488 = vld [vmem:[#allocation7 + $0x58] sm:$0xff]
    %v1489 = vld [vmem:[#allocation7 + $0x60] sm:$0xff]
    %v1490 = vld [vmem:[#allocation7 + $0x68] sm:$0xff]
    %v1491 = vld [vmem:[#allocation7 + $0x70] sm:$0xff]
    %v1492 = vld [vmem:[#allocation7 + $0x78] sm:$0xff]
    %v1493 = vld [vmem:[#allocation7 + $0x80] sm:$0xff]
    %v1494 = vld [vmem:[#allocation7 + $0x88] sm:$0xff]
    %v1495 = vld [vmem:[#allocation7 + $0x90] sm:$0xff]
    %v1496 = vld [vmem:[#allocation7 + $0x98] sm:$0xff]
    %v1497 = vld [vmem:[#allocation7 + $0xa0] sm:$0xff]
    %v1498 = vld [vmem:[#allocation7 + $0xa8] sm:$0xff]
    %v1499 = vld [vmem:[#allocation7 + $0xb0] sm:$0xff]
    %v1500 = vld [vmem:[#allocation7 + $0xb8] sm:$0xff]
    %v1501 = vld [vmem:[#allocation7 + $0xc0] sm:$0xff]
    %v1502 = vld [vmem:[#allocation7 + $0xc8] sm:$0xff]
    %v1503 = vld [vmem:[#allocation7 + $0xd0] sm:$0xff]
    %v1504 = vld [vmem:[#allocation7 + $0xd8] sm:$0xff]
    %v1505 = vld [vmem:[#allocation7 + $0xe0] sm:$0xff]
    %v1506 = vld [vmem:[#allocation7 + $0xe8] sm:$0xff]
    %v1507 = vld [vmem:[#allocation7 + $0xf0] sm:$0xff]
    %v1508 = vld [vmem:[#allocation7 + $0xf8] sm:$0xff]
    %v1509 = vld [vmem:[#allocation7 + $0x100] sm:$0xff]
    %v1510 = vld [vmem:[#allocation7 + $0x108] sm:$0xff]
    %v1511 = vld [vmem:[#allocation7 + $0x110] sm:$0xff]
    %v1512 = vld [vmem:[#allocation7 + $0x118] sm:$0xff]
    %v1513 = vld [vmem:[#allocation7 + $0x120] sm:$0xff]
    %v1514 = vld [vmem:[#allocation7 + $0x128] sm:$0xff]
    %v1515 = vld [vmem:[#allocation7 + $0x130] sm:$0xff]
    %v1516 = vld [vmem:[#allocation7 + $0x138] sm:$0xff]
    %v1517 = vld [vmem:[#allocation7 + $0x140] sm:$0xff]
    %v1518 = vld [vmem:[#allocation7 + $0x148] sm:$0xff]
    %v1519 = vld [vmem:[#allocation7 + $0x150] sm:$0xff]
    %v1520 = vld [vmem:[#allocation7 + $0x158] sm:$0xff]
    %v1521 = vld [vmem:[#allocation7 + $0x160] sm:$0xff]
    %v1522 = vld [vmem:[#allocation7 + $0x168] sm:$0xff]
    %v1523 = vld [vmem:[#allocation7 + $0x170] sm:$0xff]
    %v1524 = vld [vmem:[#allocation7 + $0x178] sm:$0xff]
    %1525 = vmatpush.msra.mxu0 %v1522
    %1526 = vmatpush.msra.mxu0 %v1519
    %1527 = vmatpush.msra.mxu0 %v1516
    %1528 = vmatpush.msra.mxu0 %v1513
    %1529 = vmatpush.msra.mxu0 %v1510
    %1530 = vmatpush.msra.mxu0 %v1507
    %1531 = vmatpush.msra.mxu0 %v1504
    %1532 = vmatpush.msra.mxu0 %v1501
    %1533 = vmatpush.msra.mxu0 %v1498
    %1534 = vmatpush.msra.mxu0 %v1495
    %1535 = vmatpush.msra.mxu0 %v1492
    %1536 = vmatpush.msra.mxu0 %v1489
    %1537 = vmatpush.msra.mxu0 %v1486
    %1538 = vmatpush.msra.mxu0 %v1483
    %1539 = vmatpush.msra.mxu0 %v1480
    %1540 = vmatpush.msra.mxu0 %v1477
    %1541 = vmatmul.f32.gmra.mxu0 %v1469
    %v1542 = vpop.f32.mrf.mxu0
    %v1543 = vadd.f32 0.0, %v1542
    %1544 = vmatmul.f32.gmra.mxu0 %v1470
    %v1545 = vpop.f32.mrf.mxu0
    %v1546 = vadd.f32 0.0, %v1545
    %1547 = vmatmul.f32.gmra.mxu0 %v1471
    %v1548 = vpop.f32.mrf.mxu0
    %v1549 = vadd.f32 0.0, %v1548
    %1550 = vmatmul.f32.gmra.mxu0 %v1472
    %v1551 = vpop.f32.mrf.mxu0
    %v1552 = vadd.f32 0.0, %v1551
    %1553 = vmatmul.f32.gmra.mxu0 %v1473
    %v1554 = vpop.f32.mrf.mxu0
    %v1555 = vadd.f32 0.0, %v1554
    %1556 = vmatmul.f32.gmra.mxu0 %v1474
    %v1557 = vpop.f32.mrf.mxu0
    %v1558 = vadd.f32 0.0, %v1557
    %1559 = vmatmul.f32.gmra.mxu0 %v1475
    %v1560 = vpop.f32.mrf.mxu0
    %v1561 = vadd.f32 0.0, %v1560
    %1562 = vmatmul.f32.gmra.mxu0 %v1476
    %v1563 = vpop.f32.mrf.mxu0
    %v1564 = vadd.f32 0.0, %v1563
    %1565 = vdwg.mxu0
    %1566 = vmatpush.msra.mxu0 %v1523
    %1567 = vmatpush.msra.mxu0 %v1520
    %1568 = vmatpush.msra.mxu0 %v1517
    %1569 = vmatpush.msra.mxu0 %v1514
    %1570 = vmatpush.msra.mxu0 %v1511
    %1571 = vmatpush.msra.mxu0 %v1508
    %1572 = vmatpush.msra.mxu0 %v1505
    %1573 = vmatpush.msra.mxu0 %v1502
    %1574 = vmatpush.msra.mxu0 %v1499
    %1575 = vmatpush.msra.mxu0 %v1496
    %1576 = vmatpush.msra.mxu0 %v1493
    %1577 = vmatpush.msra.mxu0 %v1490
    %1578 = vmatpush.msra.mxu0 %v1487
    %1579 = vmatpush.msra.mxu0 %v1484
    %1580 = vmatpush.msra.mxu0 %v1481
    %1581 = vmatpush.msra.mxu0 %v1478
    %1582 = vmatmul.f32.gmra.mxu0 %v1469
    %v1583 = vpop.f32.mrf.mxu0
    %v1584 = vadd.f32 0.0, %v1583
    %1585 = vmatmul.f32.gmra.mxu0 %v1470
    %v1586 = vpop.f32.mrf.mxu0
    %v1587 = vadd.f32 0.0, %v1586
    %1588 = vmatmul.f32.gmra.mxu0 %v1471
    %v1589 = vpop.f32.mrf.mxu0
    %v1590 = vadd.f32 0.0, %v1589
    %1591 = vmatmul.f32.gmra.mxu0 %v1472
    %v1592 = vpop.f32.mrf.mxu0
    %v1593 = vadd.f32 0.0, %v1592
    %1594 = vmatmul.f32.gmra.mxu0 %v1473
    %v1595 = vpop.f32.mrf.mxu0
    %v1596 = vadd.f32 0.0, %v1595
    %1597 = vmatmul.f32.gmra.mxu0 %v1474
    %v1598 = vpop.f32.mrf.mxu0
    %v1599 = vadd.f32 0.0, %v1598
    %1600 = vmatmul.f32.gmra.mxu0 %v1475
    %v1601 = vpop.f32.mrf.mxu0
    %v1602 = vadd.f32 0.0, %v1601
    %1603 = vmatmul.f32.gmra.mxu0 %v1476
    %v1604 = vpop.f32.mrf.mxu0
    %v1605 = vadd.f32 0.0, %v1604
    %1606 = vdwg.mxu0
    %1607 = vmatpush.msra.mxu0 %v1524
    %1608 = vmatpush.msra.mxu0 %v1521
    %1609 = vmatpush.msra.mxu0 %v1518
    %1610 = vmatpush.msra.mxu0 %v1515
    %1611 = vmatpush.msra.mxu0 %v1512
    %1612 = vmatpush.msra.mxu0 %v1509
    %1613 = vmatpush.msra.mxu0 %v1506
    %1614 = vmatpush.msra.mxu0 %v1503
    %1615 = vmatpush.msra.mxu0 %v1500
    %1616 = vmatpush.msra.mxu0 %v1497
    %1617 = vmatpush.msra.mxu0 %v1494
    %1618 = vmatpush.msra.mxu0 %v1491
    %1619 = vmatpush.msra.mxu0 %v1488
    %1620 = vmatpush.msra.mxu0 %v1485
    %1621 = vmatpush.msra.mxu0 %v1482
    %1622 = vmatpush.msra.mxu0 %v1479
    %1623 = vmatmul.f32.gmra.mxu0 %v1469
    %v1624 = vpop.f32.mrf.mxu0
    %v1625 = vadd.f32 0.0, %v1624
    %1626 = vmatmul.f32.gmra.mxu0 %v1470
    %v1627 = vpop.f32.mrf.mxu0
    %v1628 = vadd.f32 0.0, %v1627
    %1629 = vmatmul.f32.gmra.mxu0 %v1471
    %v1630 = vpop.f32.mrf.mxu0
    %v1631 = vadd.f32 0.0, %v1630
    %1632 = vmatmul.f32.gmra.mxu0 %v1472
    %v1633 = vpop.f32.mrf.mxu0
    %v1634 = vadd.f32 0.0, %v1633
    %1635 = vmatmul.f32.gmra.mxu0 %v1473
    %v1636 = vpop.f32.mrf.mxu0
    %v1637 = vadd.f32 0.0, %v1636
    %1638 = vmatmul.f32.gmra.mxu0 %v1474
    %v1639 = vpop.f32.mrf.mxu0
    %v1640 = vadd.f32 0.0, %v1639
    %1641 = vmatmul.f32.gmra.mxu0 %v1475
    %v1642 = vpop.f32.mrf.mxu0
    %v1643 = vadd.f32 0.0, %v1642
    %1644 = vmatmul.f32.gmra.mxu0 %v1476
    %v1645 = vpop.f32.mrf.mxu0
    %v1646 = vadd.f32 0.0, %v1645
    %1647 = vdwg.mxu0
    %1648 = vmatpush.msra.mxu0 %v1466
    %1649 = vmatpush.msra.mxu0 %v1463
    %1650 = vmatpush.msra.mxu0 %v1460
    %1651 = vmatpush.msra.mxu0 %v1457
    %1652 = vmatpush.msra.mxu0 %v1454
    %1653 = vmatpush.msra.mxu0 %v1451
    %1654 = vmatpush.msra.mxu0 %v1448
    %1655 = vmatpush.msra.mxu0 %v1445
    %1656 = vmatpush.msra.mxu0 %v1442
    %1657 = vmatpush.msra.mxu0 %v1439
    %1658 = vmatpush.msra.mxu0 %v1436
    %1659 = vmatpush.msra.mxu0 %v1433
    %1660 = vmatpush.msra.mxu0 %v1430
    %1661 = vmatpush.msra.mxu0 %v1427
    %1662 = vmatpush.msra.mxu0 %v1424
    %1663 = vmatpush.msra.mxu0 %v1421
    %1664 = vmatmul.f32.gmra.mxu0 %v1413
    %v1665 = vpop.f32.mrf.mxu0
    %v1666 = vadd.f32 %v1543, %v1665
    %1667 = vmatmul.f32.gmra.mxu0 %v1414
    %v1668 = vpop.f32.mrf.mxu0
    %v1669 = vadd.f32 %v1546, %v1668
    %1670 = vmatmul.f32.gmra.mxu0 %v1415
    %v1671 = vpop.f32.mrf.mxu0
    %v1672 = vadd.f32 %v1549, %v1671
    %1673 = vmatmul.f32.gmra.mxu0 %v1416
    %v1674 = vpop.f32.mrf.mxu0
    %v1675 = vadd.f32 %v1552, %v1674
    %1676 = vmatmul.f32.gmra.mxu0 %v1417
    %v1677 = vpop.f32.mrf.mxu0
    %v1678 = vadd.f32 %v1555, %v1677
    %1679 = vmatmul.f32.gmra.mxu0 %v1418
    %v1680 = vpop.f32.mrf.mxu0
    %v1681 = vadd.f32 %v1558, %v1680
    %1682 = vmatmul.f32.gmra.mxu0 %v1419
    %v1683 = vpop.f32.mrf.mxu0
    %v1684 = vadd.f32 %v1561, %v1683
    %1685 = vmatmul.f32.gmra.mxu0 %v1420
    %v1686 = vpop.f32.mrf.mxu0
    %v1687 = vadd.f32 %v1564, %v1686
    %1688 = vdwg.mxu0
    %1689 = vmatpush.msra.mxu0 %v1467
    %1690 = vmatpush.msra.mxu0 %v1464
    %1691 = vmatpush.msra.mxu0 %v1461
    %1692 = vmatpush.msra.mxu0 %v1458
    %1693 = vmatpush.msra.mxu0 %v1455
    %1694 = vmatpush.msra.mxu0 %v1452
    %1695 = vmatpush.msra.mxu0 %v1449
    %1696 = vmatpush.msra.mxu0 %v1446
    %1697 = vmatpush.msra.mxu0 %v1443
    %1698 = vmatpush.msra.mxu0 %v1440
    %1699 = vmatpush.msra.mxu0 %v1437
    %1700 = vmatpush.msra.mxu0 %v1434
    %1701 = vmatpush.msra.mxu0 %v1431
    %1702 = vmatpush.msra.mxu0 %v1428
    %1703 = vmatpush.msra.mxu0 %v1425
    %1704 = vmatpush.msra.mxu0 %v1422
    %1705 = vmatmul.f32.gmra.mxu0 %v1413
    %v1706 = vpop.f32.mrf.mxu0
    %v1707 = vadd.f32 %v1584, %v1706
    %1708 = vmatmul.f32.gmra.mxu0 %v1414
    %v1709 = vpop.f32.mrf.mxu0
    %v1710 = vadd.f32 %v1587, %v1709
    %1711 = vmatmul.f32.gmra.mxu0 %v1415
    %v1712 = vpop.f32.mrf.mxu0
    %v1713 = vadd.f32 %v1590, %v1712
    %1714 = vmatmul.f32.gmra.mxu0 %v1416
    %v1715 = vpop.f32.mrf.mxu0
    %v1716 = vadd.f32 %v1593, %v1715
    %1717 = vmatmul.f32.gmra.mxu0 %v1417
    %v1718 = vpop.f32.mrf.mxu0
    %v1719 = vadd.f32 %v1596, %v1718
    %1720 = vmatmul.f32.gmra.mxu0 %v1418
    %v1721 = vpop.f32.mrf.mxu0
    %v1722 = vadd.f32 %v1599, %v1721
    %1723 = vmatmul.f32.gmra.mxu0 %v1419
    %v1724 = vpop.f32.mrf.mxu0
    %v1725 = vadd.f32 %v1602, %v1724
    %1726 = vmatmul.f32.gmra.mxu0 %v1420
    %v1727 = vpop.f32.mrf.mxu0
    %v1728 = vadd.f32 %v1605, %v1727
    %1729 = vdwg.mxu0
    %1730 = vmatpush.msra.mxu0 %v1468
    %1731 = vmatpush.msra.mxu0 %v1465
    %1732 = vmatpush.msra.mxu0 %v1462
    %1733 = vmatpush.msra.mxu0 %v1459
    %1734 = vmatpush.msra.mxu0 %v1456
    %1735 = vmatpush.msra.mxu0 %v1453
    %1736 = vmatpush.msra.mxu0 %v1450
    %1737 = vmatpush.msra.mxu0 %v1447
    %1738 = vmatpush.msra.mxu0 %v1444
    %1739 = vmatpush.msra.mxu0 %v1441
    %1740 = vmatpush.msra.mxu0 %v1438
    %1741 = vmatpush.msra.mxu0 %v1435
    %1742 = vmatpush.msra.mxu0 %v1432
    %1743 = vmatpush.msra.mxu0 %v1429
    %1744 = vmatpush.msra.mxu0 %v1426
    %1745 = vmatpush.msra.mxu0 %v1423
    %1746 = vmatmul.f32.gmra.mxu0 %v1413
    %v1747 = vpop.f32.mrf.mxu0
    %v1748 = vadd.f32 %v1625, %v1747
    %1749 = vmatmul.f32.gmra.mxu0 %v1414
    %v1750 = vpop.f32.mrf.mxu0
    %v1751 = vadd.f32 %v1628, %v1750
    %1752 = vmatmul.f32.gmra.mxu0 %v1415
    %v1753 = vpop.f32.mrf.mxu0
    %v1754 = vadd.f32 %v1631, %v1753
    %1755 = vmatmul.f32.gmra.mxu0 %v1416
    %v1756 = vpop.f32.mrf.mxu0
    %v1757 = vadd.f32 %v1634, %v1756
    %1758 = vmatmul.f32.gmra.mxu0 %v1417
    %v1759 = vpop.f32.mrf.mxu0
    %v1760 = vadd.f32 %v1637, %v1759
    %1761 = vmatmul.f32.gmra.mxu0 %v1418
    %v1762 = vpop.f32.mrf.mxu0
    %v1763 = vadd.f32 %v1640, %v1762
    %1764 = vmatmul.f32.gmra.mxu0 %v1419
    %v1765 = vpop.f32.mrf.mxu0
    %v1766 = vadd.f32 %v1643, %v1765
    %1767 = vmatmul.f32.gmra.mxu0 %v1420
    %v1768 = vpop.f32.mrf.mxu0
    %v1769 = vadd.f32 %v1646, %v1768
    %1770 = vdwg.mxu0
    %v1771 = vld [vmem:[%s8] sm:$0x7]
    %v1773 = vperm.slane %v1771, 0
    %v1774 = vperm.slane %v1771, 1
    %v1775 = vperm.slane %v1771, 2
    %v1779 = vadd.f32 %v1666, %v1773
    %v1780 = vadd.f32 %v1707, %v1774
    %v1781 = vadd.f32 %v1748, %v1775
    %v1782 = vadd.f32 %v1669, %v1773
    %v1783 = vadd.f32 %v1710, %v1774
    %v1784 = vadd.f32 %v1751, %v1775
    %v1785 = vadd.f32 %v1672, %v1773
    %v1786 = vadd.f32 %v1713, %v1774
    %v1787 = vadd.f32 %v1754, %v1775
    %v1788 = vadd.f32 %v1675, %v1773
    %v1789 = vadd.f32 %v1716, %v1774
    %v1790 = vadd.f32 %v1757, %v1775
    %v1791 = vadd.f32 %v1678, %v1773
    %v1792 = vadd.f32 %v1719, %v1774
    %v1793 = vadd.f32 %v1760, %v1775
    %v1794 = vadd.f32 %v1681, %v1773
    %v1795 = vadd.f32 %v1722, %v1774
    %v1796 = vadd.f32 %v1763, %v1775
    %v1797 = vadd.f32 %v1684, %v1773
    %v1798 = vadd.f32 %v1725, %v1774
    %v1799 = vadd.f32 %v1766, %v1775
    %v1800 = vadd.f32 %v1687, %v1773
    %v1801 = vadd.f32 %v1728, %v1774
    %v1802 = vadd.f32 %v1769, %v1775
    %1803 = vst [vmem:[#allocation2] sm:$0xff] %v1779
    %1804 = vst [vmem:[#allocation2 + $0x8] sm:$0xff] %v1780
    %1805 = vst [vmem:[#allocation2 + $0x10] sm:$0xff] %v1781
    %1806 = vst [vmem:[#allocation2 + $0x18] sm:$0xff] %v1782
    %1807 = vst [vmem:[#allocation2 + $0x20] sm:$0xff] %v1783
    %1808 = vst [vmem:[#allocation2 + $0x28] sm:$0xff] %v1784
    %1809 = vst [vmem:[#allocation2 + $0x30] sm:$0xff] %v1785
    %1810 = vst [vmem:[#allocation2 + $0x38] sm:$0xff] %v1786
    %1811 = vst [vmem:[#allocation2 + $0x40] sm:$0xff] %v1787
    %1812 = vst [vmem:[#allocation2 + $0x48] sm:$0xff] %v1788
    %1813 = vst [vmem:[#allocation2 + $0x50] sm:$0xff] %v1789
    %1814 = vst [vmem:[#allocation2 + $0x58] sm:$0xff] %v1790
    %1815 = vst [vmem:[#allocation2 + $0x60] sm:$0xff] %v1791
    %1816 = vst [vmem:[#allocation2 + $0x68] sm:$0xff] %v1792
    %1817 = vst [vmem:[#allocation2 + $0x70] sm:$0xff] %v1793
    %1818 = vst [vmem:[#allocation2 + $0x78] sm:$0xff] %v1794
    %1819 = vst [vmem:[#allocation2 + $0x80] sm:$0xff] %v1795
    %1820 = vst [vmem:[#allocation2 + $0x88] sm:$0xff] %v1796
    %1821 = vst [vmem:[#allocation2 + $0x90] sm:$0xff] %v1797
    %1822 = vst [vmem:[#allocation2 + $0x98] sm:$0xff] %v1798
    %1823 = vst [vmem:[#allocation2 + $0xa0] sm:$0xff] %v1799
    %1824 = vst [vmem:[#allocation2 + $0xa8] sm:$0xff] %v1800
    %1825 = vst [vmem:[#allocation2 + $0xb0] sm:$0xff] %v1801
    %1826 = vst [vmem:[#allocation2 + $0xb8] sm:$0xff] %v1802
    %v1827 = vld [vmem:[#allocation9] sm:$0xff]
    %v1828 = vld [vmem:[#allocation9 + $0x8] sm:$0xff]
    %v1829 = vld [vmem:[#allocation9 + $0x10] sm:$0xff]
    %v1830 = vld [vmem:[#allocation9 + $0x18] sm:$0xff]
    %v1831 = vld [vmem:[#allocation9 + $0x20] sm:$0xff]
    %v1832 = vld [vmem:[#allocation9 + $0x28] sm:$0xff]
    %v1833 = vld [vmem:[#allocation9 + $0x30] sm:$0xff]
    %v1834 = vld [vmem:[#allocation9 + $0x38] sm:$0xff]
    %v1835 = vld [vmem:[#allocation9 + $0x40] sm:$0xff]
    %v1836 = vld [vmem:[#allocation9 + $0x48] sm:$0xff]
    %v1837 = vld [vmem:[#allocation9 + $0x50] sm:$0xff]
    %v1838 = vld [vmem:[#allocation9 + $0x58] sm:$0xff]
    %v1839 = vld [vmem:[#allocation9 + $0x60] sm:$0xff]
    %v1840 = vld [vmem:[#allocation9 + $0x68] sm:$0xff]
    %v1841 = vld [vmem:[#allocation9 + $0x70] sm:$0xff]
    %v1842 = vld [vmem:[#allocation9 + $0x78] sm:$0xff]
    %v1843 = vld [vmem:[#allocation9 + $0x80] sm:$0xff]
    %v1844 = vld [vmem:[#allocation9 + $0x88] sm:$0xff]
    %v1845 = vld [vmem:[#allocation9 + $0x90] sm:$0xff]
    %v1846 = vld [vmem:[#allocation9 + $0x98] sm:$0xff]
    %v1847 = vld [vmem:[#allocation9 + $0xa0] sm:$0xff]
    %v1848 = vld [vmem:[#allocation9 + $0xa8] sm:$0xff]
    %v1849 = vld [vmem:[#allocation9 + $0xb0] sm:$0xff]
    %v1850 = vld [vmem:[#allocation9 + $0xb8] sm:$0xff]
    %v1851 = vld [vmem:[#allocation9 + $0xc0] sm:$0xff]
    %v1852 = vld [vmem:[#allocation9 + $0xc8] sm:$0xff]
    %v1853 = vld [vmem:[#allocation9 + $0xd0] sm:$0xff]
    %v1854 = vld [vmem:[#allocation9 + $0xd8] sm:$0xff]
    %v1855 = vld [vmem:[#allocation9 + $0xe0] sm:$0xff]
    %v1856 = vld [vmem:[#allocation9 + $0xe8] sm:$0xff]
    %v1857 = vld [vmem:[#allocation9 + $0xf0] sm:$0xff]
    %v1858 = vld [vmem:[#allocation9 + $0xf8] sm:$0xff]
    %v1859 = vld [vmem:[#allocation9 + $0x100] sm:$0xff]
    %v1860 = vld [vmem:[#allocation9 + $0x108] sm:$0xff]
    %v1861 = vld [vmem:[#allocation9 + $0x110] sm:$0xff]
    %v1862 = vld [vmem:[#allocation9 + $0x118] sm:$0xff]
    %v1863 = vld [vmem:[#allocation9 + $0x120] sm:$0xff]
    %v1864 = vld [vmem:[#allocation9 + $0x128] sm:$0xff]
    %v1865 = vld [vmem:[#allocation9 + $0x130] sm:$0xff]
    %v1866 = vld [vmem:[#allocation9 + $0x138] sm:$0xff]
    %v1867 = vld [vmem:[#allocation9 + $0x140] sm:$0xff]
    %v1868 = vld [vmem:[#allocation9 + $0x148] sm:$0xff]
    %v1869 = vld [vmem:[#allocation9 + $0x150] sm:$0xff]
    %v1870 = vld [vmem:[#allocation9 + $0x158] sm:$0xff]
    %v1871 = vld [vmem:[#allocation9 + $0x160] sm:$0xff]
    %v1872 = vld [vmem:[#allocation9 + $0x168] sm:$0xff]
    %v1873 = vld [vmem:[#allocation9 + $0x170] sm:$0xff]
    %v1874 = vld [vmem:[#allocation9 + $0x178] sm:$0xff]
    %1875 = vmatpush.msra.mxu0 %v1872
    %1876 = vmatpush.msra.mxu0 %v1869
    %1877 = vmatpush.msra.mxu0 %v1866
    %1878 = vmatpush.msra.mxu0 %v1863
    %1879 = vmatpush.msra.mxu0 %v1860
    %1880 = vmatpush.msra.mxu0 %v1857
    %1881 = vmatpush.msra.mxu0 %v1854
    %1882 = vmatpush.msra.mxu0 %v1851
    %1883 = vmatpush.msra.mxu0 %v1848
    %1884 = vmatpush.msra.mxu0 %v1845
    %1885 = vmatpush.msra.mxu0 %v1842
    %1886 = vmatpush.msra.mxu0 %v1839
    %1887 = vmatpush.msra.mxu0 %v1836
    %1888 = vmatpush.msra.mxu0 %v1833
    %1889 = vmatpush.msra.mxu0 %v1830
    %1890 = vmatpush.msra.mxu0 %v1827
    %1891 = vmatmul.f32.gmra.mxu0 0.0
    %v1892 = vpop.f32.mrf.mxu0
    %v1893 = vadd.f32 0.0, %v1892
    %1894 = vdwg.mxu0
    %1895 = vmatpush.msra.mxu0 %v1873
    %1896 = vmatpush.msra.mxu0 %v1870
    %1897 = vmatpush.msra.mxu0 %v1867
    %1898 = vmatpush.msra.mxu0 %v1864
    %1899 = vmatpush.msra.mxu0 %v1861
    %1900 = vmatpush.msra.mxu0 %v1858
    %1901 = vmatpush.msra.mxu0 %v1855
    %1902 = vmatpush.msra.mxu0 %v1852
    %1903 = vmatpush.msra.mxu0 %v1849
    %1904 = vmatpush.msra.mxu0 %v1846
    %1905 = vmatpush.msra.mxu0 %v1843
    %1906 = vmatpush.msra.mxu0 %v1840
    %1907 = vmatpush.msra.mxu0 %v1837
    %1908 = vmatpush.msra.mxu0 %v1834
    %1909 = vmatpush.msra.mxu0 %v1831
    %1910 = vmatpush.msra.mxu0 %v1828
    %1911 = vmatmul.f32.gmra.mxu0 0.0
    %v1912 = vpop.f32.mrf.mxu0
    %v1913 = vadd.f32 0.0, %v1912
    %1914 = vdwg.mxu0
    %1915 = vmatpush.msra.mxu0 %v1874
    %1916 = vmatpush.msra.mxu0 %v1871
    %1917 = vmatpush.msra.mxu0 %v1868
    %1918 = vmatpush.msra.mxu0 %v1865
    %1919 = vmatpush.msra.mxu0 %v1862
    %1920 = vmatpush.msra.mxu0 %v1859
    %1921 = vmatpush.msra.mxu0 %v1856
    %1922 = vmatpush.msra.mxu0 %v1853
    %1923 = vmatpush.msra.mxu0 %v1850
    %1924 = vmatpush.msra.mxu0 %v1847
    %1925 = vmatpush.msra.mxu0 %v1844
    %1926 = vmatpush.msra.mxu0 %v1841
    %1927 = vmatpush.msra.mxu0 %v1838
    %1928 = vmatpush.msra.mxu0 %v1835
    %1929 = vmatpush.msra.mxu0 %v1832
    %1930 = vmatpush.msra.mxu0 %v1829
    %1931 = vmatmul.f32.gmra.mxu0 0.0
    %v1932 = vpop.f32.mrf.mxu0
    %v1933 = vadd.f32 0.0, %v1932
    %1934 = vdwg.mxu0
    %v1935 = vld [vmem:[#allocation2] sm:$0xff]
    %v1936 = vld [vmem:[#allocation2 + $0x8] sm:$0xff]
    %v1937 = vld [vmem:[#allocation2 + $0x10] sm:$0xff]
    %v1938 = vadd.f32 %v1935, %v1893
    %v1939 = vadd.f32 %v1936, %v1913
    %v1940 = vmul.f32 %v1938, 0.5
    %v1941 = vmul.f32 %v1939, 0.5
    %v1942 = vtanh.pop %v1940
    %v1943 = vtanh.pop %v1941
    %v1944 = vadd.f32 %v1942, 1.0
    %v1945 = vadd.f32 %v1943, 1.0
    %v1946 = vmul.f32 %v1944, 0.5
    %v1947 = vmul.f32 %v1945, 0.5
    %v1948 = vld [vmem:[%s10] sm:$0x1]
    %v1950 = vperm.slane %v1948, 0
    %v1952 = vadd.f32 %v1933, %v1950
    %v1953 = vmul.f32 %v1946, %v1952
    %v1954 = vadd.f32 %v1937, %v1953
    %v1955 = vtanh.pop %v1954
    %v1956 = vsub.f32 1.0, %v1947
    %v1957 = vmul.f32 %v1956, %v1955
    %v1958 = vmul.f32 %v1947, 0.0
    %v1959 = vadd.f32 %v1957, %v1958
    %v1960 = vsel %vm437, %v1959, 0.0
    %1961 = vmatpush.msra.mxu0 %v1872
    %1962 = vmatpush.msra.mxu0 %v1869
    %1963 = vmatpush.msra.mxu0 %v1866
    %1964 = vmatpush.msra.mxu0 %v1863
    %1965 = vmatpush.msra.mxu0 %v1860
    %1966 = vmatpush.msra.mxu0 %v1857
    %1967 = vmatpush.msra.mxu0 %v1854
    %1968 = vmatpush.msra.mxu0 %v1851
    %1969 = vmatpush.msra.mxu0 %v1848
    %1970 = vmatpush.msra.mxu0 %v1845
    %1971 = vmatpush.msra.mxu0 %v1842
    %1972 = vmatpush.msra.mxu0 %v1839
    %1973 = vmatpush.msra.mxu0 %v1836
    %1974 = vmatpush.msra.mxu0 %v1833
    %1975 = vmatpush.msra.mxu0 %v1830
    %1976 = vmatpush.msra.mxu0 %v1827
    %1977 = vmatmul.f32.gmra.mxu0 %v1960
    %v1978 = vpop.f32.mrf.mxu0
    %v1979 = vadd.f32 0.0, %v1978
    %1980 = vdwg.mxu0
    %1981 = vmatpush.msra.mxu0 %v1873
    %1982 = vmatpush.msra.mxu0 %v1870
    %1983 = vmatpush.msra.mxu0 %v1867
    %1984 = vmatpush.msra.mxu0 %v1864
    %1985 = vmatpush.msra.mxu0 %v1861
    %1986 = vmatpush.msra.mxu0 %v1858
    %1987 = vmatpush.msra.mxu0 %v1855
    %1988 = vmatpush.msra.mxu0 %v1852
    %1989 = vmatpush.msra.mxu0 %v1849
    %1990 = vmatpush.msra.mxu0 %v1846
    %1991 = vmatpush.msra.mxu0 %v1843
    %1992 = vmatpush.msra.mxu0 %v1840
    %1993 = vmatpush.msra.mxu0 %v1837
    %1994 = vmatpush.msra.mxu0 %v1834
    %1995 = vmatpush.msra.mxu0 %v1831
    %1996 = vmatpush.msra.mxu0 %v1828
    %1997 = vmatmul.f32.gmra.mxu0 %v1960
    %v1998 = vpop.f32.mrf.mxu0
    %v1999 = vadd.f32 0.0, %v1998
    %2000 = vdwg.mxu0
    %2001 = vmatpush.msra.mxu0 %v1874
    %2002 = vmatpush.msra.mxu0 %v1871
    %2003 = vmatpush.msra.mxu0 %v1868
    %2004 = vmatpush.msra.mxu0 %v1865
    %2005 = vmatpush.msra.mxu0 %v1862
    %2006 = vmatpush.msra.mxu0 %v1859
    %2007 = vmatpush.msra.mxu0 %v1856
    %2008 = vmatpush.msra.mxu0 %v1853
    %2009 = vmatpush.msra.mxu0 %v1850
    %2010 = vmatpush.msra.mxu0 %v1847
    %2011 = vmatpush.msra.mxu0 %v1844
    %2012 = vmatpush.msra.mxu0 %v1841
    %2013 = vmatpush.msra.mxu0 %v1838
    %2014 = vmatpush.msra.mxu0 %v1835
    %2015 = vmatpush.msra.mxu0 %v1832
    %2016 = vmatpush.msra.mxu0 %v1829
    %2017 = vmatmul.f32.gmra.mxu0 %v1960
    %v2018 = vpop.f32.mrf.mxu0
    %v2019 = vadd.f32 0.0, %v2018
    %2020 = vdwg.mxu0
    %v2021 = vld [vmem:[#allocation2 + $0x18] sm:$0xff]
    %v2022 = vld [vmem:[#allocation2 + $0x20] sm:$0xff]
    %v2023 = vld [vmem:[#allocation2 + $0x28] sm:$0xff]
    %v2024 = vadd.f32 %v2021, %v1979
    %v2025 = vadd.f32 %v2022, %v1999
    %v2026 = vmul.f32 %v2024, 0.5
    %v2027 = vmul.f32 %v2025, 0.5
    %v2028 = vtanh.pop %v2026
    %v2029 = vtanh.pop %v2027
    %v2030 = vadd.f32 %v2028, 1.0
    %v2031 = vadd.f32 %v2029, 1.0
    %v2032 = vmul.f32 %v2030, 0.5
    %v2033 = vmul.f32 %v2031, 0.5
    %v2034 = vadd.f32 %v2019, %v1950
    %v2035 = vmul.f32 %v2032, %v2034
    %v2036 = vadd.f32 %v2023, %v2035
    %v2037 = vtanh.pop %v2036
    %v2038 = vsub.f32 1.0, %v2033
    %v2039 = vmul.f32 %v2038, %v2037
    %v2040 = vmul.f32 %v2033, %v1960
    %v2041 = vadd.f32 %v2039, %v2040
    %v2042 = vsel %vm575, %v2041, %v1960
    %2043 = vmatpush.msra.mxu0 %v1872
    %2044 = vmatpush.msra.mxu0 %v1869
    %2045 = vmatpush.msra.mxu0 %v1866
    %2046 = vmatpush.msra.mxu0 %v1863
    %2047 = vmatpush.msra.mxu0 %v1860
    %2048 = vmatpush.msra.mxu0 %v1857
    %2049 = vmatpush.msra.mxu0 %v1854
    %2050 = vmatpush.msra.mxu0 %v1851
    %2051 = vmatpush.msra.mxu0 %v1848
    %2052 = vmatpush.msra.mxu0 %v1845
    %2053 = vmatpush.msra.mxu0 %v1842
    %2054 = vmatpush.msra.mxu0 %v1839
    %2055 = vmatpush.msra.mxu0 %v1836
    %2056 = vmatpush.msra.mxu0 %v1833
    %2057 = vmatpush.msra.mxu0 %v1830
    %2058 = vmatpush.msra.mxu0 %v1827
    %2059 = vmatmul.f32.gmra.mxu0 %v2042
    %v2060 = vpop.f32.mrf.mxu0
    %v2061 = vadd.f32 0.0, %v2060
    %2062 = vdwg.mxu0
    %2063 = vmatpush.msra.mxu0 %v1873
    %2064 = vmatpush.msra.mxu0 %v1870
    %2065 = vmatpush.msra.mxu0 %v1867
    %2066 = vmatpush.msra.mxu0 %v1864
    %2067 = vmatpush.msra.mxu0 %v1861
    %2068 = vmatpush.msra.mxu0 %v1858
    %2069 = vmatpush.msra.mxu0 %v1855
    %2070 = vmatpush.msra.mxu0 %v1852
    %2071 = vmatpush.msra.mxu0 %v1849
    %2072 = vmatpush.msra.mxu0 %v1846
    %2073 = vmatpush.msra.mxu0 %v1843
    %2074 = vmatpush.msra.mxu0 %v1840
    %2075 = vmatpush.msra.mxu0 %v1837
    %2076 = vmatpush.msra.mxu0 %v1834
    %2077 = vmatpush.msra.mxu0 %v1831
    %2078 = vmatpush.msra.mxu0 %v1828
    %2079 = vmatmul.f32.gmra.mxu0 %v2042
    %v2080 = vpop.f32.mrf.mxu0
    %v2081 = vadd.f32 0.0, %v2080
    %2082 = vdwg.mxu0
    %2083 = vmatpush.msra.mxu0 %v1874
    %2084 = vmatpush.msra.mxu0 %v1871
    %2085 = vmatpush.msra.mxu0 %v1868
    %2086 = vmatpush.msra.mxu0 %v1865
    %2087 = vmatpush.msra.mxu0 %v1862
    %2088 = vmatpush.msra.mxu0 %v1859
    %2089 = vmatpush.msra.mxu0 %v1856
    %2090 = vmatpush.msra.mxu0 %v1853
    %2091 = vmatpush.msra.mxu0 %v1850
    %2092 = vmatpush.msra.mxu0 %v1847
    %2093 = vmatpush.msra.mxu0 %v1844
    %2094 = vmatpush.msra.mxu0 %v1841
    %2095 = vmatpush.msra.mxu0 %v1838
    %2096 = vmatpush.msra.mxu0 %v1835
    %2097 = vmatpush.msra.mxu0 %v1832
    %2098 = vmatpush.msra.mxu0 %v1829
    %2099 = vmatmul.f32.gmra.mxu0 %v2042
    %v2100 = vpop.f32.mrf.mxu0
    %v2101 = vadd.f32 0.0, %v2100
    %2102 = vdwg.mxu0
    %v2103 = vld [vmem:[#allocation2 + $0x30] sm:$0xff]
    %v2104 = vld [vmem:[#allocation2 + $0x38] sm:$0xff]
    %v2105 = vld [vmem:[#allocation2 + $0x40] sm:$0xff]
    %v2106 = vadd.f32 %v2103, %v2061
    %v2107 = vadd.f32 %v2104, %v2081
    %v2108 = vmul.f32 %v2106, 0.5
    %v2109 = vmul.f32 %v2107, 0.5
    %v2110 = vtanh.pop %v2108
    %v2111 = vtanh.pop %v2109
    %v2112 = vadd.f32 %v2110, 1.0
    %v2113 = vadd.f32 %v2111, 1.0
    %v2114 = vmul.f32 %v2112, 0.5
    %v2115 = vmul.f32 %v2113, 0.5
    %v2116 = vadd.f32 %v2101, %v1950
    %v2117 = vmul.f32 %v2114, %v2116
    %v2118 = vadd.f32 %v2105, %v2117
    %v2119 = vtanh.pop %v2118
    %v2120 = vsub.f32 1.0, %v2115
    %v2121 = vmul.f32 %v2120, %v2119
    %v2122 = vmul.f32 %v2115, %v2042
    %v2123 = vadd.f32 %v2121, %v2122
    %v2124 = vsel %vm714, %v2123, %v2042
    %2125 = vmatpush.msra.mxu0 %v1872
    %2126 = vmatpush.msra.mxu0 %v1869
    %2127 = vmatpush.msra.mxu0 %v1866
    %2128 = vmatpush.msra.mxu0 %v1863
    %2129 = vmatpush.msra.mxu0 %v1860
    %2130 = vmatpush.msra.mxu0 %v1857
    %2131 = vmatpush.msra.mxu0 %v1854
    %2132 = vmatpush.msra.mxu0 %v1851
    %2133 = vmatpush.msra.mxu0 %v1848
    %2134 = vmatpush.msra.mxu0 %v1845
    %2135 = vmatpush.msra.mxu0 %v1842
    %2136 = vmatpush.msra.mxu0 %v1839
    %2137 = vmatpush.msra.mxu0 %v1836
    %2138 = vmatpush.msra.mxu0 %v1833
    %2139 = vmatpush.msra.mxu0 %v1830
    %2140 = vmatpush.msra.mxu0 %v1827
    %2141 = vmatmul.f32.gmra.mxu0 %v2124
    %v2142 = vpop.f32.mrf.mxu0
    %v2143 = vadd.f32 0.0, %v2142
    %2144 = vdwg.mxu0
    %2145 = vmatpush.msra.mxu0 %v1873
    %2146 = vmatpush.msra.mxu0 %v1870
    %2147 = vmatpush.msra.mxu0 %v1867
    %2148 = vmatpush.msra.mxu0 %v1864
    %2149 = vmatpush.msra.mxu0 %v1861
    %2150 = vmatpush.msra.mxu0 %v1858
    %2151 = vmatpush.msra.mxu0 %v1855
    %2152 = vmatpush.msra.mxu0 %v1852
    %2153 = vmatpush.msra.mxu0 %v1849
    %2154 = vmatpush.msra.mxu0 %v1846
    %2155 = vmatpush.msra.mxu0 %v1843
    %2156 = vmatpush.msra.mxu0 %v1840
    %2157 = vmatpush.msra.mxu0 %v1837
    %2158 = vmatpush.msra.mxu0 %v1834
    %2159 = vmatpush.msra.mxu0 %v1831
    %2160 = vmatpush.msra.mxu0 %v1828
    %2161 = vmatmul.f32.gmra.mxu0 %v2124
    %v2162 = vpop.f32.mrf.mxu0
    %v2163 = vadd.f32 0.0, %v2162
    %2164 = vdwg.mxu0
    %2165 = vmatpush.msra.mxu0 %v1874
    %2166 = vmatpush.msra.mxu0 %v1871
    %2167 = vmatpush.msra.mxu0 %v1868
    %2168 = vmatpush.msra.mxu0 %v1865
    %2169 = vmatpush.msra.mxu0 %v1862
    %2170 = vmatpush.msra.mxu0 %v1859
    %2171 = vmatpush.msra.mxu0 %v1856
    %2172 = vmatpush.msra.mxu0 %v1853
    %2173 = vmatpush.msra.mxu0 %v1850
    %2174 = vmatpush.msra.mxu0 %v1847
    %2175 = vmatpush.msra.mxu0 %v1844
    %2176 = vmatpush.msra.mxu0 %v1841
    %2177 = vmatpush.msra.mxu0 %v1838
    %2178 = vmatpush.msra.mxu0 %v1835
    %2179 = vmatpush.msra.mxu0 %v1832
    %2180 = vmatpush.msra.mxu0 %v1829
    %2181 = vmatmul.f32.gmra.mxu0 %v2124
    %v2182 = vpop.f32.mrf.mxu0
    %v2183 = vadd.f32 0.0, %v2182
    %2184 = vdwg.mxu0
    %v2185 = vld [vmem:[#allocation2 + $0x48] sm:$0xff]
    %v2186 = vld [vmem:[#allocation2 + $0x50] sm:$0xff]
    %v2187 = vld [vmem:[#allocation2 + $0x58] sm:$0xff]
    %v2188 = vadd.f32 %v2185, %v2143
    %v2189 = vadd.f32 %v2186, %v2163
    %v2190 = vmul.f32 %v2188, 0.5
    %v2191 = vmul.f32 %v2189, 0.5
    %v2192 = vtanh.pop %v2190
    %v2193 = vtanh.pop %v2191
    %v2194 = vadd.f32 %v2192, 1.0
    %v2195 = vadd.f32 %v2193, 1.0
    %v2196 = vmul.f32 %v2194, 0.5
    %v2197 = vmul.f32 %v2195, 0.5
    %v2198 = vadd.f32 %v2183, %v1950
    %v2199 = vmul.f32 %v2196, %v2198
    %v2200 = vadd.f32 %v2187, %v2199
    %v2201 = vtanh.pop %v2200
    %v2202 = vsub.f32 1.0, %v2197
    %v2203 = vmul.f32 %v2202, %v2201
    %v2204 = vmul.f32 %v2197, %v2124
    %v2205 = vadd.f32 %v2203, %v2204
    %v2206 = vsel %vm853, %v2205, %v2124
    %2207 = vmatpush.msra.mxu0 %v1872
    %2208 = vmatpush.msra.mxu0 %v1869
    %2209 = vmatpush.msra.mxu0 %v1866
    %2210 = vmatpush.msra.mxu0 %v1863
    %2211 = vmatpush.msra.mxu0 %v1860
    %2212 = vmatpush.msra.mxu0 %v1857
    %2213 = vmatpush.msra.mxu0 %v1854
    %2214 = vmatpush.msra.mxu0 %v1851
    %2215 = vmatpush.msra.mxu0 %v1848
    %2216 = vmatpush.msra.mxu0 %v1845
    %2217 = vmatpush.msra.mxu0 %v1842
    %2218 = vmatpush.msra.mxu0 %v1839
    %2219 = vmatpush.msra.mxu0 %v1836
    %2220 = vmatpush.msra.mxu0 %v1833
    %2221 = vmatpush.msra.mxu0 %v1830
    %2222 = vmatpush.msra.mxu0 %v1827
    %2223 = vmatmul.f32.gmra.mxu0 %v2206
    %v2224 = vpop.f32.mrf.mxu0
    %v2225 = vadd.f32 0.0, %v2224
    %2226 = vdwg.mxu0
    %2227 = vmatpush.msra.mxu0 %v1873
    %2228 = vmatpush.msra.mxu0 %v1870
    %2229 = vmatpush.msra.mxu0 %v1867
    %2230 = vmatpush.msra.mxu0 %v1864
    %2231 = vmatpush.msra.mxu0 %v1861
    %2232 = vmatpush.msra.mxu0 %v1858
    %2233 = vmatpush.msra.mxu0 %v1855
    %2234 = vmatpush.msra.mxu0 %v1852
    %2235 = vmatpush.msra.mxu0 %v1849
    %2236 = vmatpush.msra.mxu0 %v1846
    %2237 = vmatpush.msra.mxu0 %v1843
    %2238 = vmatpush.msra.mxu0 %v1840
    %2239 = vmatpush.msra.mxu0 %v1837
    %2240 = vmatpush.msra.mxu0 %v1834
    %2241 = vmatpush.msra.mxu0 %v1831
    %2242 = vmatpush.msra.mxu0 %v1828
    %2243 = vmatmul.f32.gmra.mxu0 %v2206
    %v2244 = vpop.f32.mrf.mxu0
    %v2245 = vadd.f32 0.0, %v2244
    %2246 = vdwg.mxu0
    %2247 = vmatpush.msra.mxu0 %v1874
    %2248 = vmatpush.msra.mxu0 %v1871
    %2249 = vmatpush.msra.mxu0 %v1868
    %2250 = vmatpush.msra.mxu0 %v1865
    %2251 = vmatpush.msra.mxu0 %v1862
    %2252 = vmatpush.msra.mxu0 %v1859
    %2253 = vmatpush.msra.mxu0 %v1856
    %2254 = vmatpush.msra.mxu0 %v1853
    %2255 = vmatpush.msra.mxu0 %v1850
    %2256 = vmatpush.msra.mxu0 %v1847
    %2257 = vmatpush.msra.mxu0 %v1844
    %2258 = vmatpush.msra.mxu0 %v1841
    %2259 = vmatpush.msra.mxu0 %v1838
    %2260 = vmatpush.msra.mxu0 %v1835
    %2261 = vmatpush.msra.mxu0 %v1832
    %2262 = vmatpush.msra.mxu0 %v1829
    %2263 = vmatmul.f32.gmra.mxu0 %v2206
    %v2264 = vpop.f32.mrf.mxu0
    %v2265 = vadd.f32 0.0, %v2264
    %2266 = vdwg.mxu0
    %v2267 = vld [vmem:[#allocation2 + $0x60] sm:$0xff]
    %v2268 = vld [vmem:[#allocation2 + $0x68] sm:$0xff]
    %v2269 = vld [vmem:[#allocation2 + $0x70] sm:$0xff]
    %v2270 = vadd.f32 %v2267, %v2225
    %v2271 = vadd.f32 %v2268, %v2245
    %v2272 = vmul.f32 %v2270, 0.5
    %v2273 = vmul.f32 %v2271, 0.5
    %v2274 = vtanh.pop %v2272
    %v2275 = vtanh.pop %v2273
    %v2276 = vadd.f32 %v2274, 1.0
    %v2277 = vadd.f32 %v2275, 1.0
    %v2278 = vmul.f32 %v2276, 0.5
    %v2279 = vmul.f32 %v2277, 0.5
    %v2280 = vadd.f32 %v2265, %v1950
    %v2281 = vmul.f32 %v2278, %v2280
    %v2282 = vadd.f32 %v2269, %v2281
    %v2283 = vtanh.pop %v2282
    %v2284 = vsub.f32 1.0, %v2279
    %v2285 = vmul.f32 %v2284, %v2283
    %v2286 = vmul.f32 %v2279, %v2206
    %v2287 = vadd.f32 %v2285, %v2286
    %v2288 = vsel %vm992, %v2287, %v2206
    %2289 = vmatpush.msra.mxu0 %v1872
    %2290 = vmatpush.msra.mxu0 %v1869
    %2291 = vmatpush.msra.mxu0 %v1866
    %2292 = vmatpush.msra.mxu0 %v1863
    %2293 = vmatpush.msra.mxu0 %v1860
    %2294 = vmatpush.msra.mxu0 %v1857
    %2295 = vmatpush.msra.mxu0 %v1854
    %2296 = vmatpush.msra.mxu0 %v1851
    %2297 = vmatpush.msra.mxu0 %v1848
    %2298 = vmatpush.msra.mxu0 %v1845
    %2299 = vmatpush.msra.mxu0 %v1842
    %2300 = vmatpush.msra.mxu0 %v1839
    %2301 = vmatpush.msra.mxu0 %v1836
    %2302 = vmatpush.msra.mxu0 %v1833
    %2303 = vmatpush.msra.mxu0 %v1830
    %2304 = vmatpush.msra.mxu0 %v1827
    %2305 = vmatmul.f32.gmra.mxu0 %v2288
    %v2306 = vpop.f32.mrf.mxu0
    %v2307 = vadd.f32 0.0, %v2306
    %2308 = vdwg.mxu0
    %2309 = vmatpush.msra.mxu0 %v1873
    %2310 = vmatpush.msra.mxu0 %v1870
    %2311 = vmatpush.msra.mxu0 %v1867
    %2312 = vmatpush.msra.mxu0 %v1864
    %2313 = vmatpush.msra.mxu0 %v1861
    %2314 = vmatpush.msra.mxu0 %v1858
    %2315 = vmatpush.msra.mxu0 %v1855
    %2316 = vmatpush.msra.mxu0 %v1852
    %2317 = vmatpush.msra.mxu0 %v1849
    %2318 = vmatpush.msra.mxu0 %v1846
    %2319 = vmatpush.msra.mxu0 %v1843
    %2320 = vmatpush.msra.mxu0 %v1840
    %2321 = vmatpush.msra.mxu0 %v1837
    %2322 = vmatpush.msra.mxu0 %v1834
    %2323 = vmatpush.msra.mxu0 %v1831
    %2324 = vmatpush.msra.mxu0 %v1828
    %2325 = vmatmul.f32.gmra.mxu0 %v2288
    %v2326 = vpop.f32.mrf.mxu0
    %v2327 = vadd.f32 0.0, %v2326
    %2328 = vdwg.mxu0
    %2329 = vmatpush.msra.mxu0 %v1874
    %2330 = vmatpush.msra.mxu0 %v1871
    %2331 = vmatpush.msra.mxu0 %v1868
    %2332 = vmatpush.msra.mxu0 %v1865
    %2333 = vmatpush.msra.mxu0 %v1862
    %2334 = vmatpush.msra.mxu0 %v1859
    %2335 = vmatpush.msra.mxu0 %v1856
    %2336 = vmatpush.msra.mxu0 %v1853
    %2337 = vmatpush.msra.mxu0 %v1850
    %2338 = vmatpush.msra.mxu0 %v1847
    %2339 = vmatpush.msra.mxu0 %v1844
    %2340 = vmatpush.msra.mxu0 %v1841
    %2341 = vmatpush.msra.mxu0 %v1838
    %2342 = vmatpush.msra.mxu0 %v1835
    %2343 = vmatpush.msra.mxu0 %v1832
    %2344 = vmatpush.msra.mxu0 %v1829
    %2345 = vmatmul.f32.gmra.mxu0 %v2288
    %v2346 = vpop.f32.mrf.mxu0
    %v2347 = vadd.f32 0.0, %v2346
    %2348 = vdwg.mxu0
    %v2349 = vld [vmem:[#allocation2 + $0x78] sm:$0xff]
    %v2350 = vld [vmem:[#allocation2 + $0x80] sm:$0xff]
    %v2351 = vld [vmem:[#allocation2 + $0x88] sm:$0xff]
    %v2352 = vadd.f32 %v2349, %v2307
    %v2353 = vadd.f32 %v2350, %v2327
    %v2354 = vmul.f32 %v2352, 0.5
    %v2355 = vmul.f32 %v2353, 0.5
    %v2356 = vtanh.pop %v2354
    %v2357 = vtanh.pop %v2355
    %v2358 = vadd.f32 %v2356, 1.0
    %v2359 = vadd.f32 %v2357, 1.0
    %v2360 = vmul.f32 %v2358, 0.5
    %v2361 = vmul.f32 %v2359, 0.5
    %v2362 = vadd.f32 %v2347, %v1950
    %v2363 = vmul.f32 %v2360, %v2362
    %v2364 = vadd.f32 %v2351, %v2363
    %v2365 = vtanh.pop %v2364
    %v2366 = vsub.f32 1.0, %v2361
    %v2367 = vmul.f32 %v2366, %v2365
    %v2368 = vmul.f32 %v2361, %v2288
    %v2369 = vadd.f32 %v2367, %v2368
    %v2370 = vsel %vm1131, %v2369, %v2288
    %2371 = vmatpush.msra.mxu0 %v1872
    %2372 = vmatpush.msra.mxu0 %v1869
    %2373 = vmatpush.msra.mxu0 %v1866
    %2374 = vmatpush.msra.mxu0 %v1863
    %2375 = vmatpush.msra.mxu0 %v1860
    %2376 = vmatpush.msra.mxu0 %v1857
    %2377 = vmatpush.msra.mxu0 %v1854
    %2378 = vmatpush.msra.mxu0 %v1851
    %2379 = vmatpush.msra.mxu0 %v1848
    %2380 = vmatpush.msra.mxu0 %v1845
    %2381 = vmatpush.msra.mxu0 %v1842
    %2382 = vmatpush.msra.mxu0 %v1839
    %2383 = vmatpush.msra.mxu0 %v1836
    %2384 = vmatpush.msra.mxu0 %v1833
    %2385 = vmatpush.msra.mxu0 %v1830
    %2386 = vmatpush.msra.mxu0 %v1827
    %2387 = vmatmul.f32.gmra.mxu0 %v2370
    %v2388 = vpop.f32.mrf.mxu0
    %v2389 = vadd.f32 0.0, %v2388
    %2390 = vdwg.mxu0
    %2391 = vmatpush.msra.mxu0 %v1873
    %2392 = vmatpush.msra.mxu0 %v1870
    %2393 = vmatpush.msra.mxu0 %v1867
    %2394 = vmatpush.msra.mxu0 %v1864
    %2395 = vmatpush.msra.mxu0 %v1861
    %2396 = vmatpush.msra.mxu0 %v1858
    %2397 = vmatpush.msra.mxu0 %v1855
    %2398 = vmatpush.msra.mxu0 %v1852
    %2399 = vmatpush.msra.mxu0 %v1849
    %2400 = vmatpush.msra.mxu0 %v1846
    %2401 = vmatpush.msra.mxu0 %v1843
    %2402 = vmatpush.msra.mxu0 %v1840
    %2403 = vmatpush.msra.mxu0 %v1837
    %2404 = vmatpush.msra.mxu0 %v1834
    %2405 = vmatpush.msra.mxu0 %v1831
    %2406 = vmatpush.msra.mxu0 %v1828
    %2407 = vmatmul.f32.gmra.mxu0 %v2370
    %v2408 = vpop.f32.mrf.mxu0
    %v2409 = vadd.f32 0.0, %v2408
    %2410 = vdwg.mxu0
    %2411 = vmatpush.msra.mxu0 %v1874
    %2412 = vmatpush.msra.mxu0 %v1871
    %2413 = vmatpush.msra.mxu0 %v1868
    %2414 = vmatpush.msra.mxu0 %v1865
    %2415 = vmatpush.msra.mxu0 %v1862
    %2416 = vmatpush.msra.mxu0 %v1859
    %2417 = vmatpush.msra.mxu0 %v1856
    %2418 = vmatpush.msra.mxu0 %v1853
    %2419 = vmatpush.msra.mxu0 %v1850
    %2420 = vmatpush.msra.mxu0 %v1847
    %2421 = vmatpush.msra.mxu0 %v1844
    %2422 = vmatpush.msra.mxu0 %v1841
    %2423 = vmatpush.msra.mxu0 %v1838
    %2424 = vmatpush.msra.mxu0 %v1835
    %2425 = vmatpush.msra.mxu0 %v1832
    %2426 = vmatpush.msra.mxu0 %v1829
    %2427 = vmatmul.f32.gmra.mxu0 %v2370
    %v2428 = vpop.f32.mrf.mxu0
    %v2429 = vadd.f32 0.0, %v2428
    %2430 = vdwg.mxu0
    %v2431 = vld [vmem:[#allocation2 + $0x90] sm:$0xff]
    %v2432 = vld [vmem:[#allocation2 + $0x98] sm:$0xff]
    %v2433 = vld [vmem:[#allocation2 + $0xa0] sm:$0xff]
    %v2434 = vadd.f32 %v2431, %v2389
    %v2435 = vadd.f32 %v2432, %v2409
    %v2436 = vmul.f32 %v2434, 0.5
    %v2437 = vmul.f32 %v2435, 0.5
    %v2438 = vtanh.pop %v2436
    %v2439 = vtanh.pop %v2437
    %v2440 = vadd.f32 %v2438, 1.0
    %v2441 = vadd.f32 %v2439, 1.0
    %v2442 = vmul.f32 %v2440, 0.5
    %v2443 = vmul.f32 %v2441, 0.5
    %v2444 = vadd.f32 %v2429, %v1950
    %v2445 = vmul.f32 %v2442, %v2444
    %v2446 = vadd.f32 %v2433, %v2445
    %v2447 = vtanh.pop %v2446
    %v2448 = vsub.f32 1.0, %v2443
    %v2449 = vmul.f32 %v2448, %v2447
    %v2450 = vmul.f32 %v2443, %v2370
    %v2451 = vadd.f32 %v2449, %v2450
    %v2452 = vsel %vm1270, %v2451, %v2370
    %2453 = vmatpush.msra.mxu0 %v1872
    %2454 = vmatpush.msra.mxu0 %v1869
    %2455 = vmatpush.msra.mxu0 %v1866
    %2456 = vmatpush.msra.mxu0 %v1863
    %2457 = vmatpush.msra.mxu0 %v1860
    %2458 = vmatpush.msra.mxu0 %v1857
    %2459 = vmatpush.msra.mxu0 %v1854
    %2460 = vmatpush.msra.mxu0 %v1851
    %2461 = vmatpush.msra.mxu0 %v1848
    %2462 = vmatpush.msra.mxu0 %v1845
    %2463 = vmatpush.msra.mxu0 %v1842
    %2464 = vmatpush.msra.mxu0 %v1839
    %2465 = vmatpush.msra.mxu0 %v1836
    %2466 = vmatpush.msra.mxu0 %v1833
    %2467 = vmatpush.msra.mxu0 %v1830
    %2468 = vmatpush.msra.mxu0 %v1827
    %2469 = vmatmul.f32.gmra.mxu0 %v2452
    %v2470 = vpop.f32.mrf.mxu0
    %v2471 = vadd.f32 0.0, %v2470
    %2472 = vdwg.mxu0
    %2473 = vmatpush.msra.mxu0 %v1873
    %2474 = vmatpush.msra.mxu0 %v1870
    %2475 = vmatpush.msra.mxu0 %v1867
    %2476 = vmatpush.msra.mxu0 %v1864
    %2477 = vmatpush.msra.mxu0 %v1861
    %2478 = vmatpush.msra.mxu0 %v1858
    %2479 = vmatpush.msra.mxu0 %v1855
    %2480 = vmatpush.msra.mxu0 %v1852
    %2481 = vmatpush.msra.mxu0 %v1849
    %2482 = vmatpush.msra.mxu0 %v1846
    %2483 = vmatpush.msra.mxu0 %v1843
    %2484 = vmatpush.msra.mxu0 %v1840
    %2485 = vmatpush.msra.mxu0 %v1837
    %2486 = vmatpush.msra.mxu0 %v1834
    %2487 = vmatpush.msra.mxu0 %v1831
    %2488 = vmatpush.msra.mxu0 %v1828
    %2489 = vmatmul.f32.gmra.mxu0 %v2452
    %v2490 = vpop.f32.mrf.mxu0
    %v2491 = vadd.f32 0.0, %v2490
    %2492 = vdwg.mxu0
    %2493 = vmatpush.msra.mxu0 %v1874
    %2494 = vmatpush.msra.mxu0 %v1871
    %2495 = vmatpush.msra.mxu0 %v1868
    %2496 = vmatpush.msra.mxu0 %v1865
    %2497 = vmatpush.msra.mxu0 %v1862
    %2498 = vmatpush.msra.mxu0 %v1859
    %2499 = vmatpush.msra.mxu0 %v1856
    %2500 = vmatpush.msra.mxu0 %v1853
    %2501 = vmatpush.msra.mxu0 %v1850
    %2502 = vmatpush.msra.mxu0 %v1847
    %2503 = vmatpush.msra.mxu0 %v1844
    %2504 = vmatpush.msra.mxu0 %v1841
    %2505 = vmatpush.msra.mxu0 %v1838
    %2506 = vmatpush.msra.mxu0 %v1835
    %2507 = vmatpush.msra.mxu0 %v1832
    %2508 = vmatpush.msra.mxu0 %v1829
    %2509 = vmatmul.f32.gmra.mxu0 %v2452
    %v2510 = vpop.f32.mrf.mxu0
    %v2511 = vadd.f32 0.0, %v2510
    %2512 = vdwg.mxu0
    %v2513 = vld [vmem:[#allocation2 + $0xa8] sm:$0xff]
    %v2514 = vld [vmem:[#allocation2 + $0xb0] sm:$0xff]
    %v2515 = vld [vmem:[#allocation2 + $0xb8] sm:$0xff]
    %v2516 = vadd.f32 %v2513, %v2471
    %v2517 = vadd.f32 %v2514, %v2491
    %v2518 = vmul.f32 %v2516, 0.5
    %v2519 = vmul.f32 %v2517, 0.5
    %v2520 = vtanh.pop %v2518
    %v2521 = vtanh.pop %v2519
    %v2522 = vadd.f32 %v2520, 1.0
    %v2523 = vadd.f32 %v2521, 1.0
    %v2524 = vmul.f32 %v2522, 0.5
    %v2525 = vmul.f32 %v2523, 0.5
    %v2526 = vadd.f32 %v2511, %v1950
    %v2527 = vmul.f32 %v2524, %v2526
    %v2528 = vadd.f32 %v2515, %v2527
    %v2529 = vtanh.pop %v2528
    %v2530 = vsub.f32 1.0, %v2525
    %v2531 = vmul.f32 %v2530, %v2529
    %v2532 = vmul.f32 %v2525, %v2452
    %v2533 = vadd.f32 %v2531, %v2532
    %v2534 = vsel %vm1409, %v2533, %v2452
    %2535 = vst [vmem:[%s11] sm:$0xff] %v2534
    // Predicated region
    $region58: #{predictor_forward.2} parent=1 // pred_check
      _
    $region59: #{predictor_forward.2} parent=1 // pred_check_branch
      %2537 = sbr.rel (0) target = $region61
    $region60: #{predictor_forward.2} parent=1 // pred_region
      _
    $region61: #{predictor_forward.2} parent=1 // pred_fallthru
      _
    // Predicated region
    $region62: #{predictor_forward.2} parent=1 // pred_check
      _
    $region63: #{predictor_forward.2} parent=1 // pred_check_branch
      %2539 = sbr.rel (0) target = $region65
    $region64: #{predictor_forward.2} parent=1 // pred_region
      _
    $region65: #{predictor_forward.2} parent=1 // pred_fallthru
      _
    %2540 = vsyncpa [#allocation6], 1
    %2541 = vsyncpa [#allocation8], 1

// kernel: predictor_forward.3
$region0: #{predictor_forward.3}
  #allocation0 [shape = 'u32[]', space=smem, size = 0x4, offset = 0x4, fixed_abs, tag = 'smem constant byte address 0x4 - core index']
  #allocation1 [shape = 'u32[72,128]{1,0:T(1,128)}', space=vmem, size = 0x9000, scoped, tag = 'internal scratch']
  #allocation2 [shape = 'f32[64,384]{1,0:T(8,128)}', space=vmem, size = 0x18000, scoped, tag = 'scratch operand']
  #allocation3 [shape = 'f32[64,128]{1,0:T(8,128)}', space=vmem, size = 0x8000, scoped, tag = 'scratch operand']
  #allocation4 [shape = 'f32[1,1]{1,0:T(1,128)S(1)}', space=vmem, size = 0x200, scoped, tag = 'scoped memory for predictor_forward.3']
  %s0 = inlined_call_operand.vmem [shape: f32[8,8,128], index: 0, kind: input, shape index: {}]
  %s1 = inlined_call_operand.vmem [shape: s32[8,1], index: 1, kind: input, shape index: {}]
  %s2 = inlined_call_operand.hbm [shape: f32[128,384], index: 2, kind: input, shape index: {}]
  %s3 = inlined_call_operand.vmem [shape: f32[1,384], index: 3, kind: input, shape index: {}]
  %s4 = inlined_call_operand.hbm [shape: f32[128,384], index: 4, kind: input, shape index: {}]
  %s5 = inlined_call_operand.vmem [shape: f32[1,128], index: 5, kind: input, shape index: {}]
  %s6 = inlined_call_operand.hbm [shape: f32[128,384], index: 6, kind: input, shape index: {}]
  %s7 = inlined_call_operand.vmem [shape: f32[1,384], index: 7, kind: input, shape index: {}]
  %s8 = inlined_call_operand.hbm [shape: f32[128,384], index: 8, kind: input, shape index: {}]
  %s9 = inlined_call_operand.vmem [shape: f32[1,128], index: 9, kind: input, shape index: {}]
  %s10 = inlined_call_operand.vmem [shape: f32[128,64], index: 10, kind: input, shape index: {}]
  %s11 = inlined_call_operand.vmem [shape: f32[1,64], index: 11, kind: input, shape index: {}]
  %s12 = inlined_call_operand.vmem [shape: f32[64,32], index: 12, kind: input, shape index: {}]
  %s13 = inlined_call_operand.vmem [shape: f32[1,32], index: 13, kind: input, shape index: {}]
  %s14 = inlined_call_operand.vmem [shape: f32[32,1], index: 14, kind: input, shape index: {}]
  %s15 = inlined_call_operand.<no memory space> [shape: f32[1,1], index: 15, kind: input, shape index: {}]
  %s16 = inlined_call_operand.vmem [shape: f32[8,1], index: 16, kind: output, shape index: {}]
  %s17 = sld [smem:[#allocation0]]
  $region90: #{predictor_forward.3} parent=0
    _
  %s19 = ssub.s32 1, %s17
  %s20 = scalar_select 0, %s19, %s17
  %v21 = vstv %s15
  %22 = vst [vmem:[#allocation4] sm:$0x1] %v21
  $region1: #{predictor_forward.3} parent=0
    #allocation5 [shape = 'u8[196608]{0}', space=vmem, size = 0x30000, scoped, tag = 'input window, operand 2, single buffered']
    #allocation6 [shape = 's32[1]{0}', space=sflag, size = 0x4, scoped, tag = 'scoped memory for predictor_forward.3']
    #allocation7 [shape = 'u8[196608]{0}', space=vmem, size = 0x30000, scoped, tag = 'input window, operand 4, single buffered']
    #allocation8 [shape = 's32[1]{0}', space=sflag, size = 0x4, scoped, tag = 'scoped memory for predictor_forward.3']
    #allocation9 [shape = 'u8[196608]{0}', space=vmem, size = 0x30000, scoped, tag = 'input window, operand 6, single buffered']
    #allocation10 [shape = 'u8[196608]{0}', space=vmem, size = 0x30000, scoped, tag = 'input window, operand 8, single buffered']
    #allocation11 [shape = 's32[1]{0}', space=sflag, size = 0x4, scoped, tag = 'scoped memory for predictor_forward.3']
    %23 = vsyncpa [#allocation6], 0
    %24 = vsyncpa [#allocation8], 0
    %25 = vsyncpa [#allocation11], 0
    // Predicated region
    $region2: #{predictor_forward.3} parent=1 // pred_check
      _
    $region3: #{predictor_forward.3} parent=1 // pred_check_branch
      %27 = sbr.rel (0) target = $region5
    $region4: #{predictor_forward.3} parent=1 // pred_region
      _
    $region5: #{predictor_forward.3} parent=1 // pred_fallthru
      _
    // Predicated region
    $region6: #{predictor_forward.3} parent=1 // pred_check
      _
    $region7: #{predictor_forward.3} parent=1 // pred_check_branch
      %29 = sbr.rel (0) target = $region9
    $region8: #{predictor_forward.3} parent=1 // pred_region
      _
    $region9: #{predictor_forward.3} parent=1 // pred_fallthru
      _
    // Predicated region
    $region10: #{predictor_forward.3} parent=1 // pred_check
      _
    $region11: #{predictor_forward.3} parent=1 // pred_check_branch
      %31 = sbr.rel (0) target = $region13
    $region12: #{predictor_forward.3} parent=1 // pred_region
      %33 = vsyncadd [#allocation6], 0
      %s34 = sshll.u32 %s2, 4
      %s35 = int_to_ptr.hbm [resolvable:$true] %s34
      %s36 = sshll.u32 [#allocation5], 4
      %s37 = int_to_ptr.vmem [resolvable:$true] %s36
      %42 = dma.hbm_to_vmem [thread:$0]  %s35, 6144, %s37, [#allocation6], 384, 384, 24
    $region13: #{predictor_forward.3} parent=1 // pred_fallthru
      _
    // Predicated region
    $region14: #{predictor_forward.3} parent=1 // pred_check
      _
    $region15: #{predictor_forward.3} parent=1 // pred_check_branch
      %44 = sbr.rel (0) target = $region17
    $region16: #{predictor_forward.3} parent=1 // pred_region
      _
    $region17: #{predictor_forward.3} parent=1 // pred_fallthru
      _
    // Predicated region
    $region18: #{predictor_forward.3} parent=1 // pred_check
      _
    $region19: #{predictor_forward.3} parent=1 // pred_check_branch
      %46 = sbr.rel (0) target = $region21
    $region20: #{predictor_forward.3} parent=1 // pred_region
      %48 = vsyncadd [#allocation8], 0
      %s49 = sshll.u32 %s4, 4
      %s50 = int_to_ptr.hbm [resolvable:$true] %s49
      %s51 = sshll.u32 [#allocation7], 4
      %s52 = int_to_ptr.vmem [resolvable:$true] %s51
      %57 = dma.hbm_to_vmem [thread:$0]  %s50, 6144, %s52, [#allocation8], 384, 384, 24
    $region21: #{predictor_forward.3} parent=1 // pred_fallthru
      _
    // Predicated region
    $region22: #{predictor_forward.3} parent=1 // pred_check
      _
    $region23: #{predictor_forward.3} parent=1 // pred_check_branch
      %59 = sbr.rel (0) target = $region25
    $region24: #{predictor_forward.3} parent=1 // pred_region
      _
    $region25: #{predictor_forward.3} parent=1 // pred_fallthru
      _
    // Predicated region
    $region26: #{predictor_forward.3} parent=1 // pred_check
      _
    $region27: #{predictor_forward.3} parent=1 // pred_check_branch
      %61 = sbr.rel (0) target = $region29
    $region28: #{predictor_forward.3} parent=1 // pred_region
      %63 = vsyncadd [#allocation8], 0
      %s64 = sshll.u32 %s6, 4
      %s65 = int_to_ptr.hbm [resolvable:$true] %s64
      %s66 = sshll.u32 [#allocation9], 4
      %s67 = int_to_ptr.vmem [resolvable:$true] %s66
      %72 = dma.hbm_to_vmem [thread:$0]  %s65, 6144, %s67, [#allocation8], 384, 384, 24
    $region29: #{predictor_forward.3} parent=1 // pred_fallthru
      _
    // Predicated region
    $region30: #{predictor_forward.3} parent=1 // pred_check
      _
    $region31: #{predictor_forward.3} parent=1 // pred_check_branch
      %74 = sbr.rel (0) target = $region33
    $region32: #{predictor_forward.3} parent=1 // pred_region
      _
    $region33: #{predictor_forward.3} parent=1 // pred_fallthru
      _
    // Predicated region
    $region34: #{predictor_forward.3} parent=1 // pred_check
      _
    $region35: #{predictor_forward.3} parent=1 // pred_check_branch
      %76 = sbr.rel (0) target = $region37
    $region36: #{predictor_forward.3} parent=1 // pred_region
      %78 = vsyncadd [#allocation11], 0
      %s79 = sshll.u32 %s8, 4
      %s80 = int_to_ptr.hbm [resolvable:$true] %s79
      %s81 = sshll.u32 [#allocation10], 4
      %s82 = int_to_ptr.vmem [resolvable:$true] %s81
      %87 = dma.hbm_to_vmem [thread:$0]  %s80, 6144, %s82, [#allocation11], 384, 384, 24
    $region37: #{predictor_forward.3} parent=1 // pred_fallthru
      _
    // Predicated region
    $region38: #{predictor_forward.3} parent=1 // pred_check
      _
    $region39: #{predictor_forward.3} parent=1 // pred_check_branch
      %89 = sbr.rel (0) target = $region41
    $region40: #{predictor_forward.3} parent=1 // pred_region
      _
    $region41: #{predictor_forward.3} parent=1 // pred_fallthru
      _
    // Predicated region
    $region42: #{predictor_forward.3} parent=1 // pred_check
      _
    $region43: #{predictor_forward.3} parent=1 // pred_check_branch
      %91 = sbr.rel (0) target = $region45
    $region44: #{predictor_forward.3} parent=1 // pred_region
      _
    $region45: #{predictor_forward.3} parent=1 // pred_fallthru
      _
    // Predicated region
    $region46: #{predictor_forward.3} parent=1 // pred_check
      _
    $region47: #{predictor_forward.3} parent=1 // pred_check_branch
      %93 = sbr.rel (0) target = $region49
    $region48: #{predictor_forward.3} parent=1 // pred_region
      _
    $region49: #{predictor_forward.3} parent=1 // pred_fallthru
      _
    // Predicated region
    $region50: #{predictor_forward.3} parent=1 // pred_check
      _
    $region51: #{predictor_forward.3} parent=1 // pred_check_branch
      %95 = sbr.rel (0) target = $region53
    $region52: #{predictor_forward.3} parent=1 // pred_region
      _
    $region53: #{predictor_forward.3} parent=1 // pred_fallthru
      _
    // Predicated region
    $region54: #{predictor_forward.3} parent=1 // pred_check
      _
    $region55: #{predictor_forward.3} parent=1 // pred_check_branch
      %97 = sbr.rel (0) target = $region57
    $region56: #{predictor_forward.3} parent=1 // pred_region
      _
    $region57: #{predictor_forward.3} parent=1 // pred_fallthru
      _
    // Predicated region
    $region58: #{predictor_forward.3} parent=1 // pred_check
      _
    $region59: #{predictor_forward.3} parent=1 // pred_check_branch
      %99 = sbr.rel (0) target = $region61
    $region60: #{predictor_forward.3} parent=1 // pred_region
      _
    $region61: #{predictor_forward.3} parent=1 // pred_fallthru
      _
    // Predicated region
    $region62: #{predictor_forward.3} parent=1 // pred_check
      _
    $region63: #{predictor_forward.3} parent=1 // pred_check_branch
      %101 = sbr.rel (0) target = $region65
    $region64: #{predictor_forward.3} parent=1 // pred_region
      _
    $region65: #{predictor_forward.3} parent=1 // pred_fallthru
      _
    // Predicated region
    $region66: #{predictor_forward.3} parent=1 // pred_check
      _
    $region67: #{predictor_forward.3} parent=1 // pred_check_branch
      %103 = sbr.rel (0) target = $region69
    $region68: #{predictor_forward.3} parent=1 // pred_region
      %105 = dma.done [#allocation6], 6144
    $region69: #{predictor_forward.3} parent=1 // pred_fallthru
      _
    // Predicated region
    $region70: #{predictor_forward.3} parent=1 // pred_check
      _
    $region71: #{predictor_forward.3} parent=1 // pred_check_branch
      %107 = sbr.rel (0) target = $region73
    $region72: #{predictor_forward.3} parent=1 // pred_region
      %109 = dma.done [#allocation8], 6144
    $region73: #{predictor_forward.3} parent=1 // pred_fallthru
      _
    // Predicated region
    $region74: #{predictor_forward.3} parent=1 // pred_check
      _
    $region75: #{predictor_forward.3} parent=1 // pred_check_branch
      %111 = sbr.rel (0) target = $region77
    $region76: #{predictor_forward.3} parent=1 // pred_region
      %113 = dma.done [#allocation8], 6144
    $region77: #{predictor_forward.3} parent=1 // pred_fallthru
      _
    // Predicated region
    $region78: #{predictor_forward.3} parent=1 // pred_check
      _
    $region79: #{predictor_forward.3} parent=1 // pred_check_branch
      %115 = sbr.rel (0) target = $region81
    $region80: #{predictor_forward.3} parent=1 // pred_region
      %117 = dma.done [#allocation11], 6144
    $region81: #{predictor_forward.3} parent=1 // pred_fallthru
      _
    %v118 = vld [vmem:[%s1] sm:$0xff]
    %v119 = vld [vmem:[%s0] sm:$0xff]
    %v120 = vld [vmem:[%s0 + $0x8] sm:$0xff]
    %v121 = vld [vmem:[%s0 + $0x10] sm:$0xff]
    %v122 = vld [vmem:[%s0 + $0x18] sm:$0xff]
    %v123 = vld [vmem:[%s0 + $0x20] sm:$0xff]
    %v124 = vld [vmem:[%s0 + $0x28] sm:$0xff]
    %v125 = vld [vmem:[%s0 + $0x30] sm:$0xff]
    %v126 = vld [vmem:[%s0 + $0x38] sm:$0xff]
    %v127 = vld [vmem:[#allocation5] sm:$0xff]
    %v128 = vld [vmem:[#allocation5 + $0x8] sm:$0xff]
    %v129 = vld [vmem:[#allocation5 + $0x10] sm:$0xff]
    %v130 = vld [vmem:[#allocation5 + $0x18] sm:$0xff]
    %v131 = vld [vmem:[#allocation5 + $0x20] sm:$0xff]
    %v132 = vld [vmem:[#allocation5 + $0x28] sm:$0xff]
    %v133 = vld [vmem:[#allocation5 + $0x30] sm:$0xff]
    %v134 = vld [vmem:[#allocation5 + $0x38] sm:$0xff]
    %v135 = vld [vmem:[#allocation5 + $0x40] sm:$0xff]
    %v136 = vld [vmem:[#allocation5 + $0x48] sm:$0xff]
    %v137 = vld [vmem:[#allocation5 + $0x50] sm:$0xff]
    %v138 = vld [vmem:[#allocation5 + $0x58] sm:$0xff]
    %v139 = vld [vmem:[#allocation5 + $0x60] sm:$0xff]
    %v140 = vld [vmem:[#allocation5 + $0x68] sm:$0xff]
    %v141 = vld [vmem:[#allocation5 + $0x70] sm:$0xff]
    %v142 = vld [vmem:[#allocation5 + $0x78] sm:$0xff]
    %v143 = vld [vmem:[#allocation5 + $0x80] sm:$0xff]
    %v144 = vld [vmem:[#allocation5 + $0x88] sm:$0xff]
    %v145 = vld [vmem:[#allocation5 + $0x90] sm:$0xff]
    %v146 = vld [vmem:[#allocation5 + $0x98] sm:$0xff]
    %v147 = vld [vmem:[#allocation5 + $0xa0] sm:$0xff]
    %v148 = vld [vmem:[#allocation5 + $0xa8] sm:$0xff]
    %v149 = vld [vmem:[#allocation5 + $0xb0] sm:$0xff]
    %v150 = vld [vmem:[#allocation5 + $0xb8] sm:$0xff]
    %v151 = vld [vmem:[#allocation5 + $0xc0] sm:$0xff]
    %v152 = vld [vmem:[#allocation5 + $0xc8] sm:$0xff]
    %v153 = vld [vmem:[#allocation5 + $0xd0] sm:$0xff]
    %v154 = vld [vmem:[#allocation5 + $0xd8] sm:$0xff]
    %v155 = vld [vmem:[#allocation5 + $0xe0] sm:$0xff]
    %v156 = vld [vmem:[#allocation5 + $0xe8] sm:$0xff]
    %v157 = vld [vmem:[#allocation5 + $0xf0] sm:$0xff]
    %v158 = vld [vmem:[#allocation5 + $0xf8] sm:$0xff]
    %v159 = vld [vmem:[#allocation5 + $0x100] sm:$0xff]
    %v160 = vld [vmem:[#allocation5 + $0x108] sm:$0xff]
    %v161 = vld [vmem:[#allocation5 + $0x110] sm:$0xff]
    %v162 = vld [vmem:[#allocation5 + $0x118] sm:$0xff]
    %v163 = vld [vmem:[#allocation5 + $0x120] sm:$0xff]
    %v164 = vld [vmem:[#allocation5 + $0x128] sm:$0xff]
    %v165 = vld [vmem:[#allocation5 + $0x130] sm:$0xff]
    %v166 = vld [vmem:[#allocation5 + $0x138] sm:$0xff]
    %v167 = vld [vmem:[#allocation5 + $0x140] sm:$0xff]
    %v168 = vld [vmem:[#allocation5 + $0x148] sm:$0xff]
    %v169 = vld [vmem:[#allocation5 + $0x150] sm:$0xff]
    %v170 = vld [vmem:[#allocation5 + $0x158] sm:$0xff]
    %v171 = vld [vmem:[#allocation5 + $0x160] sm:$0xff]
    %v172 = vld [vmem:[#allocation5 + $0x168] sm:$0xff]
    %v173 = vld [vmem:[#allocation5 + $0x170] sm:$0xff]
    %v174 = vld [vmem:[#allocation5 + $0x178] sm:$0xff]
    %v175 = vld [vmem:[%s3] sm:$0x7]
    %v177 = vperm.slane %v175, 0
    %v178 = vperm.slane %v175, 1
    %v179 = vperm.slane %v175, 2
    %183 = vmatpush.msra.mxu0 %v172
    %184 = vmatpush.msra.mxu0 %v169
    %185 = vmatpush.msra.mxu0 %v166
    %186 = vmatpush.msra.mxu0 %v163
    %187 = vmatpush.msra.mxu0 %v160
    %188 = vmatpush.msra.mxu0 %v157
    %189 = vmatpush.msra.mxu0 %v154
    %190 = vmatpush.msra.mxu0 %v151
    %191 = vmatpush.msra.mxu0 %v148
    %192 = vmatpush.msra.mxu0 %v145
    %193 = vmatpush.msra.mxu0 %v142
    %194 = vmatpush.msra.mxu0 %v139
    %195 = vmatpush.msra.mxu0 %v136
    %196 = vmatpush.msra.mxu0 %v133
    %197 = vmatpush.msra.mxu0 %v130
    %198 = vmatpush.msra.mxu0 %v127
    %199 = vmatmul.f32.gmra.mxu0 %v119
    %v200 = vpop.f32.mrf.mxu0
    %v201 = vadd.f32 %v177, %v200
    %202 = vmatmul.f32.gmra.mxu0 %v120
    %v203 = vpop.f32.mrf.mxu0
    %v204 = vadd.f32 %v177, %v203
    %205 = vmatmul.f32.gmra.mxu0 %v121
    %v206 = vpop.f32.mrf.mxu0
    %v207 = vadd.f32 %v177, %v206
    %208 = vmatmul.f32.gmra.mxu0 %v122
    %v209 = vpop.f32.mrf.mxu0
    %v210 = vadd.f32 %v177, %v209
    %211 = vmatmul.f32.gmra.mxu0 %v123
    %v212 = vpop.f32.mrf.mxu0
    %v213 = vadd.f32 %v177, %v212
    %214 = vmatmul.f32.gmra.mxu0 %v124
    %v215 = vpop.f32.mrf.mxu0
    %v216 = vadd.f32 %v177, %v215
    %217 = vmatmul.f32.gmra.mxu0 %v125
    %v218 = vpop.f32.mrf.mxu0
    %v219 = vadd.f32 %v177, %v218
    %220 = vmatmul.f32.gmra.mxu0 %v126
    %v221 = vpop.f32.mrf.mxu0
    %v222 = vadd.f32 %v177, %v221
    %223 = vdwg.mxu0
    %224 = vmatpush.msra.mxu0 %v173
    %225 = vmatpush.msra.mxu0 %v170
    %226 = vmatpush.msra.mxu0 %v167
    %227 = vmatpush.msra.mxu0 %v164
    %228 = vmatpush.msra.mxu0 %v161
    %229 = vmatpush.msra.mxu0 %v158
    %230 = vmatpush.msra.mxu0 %v155
    %231 = vmatpush.msra.mxu0 %v152
    %232 = vmatpush.msra.mxu0 %v149
    %233 = vmatpush.msra.mxu0 %v146
    %234 = vmatpush.msra.mxu0 %v143
    %235 = vmatpush.msra.mxu0 %v140
    %236 = vmatpush.msra.mxu0 %v137
    %237 = vmatpush.msra.mxu0 %v134
    %238 = vmatpush.msra.mxu0 %v131
    %239 = vmatpush.msra.mxu0 %v128
    %240 = vmatmul.f32.gmra.mxu0 %v119
    %v241 = vpop.f32.mrf.mxu0
    %v242 = vadd.f32 %v178, %v241
    %243 = vmatmul.f32.gmra.mxu0 %v120
    %v244 = vpop.f32.mrf.mxu0
    %v245 = vadd.f32 %v178, %v244
    %246 = vmatmul.f32.gmra.mxu0 %v121
    %v247 = vpop.f32.mrf.mxu0
    %v248 = vadd.f32 %v178, %v247
    %249 = vmatmul.f32.gmra.mxu0 %v122
    %v250 = vpop.f32.mrf.mxu0
    %v251 = vadd.f32 %v178, %v250
    %252 = vmatmul.f32.gmra.mxu0 %v123
    %v253 = vpop.f32.mrf.mxu0
    %v254 = vadd.f32 %v178, %v253
    %255 = vmatmul.f32.gmra.mxu0 %v124
    %v256 = vpop.f32.mrf.mxu0
    %v257 = vadd.f32 %v178, %v256
    %258 = vmatmul.f32.gmra.mxu0 %v125
    %v259 = vpop.f32.mrf.mxu0
    %v260 = vadd.f32 %v178, %v259
    %261 = vmatmul.f32.gmra.mxu0 %v126
    %v262 = vpop.f32.mrf.mxu0
    %v263 = vadd.f32 %v178, %v262
    %264 = vdwg.mxu0
    %265 = vmatpush.msra.mxu0 %v174
    %266 = vmatpush.msra.mxu0 %v171
    %267 = vmatpush.msra.mxu0 %v168
    %268 = vmatpush.msra.mxu0 %v165
    %269 = vmatpush.msra.mxu0 %v162
    %270 = vmatpush.msra.mxu0 %v159
    %271 = vmatpush.msra.mxu0 %v156
    %272 = vmatpush.msra.mxu0 %v153
    %273 = vmatpush.msra.mxu0 %v150
    %274 = vmatpush.msra.mxu0 %v147
    %275 = vmatpush.msra.mxu0 %v144
    %276 = vmatpush.msra.mxu0 %v141
    %277 = vmatpush.msra.mxu0 %v138
    %278 = vmatpush.msra.mxu0 %v135
    %279 = vmatpush.msra.mxu0 %v132
    %280 = vmatpush.msra.mxu0 %v129
    %281 = vmatmul.f32.gmra.mxu0 %v119
    %v282 = vpop.f32.mrf.mxu0
    %v283 = vadd.f32 %v179, %v282
    %284 = vmatmul.f32.gmra.mxu0 %v120
    %v285 = vpop.f32.mrf.mxu0
    %v286 = vadd.f32 %v179, %v285
    %287 = vmatmul.f32.gmra.mxu0 %v121
    %v288 = vpop.f32.mrf.mxu0
    %v289 = vadd.f32 %v179, %v288
    %290 = vmatmul.f32.gmra.mxu0 %v122
    %v291 = vpop.f32.mrf.mxu0
    %v292 = vadd.f32 %v179, %v291
    %293 = vmatmul.f32.gmra.mxu0 %v123
    %v294 = vpop.f32.mrf.mxu0
    %v295 = vadd.f32 %v179, %v294
    %296 = vmatmul.f32.gmra.mxu0 %v124
    %v297 = vpop.f32.mrf.mxu0
    %v298 = vadd.f32 %v179, %v297
    %299 = vmatmul.f32.gmra.mxu0 %v125
    %v300 = vpop.f32.mrf.mxu0
    %v301 = vadd.f32 %v179, %v300
    %302 = vmatmul.f32.gmra.mxu0 %v126
    %v303 = vpop.f32.mrf.mxu0
    %v304 = vadd.f32 %v179, %v303
    %305 = vdwg.mxu0
    %306 = vst [vmem:[#allocation2] sm:$0xff] %v201
    %307 = vst [vmem:[#allocation2 + $0x8] sm:$0xff] %v242
    %308 = vst [vmem:[#allocation2 + $0x10] sm:$0xff] %v283
    %309 = vst [vmem:[#allocation2 + $0x18] sm:$0xff] %v204
    %310 = vst [vmem:[#allocation2 + $0x20] sm:$0xff] %v245
    %311 = vst [vmem:[#allocation2 + $0x28] sm:$0xff] %v286
    %312 = vst [vmem:[#allocation2 + $0x30] sm:$0xff] %v207
    %313 = vst [vmem:[#allocation2 + $0x38] sm:$0xff] %v248
    %314 = vst [vmem:[#allocation2 + $0x40] sm:$0xff] %v289
    %315 = vst [vmem:[#allocation2 + $0x48] sm:$0xff] %v210
    %316 = vst [vmem:[#allocation2 + $0x50] sm:$0xff] %v251
    %317 = vst [vmem:[#allocation2 + $0x58] sm:$0xff] %v292
    %318 = vst [vmem:[#allocation2 + $0x60] sm:$0xff] %v213
    %319 = vst [vmem:[#allocation2 + $0x68] sm:$0xff] %v254
    %320 = vst [vmem:[#allocation2 + $0x70] sm:$0xff] %v295
    %321 = vst [vmem:[#allocation2 + $0x78] sm:$0xff] %v216
    %322 = vst [vmem:[#allocation2 + $0x80] sm:$0xff] %v257
    %323 = vst [vmem:[#allocation2 + $0x88] sm:$0xff] %v298
    %324 = vst [vmem:[#allocation2 + $0x90] sm:$0xff] %v219
    %325 = vst [vmem:[#allocation2 + $0x98] sm:$0xff] %v260
    %326 = vst [vmem:[#allocation2 + $0xa0] sm:$0xff] %v301
    %327 = vst [vmem:[#allocation2 + $0xa8] sm:$0xff] %v222
    %328 = vst [vmem:[#allocation2 + $0xb0] sm:$0xff] %v263
    %329 = vst [vmem:[#allocation2 + $0xb8] sm:$0xff] %v304
    %v330 = vld [vmem:[#allocation7] sm:$0xff]
    %v331 = vld [vmem:[#allocation7 + $0x8] sm:$0xff]
    %v332 = vld [vmem:[#allocation7 + $0x10] sm:$0xff]
    %v333 = vld [vmem:[#allocation7 + $0x18] sm:$0xff]
    %v334 = vld [vmem:[#allocation7 + $0x20] sm:$0xff]
    %v335 = vld [vmem:[#allocation7 + $0x28] sm:$0xff]
    %v336 = vld [vmem:[#allocation7 + $0x30] sm:$0xff]
    %v337 = vld [vmem:[#allocation7 + $0x38] sm:$0xff]
    %v338 = vld [vmem:[#allocation7 + $0x40] sm:$0xff]
    %v339 = vld [vmem:[#allocation7 + $0x48] sm:$0xff]
    %v340 = vld [vmem:[#allocation7 + $0x50] sm:$0xff]
    %v341 = vld [vmem:[#allocation7 + $0x58] sm:$0xff]
    %v342 = vld [vmem:[#allocation7 + $0x60] sm:$0xff]
    %v343 = vld [vmem:[#allocation7 + $0x68] sm:$0xff]
    %v344 = vld [vmem:[#allocation7 + $0x70] sm:$0xff]
    %v345 = vld [vmem:[#allocation7 + $0x78] sm:$0xff]
    %v346 = vld [vmem:[#allocation7 + $0x80] sm:$0xff]
    %v347 = vld [vmem:[#allocation7 + $0x88] sm:$0xff]
    %v348 = vld [vmem:[#allocation7 + $0x90] sm:$0xff]
    %v349 = vld [vmem:[#allocation7 + $0x98] sm:$0xff]
    %v350 = vld [vmem:[#allocation7 + $0xa0] sm:$0xff]
    %v351 = vld [vmem:[#allocation7 + $0xa8] sm:$0xff]
    %v352 = vld [vmem:[#allocation7 + $0xb0] sm:$0xff]
    %v353 = vld [vmem:[#allocation7 + $0xb8] sm:$0xff]
    %v354 = vld [vmem:[#allocation7 + $0xc0] sm:$0xff]
    %v355 = vld [vmem:[#allocation7 + $0xc8] sm:$0xff]
    %v356 = vld [vmem:[#allocation7 + $0xd0] sm:$0xff]
    %v357 = vld [vmem:[#allocation7 + $0xd8] sm:$0xff]
    %v358 = vld [vmem:[#allocation7 + $0xe0] sm:$0xff]
    %v359 = vld [vmem:[#allocation7 + $0xe8] sm:$0xff]
    %v360 = vld [vmem:[#allocation7 + $0xf0] sm:$0xff]
    %v361 = vld [vmem:[#allocation7 + $0xf8] sm:$0xff]
    %v362 = vld [vmem:[#allocation7 + $0x100] sm:$0xff]
    %v363 = vld [vmem:[#allocation7 + $0x108] sm:$0xff]
    %v364 = vld [vmem:[#allocation7 + $0x110] sm:$0xff]
    %v365 = vld [vmem:[#allocation7 + $0x118] sm:$0xff]
    %v366 = vld [vmem:[#allocation7 + $0x120] sm:$0xff]
    %v367 = vld [vmem:[#allocation7 + $0x128] sm:$0xff]
    %v368 = vld [vmem:[#allocation7 + $0x130] sm:$0xff]
    %v369 = vld [vmem:[#allocation7 + $0x138] sm:$0xff]
    %v370 = vld [vmem:[#allocation7 + $0x140] sm:$0xff]
    %v371 = vld [vmem:[#allocation7 + $0x148] sm:$0xff]
    %v372 = vld [vmem:[#allocation7 + $0x150] sm:$0xff]
    %v373 = vld [vmem:[#allocation7 + $0x158] sm:$0xff]
    %v374 = vld [vmem:[#allocation7 + $0x160] sm:$0xff]
    %v375 = vld [vmem:[#allocation7 + $0x168] sm:$0xff]
    %v376 = vld [vmem:[#allocation7 + $0x170] sm:$0xff]
    %v377 = vld [vmem:[#allocation7 + $0x178] sm:$0xff]
    %378 = vmatpush.msra.mxu0 %v375
    %379 = vmatpush.msra.mxu0 %v372
    %380 = vmatpush.msra.mxu0 %v369
    %381 = vmatpush.msra.mxu0 %v366
    %382 = vmatpush.msra.mxu0 %v363
    %383 = vmatpush.msra.mxu0 %v360
    %384 = vmatpush.msra.mxu0 %v357
    %385 = vmatpush.msra.mxu0 %v354
    %386 = vmatpush.msra.mxu0 %v351
    %387 = vmatpush.msra.mxu0 %v348
    %388 = vmatpush.msra.mxu0 %v345
    %389 = vmatpush.msra.mxu0 %v342
    %390 = vmatpush.msra.mxu0 %v339
    %391 = vmatpush.msra.mxu0 %v336
    %392 = vmatpush.msra.mxu0 %v333
    %393 = vmatpush.msra.mxu0 %v330
    %394 = vmatmul.f32.gmra.mxu0 0.0
    %v395 = vpop.f32.mrf.mxu0
    %v396 = vadd.f32 0.0, %v395
    %397 = vdwg.mxu0
    %398 = vmatpush.msra.mxu0 %v376
    %399 = vmatpush.msra.mxu0 %v373
    %400 = vmatpush.msra.mxu0 %v370
    %401 = vmatpush.msra.mxu0 %v367
    %402 = vmatpush.msra.mxu0 %v364
    %403 = vmatpush.msra.mxu0 %v361
    %404 = vmatpush.msra.mxu0 %v358
    %405 = vmatpush.msra.mxu0 %v355
    %406 = vmatpush.msra.mxu0 %v352
    %407 = vmatpush.msra.mxu0 %v349
    %408 = vmatpush.msra.mxu0 %v346
    %409 = vmatpush.msra.mxu0 %v343
    %410 = vmatpush.msra.mxu0 %v340
    %411 = vmatpush.msra.mxu0 %v337
    %412 = vmatpush.msra.mxu0 %v334
    %413 = vmatpush.msra.mxu0 %v331
    %414 = vmatmul.f32.gmra.mxu0 0.0
    %v415 = vpop.f32.mrf.mxu0
    %v416 = vadd.f32 0.0, %v415
    %417 = vdwg.mxu0
    %418 = vmatpush.msra.mxu0 %v377
    %419 = vmatpush.msra.mxu0 %v374
    %420 = vmatpush.msra.mxu0 %v371
    %421 = vmatpush.msra.mxu0 %v368
    %422 = vmatpush.msra.mxu0 %v365
    %423 = vmatpush.msra.mxu0 %v362
    %424 = vmatpush.msra.mxu0 %v359
    %425 = vmatpush.msra.mxu0 %v356
    %426 = vmatpush.msra.mxu0 %v353
    %427 = vmatpush.msra.mxu0 %v350
    %428 = vmatpush.msra.mxu0 %v347
    %429 = vmatpush.msra.mxu0 %v344
    %430 = vmatpush.msra.mxu0 %v341
    %431 = vmatpush.msra.mxu0 %v338
    %432 = vmatpush.msra.mxu0 %v335
    %433 = vmatpush.msra.mxu0 %v332
    %434 = vmatmul.f32.gmra.mxu0 0.0
    %v435 = vpop.f32.mrf.mxu0
    %v436 = vadd.f32 0.0, %v435
    %437 = vdwg.mxu0
    %v438 = vld [vmem:[#allocation2] sm:$0xff]
    %v439 = vld [vmem:[#allocation2 + $0x8] sm:$0xff]
    %v440 = vld [vmem:[#allocation2 + $0x10] sm:$0xff]
    %v441 = vadd.f32 %v438, %v396
    %v442 = vadd.f32 %v439, %v416
    %v443 = vmul.f32 %v441, 0.5
    %v444 = vmul.f32 %v442, 0.5
    %v445 = vtanh.pop %v443
    %v446 = vtanh.pop %v444
    %v447 = vadd.f32 %v445, 1.0
    %v448 = vadd.f32 %v446, 1.0
    %v449 = vmul.f32 %v447, 0.5
    %v450 = vmul.f32 %v448, 0.5
    %v451 = vld [vmem:[%s5] sm:$0x1]
    %v453 = vperm.slane %v451, 0
    %v455 = vadd.f32 %v436, %v453
    %v456 = vmul.f32 %v449, %v455
    %v457 = vadd.f32 %v440, %v456
    %v458 = vtanh.pop %v457
    %v459 = vsub.f32 1.0, %v450
    %v460 = vmul.f32 %v459, %v458
    %v461 = vmul.f32 %v450, 0.0
    %v462 = vadd.f32 %v460, %v461
    %vm463 = vcmp.gt.s32.totalorder %v118, 0
    %v464 = vsel %vm463, 1, 0
    %465 = vset.pattern.permute.xlu0 0
    %466 = vperm.xlu0 %465, %v464
    %v467 = vpop.permute.xlu0 %466
    %vm468 = vcmp.eq.s32.totalorder %v467, 1
    %v469 = vsel %vm468, %v462, 0.0
    %470 = vst [vmem:[#allocation3] sm:$0xff] %v469
    %v471 = vld [vmem:[#allocation7] sm:$0xff]
    %v472 = vld [vmem:[#allocation7 + $0x8] sm:$0xff]
    %v473 = vld [vmem:[#allocation7 + $0x10] sm:$0xff]
    %v474 = vld [vmem:[#allocation7 + $0x18] sm:$0xff]
    %v475 = vld [vmem:[#allocation7 + $0x20] sm:$0xff]
    %v476 = vld [vmem:[#allocation7 + $0x28] sm:$0xff]
    %v477 = vld [vmem:[#allocation7 + $0x30] sm:$0xff]
    %v478 = vld [vmem:[#allocation7 + $0x38] sm:$0xff]
    %v479 = vld [vmem:[#allocation7 + $0x40] sm:$0xff]
    %v480 = vld [vmem:[#allocation7 + $0x48] sm:$0xff]
    %v481 = vld [vmem:[#allocation7 + $0x50] sm:$0xff]
    %v482 = vld [vmem:[#allocation7 + $0x58] sm:$0xff]
    %v483 = vld [vmem:[#allocation7 + $0x60] sm:$0xff]
    %v484 = vld [vmem:[#allocation7 + $0x68] sm:$0xff]
    %v485 = vld [vmem:[#allocation7 + $0x70] sm:$0xff]
    %v486 = vld [vmem:[#allocation7 + $0x78] sm:$0xff]
    %v487 = vld [vmem:[#allocation7 + $0x80] sm:$0xff]
    %v488 = vld [vmem:[#allocation7 + $0x88] sm:$0xff]
    %v489 = vld [vmem:[#allocation7 + $0x90] sm:$0xff]
    %v490 = vld [vmem:[#allocation7 + $0x98] sm:$0xff]
    %v491 = vld [vmem:[#allocation7 + $0xa0] sm:$0xff]
    %v492 = vld [vmem:[#allocation7 + $0xa8] sm:$0xff]
    %v493 = vld [vmem:[#allocation7 + $0xb0] sm:$0xff]
    %v494 = vld [vmem:[#allocation7 + $0xb8] sm:$0xff]
    %v495 = vld [vmem:[#allocation7 + $0xc0] sm:$0xff]
    %v496 = vld [vmem:[#allocation7 + $0xc8] sm:$0xff]
    %v497 = vld [vmem:[#allocation7 + $0xd0] sm:$0xff]
    %v498 = vld [vmem:[#allocation7 + $0xd8] sm:$0xff]
    %v499 = vld [vmem:[#allocation7 + $0xe0] sm:$0xff]
    %v500 = vld [vmem:[#allocation7 + $0xe8] sm:$0xff]
    %v501 = vld [vmem:[#allocation7 + $0xf0] sm:$0xff]
    %v502 = vld [vmem:[#allocation7 + $0xf8] sm:$0xff]
    %v503 = vld [vmem:[#allocation7 + $0x100] sm:$0xff]
    %v504 = vld [vmem:[#allocation7 + $0x108] sm:$0xff]
    %v505 = vld [vmem:[#allocation7 + $0x110] sm:$0xff]
    %v506 = vld [vmem:[#allocation7 + $0x118] sm:$0xff]
    %v507 = vld [vmem:[#allocation7 + $0x120] sm:$0xff]
    %v508 = vld [vmem:[#allocation7 + $0x128] sm:$0xff]
    %v509 = vld [vmem:[#allocation7 + $0x130] sm:$0xff]
    %v510 = vld [vmem:[#allocation7 + $0x138] sm:$0xff]
    %v511 = vld [vmem:[#allocation7 + $0x140] sm:$0xff]
    %v512 = vld [vmem:[#allocation7 + $0x148] sm:$0xff]
    %v513 = vld [vmem:[#allocation7 + $0x150] sm:$0xff]
    %v514 = vld [vmem:[#allocation7 + $0x158] sm:$0xff]
    %v515 = vld [vmem:[#allocation7 + $0x160] sm:$0xff]
    %v516 = vld [vmem:[#allocation7 + $0x168] sm:$0xff]
    %v517 = vld [vmem:[#allocation7 + $0x170] sm:$0xff]
    %v518 = vld [vmem:[#allocation7 + $0x178] sm:$0xff]
    %519 = vmatpush.msra.mxu0 %v516
    %520 = vmatpush.msra.mxu0 %v513
    %521 = vmatpush.msra.mxu0 %v510
    %522 = vmatpush.msra.mxu0 %v507
    %523 = vmatpush.msra.mxu0 %v504
    %524 = vmatpush.msra.mxu0 %v501
    %525 = vmatpush.msra.mxu0 %v498
    %526 = vmatpush.msra.mxu0 %v495
    %527 = vmatpush.msra.mxu0 %v492
    %528 = vmatpush.msra.mxu0 %v489
    %529 = vmatpush.msra.mxu0 %v486
    %530 = vmatpush.msra.mxu0 %v483
    %531 = vmatpush.msra.mxu0 %v480
    %532 = vmatpush.msra.mxu0 %v477
    %533 = vmatpush.msra.mxu0 %v474
    %534 = vmatpush.msra.mxu0 %v471
    %535 = vmatmul.f32.gmra.mxu0 %v469
    %v536 = vpop.f32.mrf.mxu0
    %v537 = vadd.f32 0.0, %v536
    %538 = vdwg.mxu0
    %539 = vmatpush.msra.mxu0 %v517
    %540 = vmatpush.msra.mxu0 %v514
    %541 = vmatpush.msra.mxu0 %v511
    %542 = vmatpush.msra.mxu0 %v508
    %543 = vmatpush.msra.mxu0 %v505
    %544 = vmatpush.msra.mxu0 %v502
    %545 = vmatpush.msra.mxu0 %v499
    %546 = vmatpush.msra.mxu0 %v496
    %547 = vmatpush.msra.mxu0 %v493
    %548 = vmatpush.msra.mxu0 %v490
    %549 = vmatpush.msra.mxu0 %v487
    %550 = vmatpush.msra.mxu0 %v484
    %551 = vmatpush.msra.mxu0 %v481
    %552 = vmatpush.msra.mxu0 %v478
    %553 = vmatpush.msra.mxu0 %v475
    %554 = vmatpush.msra.mxu0 %v472
    %555 = vmatmul.f32.gmra.mxu0 %v469
    %v556 = vpop.f32.mrf.mxu0
    %v557 = vadd.f32 0.0, %v556
    %558 = vdwg.mxu0
    %559 = vmatpush.msra.mxu0 %v518
    %560 = vmatpush.msra.mxu0 %v515
    %561 = vmatpush.msra.mxu0 %v512
    %562 = vmatpush.msra.mxu0 %v509
    %563 = vmatpush.msra.mxu0 %v506
    %564 = vmatpush.msra.mxu0 %v503
    %565 = vmatpush.msra.mxu0 %v500
    %566 = vmatpush.msra.mxu0 %v497
    %567 = vmatpush.msra.mxu0 %v494
    %568 = vmatpush.msra.mxu0 %v491
    %569 = vmatpush.msra.mxu0 %v488
    %570 = vmatpush.msra.mxu0 %v485
    %571 = vmatpush.msra.mxu0 %v482
    %572 = vmatpush.msra.mxu0 %v479
    %573 = vmatpush.msra.mxu0 %v476
    %574 = vmatpush.msra.mxu0 %v473
    %575 = vmatmul.f32.gmra.mxu0 %v469
    %v576 = vpop.f32.mrf.mxu0
    %v577 = vadd.f32 0.0, %v576
    %578 = vdwg.mxu0
    %v579 = vld [vmem:[#allocation2 + $0x18] sm:$0xff]
    %v580 = vld [vmem:[#allocation2 + $0x20] sm:$0xff]
    %v581 = vld [vmem:[#allocation2 + $0x28] sm:$0xff]
    %v582 = vadd.f32 %v579, %v537
    %v583 = vadd.f32 %v580, %v557
    %v584 = vmul.f32 %v582, 0.5
    %v585 = vmul.f32 %v583, 0.5
    %v586 = vtanh.pop %v584
    %v587 = vtanh.pop %v585
    %v588 = vadd.f32 %v586, 1.0
    %v589 = vadd.f32 %v587, 1.0
    %v590 = vmul.f32 %v588, 0.5
    %v591 = vmul.f32 %v589, 0.5
    %v592 = vld [vmem:[%s5] sm:$0x1]
    %v594 = vperm.slane %v592, 0
    %v596 = vadd.f32 %v577, %v594
    %v597 = vmul.f32 %v590, %v596
    %v598 = vadd.f32 %v581, %v597
    %v599 = vtanh.pop %v598
    %v600 = vsub.f32 1.0, %v591
    %v601 = vmul.f32 %v600, %v599
    %v602 = vmul.f32 %v591, %v469
    %v603 = vadd.f32 %v601, %v602
    %vm604 = vcmp.gt.s32.totalorder %v118, 1
    %v605 = vsel %vm604, 1, 0
    %606 = vset.pattern.permute.xlu0 0
    %607 = vperm.xlu0 %606, %v605
    %v608 = vpop.permute.xlu0 %607
    %vm609 = vcmp.eq.s32.totalorder %v608, 1
    %v610 = vsel %vm609, %v603, 0.0
    %611 = vst [vmem:[#allocation3 + $0x8] sm:$0xff] %v610
    %v612 = vsel %vm609, %v603, %v469
    %v613 = vld [vmem:[#allocation7] sm:$0xff]
    %v614 = vld [vmem:[#allocation7 + $0x8] sm:$0xff]
    %v615 = vld [vmem:[#allocation7 + $0x10] sm:$0xff]
    %v616 = vld [vmem:[#allocation7 + $0x18] sm:$0xff]
    %v617 = vld [vmem:[#allocation7 + $0x20] sm:$0xff]
    %v618 = vld [vmem:[#allocation7 + $0x28] sm:$0xff]
    %v619 = vld [vmem:[#allocation7 + $0x30] sm:$0xff]
    %v620 = vld [vmem:[#allocation7 + $0x38] sm:$0xff]
    %v621 = vld [vmem:[#allocation7 + $0x40] sm:$0xff]
    %v622 = vld [vmem:[#allocation7 + $0x48] sm:$0xff]
    %v623 = vld [vmem:[#allocation7 + $0x50] sm:$0xff]
    %v624 = vld [vmem:[#allocation7 + $0x58] sm:$0xff]
    %v625 = vld [vmem:[#allocation7 + $0x60] sm:$0xff]
    %v626 = vld [vmem:[#allocation7 + $0x68] sm:$0xff]
    %v627 = vld [vmem:[#allocation7 + $0x70] sm:$0xff]
    %v628 = vld [vmem:[#allocation7 + $0x78] sm:$0xff]
    %v629 = vld [vmem:[#allocation7 + $0x80] sm:$0xff]
    %v630 = vld [vmem:[#allocation7 + $0x88] sm:$0xff]
    %v631 = vld [vmem:[#allocation7 + $0x90] sm:$0xff]
    %v632 = vld [vmem:[#allocation7 + $0x98] sm:$0xff]
    %v633 = vld [vmem:[#allocation7 + $0xa0] sm:$0xff]
    %v634 = vld [vmem:[#allocation7 + $0xa8] sm:$0xff]
    %v635 = vld [vmem:[#allocation7 + $0xb0] sm:$0xff]
    %v636 = vld [vmem:[#allocation7 + $0xb8] sm:$0xff]
    %v637 = vld [vmem:[#allocation7 + $0xc0] sm:$0xff]
    %v638 = vld [vmem:[#allocation7 + $0xc8] sm:$0xff]
    %v639 = vld [vmem:[#allocation7 + $0xd0] sm:$0xff]
    %v640 = vld [vmem:[#allocation7 + $0xd8] sm:$0xff]
    %v641 = vld [vmem:[#allocation7 + $0xe0] sm:$0xff]
    %v642 = vld [vmem:[#allocation7 + $0xe8] sm:$0xff]
    %v643 = vld [vmem:[#allocation7 + $0xf0] sm:$0xff]
    %v644 = vld [vmem:[#allocation7 + $0xf8] sm:$0xff]
    %v645 = vld [vmem:[#allocation7 + $0x100] sm:$0xff]
    %v646 = vld [vmem:[#allocation7 + $0x108] sm:$0xff]
    %v647 = vld [vmem:[#allocation7 + $0x110] sm:$0xff]
    %v648 = vld [vmem:[#allocation7 + $0x118] sm:$0xff]
    %v649 = vld [vmem:[#allocation7 + $0x120] sm:$0xff]
    %v650 = vld [vmem:[#allocation7 + $0x128] sm:$0xff]
    %v651 = vld [vmem:[#allocation7 + $0x130] sm:$0xff]
    %v652 = vld [vmem:[#allocation7 + $0x138] sm:$0xff]
    %v653 = vld [vmem:[#allocation7 + $0x140] sm:$0xff]
    %v654 = vld [vmem:[#allocation7 + $0x148] sm:$0xff]
    %v655 = vld [vmem:[#allocation7 + $0x150] sm:$0xff]
    %v656 = vld [vmem:[#allocation7 + $0x158] sm:$0xff]
    %v657 = vld [vmem:[#allocation7 + $0x160] sm:$0xff]
    %v658 = vld [vmem:[#allocation7 + $0x168] sm:$0xff]
    %v659 = vld [vmem:[#allocation7 + $0x170] sm:$0xff]
    %v660 = vld [vmem:[#allocation7 + $0x178] sm:$0xff]
    %661 = vmatpush.msra.mxu0 %v658
    %662 = vmatpush.msra.mxu0 %v655
    %663 = vmatpush.msra.mxu0 %v652
    %664 = vmatpush.msra.mxu0 %v649
    %665 = vmatpush.msra.mxu0 %v646
    %666 = vmatpush.msra.mxu0 %v643
    %667 = vmatpush.msra.mxu0 %v640
    %668 = vmatpush.msra.mxu0 %v637
    %669 = vmatpush.msra.mxu0 %v634
    %670 = vmatpush.msra.mxu0 %v631
    %671 = vmatpush.msra.mxu0 %v628
    %672 = vmatpush.msra.mxu0 %v625
    %673 = vmatpush.msra.mxu0 %v622
    %674 = vmatpush.msra.mxu0 %v619
    %675 = vmatpush.msra.mxu0 %v616
    %676 = vmatpush.msra.mxu0 %v613
    %677 = vmatmul.f32.gmra.mxu0 %v612
    %v678 = vpop.f32.mrf.mxu0
    %v679 = vadd.f32 0.0, %v678
    %680 = vdwg.mxu0
    %681 = vmatpush.msra.mxu0 %v659
    %682 = vmatpush.msra.mxu0 %v656
    %683 = vmatpush.msra.mxu0 %v653
    %684 = vmatpush.msra.mxu0 %v650
    %685 = vmatpush.msra.mxu0 %v647
    %686 = vmatpush.msra.mxu0 %v644
    %687 = vmatpush.msra.mxu0 %v641
    %688 = vmatpush.msra.mxu0 %v638
    %689 = vmatpush.msra.mxu0 %v635
    %690 = vmatpush.msra.mxu0 %v632
    %691 = vmatpush.msra.mxu0 %v629
    %692 = vmatpush.msra.mxu0 %v626
    %693 = vmatpush.msra.mxu0 %v623
    %694 = vmatpush.msra.mxu0 %v620
    %695 = vmatpush.msra.mxu0 %v617
    %696 = vmatpush.msra.mxu0 %v614
    %697 = vmatmul.f32.gmra.mxu0 %v612
    %v698 = vpop.f32.mrf.mxu0
    %v699 = vadd.f32 0.0, %v698
    %700 = vdwg.mxu0
    %701 = vmatpush.msra.mxu0 %v660
    %702 = vmatpush.msra.mxu0 %v657
    %703 = vmatpush.msra.mxu0 %v654
    %704 = vmatpush.msra.mxu0 %v651
    %705 = vmatpush.msra.mxu0 %v648
    %706 = vmatpush.msra.mxu0 %v645
    %707 = vmatpush.msra.mxu0 %v642
    %708 = vmatpush.msra.mxu0 %v639
    %709 = vmatpush.msra.mxu0 %v636
    %710 = vmatpush.msra.mxu0 %v633
    %711 = vmatpush.msra.mxu0 %v630
    %712 = vmatpush.msra.mxu0 %v627
    %713 = vmatpush.msra.mxu0 %v624
    %714 = vmatpush.msra.mxu0 %v621
    %715 = vmatpush.msra.mxu0 %v618
    %716 = vmatpush.msra.mxu0 %v615
    %717 = vmatmul.f32.gmra.mxu0 %v612
    %v718 = vpop.f32.mrf.mxu0
    %v719 = vadd.f32 0.0, %v718
    %720 = vdwg.mxu0
    %v721 = vld [vmem:[#allocation2 + $0x30] sm:$0xff]
    %v722 = vld [vmem:[#allocation2 + $0x38] sm:$0xff]
    %v723 = vld [vmem:[#allocation2 + $0x40] sm:$0xff]
    %v724 = vadd.f32 %v721, %v679
    %v725 = vadd.f32 %v722, %v699
    %v726 = vmul.f32 %v724, 0.5
    %v727 = vmul.f32 %v725, 0.5
    %v728 = vtanh.pop %v726
    %v729 = vtanh.pop %v727
    %v730 = vadd.f32 %v728, 1.0
    %v731 = vadd.f32 %v729, 1.0
    %v732 = vmul.f32 %v730, 0.5
    %v733 = vmul.f32 %v731, 0.5
    %v734 = vld [vmem:[%s5] sm:$0x1]
    %v736 = vperm.slane %v734, 0
    %v738 = vadd.f32 %v719, %v736
    %v739 = vmul.f32 %v732, %v738
    %v740 = vadd.f32 %v723, %v739
    %v741 = vtanh.pop %v740
    %v742 = vsub.f32 1.0, %v733
    %v743 = vmul.f32 %v742, %v741
    %v744 = vmul.f32 %v733, %v612
    %v745 = vadd.f32 %v743, %v744
    %vm746 = vcmp.gt.s32.totalorder %v118, 2
    %v747 = vsel %vm746, 1, 0
    %748 = vset.pattern.permute.xlu0 0
    %749 = vperm.xlu0 %748, %v747
    %v750 = vpop.permute.xlu0 %749
    %vm751 = vcmp.eq.s32.totalorder %v750, 1
    %v752 = vsel %vm751, %v745, 0.0
    %753 = vst [vmem:[#allocation3 + $0x10] sm:$0xff] %v752
    %v754 = vsel %vm751, %v745, %v612
    %v755 = vld [vmem:[#allocation7] sm:$0xff]
    %v756 = vld [vmem:[#allocation7 + $0x8] sm:$0xff]
    %v757 = vld [vmem:[#allocation7 + $0x10] sm:$0xff]
    %v758 = vld [vmem:[#allocation7 + $0x18] sm:$0xff]
    %v759 = vld [vmem:[#allocation7 + $0x20] sm:$0xff]
    %v760 = vld [vmem:[#allocation7 + $0x28] sm:$0xff]
    %v761 = vld [vmem:[#allocation7 + $0x30] sm:$0xff]
    %v762 = vld [vmem:[#allocation7 + $0x38] sm:$0xff]
    %v763 = vld [vmem:[#allocation7 + $0x40] sm:$0xff]
    %v764 = vld [vmem:[#allocation7 + $0x48] sm:$0xff]
    %v765 = vld [vmem:[#allocation7 + $0x50] sm:$0xff]
    %v766 = vld [vmem:[#allocation7 + $0x58] sm:$0xff]
    %v767 = vld [vmem:[#allocation7 + $0x60] sm:$0xff]
    %v768 = vld [vmem:[#allocation7 + $0x68] sm:$0xff]
    %v769 = vld [vmem:[#allocation7 + $0x70] sm:$0xff]
    %v770 = vld [vmem:[#allocation7 + $0x78] sm:$0xff]
    %v771 = vld [vmem:[#allocation7 + $0x80] sm:$0xff]
    %v772 = vld [vmem:[#allocation7 + $0x88] sm:$0xff]
    %v773 = vld [vmem:[#allocation7 + $0x90] sm:$0xff]
    %v774 = vld [vmem:[#allocation7 + $0x98] sm:$0xff]
    %v775 = vld [vmem:[#allocation7 + $0xa0] sm:$0xff]
    %v776 = vld [vmem:[#allocation7 + $0xa8] sm:$0xff]
    %v777 = vld [vmem:[#allocation7 + $0xb0] sm:$0xff]
    %v778 = vld [vmem:[#allocation7 + $0xb8] sm:$0xff]
    %v779 = vld [vmem:[#allocation7 + $0xc0] sm:$0xff]
    %v780 = vld [vmem:[#allocation7 + $0xc8] sm:$0xff]
    %v781 = vld [vmem:[#allocation7 + $0xd0] sm:$0xff]
    %v782 = vld [vmem:[#allocation7 + $0xd8] sm:$0xff]
    %v783 = vld [vmem:[#allocation7 + $0xe0] sm:$0xff]
    %v784 = vld [vmem:[#allocation7 + $0xe8] sm:$0xff]
    %v785 = vld [vmem:[#allocation7 + $0xf0] sm:$0xff]
    %v786 = vld [vmem:[#allocation7 + $0xf8] sm:$0xff]
    %v787 = vld [vmem:[#allocation7 + $0x100] sm:$0xff]
    %v788 = vld [vmem:[#allocation7 + $0x108] sm:$0xff]
    %v789 = vld [vmem:[#allocation7 + $0x110] sm:$0xff]
    %v790 = vld [vmem:[#allocation7 + $0x118] sm:$0xff]
    %v791 = vld [vmem:[#allocation7 + $0x120] sm:$0xff]
    %v792 = vld [vmem:[#allocation7 + $0x128] sm:$0xff]
    %v793 = vld [vmem:[#allocation7 + $0x130] sm:$0xff]
    %v794 = vld [vmem:[#allocation7 + $0x138] sm:$0xff]
    %v795 = vld [vmem:[#allocation7 + $0x140] sm:$0xff]
    %v796 = vld [vmem:[#allocation7 + $0x148] sm:$0xff]
    %v797 = vld [vmem:[#allocation7 + $0x150] sm:$0xff]
    %v798 = vld [vmem:[#allocation7 + $0x158] sm:$0xff]
    %v799 = vld [vmem:[#allocation7 + $0x160] sm:$0xff]
    %v800 = vld [vmem:[#allocation7 + $0x168] sm:$0xff]
    %v801 = vld [vmem:[#allocation7 + $0x170] sm:$0xff]
    %v802 = vld [vmem:[#allocation7 + $0x178] sm:$0xff]
    %803 = vmatpush.msra.mxu0 %v800
    %804 = vmatpush.msra.mxu0 %v797
    %805 = vmatpush.msra.mxu0 %v794
    %806 = vmatpush.msra.mxu0 %v791
    %807 = vmatpush.msra.mxu0 %v788
    %808 = vmatpush.msra.mxu0 %v785
    %809 = vmatpush.msra.mxu0 %v782
    %810 = vmatpush.msra.mxu0 %v779
    %811 = vmatpush.msra.mxu0 %v776
    %812 = vmatpush.msra.mxu0 %v773
    %813 = vmatpush.msra.mxu0 %v770
    %814 = vmatpush.msra.mxu0 %v767
    %815 = vmatpush.msra.mxu0 %v764
    %816 = vmatpush.msra.mxu0 %v761
    %817 = vmatpush.msra.mxu0 %v758
    %818 = vmatpush.msra.mxu0 %v755
    %819 = vmatmul.f32.gmra.mxu0 %v754
    %v820 = vpop.f32.mrf.mxu0
    %v821 = vadd.f32 0.0, %v820
    %822 = vdwg.mxu0
    %823 = vmatpush.msra.mxu0 %v801
    %824 = vmatpush.msra.mxu0 %v798
    %825 = vmatpush.msra.mxu0 %v795
    %826 = vmatpush.msra.mxu0 %v792
    %827 = vmatpush.msra.mxu0 %v789
    %828 = vmatpush.msra.mxu0 %v786
    %829 = vmatpush.msra.mxu0 %v783
    %830 = vmatpush.msra.mxu0 %v780
    %831 = vmatpush.msra.mxu0 %v777
    %832 = vmatpush.msra.mxu0 %v774
    %833 = vmatpush.msra.mxu0 %v771
    %834 = vmatpush.msra.mxu0 %v768
    %835 = vmatpush.msra.mxu0 %v765
    %836 = vmatpush.msra.mxu0 %v762
    %837 = vmatpush.msra.mxu0 %v759
    %838 = vmatpush.msra.mxu0 %v756
    %839 = vmatmul.f32.gmra.mxu0 %v754
    %v840 = vpop.f32.mrf.mxu0
    %v841 = vadd.f32 0.0, %v840
    %842 = vdwg.mxu0
    %843 = vmatpush.msra.mxu0 %v802
    %844 = vmatpush.msra.mxu0 %v799
    %845 = vmatpush.msra.mxu0 %v796
    %846 = vmatpush.msra.mxu0 %v793
    %847 = vmatpush.msra.mxu0 %v790
    %848 = vmatpush.msra.mxu0 %v787
    %849 = vmatpush.msra.mxu0 %v784
    %850 = vmatpush.msra.mxu0 %v781
    %851 = vmatpush.msra.mxu0 %v778
    %852 = vmatpush.msra.mxu0 %v775
    %853 = vmatpush.msra.mxu0 %v772
    %854 = vmatpush.msra.mxu0 %v769
    %855 = vmatpush.msra.mxu0 %v766
    %856 = vmatpush.msra.mxu0 %v763
    %857 = vmatpush.msra.mxu0 %v760
    %858 = vmatpush.msra.mxu0 %v757
    %859 = vmatmul.f32.gmra.mxu0 %v754
    %v860 = vpop.f32.mrf.mxu0
    %v861 = vadd.f32 0.0, %v860
    %862 = vdwg.mxu0
    %v863 = vld [vmem:[#allocation2 + $0x48] sm:$0xff]
    %v864 = vld [vmem:[#allocation2 + $0x50] sm:$0xff]
    %v865 = vld [vmem:[#allocation2 + $0x58] sm:$0xff]
    %v866 = vadd.f32 %v863, %v821
    %v867 = vadd.f32 %v864, %v841
    %v868 = vmul.f32 %v866, 0.5
    %v869 = vmul.f32 %v867, 0.5
    %v870 = vtanh.pop %v868
    %v871 = vtanh.pop %v869
    %v872 = vadd.f32 %v870, 1.0
    %v873 = vadd.f32 %v871, 1.0
    %v874 = vmul.f32 %v872, 0.5
    %v875 = vmul.f32 %v873, 0.5
    %v876 = vld [vmem:[%s5] sm:$0x1]
    %v878 = vperm.slane %v876, 0
    %v880 = vadd.f32 %v861, %v878
    %v881 = vmul.f32 %v874, %v880
    %v882 = vadd.f32 %v865, %v881
    %v883 = vtanh.pop %v882
    %v884 = vsub.f32 1.0, %v875
    %v885 = vmul.f32 %v884, %v883
    %v886 = vmul.f32 %v875, %v754
    %v887 = vadd.f32 %v885, %v886
    %vm888 = vcmp.gt.s32.totalorder %v118, 3
    %v889 = vsel %vm888, 1, 0
    %890 = vset.pattern.permute.xlu0 0
    %891 = vperm.xlu0 %890, %v889
    %v892 = vpop.permute.xlu0 %891
    %vm893 = vcmp.eq.s32.totalorder %v892, 1
    %v894 = vsel %vm893, %v887, 0.0
    %895 = vst [vmem:[#allocation3 + $0x18] sm:$0xff] %v894
    %v896 = vsel %vm893, %v887, %v754
    %v897 = vld [vmem:[#allocation7] sm:$0xff]
    %v898 = vld [vmem:[#allocation7 + $0x8] sm:$0xff]
    %v899 = vld [vmem:[#allocation7 + $0x10] sm:$0xff]
    %v900 = vld [vmem:[#allocation7 + $0x18] sm:$0xff]
    %v901 = vld [vmem:[#allocation7 + $0x20] sm:$0xff]
    %v902 = vld [vmem:[#allocation7 + $0x28] sm:$0xff]
    %v903 = vld [vmem:[#allocation7 + $0x30] sm:$0xff]
    %v904 = vld [vmem:[#allocation7 + $0x38] sm:$0xff]
    %v905 = vld [vmem:[#allocation7 + $0x40] sm:$0xff]
    %v906 = vld [vmem:[#allocation7 + $0x48] sm:$0xff]
    %v907 = vld [vmem:[#allocation7 + $0x50] sm:$0xff]
    %v908 = vld [vmem:[#allocation7 + $0x58] sm:$0xff]
    %v909 = vld [vmem:[#allocation7 + $0x60] sm:$0xff]
    %v910 = vld [vmem:[#allocation7 + $0x68] sm:$0xff]
    %v911 = vld [vmem:[#allocation7 + $0x70] sm:$0xff]
    %v912 = vld [vmem:[#allocation7 + $0x78] sm:$0xff]
    %v913 = vld [vmem:[#allocation7 + $0x80] sm:$0xff]
    %v914 = vld [vmem:[#allocation7 + $0x88] sm:$0xff]
    %v915 = vld [vmem:[#allocation7 + $0x90] sm:$0xff]
    %v916 = vld [vmem:[#allocation7 + $0x98] sm:$0xff]
    %v917 = vld [vmem:[#allocation7 + $0xa0] sm:$0xff]
    %v918 = vld [vmem:[#allocation7 + $0xa8] sm:$0xff]
    %v919 = vld [vmem:[#allocation7 + $0xb0] sm:$0xff]
    %v920 = vld [vmem:[#allocation7 + $0xb8] sm:$0xff]
    %v921 = vld [vmem:[#allocation7 + $0xc0] sm:$0xff]
    %v922 = vld [vmem:[#allocation7 + $0xc8] sm:$0xff]
    %v923 = vld [vmem:[#allocation7 + $0xd0] sm:$0xff]
    %v924 = vld [vmem:[#allocation7 + $0xd8] sm:$0xff]
    %v925 = vld [vmem:[#allocation7 + $0xe0] sm:$0xff]
    %v926 = vld [vmem:[#allocation7 + $0xe8] sm:$0xff]
    %v927 = vld [vmem:[#allocation7 + $0xf0] sm:$0xff]
    %v928 = vld [vmem:[#allocation7 + $0xf8] sm:$0xff]
    %v929 = vld [vmem:[#allocation7 + $0x100] sm:$0xff]
    %v930 = vld [vmem:[#allocation7 + $0x108] sm:$0xff]
    %v931 = vld [vmem:[#allocation7 + $0x110] sm:$0xff]
    %v932 = vld [vmem:[#allocation7 + $0x118] sm:$0xff]
    %v933 = vld [vmem:[#allocation7 + $0x120] sm:$0xff]
    %v934 = vld [vmem:[#allocation7 + $0x128] sm:$0xff]
    %v935 = vld [vmem:[#allocation7 + $0x130] sm:$0xff]
    %v936 = vld [vmem:[#allocation7 + $0x138] sm:$0xff]
    %v937 = vld [vmem:[#allocation7 + $0x140] sm:$0xff]
    %v938 = vld [vmem:[#allocation7 + $0x148] sm:$0xff]
    %v939 = vld [vmem:[#allocation7 + $0x150] sm:$0xff]
    %v940 = vld [vmem:[#allocation7 + $0x158] sm:$0xff]
    %v941 = vld [vmem:[#allocation7 + $0x160] sm:$0xff]
    %v942 = vld [vmem:[#allocation7 + $0x168] sm:$0xff]
    %v943 = vld [vmem:[#allocation7 + $0x170] sm:$0xff]
    %v944 = vld [vmem:[#allocation7 + $0x178] sm:$0xff]
    %945 = vmatpush.msra.mxu0 %v942
    %946 = vmatpush.msra.mxu0 %v939
    %947 = vmatpush.msra.mxu0 %v936
    %948 = vmatpush.msra.mxu0 %v933
    %949 = vmatpush.msra.mxu0 %v930
    %950 = vmatpush.msra.mxu0 %v927
    %951 = vmatpush.msra.mxu0 %v924
    %952 = vmatpush.msra.mxu0 %v921
    %953 = vmatpush.msra.mxu0 %v918
    %954 = vmatpush.msra.mxu0 %v915
    %955 = vmatpush.msra.mxu0 %v912
    %956 = vmatpush.msra.mxu0 %v909
    %957 = vmatpush.msra.mxu0 %v906
    %958 = vmatpush.msra.mxu0 %v903
    %959 = vmatpush.msra.mxu0 %v900
    %960 = vmatpush.msra.mxu0 %v897
    %961 = vmatmul.f32.gmra.mxu0 %v896
    %v962 = vpop.f32.mrf.mxu0
    %v963 = vadd.f32 0.0, %v962
    %964 = vdwg.mxu0
    %965 = vmatpush.msra.mxu0 %v943
    %966 = vmatpush.msra.mxu0 %v940
    %967 = vmatpush.msra.mxu0 %v937
    %968 = vmatpush.msra.mxu0 %v934
    %969 = vmatpush.msra.mxu0 %v931
    %970 = vmatpush.msra.mxu0 %v928
    %971 = vmatpush.msra.mxu0 %v925
    %972 = vmatpush.msra.mxu0 %v922
    %973 = vmatpush.msra.mxu0 %v919
    %974 = vmatpush.msra.mxu0 %v916
    %975 = vmatpush.msra.mxu0 %v913
    %976 = vmatpush.msra.mxu0 %v910
    %977 = vmatpush.msra.mxu0 %v907
    %978 = vmatpush.msra.mxu0 %v904
    %979 = vmatpush.msra.mxu0 %v901
    %980 = vmatpush.msra.mxu0 %v898
    %981 = vmatmul.f32.gmra.mxu0 %v896
    %v982 = vpop.f32.mrf.mxu0
    %v983 = vadd.f32 0.0, %v982
    %984 = vdwg.mxu0
    %985 = vmatpush.msra.mxu0 %v944
    %986 = vmatpush.msra.mxu0 %v941
    %987 = vmatpush.msra.mxu0 %v938
    %988 = vmatpush.msra.mxu0 %v935
    %989 = vmatpush.msra.mxu0 %v932
    %990 = vmatpush.msra.mxu0 %v929
    %991 = vmatpush.msra.mxu0 %v926
    %992 = vmatpush.msra.mxu0 %v923
    %993 = vmatpush.msra.mxu0 %v920
    %994 = vmatpush.msra.mxu0 %v917
    %995 = vmatpush.msra.mxu0 %v914
    %996 = vmatpush.msra.mxu0 %v911
    %997 = vmatpush.msra.mxu0 %v908
    %998 = vmatpush.msra.mxu0 %v905
    %999 = vmatpush.msra.mxu0 %v902
    %1000 = vmatpush.msra.mxu0 %v899
    %1001 = vmatmul.f32.gmra.mxu0 %v896
    %v1002 = vpop.f32.mrf.mxu0
    %v1003 = vadd.f32 0.0, %v1002
    %1004 = vdwg.mxu0
    %v1005 = vld [vmem:[#allocation2 + $0x60] sm:$0xff]
    %v1006 = vld [vmem:[#allocation2 + $0x68] sm:$0xff]
    %v1007 = vld [vmem:[#allocation2 + $0x70] sm:$0xff]
    %v1008 = vadd.f32 %v1005, %v963
    %v1009 = vadd.f32 %v1006, %v983
    %v1010 = vmul.f32 %v1008, 0.5
    %v1011 = vmul.f32 %v1009, 0.5
    %v1012 = vtanh.pop %v1010
    %v1013 = vtanh.pop %v1011
    %v1014 = vadd.f32 %v1012, 1.0
    %v1015 = vadd.f32 %v1013, 1.0
    %v1016 = vmul.f32 %v1014, 0.5
    %v1017 = vmul.f32 %v1015, 0.5
    %v1018 = vld [vmem:[%s5] sm:$0x1]
    %v1020 = vperm.slane %v1018, 0
    %v1022 = vadd.f32 %v1003, %v1020
    %v1023 = vmul.f32 %v1016, %v1022
    %v1024 = vadd.f32 %v1007, %v1023
    %v1025 = vtanh.pop %v1024
    %v1026 = vsub.f32 1.0, %v1017
    %v1027 = vmul.f32 %v1026, %v1025
    %v1028 = vmul.f32 %v1017, %v896
    %v1029 = vadd.f32 %v1027, %v1028
    %vm1030 = vcmp.gt.s32.totalorder %v118, 4
    %v1031 = vsel %vm1030, 1, 0
    %1032 = vset.pattern.permute.xlu0 0
    %1033 = vperm.xlu0 %1032, %v1031
    %v1034 = vpop.permute.xlu0 %1033
    %vm1035 = vcmp.eq.s32.totalorder %v1034, 1
    %v1036 = vsel %vm1035, %v1029, 0.0
    %1037 = vst [vmem:[#allocation3 + $0x20] sm:$0xff] %v1036
    %v1038 = vsel %vm1035, %v1029, %v896
    %v1039 = vld [vmem:[#allocation7] sm:$0xff]
    %v1040 = vld [vmem:[#allocation7 + $0x8] sm:$0xff]
    %v1041 = vld [vmem:[#allocation7 + $0x10] sm:$0xff]
    %v1042 = vld [vmem:[#allocation7 + $0x18] sm:$0xff]
    %v1043 = vld [vmem:[#allocation7 + $0x20] sm:$0xff]
    %v1044 = vld [vmem:[#allocation7 + $0x28] sm:$0xff]
    %v1045 = vld [vmem:[#allocation7 + $0x30] sm:$0xff]
    %v1046 = vld [vmem:[#allocation7 + $0x38] sm:$0xff]
    %v1047 = vld [vmem:[#allocation7 + $0x40] sm:$0xff]
    %v1048 = vld [vmem:[#allocation7 + $0x48] sm:$0xff]
    %v1049 = vld [vmem:[#allocation7 + $0x50] sm:$0xff]
    %v1050 = vld [vmem:[#allocation7 + $0x58] sm:$0xff]
    %v1051 = vld [vmem:[#allocation7 + $0x60] sm:$0xff]
    %v1052 = vld [vmem:[#allocation7 + $0x68] sm:$0xff]
    %v1053 = vld [vmem:[#allocation7 + $0x70] sm:$0xff]
    %v1054 = vld [vmem:[#allocation7 + $0x78] sm:$0xff]
    %v1055 = vld [vmem:[#allocation7 + $0x80] sm:$0xff]
    %v1056 = vld [vmem:[#allocation7 + $0x88] sm:$0xff]
    %v1057 = vld [vmem:[#allocation7 + $0x90] sm:$0xff]
    %v1058 = vld [vmem:[#allocation7 + $0x98] sm:$0xff]
    %v1059 = vld [vmem:[#allocation7 + $0xa0] sm:$0xff]
    %v1060 = vld [vmem:[#allocation7 + $0xa8] sm:$0xff]
    %v1061 = vld [vmem:[#allocation7 + $0xb0] sm:$0xff]
    %v1062 = vld [vmem:[#allocation7 + $0xb8] sm:$0xff]
    %v1063 = vld [vmem:[#allocation7 + $0xc0] sm:$0xff]
    %v1064 = vld [vmem:[#allocation7 + $0xc8] sm:$0xff]
    %v1065 = vld [vmem:[#allocation7 + $0xd0] sm:$0xff]
    %v1066 = vld [vmem:[#allocation7 + $0xd8] sm:$0xff]
    %v1067 = vld [vmem:[#allocation7 + $0xe0] sm:$0xff]
    %v1068 = vld [vmem:[#allocation7 + $0xe8] sm:$0xff]
    %v1069 = vld [vmem:[#allocation7 + $0xf0] sm:$0xff]
    %v1070 = vld [vmem:[#allocation7 + $0xf8] sm:$0xff]
    %v1071 = vld [vmem:[#allocation7 + $0x100] sm:$0xff]
    %v1072 = vld [vmem:[#allocation7 + $0x108] sm:$0xff]
    %v1073 = vld [vmem:[#allocation7 + $0x110] sm:$0xff]
    %v1074 = vld [vmem:[#allocation7 + $0x118] sm:$0xff]
    %v1075 = vld [vmem:[#allocation7 + $0x120] sm:$0xff]
    %v1076 = vld [vmem:[#allocation7 + $0x128] sm:$0xff]
    %v1077 = vld [vmem:[#allocation7 + $0x130] sm:$0xff]
    %v1078 = vld [vmem:[#allocation7 + $0x138] sm:$0xff]
    %v1079 = vld [vmem:[#allocation7 + $0x140] sm:$0xff]
    %v1080 = vld [vmem:[#allocation7 + $0x148] sm:$0xff]
    %v1081 = vld [vmem:[#allocation7 + $0x150] sm:$0xff]
    %v1082 = vld [vmem:[#allocation7 + $0x158] sm:$0xff]
    %v1083 = vld [vmem:[#allocation7 + $0x160] sm:$0xff]
    %v1084 = vld [vmem:[#allocation7 + $0x168] sm:$0xff]
    %v1085 = vld [vmem:[#allocation7 + $0x170] sm:$0xff]
    %v1086 = vld [vmem:[#allocation7 + $0x178] sm:$0xff]
    %1087 = vmatpush.msra.mxu0 %v1084
    %1088 = vmatpush.msra.mxu0 %v1081
    %1089 = vmatpush.msra.mxu0 %v1078
    %1090 = vmatpush.msra.mxu0 %v1075
    %1091 = vmatpush.msra.mxu0 %v1072
    %1092 = vmatpush.msra.mxu0 %v1069
    %1093 = vmatpush.msra.mxu0 %v1066
    %1094 = vmatpush.msra.mxu0 %v1063
    %1095 = vmatpush.msra.mxu0 %v1060
    %1096 = vmatpush.msra.mxu0 %v1057
    %1097 = vmatpush.msra.mxu0 %v1054
    %1098 = vmatpush.msra.mxu0 %v1051
    %1099 = vmatpush.msra.mxu0 %v1048
    %1100 = vmatpush.msra.mxu0 %v1045
    %1101 = vmatpush.msra.mxu0 %v1042
    %1102 = vmatpush.msra.mxu0 %v1039
    %1103 = vmatmul.f32.gmra.mxu0 %v1038
    %v1104 = vpop.f32.mrf.mxu0
    %v1105 = vadd.f32 0.0, %v1104
    %1106 = vdwg.mxu0
    %1107 = vmatpush.msra.mxu0 %v1085
    %1108 = vmatpush.msra.mxu0 %v1082
    %1109 = vmatpush.msra.mxu0 %v1079
    %1110 = vmatpush.msra.mxu0 %v1076
    %1111 = vmatpush.msra.mxu0 %v1073
    %1112 = vmatpush.msra.mxu0 %v1070
    %1113 = vmatpush.msra.mxu0 %v1067
    %1114 = vmatpush.msra.mxu0 %v1064
    %1115 = vmatpush.msra.mxu0 %v1061
    %1116 = vmatpush.msra.mxu0 %v1058
    %1117 = vmatpush.msra.mxu0 %v1055
    %1118 = vmatpush.msra.mxu0 %v1052
    %1119 = vmatpush.msra.mxu0 %v1049
    %1120 = vmatpush.msra.mxu0 %v1046
    %1121 = vmatpush.msra.mxu0 %v1043
    %1122 = vmatpush.msra.mxu0 %v1040
    %1123 = vmatmul.f32.gmra.mxu0 %v1038
    %v1124 = vpop.f32.mrf.mxu0
    %v1125 = vadd.f32 0.0, %v1124
    %1126 = vdwg.mxu0
    %1127 = vmatpush.msra.mxu0 %v1086
    %1128 = vmatpush.msra.mxu0 %v1083
    %1129 = vmatpush.msra.mxu0 %v1080
    %1130 = vmatpush.msra.mxu0 %v1077
    %1131 = vmatpush.msra.mxu0 %v1074
    %1132 = vmatpush.msra.mxu0 %v1071
    %1133 = vmatpush.msra.mxu0 %v1068
    %1134 = vmatpush.msra.mxu0 %v1065
    %1135 = vmatpush.msra.mxu0 %v1062
    %1136 = vmatpush.msra.mxu0 %v1059
    %1137 = vmatpush.msra.mxu0 %v1056
    %1138 = vmatpush.msra.mxu0 %v1053
    %1139 = vmatpush.msra.mxu0 %v1050
    %1140 = vmatpush.msra.mxu0 %v1047
    %1141 = vmatpush.msra.mxu0 %v1044
    %1142 = vmatpush.msra.mxu0 %v1041
    %1143 = vmatmul.f32.gmra.mxu0 %v1038
    %v1144 = vpop.f32.mrf.mxu0
    %v1145 = vadd.f32 0.0, %v1144
    %1146 = vdwg.mxu0
    %v1147 = vld [vmem:[#allocation2 + $0x78] sm:$0xff]
    %v1148 = vld [vmem:[#allocation2 + $0x80] sm:$0xff]
    %v1149 = vld [vmem:[#allocation2 + $0x88] sm:$0xff]
    %v1150 = vadd.f32 %v1147, %v1105
    %v1151 = vadd.f32 %v1148, %v1125
    %v1152 = vmul.f32 %v1150, 0.5
    %v1153 = vmul.f32 %v1151, 0.5
    %v1154 = vtanh.pop %v1152
    %v1155 = vtanh.pop %v1153
    %v1156 = vadd.f32 %v1154, 1.0
    %v1157 = vadd.f32 %v1155, 1.0
    %v1158 = vmul.f32 %v1156, 0.5
    %v1159 = vmul.f32 %v1157, 0.5
    %v1160 = vld [vmem:[%s5] sm:$0x1]
    %v1162 = vperm.slane %v1160, 0
    %v1164 = vadd.f32 %v1145, %v1162
    %v1165 = vmul.f32 %v1158, %v1164
    %v1166 = vadd.f32 %v1149, %v1165
    %v1167 = vtanh.pop %v1166
    %v1168 = vsub.f32 1.0, %v1159
    %v1169 = vmul.f32 %v1168, %v1167
    %v1170 = vmul.f32 %v1159, %v1038
    %v1171 = vadd.f32 %v1169, %v1170
    %vm1172 = vcmp.gt.s32.totalorder %v118, 5
    %v1173 = vsel %vm1172, 1, 0
    %1174 = vset.pattern.permute.xlu0 0
    %1175 = vperm.xlu0 %1174, %v1173
    %v1176 = vpop.permute.xlu0 %1175
    %vm1177 = vcmp.eq.s32.totalorder %v1176, 1
    %v1178 = vsel %vm1177, %v1171, 0.0
    %1179 = vst [vmem:[#allocation3 + $0x28] sm:$0xff] %v1178
    %v1180 = vsel %vm1177, %v1171, %v1038
    %v1181 = vld [vmem:[#allocation7] sm:$0xff]
    %v1182 = vld [vmem:[#allocation7 + $0x8] sm:$0xff]
    %v1183 = vld [vmem:[#allocation7 + $0x10] sm:$0xff]
    %v1184 = vld [vmem:[#allocation7 + $0x18] sm:$0xff]
    %v1185 = vld [vmem:[#allocation7 + $0x20] sm:$0xff]
    %v1186 = vld [vmem:[#allocation7 + $0x28] sm:$0xff]
    %v1187 = vld [vmem:[#allocation7 + $0x30] sm:$0xff]
    %v1188 = vld [vmem:[#allocation7 + $0x38] sm:$0xff]
    %v1189 = vld [vmem:[#allocation7 + $0x40] sm:$0xff]
    %v1190 = vld [vmem:[#allocation7 + $0x48] sm:$0xff]
    %v1191 = vld [vmem:[#allocation7 + $0x50] sm:$0xff]
    %v1192 = vld [vmem:[#allocation7 + $0x58] sm:$0xff]
    %v1193 = vld [vmem:[#allocation7 + $0x60] sm:$0xff]
    %v1194 = vld [vmem:[#allocation7 + $0x68] sm:$0xff]
    %v1195 = vld [vmem:[#allocation7 + $0x70] sm:$0xff]
    %v1196 = vld [vmem:[#allocation7 + $0x78] sm:$0xff]
    %v1197 = vld [vmem:[#allocation7 + $0x80] sm:$0xff]
    %v1198 = vld [vmem:[#allocation7 + $0x88] sm:$0xff]
    %v1199 = vld [vmem:[#allocation7 + $0x90] sm:$0xff]
    %v1200 = vld [vmem:[#allocation7 + $0x98] sm:$0xff]
    %v1201 = vld [vmem:[#allocation7 + $0xa0] sm:$0xff]
    %v1202 = vld [vmem:[#allocation7 + $0xa8] sm:$0xff]
    %v1203 = vld [vmem:[#allocation7 + $0xb0] sm:$0xff]
    %v1204 = vld [vmem:[#allocation7 + $0xb8] sm:$0xff]
    %v1205 = vld [vmem:[#allocation7 + $0xc0] sm:$0xff]
    %v1206 = vld [vmem:[#allocation7 + $0xc8] sm:$0xff]
    %v1207 = vld [vmem:[#allocation7 + $0xd0] sm:$0xff]
    %v1208 = vld [vmem:[#allocation7 + $0xd8] sm:$0xff]
    %v1209 = vld [vmem:[#allocation7 + $0xe0] sm:$0xff]
    %v1210 = vld [vmem:[#allocation7 + $0xe8] sm:$0xff]
    %v1211 = vld [vmem:[#allocation7 + $0xf0] sm:$0xff]
    %v1212 = vld [vmem:[#allocation7 + $0xf8] sm:$0xff]
    %v1213 = vld [vmem:[#allocation7 + $0x100] sm:$0xff]
    %v1214 = vld [vmem:[#allocation7 + $0x108] sm:$0xff]
    %v1215 = vld [vmem:[#allocation7 + $0x110] sm:$0xff]
    %v1216 = vld [vmem:[#allocation7 + $0x118] sm:$0xff]
    %v1217 = vld [vmem:[#allocation7 + $0x120] sm:$0xff]
    %v1218 = vld [vmem:[#allocation7 + $0x128] sm:$0xff]
    %v1219 = vld [vmem:[#allocation7 + $0x130] sm:$0xff]
    %v1220 = vld [vmem:[#allocation7 + $0x138] sm:$0xff]
    %v1221 = vld [vmem:[#allocation7 + $0x140] sm:$0xff]
    %v1222 = vld [vmem:[#allocation7 + $0x148] sm:$0xff]
    %v1223 = vld [vmem:[#allocation7 + $0x150] sm:$0xff]
    %v1224 = vld [vmem:[#allocation7 + $0x158] sm:$0xff]
    %v1225 = vld [vmem:[#allocation7 + $0x160] sm:$0xff]
    %v1226 = vld [vmem:[#allocation7 + $0x168] sm:$0xff]
    %v1227 = vld [vmem:[#allocation7 + $0x170] sm:$0xff]
    %v1228 = vld [vmem:[#allocation7 + $0x178] sm:$0xff]
    %1229 = vmatpush.msra.mxu0 %v1226
    %1230 = vmatpush.msra.mxu0 %v1223
    %1231 = vmatpush.msra.mxu0 %v1220
    %1232 = vmatpush.msra.mxu0 %v1217
    %1233 = vmatpush.msra.mxu0 %v1214
    %1234 = vmatpush.msra.mxu0 %v1211
    %1235 = vmatpush.msra.mxu0 %v1208
    %1236 = vmatpush.msra.mxu0 %v1205
    %1237 = vmatpush.msra.mxu0 %v1202
    %1238 = vmatpush.msra.mxu0 %v1199
    %1239 = vmatpush.msra.mxu0 %v1196
    %1240 = vmatpush.msra.mxu0 %v1193
    %1241 = vmatpush.msra.mxu0 %v1190
    %1242 = vmatpush.msra.mxu0 %v1187
    %1243 = vmatpush.msra.mxu0 %v1184
    %1244 = vmatpush.msra.mxu0 %v1181
    %1245 = vmatmul.f32.gmra.mxu0 %v1180
    %v1246 = vpop.f32.mrf.mxu0
    %v1247 = vadd.f32 0.0, %v1246
    %1248 = vdwg.mxu0
    %1249 = vmatpush.msra.mxu0 %v1227
    %1250 = vmatpush.msra.mxu0 %v1224
    %1251 = vmatpush.msra.mxu0 %v1221
    %1252 = vmatpush.msra.mxu0 %v1218
    %1253 = vmatpush.msra.mxu0 %v1215
    %1254 = vmatpush.msra.mxu0 %v1212
    %1255 = vmatpush.msra.mxu0 %v1209
    %1256 = vmatpush.msra.mxu0 %v1206
    %1257 = vmatpush.msra.mxu0 %v1203
    %1258 = vmatpush.msra.mxu0 %v1200
    %1259 = vmatpush.msra.mxu0 %v1197
    %1260 = vmatpush.msra.mxu0 %v1194
    %1261 = vmatpush.msra.mxu0 %v1191
    %1262 = vmatpush.msra.mxu0 %v1188
    %1263 = vmatpush.msra.mxu0 %v1185
    %1264 = vmatpush.msra.mxu0 %v1182
    %1265 = vmatmul.f32.gmra.mxu0 %v1180
    %v1266 = vpop.f32.mrf.mxu0
    %v1267 = vadd.f32 0.0, %v1266
    %1268 = vdwg.mxu0
    %1269 = vmatpush.msra.mxu0 %v1228
    %1270 = vmatpush.msra.mxu0 %v1225
    %1271 = vmatpush.msra.mxu0 %v1222
    %1272 = vmatpush.msra.mxu0 %v1219
    %1273 = vmatpush.msra.mxu0 %v1216
    %1274 = vmatpush.msra.mxu0 %v1213
    %1275 = vmatpush.msra.mxu0 %v1210
    %1276 = vmatpush.msra.mxu0 %v1207
    %1277 = vmatpush.msra.mxu0 %v1204
    %1278 = vmatpush.msra.mxu0 %v1201
    %1279 = vmatpush.msra.mxu0 %v1198
    %1280 = vmatpush.msra.mxu0 %v1195
    %1281 = vmatpush.msra.mxu0 %v1192
    %1282 = vmatpush.msra.mxu0 %v1189
    %1283 = vmatpush.msra.mxu0 %v1186
    %1284 = vmatpush.msra.mxu0 %v1183
    %1285 = vmatmul.f32.gmra.mxu0 %v1180
    %v1286 = vpop.f32.mrf.mxu0
    %v1287 = vadd.f32 0.0, %v1286
    %1288 = vdwg.mxu0
    %v1289 = vld [vmem:[#allocation2 + $0x90] sm:$0xff]
    %v1290 = vld [vmem:[#allocation2 + $0x98] sm:$0xff]
    %v1291 = vld [vmem:[#allocation2 + $0xa0] sm:$0xff]
    %v1292 = vadd.f32 %v1289, %v1247
    %v1293 = vadd.f32 %v1290, %v1267
    %v1294 = vmul.f32 %v1292, 0.5
    %v1295 = vmul.f32 %v1293, 0.5
    %v1296 = vtanh.pop %v1294
    %v1297 = vtanh.pop %v1295
    %v1298 = vadd.f32 %v1296, 1.0
    %v1299 = vadd.f32 %v1297, 1.0
    %v1300 = vmul.f32 %v1298, 0.5
    %v1301 = vmul.f32 %v1299, 0.5
    %v1302 = vld [vmem:[%s5] sm:$0x1]
    %v1304 = vperm.slane %v1302, 0
    %v1306 = vadd.f32 %v1287, %v1304
    %v1307 = vmul.f32 %v1300, %v1306
    %v1308 = vadd.f32 %v1291, %v1307
    %v1309 = vtanh.pop %v1308
    %v1310 = vsub.f32 1.0, %v1301
    %v1311 = vmul.f32 %v1310, %v1309
    %v1312 = vmul.f32 %v1301, %v1180
    %v1313 = vadd.f32 %v1311, %v1312
    %vm1314 = vcmp.gt.s32.totalorder %v118, 6
    %v1315 = vsel %vm1314, 1, 0
    %1316 = vset.pattern.permute.xlu0 0
    %1317 = vperm.xlu0 %1316, %v1315
    %v1318 = vpop.permute.xlu0 %1317
    %vm1319 = vcmp.eq.s32.totalorder %v1318, 1
    %v1320 = vsel %vm1319, %v1313, 0.0
    %1321 = vst [vmem:[#allocation3 + $0x30] sm:$0xff] %v1320
    %v1322 = vsel %vm1319, %v1313, %v1180
    %v1323 = vld [vmem:[#allocation7] sm:$0xff]
    %v1324 = vld [vmem:[#allocation7 + $0x8] sm:$0xff]
    %v1325 = vld [vmem:[#allocation7 + $0x10] sm:$0xff]
    %v1326 = vld [vmem:[#allocation7 + $0x18] sm:$0xff]
    %v1327 = vld [vmem:[#allocation7 + $0x20] sm:$0xff]
    %v1328 = vld [vmem:[#allocation7 + $0x28] sm:$0xff]
    %v1329 = vld [vmem:[#allocation7 + $0x30] sm:$0xff]
    %v1330 = vld [vmem:[#allocation7 + $0x38] sm:$0xff]
    %v1331 = vld [vmem:[#allocation7 + $0x40] sm:$0xff]
    %v1332 = vld [vmem:[#allocation7 + $0x48] sm:$0xff]
    %v1333 = vld [vmem:[#allocation7 + $0x50] sm:$0xff]
    %v1334 = vld [vmem:[#allocation7 + $0x58] sm:$0xff]
    %v1335 = vld [vmem:[#allocation7 + $0x60] sm:$0xff]
    %v1336 = vld [vmem:[#allocation7 + $0x68] sm:$0xff]
    %v1337 = vld [vmem:[#allocation7 + $0x70] sm:$0xff]
    %v1338 = vld [vmem:[#allocation7 + $0x78] sm:$0xff]
    %v1339 = vld [vmem:[#allocation7 + $0x80] sm:$0xff]
    %v1340 = vld [vmem:[#allocation7 + $0x88] sm:$0xff]
    %v1341 = vld [vmem:[#allocation7 + $0x90] sm:$0xff]
    %v1342 = vld [vmem:[#allocation7 + $0x98] sm:$0xff]
    %v1343 = vld [vmem:[#allocation7 + $0xa0] sm:$0xff]
    %v1344 = vld [vmem:[#allocation7 + $0xa8] sm:$0xff]
    %v1345 = vld [vmem:[#allocation7 + $0xb0] sm:$0xff]
    %v1346 = vld [vmem:[#allocation7 + $0xb8] sm:$0xff]
    %v1347 = vld [vmem:[#allocation7 + $0xc0] sm:$0xff]
    %v1348 = vld [vmem:[#allocation7 + $0xc8] sm:$0xff]
    %v1349 = vld [vmem:[#allocation7 + $0xd0] sm:$0xff]
    %v1350 = vld [vmem:[#allocation7 + $0xd8] sm:$0xff]
    %v1351 = vld [vmem:[#allocation7 + $0xe0] sm:$0xff]
    %v1352 = vld [vmem:[#allocation7 + $0xe8] sm:$0xff]
    %v1353 = vld [vmem:[#allocation7 + $0xf0] sm:$0xff]
    %v1354 = vld [vmem:[#allocation7 + $0xf8] sm:$0xff]
    %v1355 = vld [vmem:[#allocation7 + $0x100] sm:$0xff]
    %v1356 = vld [vmem:[#allocation7 + $0x108] sm:$0xff]
    %v1357 = vld [vmem:[#allocation7 + $0x110] sm:$0xff]
    %v1358 = vld [vmem:[#allocation7 + $0x118] sm:$0xff]
    %v1359 = vld [vmem:[#allocation7 + $0x120] sm:$0xff]
    %v1360 = vld [vmem:[#allocation7 + $0x128] sm:$0xff]
    %v1361 = vld [vmem:[#allocation7 + $0x130] sm:$0xff]
    %v1362 = vld [vmem:[#allocation7 + $0x138] sm:$0xff]
    %v1363 = vld [vmem:[#allocation7 + $0x140] sm:$0xff]
    %v1364 = vld [vmem:[#allocation7 + $0x148] sm:$0xff]
    %v1365 = vld [vmem:[#allocation7 + $0x150] sm:$0xff]
    %v1366 = vld [vmem:[#allocation7 + $0x158] sm:$0xff]
    %v1367 = vld [vmem:[#allocation7 + $0x160] sm:$0xff]
    %v1368 = vld [vmem:[#allocation7 + $0x168] sm:$0xff]
    %v1369 = vld [vmem:[#allocation7 + $0x170] sm:$0xff]
    %v1370 = vld [vmem:[#allocation7 + $0x178] sm:$0xff]
    %1371 = vmatpush.msra.mxu0 %v1368
    %1372 = vmatpush.msra.mxu0 %v1365
    %1373 = vmatpush.msra.mxu0 %v1362
    %1374 = vmatpush.msra.mxu0 %v1359
    %1375 = vmatpush.msra.mxu0 %v1356
    %1376 = vmatpush.msra.mxu0 %v1353
    %1377 = vmatpush.msra.mxu0 %v1350
    %1378 = vmatpush.msra.mxu0 %v1347
    %1379 = vmatpush.msra.mxu0 %v1344
    %1380 = vmatpush.msra.mxu0 %v1341
    %1381 = vmatpush.msra.mxu0 %v1338
    %1382 = vmatpush.msra.mxu0 %v1335
    %1383 = vmatpush.msra.mxu0 %v1332
    %1384 = vmatpush.msra.mxu0 %v1329
    %1385 = vmatpush.msra.mxu0 %v1326
    %1386 = vmatpush.msra.mxu0 %v1323
    %1387 = vmatmul.f32.gmra.mxu0 %v1322
    %v1388 = vpop.f32.mrf.mxu0
    %v1389 = vadd.f32 0.0, %v1388
    %1390 = vdwg.mxu0
    %1391 = vmatpush.msra.mxu0 %v1369
    %1392 = vmatpush.msra.mxu0 %v1366
    %1393 = vmatpush.msra.mxu0 %v1363
    %1394 = vmatpush.msra.mxu0 %v1360
    %1395 = vmatpush.msra.mxu0 %v1357
    %1396 = vmatpush.msra.mxu0 %v1354
    %1397 = vmatpush.msra.mxu0 %v1351
    %1398 = vmatpush.msra.mxu0 %v1348
    %1399 = vmatpush.msra.mxu0 %v1345
    %1400 = vmatpush.msra.mxu0 %v1342
    %1401 = vmatpush.msra.mxu0 %v1339
    %1402 = vmatpush.msra.mxu0 %v1336
    %1403 = vmatpush.msra.mxu0 %v1333
    %1404 = vmatpush.msra.mxu0 %v1330
    %1405 = vmatpush.msra.mxu0 %v1327
    %1406 = vmatpush.msra.mxu0 %v1324
    %1407 = vmatmul.f32.gmra.mxu0 %v1322
    %v1408 = vpop.f32.mrf.mxu0
    %v1409 = vadd.f32 0.0, %v1408
    %1410 = vdwg.mxu0
    %1411 = vmatpush.msra.mxu0 %v1370
    %1412 = vmatpush.msra.mxu0 %v1367
    %1413 = vmatpush.msra.mxu0 %v1364
    %1414 = vmatpush.msra.mxu0 %v1361
    %1415 = vmatpush.msra.mxu0 %v1358
    %1416 = vmatpush.msra.mxu0 %v1355
    %1417 = vmatpush.msra.mxu0 %v1352
    %1418 = vmatpush.msra.mxu0 %v1349
    %1419 = vmatpush.msra.mxu0 %v1346
    %1420 = vmatpush.msra.mxu0 %v1343
    %1421 = vmatpush.msra.mxu0 %v1340
    %1422 = vmatpush.msra.mxu0 %v1337
    %1423 = vmatpush.msra.mxu0 %v1334
    %1424 = vmatpush.msra.mxu0 %v1331
    %1425 = vmatpush.msra.mxu0 %v1328
    %1426 = vmatpush.msra.mxu0 %v1325
    %1427 = vmatmul.f32.gmra.mxu0 %v1322
    %v1428 = vpop.f32.mrf.mxu0
    %v1429 = vadd.f32 0.0, %v1428
    %1430 = vdwg.mxu0
    %v1431 = vld [vmem:[#allocation2 + $0xa8] sm:$0xff]
    %v1432 = vld [vmem:[#allocation2 + $0xb0] sm:$0xff]
    %v1433 = vld [vmem:[#allocation2 + $0xb8] sm:$0xff]
    %v1434 = vadd.f32 %v1431, %v1389
    %v1435 = vadd.f32 %v1432, %v1409
    %v1436 = vmul.f32 %v1434, 0.5
    %v1437 = vmul.f32 %v1435, 0.5
    %v1438 = vtanh.pop %v1436
    %v1439 = vtanh.pop %v1437
    %v1440 = vadd.f32 %v1438, 1.0
    %v1441 = vadd.f32 %v1439, 1.0
    %v1442 = vmul.f32 %v1440, 0.5
    %v1443 = vmul.f32 %v1441, 0.5
    %v1444 = vld [vmem:[%s5] sm:$0x1]
    %v1446 = vperm.slane %v1444, 0
    %v1448 = vadd.f32 %v1429, %v1446
    %v1449 = vmul.f32 %v1442, %v1448
    %v1450 = vadd.f32 %v1433, %v1449
    %v1451 = vtanh.pop %v1450
    %v1452 = vsub.f32 1.0, %v1443
    %v1453 = vmul.f32 %v1452, %v1451
    %v1454 = vmul.f32 %v1443, %v1322
    %v1455 = vadd.f32 %v1453, %v1454
    %vm1456 = vcmp.gt.s32.totalorder %v118, 7
    %v1457 = vsel %vm1456, 1, 0
    %1458 = vset.pattern.permute.xlu0 0
    %1459 = vperm.xlu0 %1458, %v1457
    %v1460 = vpop.permute.xlu0 %1459
    %vm1461 = vcmp.eq.s32.totalorder %v1460, 1
    %v1462 = vsel %vm1461, %v1455, 0.0
    %1463 = vst [vmem:[#allocation3 + $0x38] sm:$0xff] %v1462
    %v1464 = vld [vmem:[#allocation3] sm:$0xff]
    %v1465 = vld [vmem:[#allocation3 + $0x8] sm:$0xff]
    %v1466 = vld [vmem:[#allocation3 + $0x10] sm:$0xff]
    %v1467 = vld [vmem:[#allocation3 + $0x18] sm:$0xff]
    %v1468 = vld [vmem:[#allocation3 + $0x20] sm:$0xff]
    %v1469 = vld [vmem:[#allocation3 + $0x28] sm:$0xff]
    %v1470 = vld [vmem:[#allocation3 + $0x30] sm:$0xff]
    %v1471 = vld [vmem:[#allocation3 + $0x38] sm:$0xff]
    %v1472 = vld [vmem:[#allocation9] sm:$0xff]
    %v1473 = vld [vmem:[#allocation9 + $0x8] sm:$0xff]
    %v1474 = vld [vmem:[#allocation9 + $0x10] sm:$0xff]
    %v1475 = vld [vmem:[#allocation9 + $0x18] sm:$0xff]
    %v1476 = vld [vmem:[#allocation9 + $0x20] sm:$0xff]
    %v1477 = vld [vmem:[#allocation9 + $0x28] sm:$0xff]
    %v1478 = vld [vmem:[#allocation9 + $0x30] sm:$0xff]
    %v1479 = vld [vmem:[#allocation9 + $0x38] sm:$0xff]
    %v1480 = vld [vmem:[#allocation9 + $0x40] sm:$0xff]
    %v1481 = vld [vmem:[#allocation9 + $0x48] sm:$0xff]
    %v1482 = vld [vmem:[#allocation9 + $0x50] sm:$0xff]
    %v1483 = vld [vmem:[#allocation9 + $0x58] sm:$0xff]
    %v1484 = vld [vmem:[#allocation9 + $0x60] sm:$0xff]
    %v1485 = vld [vmem:[#allocation9 + $0x68] sm:$0xff]
    %v1486 = vld [vmem:[#allocation9 + $0x70] sm:$0xff]
    %v1487 = vld [vmem:[#allocation9 + $0x78] sm:$0xff]
    %v1488 = vld [vmem:[#allocation9 + $0x80] sm:$0xff]
    %v1489 = vld [vmem:[#allocation9 + $0x88] sm:$0xff]
    %v1490 = vld [vmem:[#allocation9 + $0x90] sm:$0xff]
    %v1491 = vld [vmem:[#allocation9 + $0x98] sm:$0xff]
    %v1492 = vld [vmem:[#allocation9 + $0xa0] sm:$0xff]
    %v1493 = vld [vmem:[#allocation9 + $0xa8] sm:$0xff]
    %v1494 = vld [vmem:[#allocation9 + $0xb0] sm:$0xff]
    %v1495 = vld [vmem:[#allocation9 + $0xb8] sm:$0xff]
    %v1496 = vld [vmem:[#allocation9 + $0xc0] sm:$0xff]
    %v1497 = vld [vmem:[#allocation9 + $0xc8] sm:$0xff]
    %v1498 = vld [vmem:[#allocation9 + $0xd0] sm:$0xff]
    %v1499 = vld [vmem:[#allocation9 + $0xd8] sm:$0xff]
    %v1500 = vld [vmem:[#allocation9 + $0xe0] sm:$0xff]
    %v1501 = vld [vmem:[#allocation9 + $0xe8] sm:$0xff]
    %v1502 = vld [vmem:[#allocation9 + $0xf0] sm:$0xff]
    %v1503 = vld [vmem:[#allocation9 + $0xf8] sm:$0xff]
    %v1504 = vld [vmem:[#allocation9 + $0x100] sm:$0xff]
    %v1505 = vld [vmem:[#allocation9 + $0x108] sm:$0xff]
    %v1506 = vld [vmem:[#allocation9 + $0x110] sm:$0xff]
    %v1507 = vld [vmem:[#allocation9 + $0x118] sm:$0xff]
    %v1508 = vld [vmem:[#allocation9 + $0x120] sm:$0xff]
    %v1509 = vld [vmem:[#allocation9 + $0x128] sm:$0xff]
    %v1510 = vld [vmem:[#allocation9 + $0x130] sm:$0xff]
    %v1511 = vld [vmem:[#allocation9 + $0x138] sm:$0xff]
    %v1512 = vld [vmem:[#allocation9 + $0x140] sm:$0xff]
    %v1513 = vld [vmem:[#allocation9 + $0x148] sm:$0xff]
    %v1514 = vld [vmem:[#allocation9 + $0x150] sm:$0xff]
    %v1515 = vld [vmem:[#allocation9 + $0x158] sm:$0xff]
    %v1516 = vld [vmem:[#allocation9 + $0x160] sm:$0xff]
    %v1517 = vld [vmem:[#allocation9 + $0x168] sm:$0xff]
    %v1518 = vld [vmem:[#allocation9 + $0x170] sm:$0xff]
    %v1519 = vld [vmem:[#allocation9 + $0x178] sm:$0xff]
    %v1520 = vld [vmem:[%s7] sm:$0x7]
    %v1522 = vperm.slane %v1520, 0
    %v1523 = vperm.slane %v1520, 1
    %v1524 = vperm.slane %v1520, 2
    %1528 = vmatpush.msra.mxu0 %v1517
    %1529 = vmatpush.msra.mxu0 %v1514
    %1530 = vmatpush.msra.mxu0 %v1511
    %1531 = vmatpush.msra.mxu0 %v1508
    %1532 = vmatpush.msra.mxu0 %v1505
    %1533 = vmatpush.msra.mxu0 %v1502
    %1534 = vmatpush.msra.mxu0 %v1499
    %1535 = vmatpush.msra.mxu0 %v1496
    %1536 = vmatpush.msra.mxu0 %v1493
    %1537 = vmatpush.msra.mxu0 %v1490
    %1538 = vmatpush.msra.mxu0 %v1487
    %1539 = vmatpush.msra.mxu0 %v1484
    %1540 = vmatpush.msra.mxu0 %v1481
    %1541 = vmatpush.msra.mxu0 %v1478
    %1542 = vmatpush.msra.mxu0 %v1475
    %1543 = vmatpush.msra.mxu0 %v1472
    %1544 = vmatmul.f32.gmra.mxu0 %v1464
    %v1545 = vpop.f32.mrf.mxu0
    %v1546 = vadd.f32 %v1522, %v1545
    %1547 = vmatmul.f32.gmra.mxu0 %v1465
    %v1548 = vpop.f32.mrf.mxu0
    %v1549 = vadd.f32 %v1522, %v1548
    %1550 = vmatmul.f32.gmra.mxu0 %v1466
    %v1551 = vpop.f32.mrf.mxu0
    %v1552 = vadd.f32 %v1522, %v1551
    %1553 = vmatmul.f32.gmra.mxu0 %v1467
    %v1554 = vpop.f32.mrf.mxu0
    %v1555 = vadd.f32 %v1522, %v1554
    %1556 = vmatmul.f32.gmra.mxu0 %v1468
    %v1557 = vpop.f32.mrf.mxu0
    %v1558 = vadd.f32 %v1522, %v1557
    %1559 = vmatmul.f32.gmra.mxu0 %v1469
    %v1560 = vpop.f32.mrf.mxu0
    %v1561 = vadd.f32 %v1522, %v1560
    %1562 = vmatmul.f32.gmra.mxu0 %v1470
    %v1563 = vpop.f32.mrf.mxu0
    %v1564 = vadd.f32 %v1522, %v1563
    %1565 = vmatmul.f32.gmra.mxu0 %v1471
    %v1566 = vpop.f32.mrf.mxu0
    %v1567 = vadd.f32 %v1522, %v1566
    %1568 = vdwg.mxu0
    %1569 = vmatpush.msra.mxu0 %v1518
    %1570 = vmatpush.msra.mxu0 %v1515
    %1571 = vmatpush.msra.mxu0 %v1512
    %1572 = vmatpush.msra.mxu0 %v1509
    %1573 = vmatpush.msra.mxu0 %v1506
    %1574 = vmatpush.msra.mxu0 %v1503
    %1575 = vmatpush.msra.mxu0 %v1500
    %1576 = vmatpush.msra.mxu0 %v1497
    %1577 = vmatpush.msra.mxu0 %v1494
    %1578 = vmatpush.msra.mxu0 %v1491
    %1579 = vmatpush.msra.mxu0 %v1488
    %1580 = vmatpush.msra.mxu0 %v1485
    %1581 = vmatpush.msra.mxu0 %v1482
    %1582 = vmatpush.msra.mxu0 %v1479
    %1583 = vmatpush.msra.mxu0 %v1476
    %1584 = vmatpush.msra.mxu0 %v1473
    %1585 = vmatmul.f32.gmra.mxu0 %v1464
    %v1586 = vpop.f32.mrf.mxu0
    %v1587 = vadd.f32 %v1523, %v1586
    %1588 = vmatmul.f32.gmra.mxu0 %v1465
    %v1589 = vpop.f32.mrf.mxu0
    %v1590 = vadd.f32 %v1523, %v1589
    %1591 = vmatmul.f32.gmra.mxu0 %v1466
    %v1592 = vpop.f32.mrf.mxu0
    %v1593 = vadd.f32 %v1523, %v1592
    %1594 = vmatmul.f32.gmra.mxu0 %v1467
    %v1595 = vpop.f32.mrf.mxu0
    %v1596 = vadd.f32 %v1523, %v1595
    %1597 = vmatmul.f32.gmra.mxu0 %v1468
    %v1598 = vpop.f32.mrf.mxu0
    %v1599 = vadd.f32 %v1523, %v1598
    %1600 = vmatmul.f32.gmra.mxu0 %v1469
    %v1601 = vpop.f32.mrf.mxu0
    %v1602 = vadd.f32 %v1523, %v1601
    %1603 = vmatmul.f32.gmra.mxu0 %v1470
    %v1604 = vpop.f32.mrf.mxu0
    %v1605 = vadd.f32 %v1523, %v1604
    %1606 = vmatmul.f32.gmra.mxu0 %v1471
    %v1607 = vpop.f32.mrf.mxu0
    %v1608 = vadd.f32 %v1523, %v1607
    %1609 = vdwg.mxu0
    %1610 = vmatpush.msra.mxu0 %v1519
    %1611 = vmatpush.msra.mxu0 %v1516
    %1612 = vmatpush.msra.mxu0 %v1513
    %1613 = vmatpush.msra.mxu0 %v1510
    %1614 = vmatpush.msra.mxu0 %v1507
    %1615 = vmatpush.msra.mxu0 %v1504
    %1616 = vmatpush.msra.mxu0 %v1501
    %1617 = vmatpush.msra.mxu0 %v1498
    %1618 = vmatpush.msra.mxu0 %v1495
    %1619 = vmatpush.msra.mxu0 %v1492
    %1620 = vmatpush.msra.mxu0 %v1489
    %1621 = vmatpush.msra.mxu0 %v1486
    %1622 = vmatpush.msra.mxu0 %v1483
    %1623 = vmatpush.msra.mxu0 %v1480
    %1624 = vmatpush.msra.mxu0 %v1477
    %1625 = vmatpush.msra.mxu0 %v1474
    %1626 = vmatmul.f32.gmra.mxu0 %v1464
    %v1627 = vpop.f32.mrf.mxu0
    %v1628 = vadd.f32 %v1524, %v1627
    %1629 = vmatmul.f32.gmra.mxu0 %v1465
    %v1630 = vpop.f32.mrf.mxu0
    %v1631 = vadd.f32 %v1524, %v1630
    %1632 = vmatmul.f32.gmra.mxu0 %v1466
    %v1633 = vpop.f32.mrf.mxu0
    %v1634 = vadd.f32 %v1524, %v1633
    %1635 = vmatmul.f32.gmra.mxu0 %v1467
    %v1636 = vpop.f32.mrf.mxu0
    %v1637 = vadd.f32 %v1524, %v1636
    %1638 = vmatmul.f32.gmra.mxu0 %v1468
    %v1639 = vpop.f32.mrf.mxu0
    %v1640 = vadd.f32 %v1524, %v1639
    %1641 = vmatmul.f32.gmra.mxu0 %v1469
    %v1642 = vpop.f32.mrf.mxu0
    %v1643 = vadd.f32 %v1524, %v1642
    %1644 = vmatmul.f32.gmra.mxu0 %v1470
    %v1645 = vpop.f32.mrf.mxu0
    %v1646 = vadd.f32 %v1524, %v1645
    %1647 = vmatmul.f32.gmra.mxu0 %v1471
    %v1648 = vpop.f32.mrf.mxu0
    %v1649 = vadd.f32 %v1524, %v1648
    %1650 = vdwg.mxu0
    %1651 = vst [vmem:[#allocation2] sm:$0xff] %v1546
    %1652 = vst [vmem:[#allocation2 + $0x8] sm:$0xff] %v1587
    %1653 = vst [vmem:[#allocation2 + $0x10] sm:$0xff] %v1628
    %1654 = vst [vmem:[#allocation2 + $0x18] sm:$0xff] %v1549
    %1655 = vst [vmem:[#allocation2 + $0x20] sm:$0xff] %v1590
    %1656 = vst [vmem:[#allocation2 + $0x28] sm:$0xff] %v1631
    %1657 = vst [vmem:[#allocation2 + $0x30] sm:$0xff] %v1552
    %1658 = vst [vmem:[#allocation2 + $0x38] sm:$0xff] %v1593
    %1659 = vst [vmem:[#allocation2 + $0x40] sm:$0xff] %v1634
    %1660 = vst [vmem:[#allocation2 + $0x48] sm:$0xff] %v1555
    %1661 = vst [vmem:[#allocation2 + $0x50] sm:$0xff] %v1596
    %1662 = vst [vmem:[#allocation2 + $0x58] sm:$0xff] %v1637
    %1663 = vst [vmem:[#allocation2 + $0x60] sm:$0xff] %v1558
    %1664 = vst [vmem:[#allocation2 + $0x68] sm:$0xff] %v1599
    %1665 = vst [vmem:[#allocation2 + $0x70] sm:$0xff] %v1640
    %1666 = vst [vmem:[#allocation2 + $0x78] sm:$0xff] %v1561
    %1667 = vst [vmem:[#allocation2 + $0x80] sm:$0xff] %v1602
    %1668 = vst [vmem:[#allocation2 + $0x88] sm:$0xff] %v1643
    %1669 = vst [vmem:[#allocation2 + $0x90] sm:$0xff] %v1564
    %1670 = vst [vmem:[#allocation2 + $0x98] sm:$0xff] %v1605
    %1671 = vst [vmem:[#allocation2 + $0xa0] sm:$0xff] %v1646
    %1672 = vst [vmem:[#allocation2 + $0xa8] sm:$0xff] %v1567
    %1673 = vst [vmem:[#allocation2 + $0xb0] sm:$0xff] %v1608
    %1674 = vst [vmem:[#allocation2 + $0xb8] sm:$0xff] %v1649
    %v1675 = vld [vmem:[#allocation10] sm:$0xff]
    %v1676 = vld [vmem:[#allocation10 + $0x8] sm:$0xff]
    %v1677 = vld [vmem:[#allocation10 + $0x10] sm:$0xff]
    %v1678 = vld [vmem:[#allocation10 + $0x18] sm:$0xff]
    %v1679 = vld [vmem:[#allocation10 + $0x20] sm:$0xff]
    %v1680 = vld [vmem:[#allocation10 + $0x28] sm:$0xff]
    %v1681 = vld [vmem:[#allocation10 + $0x30] sm:$0xff]
    %v1682 = vld [vmem:[#allocation10 + $0x38] sm:$0xff]
    %v1683 = vld [vmem:[#allocation10 + $0x40] sm:$0xff]
    %v1684 = vld [vmem:[#allocation10 + $0x48] sm:$0xff]
    %v1685 = vld [vmem:[#allocation10 + $0x50] sm:$0xff]
    %v1686 = vld [vmem:[#allocation10 + $0x58] sm:$0xff]
    %v1687 = vld [vmem:[#allocation10 + $0x60] sm:$0xff]
    %v1688 = vld [vmem:[#allocation10 + $0x68] sm:$0xff]
    %v1689 = vld [vmem:[#allocation10 + $0x70] sm:$0xff]
    %v1690 = vld [vmem:[#allocation10 + $0x78] sm:$0xff]
    %v1691 = vld [vmem:[#allocation10 + $0x80] sm:$0xff]
    %v1692 = vld [vmem:[#allocation10 + $0x88] sm:$0xff]
    %v1693 = vld [vmem:[#allocation10 + $0x90] sm:$0xff]
    %v1694 = vld [vmem:[#allocation10 + $0x98] sm:$0xff]
    %v1695 = vld [vmem:[#allocation10 + $0xa0] sm:$0xff]
    %v1696 = vld [vmem:[#allocation10 + $0xa8] sm:$0xff]
    %v1697 = vld [vmem:[#allocation10 + $0xb0] sm:$0xff]
    %v1698 = vld [vmem:[#allocation10 + $0xb8] sm:$0xff]
    %v1699 = vld [vmem:[#allocation10 + $0xc0] sm:$0xff]
    %v1700 = vld [vmem:[#allocation10 + $0xc8] sm:$0xff]
    %v1701 = vld [vmem:[#allocation10 + $0xd0] sm:$0xff]
    %v1702 = vld [vmem:[#allocation10 + $0xd8] sm:$0xff]
    %v1703 = vld [vmem:[#allocation10 + $0xe0] sm:$0xff]
    %v1704 = vld [vmem:[#allocation10 + $0xe8] sm:$0xff]
    %v1705 = vld [vmem:[#allocation10 + $0xf0] sm:$0xff]
    %v1706 = vld [vmem:[#allocation10 + $0xf8] sm:$0xff]
    %v1707 = vld [vmem:[#allocation10 + $0x100] sm:$0xff]
    %v1708 = vld [vmem:[#allocation10 + $0x108] sm:$0xff]
    %v1709 = vld [vmem:[#allocation10 + $0x110] sm:$0xff]
    %v1710 = vld [vmem:[#allocation10 + $0x118] sm:$0xff]
    %v1711 = vld [vmem:[#allocation10 + $0x120] sm:$0xff]
    %v1712 = vld [vmem:[#allocation10 + $0x128] sm:$0xff]
    %v1713 = vld [vmem:[#allocation10 + $0x130] sm:$0xff]
    %v1714 = vld [vmem:[#allocation10 + $0x138] sm:$0xff]
    %v1715 = vld [vmem:[#allocation10 + $0x140] sm:$0xff]
    %v1716 = vld [vmem:[#allocation10 + $0x148] sm:$0xff]
    %v1717 = vld [vmem:[#allocation10 + $0x150] sm:$0xff]
    %v1718 = vld [vmem:[#allocation10 + $0x158] sm:$0xff]
    %v1719 = vld [vmem:[#allocation10 + $0x160] sm:$0xff]
    %v1720 = vld [vmem:[#allocation10 + $0x168] sm:$0xff]
    %v1721 = vld [vmem:[#allocation10 + $0x170] sm:$0xff]
    %v1722 = vld [vmem:[#allocation10 + $0x178] sm:$0xff]
    %1723 = vmatpush.msra.mxu0 %v1720
    %1724 = vmatpush.msra.mxu0 %v1717
    %1725 = vmatpush.msra.mxu0 %v1714
    %1726 = vmatpush.msra.mxu0 %v1711
    %1727 = vmatpush.msra.mxu0 %v1708
    %1728 = vmatpush.msra.mxu0 %v1705
    %1729 = vmatpush.msra.mxu0 %v1702
    %1730 = vmatpush.msra.mxu0 %v1699
    %1731 = vmatpush.msra.mxu0 %v1696
    %1732 = vmatpush.msra.mxu0 %v1693
    %1733 = vmatpush.msra.mxu0 %v1690
    %1734 = vmatpush.msra.mxu0 %v1687
    %1735 = vmatpush.msra.mxu0 %v1684
    %1736 = vmatpush.msra.mxu0 %v1681
    %1737 = vmatpush.msra.mxu0 %v1678
    %1738 = vmatpush.msra.mxu0 %v1675
    %1739 = vmatmul.f32.gmra.mxu0 0.0
    %v1740 = vpop.f32.mrf.mxu0
    %v1741 = vadd.f32 0.0, %v1740
    %1742 = vdwg.mxu0
    %1743 = vmatpush.msra.mxu0 %v1721
    %1744 = vmatpush.msra.mxu0 %v1718
    %1745 = vmatpush.msra.mxu0 %v1715
    %1746 = vmatpush.msra.mxu0 %v1712
    %1747 = vmatpush.msra.mxu0 %v1709
    %1748 = vmatpush.msra.mxu0 %v1706
    %1749 = vmatpush.msra.mxu0 %v1703
    %1750 = vmatpush.msra.mxu0 %v1700
    %1751 = vmatpush.msra.mxu0 %v1697
    %1752 = vmatpush.msra.mxu0 %v1694
    %1753 = vmatpush.msra.mxu0 %v1691
    %1754 = vmatpush.msra.mxu0 %v1688
    %1755 = vmatpush.msra.mxu0 %v1685
    %1756 = vmatpush.msra.mxu0 %v1682
    %1757 = vmatpush.msra.mxu0 %v1679
    %1758 = vmatpush.msra.mxu0 %v1676
    %1759 = vmatmul.f32.gmra.mxu0 0.0
    %v1760 = vpop.f32.mrf.mxu0
    %v1761 = vadd.f32 0.0, %v1760
    %1762 = vdwg.mxu0
    %1763 = vmatpush.msra.mxu0 %v1722
    %1764 = vmatpush.msra.mxu0 %v1719
    %1765 = vmatpush.msra.mxu0 %v1716
    %1766 = vmatpush.msra.mxu0 %v1713
    %1767 = vmatpush.msra.mxu0 %v1710
    %1768 = vmatpush.msra.mxu0 %v1707
    %1769 = vmatpush.msra.mxu0 %v1704
    %1770 = vmatpush.msra.mxu0 %v1701
    %1771 = vmatpush.msra.mxu0 %v1698
    %1772 = vmatpush.msra.mxu0 %v1695
    %1773 = vmatpush.msra.mxu0 %v1692
    %1774 = vmatpush.msra.mxu0 %v1689
    %1775 = vmatpush.msra.mxu0 %v1686
    %1776 = vmatpush.msra.mxu0 %v1683
    %1777 = vmatpush.msra.mxu0 %v1680
    %1778 = vmatpush.msra.mxu0 %v1677
    %1779 = vmatmul.f32.gmra.mxu0 0.0
    %v1780 = vpop.f32.mrf.mxu0
    %v1781 = vadd.f32 0.0, %v1780
    %1782 = vdwg.mxu0
    %v1783 = vld [vmem:[#allocation2] sm:$0xff]
    %v1784 = vld [vmem:[#allocation2 + $0x8] sm:$0xff]
    %v1785 = vld [vmem:[#allocation2 + $0x10] sm:$0xff]
    %v1786 = vadd.f32 %v1783, %v1741
    %v1787 = vadd.f32 %v1784, %v1761
    %v1788 = vmul.f32 %v1786, 0.5
    %v1789 = vmul.f32 %v1787, 0.5
    %v1790 = vtanh.pop %v1788
    %v1791 = vtanh.pop %v1789
    %v1792 = vadd.f32 %v1790, 1.0
    %v1793 = vadd.f32 %v1791, 1.0
    %v1794 = vmul.f32 %v1792, 0.5
    %v1795 = vmul.f32 %v1793, 0.5
    %v1796 = vld [vmem:[%s9] sm:$0x1]
    %v1798 = vperm.slane %v1796, 0
    %v1800 = vadd.f32 %v1781, %v1798
    %v1801 = vmul.f32 %v1794, %v1800
    %v1802 = vadd.f32 %v1785, %v1801
    %v1803 = vtanh.pop %v1802
    %v1804 = vsub.f32 1.0, %v1795
    %v1805 = vmul.f32 %v1804, %v1803
    %v1806 = vmul.f32 %v1795, 0.0
    %v1807 = vadd.f32 %v1805, %v1806
    %v1808 = vsel %vm468, %v1807, 0.0
    %1809 = vmatpush.msra.mxu0 %v1720
    %1810 = vmatpush.msra.mxu0 %v1717
    %1811 = vmatpush.msra.mxu0 %v1714
    %1812 = vmatpush.msra.mxu0 %v1711
    %1813 = vmatpush.msra.mxu0 %v1708
    %1814 = vmatpush.msra.mxu0 %v1705
    %1815 = vmatpush.msra.mxu0 %v1702
    %1816 = vmatpush.msra.mxu0 %v1699
    %1817 = vmatpush.msra.mxu0 %v1696
    %1818 = vmatpush.msra.mxu0 %v1693
    %1819 = vmatpush.msra.mxu0 %v1690
    %1820 = vmatpush.msra.mxu0 %v1687
    %1821 = vmatpush.msra.mxu0 %v1684
    %1822 = vmatpush.msra.mxu0 %v1681
    %1823 = vmatpush.msra.mxu0 %v1678
    %1824 = vmatpush.msra.mxu0 %v1675
    %1825 = vmatmul.f32.gmra.mxu0 %v1808
    %v1826 = vpop.f32.mrf.mxu0
    %v1827 = vadd.f32 0.0, %v1826
    %1828 = vdwg.mxu0
    %1829 = vmatpush.msra.mxu0 %v1721
    %1830 = vmatpush.msra.mxu0 %v1718
    %1831 = vmatpush.msra.mxu0 %v1715
    %1832 = vmatpush.msra.mxu0 %v1712
    %1833 = vmatpush.msra.mxu0 %v1709
    %1834 = vmatpush.msra.mxu0 %v1706
    %1835 = vmatpush.msra.mxu0 %v1703
    %1836 = vmatpush.msra.mxu0 %v1700
    %1837 = vmatpush.msra.mxu0 %v1697
    %1838 = vmatpush.msra.mxu0 %v1694
    %1839 = vmatpush.msra.mxu0 %v1691
    %1840 = vmatpush.msra.mxu0 %v1688
    %1841 = vmatpush.msra.mxu0 %v1685
    %1842 = vmatpush.msra.mxu0 %v1682
    %1843 = vmatpush.msra.mxu0 %v1679
    %1844 = vmatpush.msra.mxu0 %v1676
    %1845 = vmatmul.f32.gmra.mxu0 %v1808
    %v1846 = vpop.f32.mrf.mxu0
    %v1847 = vadd.f32 0.0, %v1846
    %1848 = vdwg.mxu0
    %1849 = vmatpush.msra.mxu0 %v1722
    %1850 = vmatpush.msra.mxu0 %v1719
    %1851 = vmatpush.msra.mxu0 %v1716
    %1852 = vmatpush.msra.mxu0 %v1713
    %1853 = vmatpush.msra.mxu0 %v1710
    %1854 = vmatpush.msra.mxu0 %v1707
    %1855 = vmatpush.msra.mxu0 %v1704
    %1856 = vmatpush.msra.mxu0 %v1701
    %1857 = vmatpush.msra.mxu0 %v1698
    %1858 = vmatpush.msra.mxu0 %v1695
    %1859 = vmatpush.msra.mxu0 %v1692
    %1860 = vmatpush.msra.mxu0 %v1689
    %1861 = vmatpush.msra.mxu0 %v1686
    %1862 = vmatpush.msra.mxu0 %v1683
    %1863 = vmatpush.msra.mxu0 %v1680
    %1864 = vmatpush.msra.mxu0 %v1677
    %1865 = vmatmul.f32.gmra.mxu0 %v1808
    %v1866 = vpop.f32.mrf.mxu0
    %v1867 = vadd.f32 0.0, %v1866
    %1868 = vdwg.mxu0
    %v1869 = vld [vmem:[#allocation2 + $0x18] sm:$0xff]
    %v1870 = vld [vmem:[#allocation2 + $0x20] sm:$0xff]
    %v1871 = vld [vmem:[#allocation2 + $0x28] sm:$0xff]
    %v1872 = vadd.f32 %v1869, %v1827
    %v1873 = vadd.f32 %v1870, %v1847
    %v1874 = vmul.f32 %v1872, 0.5
    %v1875 = vmul.f32 %v1873, 0.5
    %v1876 = vtanh.pop %v1874
    %v1877 = vtanh.pop %v1875
    %v1878 = vadd.f32 %v1876, 1.0
    %v1879 = vadd.f32 %v1877, 1.0
    %v1880 = vmul.f32 %v1878, 0.5
    %v1881 = vmul.f32 %v1879, 0.5
    %v1882 = vadd.f32 %v1867, %v1798
    %v1883 = vmul.f32 %v1880, %v1882
    %v1884 = vadd.f32 %v1871, %v1883
    %v1885 = vtanh.pop %v1884
    %v1886 = vsub.f32 1.0, %v1881
    %v1887 = vmul.f32 %v1886, %v1885
    %v1888 = vmul.f32 %v1881, %v1808
    %v1889 = vadd.f32 %v1887, %v1888
    %v1890 = vsel %vm609, %v1889, %v1808
    %1891 = vmatpush.msra.mxu0 %v1720
    %1892 = vmatpush.msra.mxu0 %v1717
    %1893 = vmatpush.msra.mxu0 %v1714
    %1894 = vmatpush.msra.mxu0 %v1711
    %1895 = vmatpush.msra.mxu0 %v1708
    %1896 = vmatpush.msra.mxu0 %v1705
    %1897 = vmatpush.msra.mxu0 %v1702
    %1898 = vmatpush.msra.mxu0 %v1699
    %1899 = vmatpush.msra.mxu0 %v1696
    %1900 = vmatpush.msra.mxu0 %v1693
    %1901 = vmatpush.msra.mxu0 %v1690
    %1902 = vmatpush.msra.mxu0 %v1687
    %1903 = vmatpush.msra.mxu0 %v1684
    %1904 = vmatpush.msra.mxu0 %v1681
    %1905 = vmatpush.msra.mxu0 %v1678
    %1906 = vmatpush.msra.mxu0 %v1675
    %1907 = vmatmul.f32.gmra.mxu0 %v1890
    %v1908 = vpop.f32.mrf.mxu0
    %v1909 = vadd.f32 0.0, %v1908
    %1910 = vdwg.mxu0
    %1911 = vmatpush.msra.mxu0 %v1721
    %1912 = vmatpush.msra.mxu0 %v1718
    %1913 = vmatpush.msra.mxu0 %v1715
    %1914 = vmatpush.msra.mxu0 %v1712
    %1915 = vmatpush.msra.mxu0 %v1709
    %1916 = vmatpush.msra.mxu0 %v1706
    %1917 = vmatpush.msra.mxu0 %v1703
    %1918 = vmatpush.msra.mxu0 %v1700
    %1919 = vmatpush.msra.mxu0 %v1697
    %1920 = vmatpush.msra.mxu0 %v1694
    %1921 = vmatpush.msra.mxu0 %v1691
    %1922 = vmatpush.msra.mxu0 %v1688
    %1923 = vmatpush.msra.mxu0 %v1685
    %1924 = vmatpush.msra.mxu0 %v1682
    %1925 = vmatpush.msra.mxu0 %v1679
    %1926 = vmatpush.msra.mxu0 %v1676
    %1927 = vmatmul.f32.gmra.mxu0 %v1890
    %v1928 = vpop.f32.mrf.mxu0
    %v1929 = vadd.f32 0.0, %v1928
    %1930 = vdwg.mxu0
    %1931 = vmatpush.msra.mxu0 %v1722
    %1932 = vmatpush.msra.mxu0 %v1719
    %1933 = vmatpush.msra.mxu0 %v1716
    %1934 = vmatpush.msra.mxu0 %v1713
    %1935 = vmatpush.msra.mxu0 %v1710
    %1936 = vmatpush.msra.mxu0 %v1707
    %1937 = vmatpush.msra.mxu0 %v1704
    %1938 = vmatpush.msra.mxu0 %v1701
    %1939 = vmatpush.msra.mxu0 %v1698
    %1940 = vmatpush.msra.mxu0 %v1695
    %1941 = vmatpush.msra.mxu0 %v1692
    %1942 = vmatpush.msra.mxu0 %v1689
    %1943 = vmatpush.msra.mxu0 %v1686
    %1944 = vmatpush.msra.mxu0 %v1683
    %1945 = vmatpush.msra.mxu0 %v1680
    %1946 = vmatpush.msra.mxu0 %v1677
    %1947 = vmatmul.f32.gmra.mxu0 %v1890
    %v1948 = vpop.f32.mrf.mxu0
    %v1949 = vadd.f32 0.0, %v1948
    %1950 = vdwg.mxu0
    %v1951 = vld [vmem:[#allocation2 + $0x30] sm:$0xff]
    %v1952 = vld [vmem:[#allocation2 + $0x38] sm:$0xff]
    %v1953 = vld [vmem:[#allocation2 + $0x40] sm:$0xff]
    %v1954 = vadd.f32 %v1951, %v1909
    %v1955 = vadd.f32 %v1952, %v1929
    %v1956 = vmul.f32 %v1954, 0.5
    %v1957 = vmul.f32 %v1955, 0.5
    %v1958 = vtanh.pop %v1956
    %v1959 = vtanh.pop %v1957
    %v1960 = vadd.f32 %v1958, 1.0
    %v1961 = vadd.f32 %v1959, 1.0
    %v1962 = vmul.f32 %v1960, 0.5
    %v1963 = vmul.f32 %v1961, 0.5
    %v1964 = vadd.f32 %v1949, %v1798
    %v1965 = vmul.f32 %v1962, %v1964
    %v1966 = vadd.f32 %v1953, %v1965
    %v1967 = vtanh.pop %v1966
    %v1968 = vsub.f32 1.0, %v1963
    %v1969 = vmul.f32 %v1968, %v1967
    %v1970 = vmul.f32 %v1963, %v1890
    %v1971 = vadd.f32 %v1969, %v1970
    %v1972 = vsel %vm751, %v1971, %v1890
    %1973 = vmatpush.msra.mxu0 %v1720
    %1974 = vmatpush.msra.mxu0 %v1717
    %1975 = vmatpush.msra.mxu0 %v1714
    %1976 = vmatpush.msra.mxu0 %v1711
    %1977 = vmatpush.msra.mxu0 %v1708
    %1978 = vmatpush.msra.mxu0 %v1705
    %1979 = vmatpush.msra.mxu0 %v1702
    %1980 = vmatpush.msra.mxu0 %v1699
    %1981 = vmatpush.msra.mxu0 %v1696
    %1982 = vmatpush.msra.mxu0 %v1693
    %1983 = vmatpush.msra.mxu0 %v1690
    %1984 = vmatpush.msra.mxu0 %v1687
    %1985 = vmatpush.msra.mxu0 %v1684
    %1986 = vmatpush.msra.mxu0 %v1681
    %1987 = vmatpush.msra.mxu0 %v1678
    %1988 = vmatpush.msra.mxu0 %v1675
    %1989 = vmatmul.f32.gmra.mxu0 %v1972
    %v1990 = vpop.f32.mrf.mxu0
    %v1991 = vadd.f32 0.0, %v1990
    %1992 = vdwg.mxu0
    %1993 = vmatpush.msra.mxu0 %v1721
    %1994 = vmatpush.msra.mxu0 %v1718
    %1995 = vmatpush.msra.mxu0 %v1715
    %1996 = vmatpush.msra.mxu0 %v1712
    %1997 = vmatpush.msra.mxu0 %v1709
    %1998 = vmatpush.msra.mxu0 %v1706
    %1999 = vmatpush.msra.mxu0 %v1703
    %2000 = vmatpush.msra.mxu0 %v1700
    %2001 = vmatpush.msra.mxu0 %v1697
    %2002 = vmatpush.msra.mxu0 %v1694
    %2003 = vmatpush.msra.mxu0 %v1691
    %2004 = vmatpush.msra.mxu0 %v1688
    %2005 = vmatpush.msra.mxu0 %v1685
    %2006 = vmatpush.msra.mxu0 %v1682
    %2007 = vmatpush.msra.mxu0 %v1679
    %2008 = vmatpush.msra.mxu0 %v1676
    %2009 = vmatmul.f32.gmra.mxu0 %v1972
    %v2010 = vpop.f32.mrf.mxu0
    %v2011 = vadd.f32 0.0, %v2010
    %2012 = vdwg.mxu0
    %2013 = vmatpush.msra.mxu0 %v1722
    %2014 = vmatpush.msra.mxu0 %v1719
    %2015 = vmatpush.msra.mxu0 %v1716
    %2016 = vmatpush.msra.mxu0 %v1713
    %2017 = vmatpush.msra.mxu0 %v1710
    %2018 = vmatpush.msra.mxu0 %v1707
    %2019 = vmatpush.msra.mxu0 %v1704
    %2020 = vmatpush.msra.mxu0 %v1701
    %2021 = vmatpush.msra.mxu0 %v1698
    %2022 = vmatpush.msra.mxu0 %v1695
    %2023 = vmatpush.msra.mxu0 %v1692
    %2024 = vmatpush.msra.mxu0 %v1689
    %2025 = vmatpush.msra.mxu0 %v1686
    %2026 = vmatpush.msra.mxu0 %v1683
    %2027 = vmatpush.msra.mxu0 %v1680
    %2028 = vmatpush.msra.mxu0 %v1677
    %2029 = vmatmul.f32.gmra.mxu0 %v1972
    %v2030 = vpop.f32.mrf.mxu0
    %v2031 = vadd.f32 0.0, %v2030
    %2032 = vdwg.mxu0
    %v2033 = vld [vmem:[#allocation2 + $0x48] sm:$0xff]
    %v2034 = vld [vmem:[#allocation2 + $0x50] sm:$0xff]
    %v2035 = vld [vmem:[#allocation2 + $0x58] sm:$0xff]
    %v2036 = vadd.f32 %v2033, %v1991
    %v2037 = vadd.f32 %v2034, %v2011
    %v2038 = vmul.f32 %v2036, 0.5
    %v2039 = vmul.f32 %v2037, 0.5
    %v2040 = vtanh.pop %v2038
    %v2041 = vtanh.pop %v2039
    %v2042 = vadd.f32 %v2040, 1.0
    %v2043 = vadd.f32 %v2041, 1.0
    %v2044 = vmul.f32 %v2042, 0.5
    %v2045 = vmul.f32 %v2043, 0.5
    %v2046 = vadd.f32 %v2031, %v1798
    %v2047 = vmul.f32 %v2044, %v2046
    %v2048 = vadd.f32 %v2035, %v2047
    %v2049 = vtanh.pop %v2048
    %v2050 = vsub.f32 1.0, %v2045
    %v2051 = vmul.f32 %v2050, %v2049
    %v2052 = vmul.f32 %v2045, %v1972
    %v2053 = vadd.f32 %v2051, %v2052
    %v2054 = vsel %vm893, %v2053, %v1972
    %2055 = vmatpush.msra.mxu0 %v1720
    %2056 = vmatpush.msra.mxu0 %v1717
    %2057 = vmatpush.msra.mxu0 %v1714
    %2058 = vmatpush.msra.mxu0 %v1711
    %2059 = vmatpush.msra.mxu0 %v1708
    %2060 = vmatpush.msra.mxu0 %v1705
    %2061 = vmatpush.msra.mxu0 %v1702
    %2062 = vmatpush.msra.mxu0 %v1699
    %2063 = vmatpush.msra.mxu0 %v1696
    %2064 = vmatpush.msra.mxu0 %v1693
    %2065 = vmatpush.msra.mxu0 %v1690
    %2066 = vmatpush.msra.mxu0 %v1687
    %2067 = vmatpush.msra.mxu0 %v1684
    %2068 = vmatpush.msra.mxu0 %v1681
    %2069 = vmatpush.msra.mxu0 %v1678
    %2070 = vmatpush.msra.mxu0 %v1675
    %2071 = vmatmul.f32.gmra.mxu0 %v2054
    %v2072 = vpop.f32.mrf.mxu0
    %v2073 = vadd.f32 0.0, %v2072
    %2074 = vdwg.mxu0
    %2075 = vmatpush.msra.mxu0 %v1721
    %2076 = vmatpush.msra.mxu0 %v1718
    %2077 = vmatpush.msra.mxu0 %v1715
    %2078 = vmatpush.msra.mxu0 %v1712
    %2079 = vmatpush.msra.mxu0 %v1709
    %2080 = vmatpush.msra.mxu0 %v1706
    %2081 = vmatpush.msra.mxu0 %v1703
    %2082 = vmatpush.msra.mxu0 %v1700
    %2083 = vmatpush.msra.mxu0 %v1697
    %2084 = vmatpush.msra.mxu0 %v1694
    %2085 = vmatpush.msra.mxu0 %v1691
    %2086 = vmatpush.msra.mxu0 %v1688
    %2087 = vmatpush.msra.mxu0 %v1685
    %2088 = vmatpush.msra.mxu0 %v1682
    %2089 = vmatpush.msra.mxu0 %v1679
    %2090 = vmatpush.msra.mxu0 %v1676
    %2091 = vmatmul.f32.gmra.mxu0 %v2054
    %v2092 = vpop.f32.mrf.mxu0
    %v2093 = vadd.f32 0.0, %v2092
    %2094 = vdwg.mxu0
    %2095 = vmatpush.msra.mxu0 %v1722
    %2096 = vmatpush.msra.mxu0 %v1719
    %2097 = vmatpush.msra.mxu0 %v1716
    %2098 = vmatpush.msra.mxu0 %v1713
    %2099 = vmatpush.msra.mxu0 %v1710
    %2100 = vmatpush.msra.mxu0 %v1707
    %2101 = vmatpush.msra.mxu0 %v1704
    %2102 = vmatpush.msra.mxu0 %v1701
    %2103 = vmatpush.msra.mxu0 %v1698
    %2104 = vmatpush.msra.mxu0 %v1695
    %2105 = vmatpush.msra.mxu0 %v1692
    %2106 = vmatpush.msra.mxu0 %v1689
    %2107 = vmatpush.msra.mxu0 %v1686
    %2108 = vmatpush.msra.mxu0 %v1683
    %2109 = vmatpush.msra.mxu0 %v1680
    %2110 = vmatpush.msra.mxu0 %v1677
    %2111 = vmatmul.f32.gmra.mxu0 %v2054
    %v2112 = vpop.f32.mrf.mxu0
    %v2113 = vadd.f32 0.0, %v2112
    %2114 = vdwg.mxu0
    %v2115 = vld [vmem:[#allocation2 + $0x60] sm:$0xff]
    %v2116 = vld [vmem:[#allocation2 + $0x68] sm:$0xff]
    %v2117 = vld [vmem:[#allocation2 + $0x70] sm:$0xff]
    %v2118 = vadd.f32 %v2115, %v2073
    %v2119 = vadd.f32 %v2116, %v2093
    %v2120 = vmul.f32 %v2118, 0.5
    %v2121 = vmul.f32 %v2119, 0.5
    %v2122 = vtanh.pop %v2120
    %v2123 = vtanh.pop %v2121
    %v2124 = vadd.f32 %v2122, 1.0
    %v2125 = vadd.f32 %v2123, 1.0
    %v2126 = vmul.f32 %v2124, 0.5
    %v2127 = vmul.f32 %v2125, 0.5
    %v2128 = vadd.f32 %v2113, %v1798
    %v2129 = vmul.f32 %v2126, %v2128
    %v2130 = vadd.f32 %v2117, %v2129
    %v2131 = vtanh.pop %v2130
    %v2132 = vsub.f32 1.0, %v2127
    %v2133 = vmul.f32 %v2132, %v2131
    %v2134 = vmul.f32 %v2127, %v2054
    %v2135 = vadd.f32 %v2133, %v2134
    %v2136 = vsel %vm1035, %v2135, %v2054
    %2137 = vmatpush.msra.mxu0 %v1720
    %2138 = vmatpush.msra.mxu0 %v1717
    %2139 = vmatpush.msra.mxu0 %v1714
    %2140 = vmatpush.msra.mxu0 %v1711
    %2141 = vmatpush.msra.mxu0 %v1708
    %2142 = vmatpush.msra.mxu0 %v1705
    %2143 = vmatpush.msra.mxu0 %v1702
    %2144 = vmatpush.msra.mxu0 %v1699
    %2145 = vmatpush.msra.mxu0 %v1696
    %2146 = vmatpush.msra.mxu0 %v1693
    %2147 = vmatpush.msra.mxu0 %v1690
    %2148 = vmatpush.msra.mxu0 %v1687
    %2149 = vmatpush.msra.mxu0 %v1684
    %2150 = vmatpush.msra.mxu0 %v1681
    %2151 = vmatpush.msra.mxu0 %v1678
    %2152 = vmatpush.msra.mxu0 %v1675
    %2153 = vmatmul.f32.gmra.mxu0 %v2136
    %v2154 = vpop.f32.mrf.mxu0
    %v2155 = vadd.f32 0.0, %v2154
    %2156 = vdwg.mxu0
    %2157 = vmatpush.msra.mxu0 %v1721
    %2158 = vmatpush.msra.mxu0 %v1718
    %2159 = vmatpush.msra.mxu0 %v1715
    %2160 = vmatpush.msra.mxu0 %v1712
    %2161 = vmatpush.msra.mxu0 %v1709
    %2162 = vmatpush.msra.mxu0 %v1706
    %2163 = vmatpush.msra.mxu0 %v1703
    %2164 = vmatpush.msra.mxu0 %v1700
    %2165 = vmatpush.msra.mxu0 %v1697
    %2166 = vmatpush.msra.mxu0 %v1694
    %2167 = vmatpush.msra.mxu0 %v1691
    %2168 = vmatpush.msra.mxu0 %v1688
    %2169 = vmatpush.msra.mxu0 %v1685
    %2170 = vmatpush.msra.mxu0 %v1682
    %2171 = vmatpush.msra.mxu0 %v1679
    %2172 = vmatpush.msra.mxu0 %v1676
    %2173 = vmatmul.f32.gmra.mxu0 %v2136
    %v2174 = vpop.f32.mrf.mxu0
    %v2175 = vadd.f32 0.0, %v2174
    %2176 = vdwg.mxu0
    %2177 = vmatpush.msra.mxu0 %v1722
    %2178 = vmatpush.msra.mxu0 %v1719
    %2179 = vmatpush.msra.mxu0 %v1716
    %2180 = vmatpush.msra.mxu0 %v1713
    %2181 = vmatpush.msra.mxu0 %v1710
    %2182 = vmatpush.msra.mxu0 %v1707
    %2183 = vmatpush.msra.mxu0 %v1704
    %2184 = vmatpush.msra.mxu0 %v1701
    %2185 = vmatpush.msra.mxu0 %v1698
    %2186 = vmatpush.msra.mxu0 %v1695
    %2187 = vmatpush.msra.mxu0 %v1692
    %2188 = vmatpush.msra.mxu0 %v1689
    %2189 = vmatpush.msra.mxu0 %v1686
    %2190 = vmatpush.msra.mxu0 %v1683
    %2191 = vmatpush.msra.mxu0 %v1680
    %2192 = vmatpush.msra.mxu0 %v1677
    %2193 = vmatmul.f32.gmra.mxu0 %v2136
    %v2194 = vpop.f32.mrf.mxu0
    %v2195 = vadd.f32 0.0, %v2194
    %2196 = vdwg.mxu0
    %v2197 = vld [vmem:[#allocation2 + $0x78] sm:$0xff]
    %v2198 = vld [vmem:[#allocation2 + $0x80] sm:$0xff]
    %v2199 = vld [vmem:[#allocation2 + $0x88] sm:$0xff]
    %v2200 = vadd.f32 %v2197, %v2155
    %v2201 = vadd.f32 %v2198, %v2175
    %v2202 = vmul.f32 %v2200, 0.5
    %v2203 = vmul.f32 %v2201, 0.5
    %v2204 = vtanh.pop %v2202
    %v2205 = vtanh.pop %v2203
    %v2206 = vadd.f32 %v2204, 1.0
    %v2207 = vadd.f32 %v2205, 1.0
    %v2208 = vmul.f32 %v2206, 0.5
    %v2209 = vmul.f32 %v2207, 0.5
    %v2210 = vadd.f32 %v2195, %v1798
    %v2211 = vmul.f32 %v2208, %v2210
    %v2212 = vadd.f32 %v2199, %v2211
    %v2213 = vtanh.pop %v2212
    %v2214 = vsub.f32 1.0, %v2209
    %v2215 = vmul.f32 %v2214, %v2213
    %v2216 = vmul.f32 %v2209, %v2136
    %v2217 = vadd.f32 %v2215, %v2216
    %v2218 = vsel %vm1177, %v2217, %v2136
    %2219 = vmatpush.msra.mxu0 %v1720
    %2220 = vmatpush.msra.mxu0 %v1717
    %2221 = vmatpush.msra.mxu0 %v1714
    %2222 = vmatpush.msra.mxu0 %v1711
    %2223 = vmatpush.msra.mxu0 %v1708
    %2224 = vmatpush.msra.mxu0 %v1705
    %2225 = vmatpush.msra.mxu0 %v1702
    %2226 = vmatpush.msra.mxu0 %v1699
    %2227 = vmatpush.msra.mxu0 %v1696
    %2228 = vmatpush.msra.mxu0 %v1693
    %2229 = vmatpush.msra.mxu0 %v1690
    %2230 = vmatpush.msra.mxu0 %v1687
    %2231 = vmatpush.msra.mxu0 %v1684
    %2232 = vmatpush.msra.mxu0 %v1681
    %2233 = vmatpush.msra.mxu0 %v1678
    %2234 = vmatpush.msra.mxu0 %v1675
    %2235 = vmatmul.f32.gmra.mxu0 %v2218
    %v2236 = vpop.f32.mrf.mxu0
    %v2237 = vadd.f32 0.0, %v2236
    %2238 = vdwg.mxu0
    %2239 = vmatpush.msra.mxu0 %v1721
    %2240 = vmatpush.msra.mxu0 %v1718
    %2241 = vmatpush.msra.mxu0 %v1715
    %2242 = vmatpush.msra.mxu0 %v1712
    %2243 = vmatpush.msra.mxu0 %v1709
    %2244 = vmatpush.msra.mxu0 %v1706
    %2245 = vmatpush.msra.mxu0 %v1703
    %2246 = vmatpush.msra.mxu0 %v1700
    %2247 = vmatpush.msra.mxu0 %v1697
    %2248 = vmatpush.msra.mxu0 %v1694
    %2249 = vmatpush.msra.mxu0 %v1691
    %2250 = vmatpush.msra.mxu0 %v1688
    %2251 = vmatpush.msra.mxu0 %v1685
    %2252 = vmatpush.msra.mxu0 %v1682
    %2253 = vmatpush.msra.mxu0 %v1679
    %2254 = vmatpush.msra.mxu0 %v1676
    %2255 = vmatmul.f32.gmra.mxu0 %v2218
    %v2256 = vpop.f32.mrf.mxu0
    %v2257 = vadd.f32 0.0, %v2256
    %2258 = vdwg.mxu0
    %2259 = vmatpush.msra.mxu0 %v1722
    %2260 = vmatpush.msra.mxu0 %v1719
    %2261 = vmatpush.msra.mxu0 %v1716
    %2262 = vmatpush.msra.mxu0 %v1713
    %2263 = vmatpush.msra.mxu0 %v1710
    %2264 = vmatpush.msra.mxu0 %v1707
    %2265 = vmatpush.msra.mxu0 %v1704
    %2266 = vmatpush.msra.mxu0 %v1701
    %2267 = vmatpush.msra.mxu0 %v1698
    %2268 = vmatpush.msra.mxu0 %v1695
    %2269 = vmatpush.msra.mxu0 %v1692
    %2270 = vmatpush.msra.mxu0 %v1689
    %2271 = vmatpush.msra.mxu0 %v1686
    %2272 = vmatpush.msra.mxu0 %v1683
    %2273 = vmatpush.msra.mxu0 %v1680
    %2274 = vmatpush.msra.mxu0 %v1677
    %2275 = vmatmul.f32.gmra.mxu0 %v2218
    %v2276 = vpop.f32.mrf.mxu0
    %v2277 = vadd.f32 0.0, %v2276
    %2278 = vdwg.mxu0
    %v2279 = vld [vmem:[#allocation2 + $0x90] sm:$0xff]
    %v2280 = vld [vmem:[#allocation2 + $0x98] sm:$0xff]
    %v2281 = vld [vmem:[#allocation2 + $0xa0] sm:$0xff]
    %v2282 = vadd.f32 %v2279, %v2237
    %v2283 = vadd.f32 %v2280, %v2257
    %v2284 = vmul.f32 %v2282, 0.5
    %v2285 = vmul.f32 %v2283, 0.5
    %v2286 = vtanh.pop %v2284
    %v2287 = vtanh.pop %v2285
    %v2288 = vadd.f32 %v2286, 1.0
    %v2289 = vadd.f32 %v2287, 1.0
    %v2290 = vmul.f32 %v2288, 0.5
    %v2291 = vmul.f32 %v2289, 0.5
    %v2292 = vadd.f32 %v2277, %v1798
    %v2293 = vmul.f32 %v2290, %v2292
    %v2294 = vadd.f32 %v2281, %v2293
    %v2295 = vtanh.pop %v2294
    %v2296 = vsub.f32 1.0, %v2291
    %v2297 = vmul.f32 %v2296, %v2295
    %v2298 = vmul.f32 %v2291, %v2218
    %v2299 = vadd.f32 %v2297, %v2298
    %v2300 = vsel %vm1319, %v2299, %v2218
    %2301 = vmatpush.msra.mxu0 %v1720
    %2302 = vmatpush.msra.mxu0 %v1717
    %2303 = vmatpush.msra.mxu0 %v1714
    %2304 = vmatpush.msra.mxu0 %v1711
    %2305 = vmatpush.msra.mxu0 %v1708
    %2306 = vmatpush.msra.mxu0 %v1705
    %2307 = vmatpush.msra.mxu0 %v1702
    %2308 = vmatpush.msra.mxu0 %v1699
    %2309 = vmatpush.msra.mxu0 %v1696
    %2310 = vmatpush.msra.mxu0 %v1693
    %2311 = vmatpush.msra.mxu0 %v1690
    %2312 = vmatpush.msra.mxu0 %v1687
    %2313 = vmatpush.msra.mxu0 %v1684
    %2314 = vmatpush.msra.mxu0 %v1681
    %2315 = vmatpush.msra.mxu0 %v1678
    %2316 = vmatpush.msra.mxu0 %v1675
    %2317 = vmatmul.f32.gmra.mxu0 %v2300
    %v2318 = vpop.f32.mrf.mxu0
    %v2319 = vadd.f32 0.0, %v2318
    %2320 = vdwg.mxu0
    %2321 = vmatpush.msra.mxu0 %v1721
    %2322 = vmatpush.msra.mxu0 %v1718
    %2323 = vmatpush.msra.mxu0 %v1715
    %2324 = vmatpush.msra.mxu0 %v1712
    %2325 = vmatpush.msra.mxu0 %v1709
    %2326 = vmatpush.msra.mxu0 %v1706
    %2327 = vmatpush.msra.mxu0 %v1703
    %2328 = vmatpush.msra.mxu0 %v1700
    %2329 = vmatpush.msra.mxu0 %v1697
    %2330 = vmatpush.msra.mxu0 %v1694
    %2331 = vmatpush.msra.mxu0 %v1691
    %2332 = vmatpush.msra.mxu0 %v1688
    %2333 = vmatpush.msra.mxu0 %v1685
    %2334 = vmatpush.msra.mxu0 %v1682
    %2335 = vmatpush.msra.mxu0 %v1679
    %2336 = vmatpush.msra.mxu0 %v1676
    %2337 = vmatmul.f32.gmra.mxu0 %v2300
    %v2338 = vpop.f32.mrf.mxu0
    %v2339 = vadd.f32 0.0, %v2338
    %2340 = vdwg.mxu0
    %2341 = vmatpush.msra.mxu0 %v1722
    %2342 = vmatpush.msra.mxu0 %v1719
    %2343 = vmatpush.msra.mxu0 %v1716
    %2344 = vmatpush.msra.mxu0 %v1713
    %2345 = vmatpush.msra.mxu0 %v1710
    %2346 = vmatpush.msra.mxu0 %v1707
    %2347 = vmatpush.msra.mxu0 %v1704
    %2348 = vmatpush.msra.mxu0 %v1701
    %2349 = vmatpush.msra.mxu0 %v1698
    %2350 = vmatpush.msra.mxu0 %v1695
    %2351 = vmatpush.msra.mxu0 %v1692
    %2352 = vmatpush.msra.mxu0 %v1689
    %2353 = vmatpush.msra.mxu0 %v1686
    %2354 = vmatpush.msra.mxu0 %v1683
    %2355 = vmatpush.msra.mxu0 %v1680
    %2356 = vmatpush.msra.mxu0 %v1677
    %2357 = vmatmul.f32.gmra.mxu0 %v2300
    %v2358 = vpop.f32.mrf.mxu0
    %v2359 = vadd.f32 0.0, %v2358
    %2360 = vdwg.mxu0
    %v2361 = vld [vmem:[#allocation2 + $0xa8] sm:$0xff]
    %v2362 = vld [vmem:[#allocation2 + $0xb0] sm:$0xff]
    %v2363 = vld [vmem:[#allocation2 + $0xb8] sm:$0xff]
    %v2364 = vadd.f32 %v2361, %v2319
    %v2365 = vadd.f32 %v2362, %v2339
    %v2366 = vmul.f32 %v2364, 0.5
    %v2367 = vmul.f32 %v2365, 0.5
    %v2368 = vtanh.pop %v2366
    %v2369 = vtanh.pop %v2367
    %v2370 = vadd.f32 %v2368, 1.0
    %v2371 = vadd.f32 %v2369, 1.0
    %v2372 = vmul.f32 %v2370, 0.5
    %v2373 = vmul.f32 %v2371, 0.5
    %v2374 = vadd.f32 %v2359, %v1798
    %v2375 = vmul.f32 %v2372, %v2374
    %v2376 = vadd.f32 %v2363, %v2375
    %v2377 = vtanh.pop %v2376
    %v2378 = vsub.f32 1.0, %v2373
    %v2379 = vmul.f32 %v2378, %v2377
    %v2380 = vmul.f32 %v2373, %v2300
    %v2381 = vadd.f32 %v2379, %v2380
    %v2382 = vsel %vm1461, %v2381, %v2300
    %v2383 = vld [vmem:[%s10] sm:$0xff]
    %v2384 = vld [vmem:[%s10 + $0x8] sm:$0xff]
    %v2385 = vld [vmem:[%s10 + $0x10] sm:$0xff]
    %v2386 = vld [vmem:[%s10 + $0x18] sm:$0xff]
    %v2387 = vld [vmem:[%s10 + $0x20] sm:$0xff]
    %v2388 = vld [vmem:[%s10 + $0x28] sm:$0xff]
    %v2389 = vld [vmem:[%s10 + $0x30] sm:$0xff]
    %v2390 = vld [vmem:[%s10 + $0x38] sm:$0xff]
    %v2391 = vld [vmem:[%s10 + $0x40] sm:$0xff]
    %v2392 = vld [vmem:[%s10 + $0x48] sm:$0xff]
    %v2393 = vld [vmem:[%s10 + $0x50] sm:$0xff]
    %v2394 = vld [vmem:[%s10 + $0x58] sm:$0xff]
    %v2395 = vld [vmem:[%s10 + $0x60] sm:$0xff]
    %v2396 = vld [vmem:[%s10 + $0x68] sm:$0xff]
    %v2397 = vld [vmem:[%s10 + $0x70] sm:$0xff]
    %v2398 = vld [vmem:[%s10 + $0x78] sm:$0xff]
    %v2399 = vld [vmem:[%s11] sm:$0x1]
    %v2401 = vperm.slane %v2399, 0
    %2403 = vmatpush.msra.mxu0 %v2398
    %2404 = vmatpush.msra.mxu0 %v2397
    %2405 = vmatpush.msra.mxu0 %v2396
    %2406 = vmatpush.msra.mxu0 %v2395
    %2407 = vmatpush.msra.mxu0 %v2394
    %2408 = vmatpush.msra.mxu0 %v2393
    %2409 = vmatpush.msra.mxu0 %v2392
    %2410 = vmatpush.msra.mxu0 %v2391
    %2411 = vmatpush.msra.mxu0 %v2390
    %2412 = vmatpush.msra.mxu0 %v2389
    %2413 = vmatpush.msra.mxu0 %v2388
    %2414 = vmatpush.msra.mxu0 %v2387
    %2415 = vmatpush.msra.mxu0 %v2386
    %2416 = vmatpush.msra.mxu0 %v2385
    %2417 = vmatpush.msra.mxu0 %v2384
    %2418 = vmatpush.msra.mxu0 %v2383
    %2419 = vmatmul.f32.gmra.mxu0 %v2382
    %v2420 = vpop.f32.mrf.mxu0
    %v2421 = vadd.f32 %v2401, %v2420
    %2422 = vdwg.mxu0
    %vm2423 = vcmp.gt.f32.partialorder %v2421, 0.0
    %v2424 = vmul.f32 %v2421, 0.01
    %v2425 = vsel %vm2423, %v2421, %v2424
    %v2426 = vld [vmem:[%s12] sm:$0xff]
    %v2427 = vld [vmem:[%s12 + $0x8] sm:$0xff]
    %v2428 = vld [vmem:[%s12 + $0x10] sm:$0xff]
    %v2429 = vld [vmem:[%s12 + $0x18] sm:$0xff]
    %v2430 = vld [vmem:[%s12 + $0x20] sm:$0xff]
    %v2431 = vld [vmem:[%s12 + $0x28] sm:$0xff]
    %v2432 = vld [vmem:[%s12 + $0x30] sm:$0xff]
    %v2433 = vld [vmem:[%s12 + $0x38] sm:$0xff]
    %v2434 = vld [vmem:[%s13] sm:$0x1]
    %v2436 = vperm.slane %v2434, 0
    %vm2438 = vcmask 523264
    %v2440 = vsel %vm2438, %v2425, 0
    %2442 = vmatpush.msra.mxu0 0.0
    %2443 = vmatpush.msra.mxu0 0.0
    %2444 = vmatpush.msra.mxu0 0.0
    %2445 = vmatpush.msra.mxu0 0.0
    %2446 = vmatpush.msra.mxu0 0.0
    %2447 = vmatpush.msra.mxu0 0.0
    %2448 = vmatpush.msra.mxu0 0.0
    %2449 = vmatpush.msra.mxu0 0.0
    %2450 = vmatpush.msra.mxu0 %v2433
    %2451 = vmatpush.msra.mxu0 %v2432
    %2452 = vmatpush.msra.mxu0 %v2431
    %2453 = vmatpush.msra.mxu0 %v2430
    %2454 = vmatpush.msra.mxu0 %v2429
    %2455 = vmatpush.msra.mxu0 %v2428
    %2456 = vmatpush.msra.mxu0 %v2427
    %2457 = vmatpush.msra.mxu0 %v2426
    %2458 = vmatmul.f32.gmra.mxu0 %v2440
    %v2459 = vpop.f32.mrf.mxu0
    %v2460 = vadd.f32 %v2436, %v2459
    %2461 = vdwg.mxu0
    %vm2462 = vcmp.gt.f32.partialorder %v2460, 0.0
    %v2463 = vmul.f32 %v2460, 0.01
    %v2464 = vsel %vm2462, %v2460, %v2463
    %v2465 = vld [vmem:[%s14] sm:$0xff]
    %v2466 = vld [vmem:[%s14 + $0x8] sm:$0xff]
    %v2467 = vld [vmem:[%s14 + $0x10] sm:$0xff]
    %v2468 = vld [vmem:[%s14 + $0x18] sm:$0xff]
    %v2469 = vld [vmem:[#allocation4] sm:$0x1]
    %v2471 = vperm.slane %v2469, 0
    %vm2473 = vcmask 261120
    %v2475 = vsel %vm2473, %v2464, 0
    %2477 = vmatpush.msra.mxu0 0.0
    %2478 = vmatpush.msra.mxu0 0.0
    %2479 = vmatpush.msra.mxu0 0.0
    %2480 = vmatpush.msra.mxu0 0.0
    %2481 = vmatpush.msra.mxu0 0.0
    %2482 = vmatpush.msra.mxu0 0.0
    %2483 = vmatpush.msra.mxu0 0.0
    %2484 = vmatpush.msra.mxu0 0.0
    %2485 = vmatpush.msra.mxu0 0.0
    %2486 = vmatpush.msra.mxu0 0.0
    %2487 = vmatpush.msra.mxu0 0.0
    %2488 = vmatpush.msra.mxu0 0.0
    %2489 = vmatpush.msra.mxu0 %v2468
    %2490 = vmatpush.msra.mxu0 %v2467
    %2491 = vmatpush.msra.mxu0 %v2466
    %2492 = vmatpush.msra.mxu0 %v2465
    %2493 = vmatmul.f32.gmra.mxu0 %v2475
    %v2494 = vpop.f32.mrf.mxu0
    %v2495 = vadd.f32 %v2471, %v2494
    %2496 = vdwg.mxu0
    %vm2497 = vcmask 7168
    %2498 = vst.msk [vmem:[%s16] sm:$0xff] %vm2497, %v2495
    // Predicated region
    $region82: #{predictor_forward.3} parent=1 // pred_check
      _
    $region83: #{predictor_forward.3} parent=1 // pred_check_branch
      %2500 = sbr.rel (0) target = $region85
    $region84: #{predictor_forward.3} parent=1 // pred_region
      _
    $region85: #{predictor_forward.3} parent=1 // pred_fallthru
      _
    // Predicated region
    $region86: #{predictor_forward.3} parent=1 // pred_check
      _
    $region87: #{predictor_forward.3} parent=1 // pred_check_branch
      %2502 = sbr.rel (0) target = $region89
    $region88: #{predictor_forward.3} parent=1 // pred_region
      _
    $region89: #{predictor_forward.3} parent=1 // pred_fallthru
      _
    %2503 = vsyncpa [#allocation6], 1
    %2504 = vsyncpa [#allocation8], 1
    %2505 = vsyncpa [#allocation11], 1

</llo_original>
